<compile_context>
chip_gen: v7x
topology: tpu7x:2x2x1
jax: 0.10.0
libtpu: 0.0.40
codegen_flags: <defaults>
</compile_context>

<pallas_src>
import numpy as np

import jax
import jax.numpy as jnp
from jax.experimental import pallas as pl
from jax.experimental.pallas import tpu as pltpu


# ---------------------------------------------------------------------------
# Fused conv + bias + ReLU + 2x2-maxpool kernel (TB images per grid step)
# ---------------------------------------------------------------------------

def _make_conv_pool_kernel(TB, C, K, Wp, Lout, Lout_pad, Lsel, KKC, KKC_pad):
    """One grid step: TB images, fully fused conv stage."""

    def kernel(xf_ref, w_ref, b_ref, sel_ref, o_ref, patches_ref, act_ref):
        total = TB * Lout_pad

        # ---- fused im2col into VMEM scratch --------------------------------
        # patch row (di*K+dj)*C + c  <-  xflat[c, di*Wp+dj : di*Wp+dj + Lout]
        # (wrap-around columns are garbage but are never selected by the pool)
        for t in range(TB):
            base = t * Lout_pad
            for kk in range(K * K):
                di, dj = divmod(kk, K)
                off = di * Wp + dj
                patches_ref[kk * C:(kk + 1) * C, base:base + Lout] = (
                    xf_ref[t, :, off:off + Lout])
            if Lout_pad > Lout:        # keep lane-padding columns finite
                patches_ref[:, base + Lout:base + Lout_pad] = jnp.zeros(
                    (KKC_pad, Lout_pad - Lout), jnp.bfloat16)
        if KKC_pad > KKC:              # zero K-padding rows (weights there are 0)
            patches_ref[KKC:KKC_pad, :] = jnp.zeros(
                (KKC_pad - KKC, total), jnp.bfloat16)

        # ---- conv for the whole batch tile: one lane-dense MXU matmul -------
        acc = jnp.dot(w_ref[...], patches_ref[...],
                      preferred_element_type=jnp.float32)        # (OC, total)
        act_ref[...] = jnp.maximum(acc + b_ref[...], 0.0).astype(jnp.bfloat16)

        # ---- 2x2 max-pool: 3 shifted-window maxes + 1 selection matmul ------
        sel = sel_ref[...]                                       # (Lsel, P)
        for t in range(TB):
            base = t * Lout_pad
            h = jnp.maximum(
                jnp.maximum(act_ref[:, base:base + Lsel],
                            act_ref[:, base + 1:base + 1 + Lsel]),
                jnp.maximum(act_ref[:, base + Wp:base + Wp + Lsel],
                            act_ref[:, base + Wp + 1:base + Wp + 1 + Lsel]))
            pooled = jnp.dot(h, sel, preferred_element_type=jnp.float32)
            o_ref[t] = pooled.astype(o_ref.dtype)                # (OC, H2*W2)

    return kernel


def _pool_select_mat(H, W, Wp):
    """(Lsel, H2*W2) 0/1 matrix picking the top-left corner of each 2x2 window."""
    H2, W2 = H // 2, W // 2
    Lsel = (H - 2) * Wp + W - 1
    m = np.zeros((Lsel, H2 * W2), np.float32)
    for i in range(H2):
        for j in range(W2):
            m[2 * i * Wp + 2 * j, i * W2 + j] = 1.0
    return jnp.asarray(m, jnp.bfloat16)


def _conv_relu_pool(x, w, b, max_tb=8):
    """x: (B, C, H, W), w: (OC, C, K, K) [torch layout], b: (OC,).
    Returns (B, OC, (H//2)*(W//2)) bf16, pixel order h*(W//2)+w."""
    B, C, H, W = x.shape
    OC, _, K, _ = w.shape
    pad = (K - 1) // 2
    Hp, Wp = H + 2 * pad, W + 2 * pad
    Lin = Hp * Wp
    Lout = (H - 1) * Wp + W              # flat positions covering all conv outputs
    Lout_pad = ((Lout + 127) // 128) * 128   # 128-aligned per-image lane slot
    Lsel = (H - 2) * Wp + W - 1          # flat positions covering all pool windows
    H2, W2 = H // 2, W // 2
    P = H2 * W2
    KKC = K * K * C
    KKC_pad = ((KKC + 15) // 16) * 16    # pad contraction dim (25 -> 32)

    TB = min(B, max_tb)
    B_pad = ((B + TB - 1) // TB) * TB

    # zero-pad (batch to TB multiple, spatial for the conv), flatten rows
    xf = jnp.pad(x, ((0, B_pad - B), (0, 0), (pad, pad), (pad, pad)))
    xf = xf.reshape(B_pad, C, Lin).astype(jnp.bfloat16)

    # torch weight (OC, C, K, K) -> (OC, (di,dj,c)) matching patch-row order
    w2 = w.transpose(0, 2, 3, 1).reshape(OC, KKC)
    w2 = jnp.pad(w2, ((0, 0), (0, KKC_pad - KKC))).astype(jnp.bfloat16)
    b2 = b.reshape(OC, 1).astype(jnp.float32)
    sel = _pool_select_mat(H, W, Wp)

    out = pl.pallas_call(
        _make_conv_pool_kernel(TB, C, K, Wp, Lout, Lout_pad, Lsel, KKC, KKC_pad),
        out_shape=jax.ShapeDtypeStruct((B_pad, OC, P), jnp.bfloat16),
        grid=(B_pad // TB,),
        in_specs=[
            pl.BlockSpec((TB, C, Lin), lambda i: (i, 0, 0)),
            pl.BlockSpec((OC, KKC_pad), lambda i: (0, 0)),
            pl.BlockSpec((OC, 1), lambda i: (0, 0)),
            pl.BlockSpec((Lsel, P), lambda i: (0, 0)),
        ],
        out_specs=pl.BlockSpec((TB, OC, P), lambda i: (i, 0, 0)),
        scratch_shapes=[
            pltpu.VMEM((KKC_pad, TB * Lout_pad), jnp.bfloat16),   # im2col patches
            pltpu.VMEM((OC, TB * Lout_pad), jnp.bfloat16),        # ReLU'd activation
        ],
        compiler_params=pltpu.CompilerParams(
            dimension_semantics=("parallel",),
            vmem_limit_bytes=32 * 1024 * 1024),
    )(xf, w2, b2, sel)
    return out[:B] if B_pad != B else out


# ---------------------------------------------------------------------------
# Final linear layer kernel (tiled over batch)
# ---------------------------------------------------------------------------

def _linear_kernel(x_ref, w_ref, b_ref, o_ref):
    o_ref[...] = jnp.dot(x_ref[...], w_ref[...],
                         preferred_element_type=jnp.float32) + b_ref[...]


def _linear(x, w, b):
    """x: (B, F), w: (N, F) [torch layout], b: (N,) -> (B, N) f32."""
    B, F = x.shape
    N = w.shape[0]
    TB = B if B <= 512 else 512
    return pl.pallas_call(
        _linear_kernel,
        out_shape=jax.ShapeDtypeStruct((B, N), jnp.float32),
        grid=(pl.cdiv(B, TB),),
        in_specs=[pl.BlockSpec((TB, F), lambda i: (i, 0)),
                  pl.BlockSpec((F, N), lambda i: (0, 0)),
                  pl.BlockSpec((1, N), lambda i: (0, 0))],
        out_specs=pl.BlockSpec((TB, N), lambda i: (i, 0)),
        compiler_params=pltpu.CompilerParams(
            dimension_semantics=("parallel",),
            vmem_limit_bytes=32 * 1024 * 1024),
    )(x.astype(jnp.bfloat16), w.T.astype(jnp.bfloat16),
      b.reshape(1, N).astype(jnp.float32))


# ---------------------------------------------------------------------------
# Forward pass (matches the PyTorch CNN.forward)
# ---------------------------------------------------------------------------

def cnn_forward(params, x):
    B = x.shape[0]
    h1 = _conv_relu_pool(x, params["w1"], params["b1"])       # (B, 16, 14*14)
    h1 = h1.reshape(B, 16, 14, 14)                            # cheap, no transpose
    h2 = _conv_relu_pool(h1, params["w2"], params["b2"])      # (B, 32, 7*7)
    flat = h2.reshape(B, 32 * 7 * 7)                          # == torch .view order
    return _linear(flat, params["w_out"], params["b_out"])    # (B, 10) f32


# ---------------------------------------------------------------------------
# Pure-JAX reference (f32) for a sanity check
# ---------------------------------------------------------------------------

def _reference_forward(params, x):
    def conv_block(y, w, b):
        y = jax.lax.conv_general_dilated(
            y, w, (1, 1), ((2, 2), (2, 2)),
            dimension_numbers=("NCHW", "OIHW", "NCHW"))
        y = jnp.maximum(y + b.reshape(1, -1, 1, 1), 0.0)
        B, C, H, W = y.shape
        return y.reshape(B, C, H // 2, 2, W // 2, 2).max(axis=(3, 5))

    y = conv_block(x, params["w1"], params["b1"])
    y = conv_block(y, params["w2"], params["b2"])
    y = y.reshape(y.shape[0], -1)
    return y @ params["w_out"].T + params["b_out"]


# ---------------------------------------------------------------------------
# Deterministic parameter init (torch-style uniform(-1/sqrt(fan_in), +))
# ---------------------------------------------------------------------------

def init_params(key):
    ks = jax.random.split(key, 6)

    def u(k, shape, fan_in):
        bound = 1.0 / (fan_in ** 0.5)
        return jax.random.uniform(k, shape, jnp.float32, -bound, bound)

    return {
        "w1": u(ks[0], (16, 1, 5, 5), 1 * 5 * 5),
        "b1": u(ks[1], (16,), 1 * 5 * 5),
        "w2": u(ks[2], (32, 16, 5, 5), 16 * 5 * 5),
        "b2": u(ks[3], (32,), 16 * 5 * 5),
        "w_out": u(ks[4], (10, 32 * 7 * 7), 32 * 7 * 7),
        "b_out": u(ks[5], (10,), 32 * 7 * 7),
    }


if __name__ == "__main__":
    key = jax.random.PRNGKey(0)
    pkey, xkey = jax.random.split(key)
    params = init_params(pkey)
    x = jax.random.normal(xkey, (2, 1, 28, 28), jnp.float32)  # NCHW, MNIST-sized

    out = jax.jit(cnn_forward)(params, x)
    out = jax.block_until_ready(out)

    assert out.shape == (2, 10), out.shape
    assert bool(jnp.all(jnp.isfinite(out)))

    ref = _reference_forward(params, x)
    err = float(jnp.max(jnp.abs(out - ref)))
    assert err < 0.1, f"mismatch vs f32 reference: max abs err = {err}"

    print("KERNEL_OK")
</pallas_src>

<mosaic_0001>
module attributes {stable_mosaic.version = 11 : i64} {
  func.func @kernel(%arg0: i32, %arg1: memref<2x1x1024xbf16, #tpu.memory_space<vmem>>, %arg2: memref<16x32xbf16, #tpu.memory_space<vmem>>, %arg3: memref<16x1xf32, #tpu.memory_space<vmem>>, %arg4: memref<859x196xbf16, #tpu.memory_space<vmem>>, %arg5: memref<2x16x196xbf16, #tpu.memory_space<vmem>>, %arg6: memref<32x1792xbf16, #tpu.memory_space<vmem>>, %arg7: memref<16x1792xbf16, #tpu.memory_space<vmem>>) attributes {dimension_semantics = [#tpu.dimension_semantics<parallel>], iteration_bounds = array<i64: 1>, scalar_prefetch = 0 : i64, scratch_operands = 2 : i64, tpu.core_type = #tpu.core_type<tc>, window_params = [{transform_indices = @transform_0, window_bounds = array<i64: 2, 1, 1024>}, {pipeline_mode = #tpu.pipeline_mode<synchronous>, transform_indices = @transform_1, window_bounds = array<i64: 16, 32>}, {pipeline_mode = #tpu.pipeline_mode<synchronous>, transform_indices = @transform_2, window_bounds = array<i64: 16, 1>}, {pipeline_mode = #tpu.pipeline_mode<synchronous>, transform_indices = @transform_3, window_bounds = array<i64: 859, 196>}, {transform_indices = @transform_4, window_bounds = array<i64: 2, 16, 196>}]} {
    %c0 = arith.constant 0 : index
    %c0_0 = arith.constant 0 : index
    %c0_1 = arith.constant 0 : index
    %0 = vector.load %arg1[%c0, %c0_0, %c0_1] : memref<2x1x1024xbf16, #tpu.memory_space<vmem>>, vector<1x1x892xbf16>
    %1 = vector.shape_cast %0 : vector<1x1x892xbf16> to vector<1x892xbf16>
    %c0_2 = arith.constant 0 : index
    %c0_3 = arith.constant 0 : index
    %2 = vector.load %arg6[%c0_2, %c0_3] : memref<32x1792xbf16, #tpu.memory_space<vmem>>, vector<1x892xbf16>
    tpu.vector_store %arg6[%c0_2, %c0_3], %1 {strides = array<i32>} : memref<32x1792xbf16, #tpu.memory_space<vmem>>, vector<1x892xbf16>,
    %c0_4 = arith.constant 0 : index
    %c0_5 = arith.constant 0 : index
    %c1 = arith.constant 1 : index
    %3 = vector.load %arg1[%c0_4, %c0_5, %c1] : memref<2x1x1024xbf16, #tpu.memory_space<vmem>>, vector<1x1x892xbf16>
    %4 = vector.shape_cast %3 : vector<1x1x892xbf16> to vector<1x892xbf16>
    %c1_6 = arith.constant 1 : index
    %c0_7 = arith.constant 0 : index
    %5 = vector.load %arg6[%c1_6, %c0_7] : memref<32x1792xbf16, #tpu.memory_space<vmem>>, vector<1x892xbf16>
    tpu.vector_store %arg6[%c1_6, %c0_7], %4 {strides = array<i32>} : memref<32x1792xbf16, #tpu.memory_space<vmem>>, vector<1x892xbf16>,
    %c0_8 = arith.constant 0 : index
    %c0_9 = arith.constant 0 : index
    %c2 = arith.constant 2 : index
    %6 = vector.load %arg1[%c0_8, %c0_9, %c2] : memref<2x1x1024xbf16, #tpu.memory_space<vmem>>, vector<1x1x892xbf16>
    %7 = vector.shape_cast %6 : vector<1x1x892xbf16> to vector<1x892xbf16>
    %c2_10 = arith.constant 2 : index
    %c0_11 = arith.constant 0 : index
    %8 = vector.load %arg6[%c2_10, %c0_11] : memref<32x1792xbf16, #tpu.memory_space<vmem>>, vector<1x892xbf16>
    tpu.vector_store %arg6[%c2_10, %c0_11], %7 {strides = array<i32>} : memref<32x1792xbf16, #tpu.memory_space<vmem>>, vector<1x892xbf16>,
    %c0_12 = arith.constant 0 : index
    %c0_13 = arith.constant 0 : index
    %c3 = arith.constant 3 : index
    %9 = vector.load %arg1[%c0_12, %c0_13, %c3] : memref<2x1x1024xbf16, #tpu.memory_space<vmem>>, vector<1x1x892xbf16>
    %10 = vector.shape_cast %9 : vector<1x1x892xbf16> to vector<1x892xbf16>
    %c3_14 = arith.constant 3 : index
    %c0_15 = arith.constant 0 : index
    %11 = vector.load %arg6[%c3_14, %c0_15] : memref<32x1792xbf16, #tpu.memory_space<vmem>>, vector<1x892xbf16>
    tpu.vector_store %arg6[%c3_14, %c0_15], %10 {strides = array<i32>} : memref<32x1792xbf16, #tpu.memory_space<vmem>>, vector<1x892xbf16>,
    %c0_16 = arith.constant 0 : index
    %c0_17 = arith.constant 0 : index
    %c4 = arith.constant 4 : index
    %12 = vector.load %arg1[%c0_16, %c0_17, %c4] : memref<2x1x1024xbf16, #tpu.memory_space<vmem>>, vector<1x1x892xbf16>
    %13 = vector.shape_cast %12 : vector<1x1x892xbf16> to vector<1x892xbf16>
    %c4_18 = arith.constant 4 : index
    %c0_19 = arith.constant 0 : index
    %14 = vector.load %arg6[%c4_18, %c0_19] : memref<32x1792xbf16, #tpu.memory_space<vmem>>, vector<1x892xbf16>
    tpu.vector_store %arg6[%c4_18, %c0_19], %13 {strides = array<i32>} : memref<32x1792xbf16, #tpu.memory_space<vmem>>, vector<1x892xbf16>,
    %c0_20 = arith.constant 0 : index
    %c0_21 = arith.constant 0 : index
    %c32 = arith.constant 32 : index
    %15 = vector.load %arg1[%c0_20, %c0_21, %c32] : memref<2x1x1024xbf16, #tpu.memory_space<vmem>>, vector<1x1x892xbf16>
    %16 = vector.shape_cast %15 : vector<1x1x892xbf16> to vector<1x892xbf16>
    %c5 = arith.constant 5 : index
    %c0_22 = arith.constant 0 : index
    %17 = vector.load %arg6[%c5, %c0_22] : memref<32x1792xbf16, #tpu.memory_space<vmem>>, vector<1x892xbf16>
    tpu.vector_store %arg6[%c5, %c0_22], %16 {strides = array<i32>} : memref<32x1792xbf16, #tpu.memory_space<vmem>>, vector<1x892xbf16>,
    %c0_23 = arith.constant 0 : index
    %c0_24 = arith.constant 0 : index
    %c33 = arith.constant 33 : index
    %18 = vector.load %arg1[%c0_23, %c0_24, %c33] : memref<2x1x1024xbf16, #tpu.memory_space<vmem>>, vector<1x1x892xbf16>
    %19 = vector.shape_cast %18 : vector<1x1x892xbf16> to vector<1x892xbf16>
    %c6 = arith.constant 6 : index
    %c0_25 = arith.constant 0 : index
    %20 = vector.load %arg6[%c6, %c0_25] : memref<32x1792xbf16, #tpu.memory_space<vmem>>, vector<1x892xbf16>
    tpu.vector_store %arg6[%c6, %c0_25], %19 {strides = array<i32>} : memref<32x1792xbf16, #tpu.memory_space<vmem>>, vector<1x892xbf16>,
    %c0_26 = arith.constant 0 : index
    %c0_27 = arith.constant 0 : index
    %c34 = arith.constant 34 : index
    %21 = vector.load %arg1[%c0_26, %c0_27, %c34] : memref<2x1x1024xbf16, #tpu.memory_space<vmem>>, vector<1x1x892xbf16>
    %22 = vector.shape_cast %21 : vector<1x1x892xbf16> to vector<1x892xbf16>
    %c7 = arith.constant 7 : index
    %c0_28 = arith.constant 0 : index
    %23 = vector.load %arg6[%c7, %c0_28] : memref<32x1792xbf16, #tpu.memory_space<vmem>>, vector<1x892xbf16>
    tpu.vector_store %arg6[%c7, %c0_28], %22 {strides = array<i32>} : memref<32x1792xbf16, #tpu.memory_space<vmem>>, vector<1x892xbf16>,
    %c0_29 = arith.constant 0 : index
    %c0_30 = arith.constant 0 : index
    %c35 = arith.constant 35 : index
    %24 = vector.load %arg1[%c0_29, %c0_30, %c35] : memref<2x1x1024xbf16, #tpu.memory_space<vmem>>, vector<1x1x892xbf16>
    %25 = vector.shape_cast %24 : vector<1x1x892xbf16> to vector<1x892xbf16>
    %c8 = arith.constant 8 : index
    %c0_31 = arith.constant 0 : index
    %26 = vector.load %arg6[%c8, %c0_31] : memref<32x1792xbf16, #tpu.memory_space<vmem>>, vector<1x892xbf16>
    tpu.vector_store %arg6[%c8, %c0_31], %25 {strides = array<i32>} : memref<32x1792xbf16, #tpu.memory_space<vmem>>, vector<1x892xbf16>,
    %c0_32 = arith.constant 0 : index
    %c0_33 = arith.constant 0 : index
    %c36 = arith.constant 36 : index
    %27 = vector.load %arg1[%c0_32, %c0_33, %c36] : memref<2x1x1024xbf16, #tpu.memory_space<vmem>>, vector<1x1x892xbf16>
    %28 = vector.shape_cast %27 : vector<1x1x892xbf16> to vector<1x892xbf16>
    %c9 = arith.constant 9 : index
    %c0_34 = arith.constant 0 : index
    %29 = vector.load %arg6[%c9, %c0_34] : memref<32x1792xbf16, #tpu.memory_space<vmem>>, vector<1x892xbf16>
    tpu.vector_store %arg6[%c9, %c0_34], %28 {strides = array<i32>} : memref<32x1792xbf16, #tpu.memory_space<vmem>>, vector<1x892xbf16>,
    %c0_35 = arith.constant 0 : index
    %c0_36 = arith.constant 0 : index
    %c64 = arith.constant 64 : index
    %30 = vector.load %arg1[%c0_35, %c0_36, %c64] : memref<2x1x1024xbf16, #tpu.memory_space<vmem>>, vector<1x1x892xbf16>
    %31 = vector.shape_cast %30 : vector<1x1x892xbf16> to vector<1x892xbf16>
    %c10 = arith.constant 10 : index
    %c0_37 = arith.constant 0 : index
    %32 = vector.load %arg6[%c10, %c0_37] : memref<32x1792xbf16, #tpu.memory_space<vmem>>, vector<1x892xbf16>
    tpu.vector_store %arg6[%c10, %c0_37], %31 {strides = array<i32>} : memref<32x1792xbf16, #tpu.memory_space<vmem>>, vector<1x892xbf16>,
    %c0_38 = arith.constant 0 : index
    %c0_39 = arith.constant 0 : index
    %c65 = arith.constant 65 : index
    %33 = vector.load %arg1[%c0_38, %c0_39, %c65] : memref<2x1x1024xbf16, #tpu.memory_space<vmem>>, vector<1x1x892xbf16>
    %34 = vector.shape_cast %33 : vector<1x1x892xbf16> to vector<1x892xbf16>
    %c11 = arith.constant 11 : index
    %c0_40 = arith.constant 0 : index
    %35 = vector.load %arg6[%c11, %c0_40] : memref<32x1792xbf16, #tpu.memory_space<vmem>>, vector<1x892xbf16>
    tpu.vector_store %arg6[%c11, %c0_40], %34 {strides = array<i32>} : memref<32x1792xbf16, #tpu.memory_space<vmem>>, vector<1x892xbf16>,
    %c0_41 = arith.constant 0 : index
    %c0_42 = arith.constant 0 : index
    %c66 = arith.constant 66 : index
    %36 = vector.load %arg1[%c0_41, %c0_42, %c66] : memref<2x1x1024xbf16, #tpu.memory_space<vmem>>, vector<1x1x892xbf16>
    %37 = vector.shape_cast %36 : vector<1x1x892xbf16> to vector<1x892xbf16>
    %c12 = arith.constant 12 : index
    %c0_43 = arith.constant 0 : index
    %38 = vector.load %arg6[%c12, %c0_43] : memref<32x1792xbf16, #tpu.memory_space<vmem>>, vector<1x892xbf16>
    tpu.vector_store %arg6[%c12, %c0_43], %37 {strides = array<i32>} : memref<32x1792xbf16, #tpu.memory_space<vmem>>, vector<1x892xbf16>,
    %c0_44 = arith.constant 0 : index
    %c0_45 = arith.constant 0 : index
    %c67 = arith.constant 67 : index
    %39 = vector.load %arg1[%c0_44, %c0_45, %c67] : memref<2x1x1024xbf16, #tpu.memory_space<vmem>>, vector<1x1x892xbf16>
    %40 = vector.shape_cast %39 : vector<1x1x892xbf16> to vector<1x892xbf16>
    %c13 = arith.constant 13 : index
    %c0_46 = arith.constant 0 : index
    %41 = vector.load %arg6[%c13, %c0_46] : memref<32x1792xbf16, #tpu.memory_space<vmem>>, vector<1x892xbf16>
    tpu.vector_store %arg6[%c13, %c0_46], %40 {strides = array<i32>} : memref<32x1792xbf16, #tpu.memory_space<vmem>>, vector<1x892xbf16>,
    %c0_47 = arith.constant 0 : index
    %c0_48 = arith.constant 0 : index
    %c68 = arith.constant 68 : index
    %42 = vector.load %arg1[%c0_47, %c0_48, %c68] : memref<2x1x1024xbf16, #tpu.memory_space<vmem>>, vector<1x1x892xbf16>
    %43 = vector.shape_cast %42 : vector<1x1x892xbf16> to vector<1x892xbf16>
    %c14 = arith.constant 14 : index
    %c0_49 = arith.constant 0 : index
    %44 = vector.load %arg6[%c14, %c0_49] : memref<32x1792xbf16, #tpu.memory_space<vmem>>, vector<1x892xbf16>
    tpu.vector_store %arg6[%c14, %c0_49], %43 {strides = array<i32>} : memref<32x1792xbf16, #tpu.memory_space<vmem>>, vector<1x892xbf16>,
    %c0_50 = arith.constant 0 : index
    %c0_51 = arith.constant 0 : index
    %c96 = arith.constant 96 : index
    %45 = vector.load %arg1[%c0_50, %c0_51, %c96] : memref<2x1x1024xbf16, #tpu.memory_space<vmem>>, vector<1x1x892xbf16>
    %46 = vector.shape_cast %45 : vector<1x1x892xbf16> to vector<1x892xbf16>
    %c15 = arith.constant 15 : index
    %c0_52 = arith.constant 0 : index
    %47 = vector.load %arg6[%c15, %c0_52] : memref<32x1792xbf16, #tpu.memory_space<vmem>>, vector<1x892xbf16>
    tpu.vector_store %arg6[%c15, %c0_52], %46 {strides = array<i32>} : memref<32x1792xbf16, #tpu.memory_space<vmem>>, vector<1x892xbf16>,
    %c0_53 = arith.constant 0 : index
    %c0_54 = arith.constant 0 : index
    %c97 = arith.constant 97 : index
    %48 = vector.load %arg1[%c0_53, %c0_54, %c97] : memref<2x1x1024xbf16, #tpu.memory_space<vmem>>, vector<1x1x892xbf16>
    %49 = vector.shape_cast %48 : vector<1x1x892xbf16> to vector<1x892xbf16>
    %c16 = arith.constant 16 : index
    %c0_55 = arith.constant 0 : index
    %50 = vector.load %arg6[%c16, %c0_55] : memref<32x1792xbf16, #tpu.memory_space<vmem>>, vector<1x892xbf16>
    tpu.vector_store %arg6[%c16, %c0_55], %49 {strides = array<i32>} : memref<32x1792xbf16, #tpu.memory_space<vmem>>, vector<1x892xbf16>,
    %c0_56 = arith.constant 0 : index
    %c0_57 = arith.constant 0 : index
    %c98 = arith.constant 98 : index
    %51 = vector.load %arg1[%c0_56, %c0_57, %c98] : memref<2x1x1024xbf16, #tpu.memory_space<vmem>>, vector<1x1x892xbf16>
    %52 = vector.shape_cast %51 : vector<1x1x892xbf16> to vector<1x892xbf16>
    %c17 = arith.constant 17 : index
    %c0_58 = arith.constant 0 : index
    %53 = vector.load %arg6[%c17, %c0_58] : memref<32x1792xbf16, #tpu.memory_space<vmem>>, vector<1x892xbf16>
    tpu.vector_store %arg6[%c17, %c0_58], %52 {strides = array<i32>} : memref<32x1792xbf16, #tpu.memory_space<vmem>>, vector<1x892xbf16>,
    %c0_59 = arith.constant 0 : index
    %c0_60 = arith.constant 0 : index
    %c99 = arith.constant 99 : index
    %54 = vector.load %arg1[%c0_59, %c0_60, %c99] : memref<2x1x1024xbf16, #tpu.memory_space<vmem>>, vector<1x1x892xbf16>
    %55 = vector.shape_cast %54 : vector<1x1x892xbf16> to vector<1x892xbf16>
    %c18 = arith.constant 18 : index
    %c0_61 = arith.constant 0 : index
    %56 = vector.load %arg6[%c18, %c0_61] : memref<32x1792xbf16, #tpu.memory_space<vmem>>, vector<1x892xbf16>
    tpu.vector_store %arg6[%c18, %c0_61], %55 {strides = array<i32>} : memref<32x1792xbf16, #tpu.memory_space<vmem>>, vector<1x892xbf16>,
    %c0_62 = arith.constant 0 : index
    %c0_63 = arith.constant 0 : index
    %c100 = arith.constant 100 : index
    %57 = vector.load %arg1[%c0_62, %c0_63, %c100] : memref<2x1x1024xbf16, #tpu.memory_space<vmem>>, vector<1x1x892xbf16>
    %58 = vector.shape_cast %57 : vector<1x1x892xbf16> to vector<1x892xbf16>
    %c19 = arith.constant 19 : index
    %c0_64 = arith.constant 0 : index
    %59 = vector.load %arg6[%c19, %c0_64] : memref<32x1792xbf16, #tpu.memory_space<vmem>>, vector<1x892xbf16>
    tpu.vector_store %arg6[%c19, %c0_64], %58 {strides = array<i32>} : memref<32x1792xbf16, #tpu.memory_space<vmem>>, vector<1x892xbf16>,
    %c0_65 = arith.constant 0 : index
    %c0_66 = arith.constant 0 : index
    %c128 = arith.constant 128 : index
    %60 = vector.load %arg1[%c0_65, %c0_66, %c128] : memref<2x1x1024xbf16, #tpu.memory_space<vmem>>, vector<1x1x892xbf16>
    %61 = vector.shape_cast %60 : vector<1x1x892xbf16> to vector<1x892xbf16>
    %c20 = arith.constant 20 : index
    %c0_67 = arith.constant 0 : index
    %62 = vector.load %arg6[%c20, %c0_67] : memref<32x1792xbf16, #tpu.memory_space<vmem>>, vector<1x892xbf16>
    tpu.vector_store %arg6[%c20, %c0_67], %61 {strides = array<i32>} : memref<32x1792xbf16, #tpu.memory_space<vmem>>, vector<1x892xbf16>,
    %c0_68 = arith.constant 0 : index
    %c0_69 = arith.constant 0 : index
    %c129 = arith.constant 129 : index
    %63 = vector.load %arg1[%c0_68, %c0_69, %c129] : memref<2x1x1024xbf16, #tpu.memory_space<vmem>>, vector<1x1x892xbf16>
    %64 = vector.shape_cast %63 : vector<1x1x892xbf16> to vector<1x892xbf16>
    %c21 = arith.constant 21 : index
    %c0_70 = arith.constant 0 : index
    %65 = vector.load %arg6[%c21, %c0_70] : memref<32x1792xbf16, #tpu.memory_space<vmem>>, vector<1x892xbf16>
    tpu.vector_store %arg6[%c21, %c0_70], %64 {strides = array<i32>} : memref<32x1792xbf16, #tpu.memory_space<vmem>>, vector<1x892xbf16>,
    %c0_71 = arith.constant 0 : index
    %c0_72 = arith.constant 0 : index
    %c130 = arith.constant 130 : index
    %66 = vector.load %arg1[%c0_71, %c0_72, %c130] : memref<2x1x1024xbf16, #tpu.memory_space<vmem>>, vector<1x1x892xbf16>
    %67 = vector.shape_cast %66 : vector<1x1x892xbf16> to vector<1x892xbf16>
    %c22 = arith.constant 22 : index
    %c0_73 = arith.constant 0 : index
    %68 = vector.load %arg6[%c22, %c0_73] : memref<32x1792xbf16, #tpu.memory_space<vmem>>, vector<1x892xbf16>
    tpu.vector_store %arg6[%c22, %c0_73], %67 {strides = array<i32>} : memref<32x1792xbf16, #tpu.memory_space<vmem>>, vector<1x892xbf16>,
    %c0_74 = arith.constant 0 : index
    %c0_75 = arith.constant 0 : index
    %c131 = arith.constant 131 : index
    %69 = vector.load %arg1[%c0_74, %c0_75, %c131] : memref<2x1x1024xbf16, #tpu.memory_space<vmem>>, vector<1x1x892xbf16>
    %70 = vector.shape_cast %69 : vector<1x1x892xbf16> to vector<1x892xbf16>
    %c23 = arith.constant 23 : index
    %c0_76 = arith.constant 0 : index
    %71 = vector.load %arg6[%c23, %c0_76] : memref<32x1792xbf16, #tpu.memory_space<vmem>>, vector<1x892xbf16>
    tpu.vector_store %arg6[%c23, %c0_76], %70 {strides = array<i32>} : memref<32x1792xbf16, #tpu.memory_space<vmem>>, vector<1x892xbf16>,
    %c0_77 = arith.constant 0 : index
    %c0_78 = arith.constant 0 : index
    %c132 = arith.constant 132 : index
    %72 = vector.load %arg1[%c0_77, %c0_78, %c132] : memref<2x1x1024xbf16, #tpu.memory_space<vmem>>, vector<1x1x892xbf16>
    %73 = vector.shape_cast %72 : vector<1x1x892xbf16> to vector<1x892xbf16>
    %c24 = arith.constant 24 : index
    %c0_79 = arith.constant 0 : index
    %74 = vector.load %arg6[%c24, %c0_79] : memref<32x1792xbf16, #tpu.memory_space<vmem>>, vector<1x892xbf16>
    tpu.vector_store %arg6[%c24, %c0_79], %73 {strides = array<i32>} : memref<32x1792xbf16, #tpu.memory_space<vmem>>, vector<1x892xbf16>,
    %cst = arith.constant 0.000000e+00 : bf16
    %75 = vector.broadcast %cst : bf16 to vector<32x4xbf16>
    %c0_80 = arith.constant 0 : index
    %c892 = arith.constant 892 : index
    %76 = vector.load %arg6[%c0_80, %c892] : memref<32x1792xbf16, #tpu.memory_space<vmem>>, vector<32x4xbf16>
    tpu.vector_store %arg6[%c0_80, %c892], %75 {strides = array<i32>} : memref<32x1792xbf16, #tpu.memory_space<vmem>>, vector<32x4xbf16>,
    %c1_81 = arith.constant 1 : index
    %c0_82 = arith.constant 0 : index
    %c0_83 = arith.constant 0 : index
    %77 = vector.load %arg1[%c1_81, %c0_82, %c0_83] : memref<2x1x1024xbf16, #tpu.memory_space<vmem>>, vector<1x1x892xbf16>
    %78 = vector.shape_cast %77 : vector<1x1x892xbf16> to vector<1x892xbf16>
    %c0_84 = arith.constant 0 : index
    %c896 = arith.constant 896 : index
    %79 = vector.load %arg6[%c0_84, %c896] : memref<32x1792xbf16, #tpu.memory_space<vmem>>, vector<1x892xbf16>
    tpu.vector_store %arg6[%c0_84, %c896], %78 {strides = array<i32>} : memref<32x1792xbf16, #tpu.memory_space<vmem>>, vector<1x892xbf16>,
    %c1_85 = arith.constant 1 : index
    %c0_86 = arith.constant 0 : index
    %c1_87 = arith.constant 1 : index
    %80 = vector.load %arg1[%c1_85, %c0_86, %c1_87] : memref<2x1x1024xbf16, #tpu.memory_space<vmem>>, vector<1x1x892xbf16>
    %81 = vector.shape_cast %80 : vector<1x1x892xbf16> to vector<1x892xbf16>
    %c1_88 = arith.constant 1 : index
    %c896_89 = arith.constant 896 : index
    %82 = vector.load %arg6[%c1_88, %c896_89] : memref<32x1792xbf16, #tpu.memory_space<vmem>>, vector<1x892xbf16>
    tpu.vector_store %arg6[%c1_88, %c896_89], %81 {strides = array<i32>} : memref<32x1792xbf16, #tpu.memory_space<vmem>>, vector<1x892xbf16>,
    %c1_90 = arith.constant 1 : index
    %c0_91 = arith.constant 0 : index
    %c2_92 = arith.constant 2 : index
    %83 = vector.load %arg1[%c1_90, %c0_91, %c2_92] : memref<2x1x1024xbf16, #tpu.memory_space<vmem>>, vector<1x1x892xbf16>
    %84 = vector.shape_cast %83 : vector<1x1x892xbf16> to vector<1x892xbf16>
    %c2_93 = arith.constant 2 : index
    %c896_94 = arith.constant 896 : index
    %85 = vector.load %arg6[%c2_93, %c896_94] : memref<32x1792xbf16, #tpu.memory_space<vmem>>, vector<1x892xbf16>
    tpu.vector_store %arg6[%c2_93, %c896_94], %84 {strides = array<i32>} : memref<32x1792xbf16, #tpu.memory_space<vmem>>, vector<1x892xbf16>,
    %c1_95 = arith.constant 1 : index
    %c0_96 = arith.constant 0 : index
    %c3_97 = arith.constant 3 : index
    %86 = vector.load %arg1[%c1_95, %c0_96, %c3_97] : memref<2x1x1024xbf16, #tpu.memory_space<vmem>>, vector<1x1x892xbf16>
    %87 = vector.shape_cast %86 : vector<1x1x892xbf16> to vector<1x892xbf16>
    %c3_98 = arith.constant 3 : index
    %c896_99 = arith.constant 896 : index
    %88 = vector.load %arg6[%c3_98, %c896_99] : memref<32x1792xbf16, #tpu.memory_space<vmem>>, vector<1x892xbf16>
    tpu.vector_store %arg6[%c3_98, %c896_99], %87 {strides = array<i32>} : memref<32x1792xbf16, #tpu.memory_space<vmem>>, vector<1x892xbf16>,
    %c1_100 = arith.constant 1 : index
    %c0_101 = arith.constant 0 : index
    %c4_102 = arith.constant 4 : index
    %89 = vector.load %arg1[%c1_100, %c0_101, %c4_102] : memref<2x1x1024xbf16, #tpu.memory_space<vmem>>, vector<1x1x892xbf16>
    %90 = vector.shape_cast %89 : vector<1x1x892xbf16> to vector<1x892xbf16>
    %c4_103 = arith.constant 4 : index
    %c896_104 = arith.constant 896 : index
    %91 = vector.load %arg6[%c4_103, %c896_104] : memref<32x1792xbf16, #tpu.memory_space<vmem>>, vector<1x892xbf16>
    tpu.vector_store %arg6[%c4_103, %c896_104], %90 {strides = array<i32>} : memref<32x1792xbf16, #tpu.memory_space<vmem>>, vector<1x892xbf16>,
    %c1_105 = arith.constant 1 : index
    %c0_106 = arith.constant 0 : index
    %c32_107 = arith.constant 32 : index
    %92 = vector.load %arg1[%c1_105, %c0_106, %c32_107] : memref<2x1x1024xbf16, #tpu.memory_space<vmem>>, vector<1x1x892xbf16>
    %93 = vector.shape_cast %92 : vector<1x1x892xbf16> to vector<1x892xbf16>
    %c5_108 = arith.constant 5 : index
    %c896_109 = arith.constant 896 : index
    %94 = vector.load %arg6[%c5_108, %c896_109] : memref<32x1792xbf16, #tpu.memory_space<vmem>>, vector<1x892xbf16>
    tpu.vector_store %arg6[%c5_108, %c896_109], %93 {strides = array<i32>} : memref<32x1792xbf16, #tpu.memory_space<vmem>>, vector<1x892xbf16>,
    %c1_110 = arith.constant 1 : index
    %c0_111 = arith.constant 0 : index
    %c33_112 = arith.constant 33 : index
    %95 = vector.load %arg1[%c1_110, %c0_111, %c33_112] : memref<2x1x1024xbf16, #tpu.memory_space<vmem>>, vector<1x1x892xbf16>
    %96 = vector.shape_cast %95 : vector<1x1x892xbf16> to vector<1x892xbf16>
    %c6_113 = arith.constant 6 : index
    %c896_114 = arith.constant 896 : index
    %97 = vector.load %arg6[%c6_113, %c896_114] : memref<32x1792xbf16, #tpu.memory_space<vmem>>, vector<1x892xbf16>
    tpu.vector_store %arg6[%c6_113, %c896_114], %96 {strides = array<i32>} : memref<32x1792xbf16, #tpu.memory_space<vmem>>, vector<1x892xbf16>,
    %c1_115 = arith.constant 1 : index
    %c0_116 = arith.constant 0 : index
    %c34_117 = arith.constant 34 : index
    %98 = vector.load %arg1[%c1_115, %c0_116, %c34_117] : memref<2x1x1024xbf16, #tpu.memory_space<vmem>>, vector<1x1x892xbf16>
    %99 = vector.shape_cast %98 : vector<1x1x892xbf16> to vector<1x892xbf16>
    %c7_118 = arith.constant 7 : index
    %c896_119 = arith.constant 896 : index
    %100 = vector.load %arg6[%c7_118, %c896_119] : memref<32x1792xbf16, #tpu.memory_space<vmem>>, vector<1x892xbf16>
    tpu.vector_store %arg6[%c7_118, %c896_119], %99 {strides = array<i32>} : memref<32x1792xbf16, #tpu.memory_space<vmem>>, vector<1x892xbf16>,
    %c1_120 = arith.constant 1 : index
    %c0_121 = arith.constant 0 : index
    %c35_122 = arith.constant 35 : index
    %101 = vector.load %arg1[%c1_120, %c0_121, %c35_122] : memref<2x1x1024xbf16, #tpu.memory_space<vmem>>, vector<1x1x892xbf16>
    %102 = vector.shape_cast %101 : vector<1x1x892xbf16> to vector<1x892xbf16>
    %c8_123 = arith.constant 8 : index
    %c896_124 = arith.constant 896 : index
    %103 = vector.load %arg6[%c8_123, %c896_124] : memref<32x1792xbf16, #tpu.memory_space<vmem>>, vector<1x892xbf16>
    tpu.vector_store %arg6[%c8_123, %c896_124], %102 {strides = array<i32>} : memref<32x1792xbf16, #tpu.memory_space<vmem>>, vector<1x892xbf16>,
    %c1_125 = arith.constant 1 : index
    %c0_126 = arith.constant 0 : index
    %c36_127 = arith.constant 36 : index
    %104 = vector.load %arg1[%c1_125, %c0_126, %c36_127] : memref<2x1x1024xbf16, #tpu.memory_space<vmem>>, vector<1x1x892xbf16>
    %105 = vector.shape_cast %104 : vector<1x1x892xbf16> to vector<1x892xbf16>
    %c9_128 = arith.constant 9 : index
    %c896_129 = arith.constant 896 : index
    %106 = vector.load %arg6[%c9_128, %c896_129] : memref<32x1792xbf16, #tpu.memory_space<vmem>>, vector<1x892xbf16>
    tpu.vector_store %arg6[%c9_128, %c896_129], %105 {strides = array<i32>} : memref<32x1792xbf16, #tpu.memory_space<vmem>>, vector<1x892xbf16>,
    %c1_130 = arith.constant 1 : index
    %c0_131 = arith.constant 0 : index
    %c64_132 = arith.constant 64 : index
    %107 = vector.load %arg1[%c1_130, %c0_131, %c64_132] : memref<2x1x1024xbf16, #tpu.memory_space<vmem>>, vector<1x1x892xbf16>
    %108 = vector.shape_cast %107 : vector<1x1x892xbf16> to vector<1x892xbf16>
    %c10_133 = arith.constant 10 : index
    %c896_134 = arith.constant 896 : index
    %109 = vector.load %arg6[%c10_133, %c896_134] : memref<32x1792xbf16, #tpu.memory_space<vmem>>, vector<1x892xbf16>
    tpu.vector_store %arg6[%c10_133, %c896_134], %108 {strides = array<i32>} : memref<32x1792xbf16, #tpu.memory_space<vmem>>, vector<1x892xbf16>,
    %c1_135 = arith.constant 1 : index
    %c0_136 = arith.constant 0 : index
    %c65_137 = arith.constant 65 : index
    %110 = vector.load %arg1[%c1_135, %c0_136, %c65_137] : memref<2x1x1024xbf16, #tpu.memory_space<vmem>>, vector<1x1x892xbf16>
    %111 = vector.shape_cast %110 : vector<1x1x892xbf16> to vector<1x892xbf16>
    %c11_138 = arith.constant 11 : index
    %c896_139 = arith.constant 896 : index
    %112 = vector.load %arg6[%c11_138, %c896_139] : memref<32x1792xbf16, #tpu.memory_space<vmem>>, vector<1x892xbf16>
    tpu.vector_store %arg6[%c11_138, %c896_139], %111 {strides = array<i32>} : memref<32x1792xbf16, #tpu.memory_space<vmem>>, vector<1x892xbf16>,
    %c1_140 = arith.constant 1 : index
    %c0_141 = arith.constant 0 : index
    %c66_142 = arith.constant 66 : index
    %113 = vector.load %arg1[%c1_140, %c0_141, %c66_142] : memref<2x1x1024xbf16, #tpu.memory_space<vmem>>, vector<1x1x892xbf16>
    %114 = vector.shape_cast %113 : vector<1x1x892xbf16> to vector<1x892xbf16>
    %c12_143 = arith.constant 12 : index
    %c896_144 = arith.constant 896 : index
    %115 = vector.load %arg6[%c12_143, %c896_144] : memref<32x1792xbf16, #tpu.memory_space<vmem>>, vector<1x892xbf16>
    tpu.vector_store %arg6[%c12_143, %c896_144], %114 {strides = array<i32>} : memref<32x1792xbf16, #tpu.memory_space<vmem>>, vector<1x892xbf16>,
    %c1_145 = arith.constant 1 : index
    %c0_146 = arith.constant 0 : index
    %c67_147 = arith.constant 67 : index
    %116 = vector.load %arg1[%c1_145, %c0_146, %c67_147] : memref<2x1x1024xbf16, #tpu.memory_space<vmem>>, vector<1x1x892xbf16>
    %117 = vector.shape_cast %116 : vector<1x1x892xbf16> to vector<1x892xbf16>
    %c13_148 = arith.constant 13 : index
    %c896_149 = arith.constant 896 : index
    %118 = vector.load %arg6[%c13_148, %c896_149] : memref<32x1792xbf16, #tpu.memory_space<vmem>>, vector<1x892xbf16>
    tpu.vector_store %arg6[%c13_148, %c896_149], %117 {strides = array<i32>} : memref<32x1792xbf16, #tpu.memory_space<vmem>>, vector<1x892xbf16>,
    %c1_150 = arith.constant 1 : index
    %c0_151 = arith.constant 0 : index
    %c68_152 = arith.constant 68 : index
    %119 = vector.load %arg1[%c1_150, %c0_151, %c68_152] : memref<2x1x1024xbf16, #tpu.memory_space<vmem>>, vector<1x1x892xbf16>
    %120 = vector.shape_cast %119 : vector<1x1x892xbf16> to vector<1x892xbf16>
    %c14_153 = arith.constant 14 : index
    %c896_154 = arith.constant 896 : index
    %121 = vector.load %arg6[%c14_153, %c896_154] : memref<32x1792xbf16, #tpu.memory_space<vmem>>, vector<1x892xbf16>
    tpu.vector_store %arg6[%c14_153, %c896_154], %120 {strides = array<i32>} : memref<32x1792xbf16, #tpu.memory_space<vmem>>, vector<1x892xbf16>,
    %c1_155 = arith.constant 1 : index
    %c0_156 = arith.constant 0 : index
    %c96_157 = arith.constant 96 : index
    %122 = vector.load %arg1[%c1_155, %c0_156, %c96_157] : memref<2x1x1024xbf16, #tpu.memory_space<vmem>>, vector<1x1x892xbf16>
    %123 = vector.shape_cast %122 : vector<1x1x892xbf16> to vector<1x892xbf16>
    %c15_158 = arith.constant 15 : index
    %c896_159 = arith.constant 896 : index
    %124 = vector.load %arg6[%c15_158, %c896_159] : memref<32x1792xbf16, #tpu.memory_space<vmem>>, vector<1x892xbf16>
    tpu.vector_store %arg6[%c15_158, %c896_159], %123 {strides = array<i32>} : memref<32x1792xbf16, #tpu.memory_space<vmem>>, vector<1x892xbf16>,
    %c1_160 = arith.constant 1 : index
    %c0_161 = arith.constant 0 : index
    %c97_162 = arith.constant 97 : index
    %125 = vector.load %arg1[%c1_160, %c0_161, %c97_162] : memref<2x1x1024xbf16, #tpu.memory_space<vmem>>, vector<1x1x892xbf16>
    %126 = vector.shape_cast %125 : vector<1x1x892xbf16> to vector<1x892xbf16>
    %c16_163 = arith.constant 16 : index
    %c896_164 = arith.constant 896 : index
    %127 = vector.load %arg6[%c16_163, %c896_164] : memref<32x1792xbf16, #tpu.memory_space<vmem>>, vector<1x892xbf16>
    tpu.vector_store %arg6[%c16_163, %c896_164], %126 {strides = array<i32>} : memref<32x1792xbf16, #tpu.memory_space<vmem>>, vector<1x892xbf16>,
    %c1_165 = arith.constant 1 : index
    %c0_166 = arith.constant 0 : index
    %c98_167 = arith.constant 98 : index
    %128 = vector.load %arg1[%c1_165, %c0_166, %c98_167] : memref<2x1x1024xbf16, #tpu.memory_space<vmem>>, vector<1x1x892xbf16>
    %129 = vector.shape_cast %128 : vector<1x1x892xbf16> to vector<1x892xbf16>
    %c17_168 = arith.constant 17 : index
    %c896_169 = arith.constant 896 : index
    %130 = vector.load %arg6[%c17_168, %c896_169] : memref<32x1792xbf16, #tpu.memory_space<vmem>>, vector<1x892xbf16>
    tpu.vector_store %arg6[%c17_168, %c896_169], %129 {strides = array<i32>} : memref<32x1792xbf16, #tpu.memory_space<vmem>>, vector<1x892xbf16>,
    %c1_170 = arith.constant 1 : index
    %c0_171 = arith.constant 0 : index
    %c99_172 = arith.constant 99 : index
    %131 = vector.load %arg1[%c1_170, %c0_171, %c99_172] : memref<2x1x1024xbf16, #tpu.memory_space<vmem>>, vector<1x1x892xbf16>
    %132 = vector.shape_cast %131 : vector<1x1x892xbf16> to vector<1x892xbf16>
    %c18_173 = arith.constant 18 : index
    %c896_174 = arith.constant 896 : index
    %133 = vector.load %arg6[%c18_173, %c896_174] : memref<32x1792xbf16, #tpu.memory_space<vmem>>, vector<1x892xbf16>
    tpu.vector_store %arg6[%c18_173, %c896_174], %132 {strides = array<i32>} : memref<32x1792xbf16, #tpu.memory_space<vmem>>, vector<1x892xbf16>,
    %c1_175 = arith.constant 1 : index
    %c0_176 = arith.constant 0 : index
    %c100_177 = arith.constant 100 : index
    %134 = vector.load %arg1[%c1_175, %c0_176, %c100_177] : memref<2x1x1024xbf16, #tpu.memory_space<vmem>>, vector<1x1x892xbf16>
    %135 = vector.shape_cast %134 : vector<1x1x892xbf16> to vector<1x892xbf16>
    %c19_178 = arith.constant 19 : index
    %c896_179 = arith.constant 896 : index
    %136 = vector.load %arg6[%c19_178, %c896_179] : memref<32x1792xbf16, #tpu.memory_space<vmem>>, vector<1x892xbf16>
    tpu.vector_store %arg6[%c19_178, %c896_179], %135 {strides = array<i32>} : memref<32x1792xbf16, #tpu.memory_space<vmem>>, vector<1x892xbf16>,
    %c1_180 = arith.constant 1 : index
    %c0_181 = arith.constant 0 : index
    %c128_182 = arith.constant 128 : index
    %137 = vector.load %arg1[%c1_180, %c0_181, %c128_182] : memref<2x1x1024xbf16, #tpu.memory_space<vmem>>, vector<1x1x892xbf16>
    %138 = vector.shape_cast %137 : vector<1x1x892xbf16> to vector<1x892xbf16>
    %c20_183 = arith.constant 20 : index
    %c896_184 = arith.constant 896 : index
    %139 = vector.load %arg6[%c20_183, %c896_184] : memref<32x1792xbf16, #tpu.memory_space<vmem>>, vector<1x892xbf16>
    tpu.vector_store %arg6[%c20_183, %c896_184], %138 {strides = array<i32>} : memref<32x1792xbf16, #tpu.memory_space<vmem>>, vector<1x892xbf16>,
    %c1_185 = arith.constant 1 : index
    %c0_186 = arith.constant 0 : index
    %c129_187 = arith.constant 129 : index
    %140 = vector.load %arg1[%c1_185, %c0_186, %c129_187] : memref<2x1x1024xbf16, #tpu.memory_space<vmem>>, vector<1x1x892xbf16>
    %141 = vector.shape_cast %140 : vector<1x1x892xbf16> to vector<1x892xbf16>
    %c21_188 = arith.constant 21 : index
    %c896_189 = arith.constant 896 : index
    %142 = vector.load %arg6[%c21_188, %c896_189] : memref<32x1792xbf16, #tpu.memory_space<vmem>>, vector<1x892xbf16>
    tpu.vector_store %arg6[%c21_188, %c896_189], %141 {strides = array<i32>} : memref<32x1792xbf16, #tpu.memory_space<vmem>>, vector<1x892xbf16>,
    %c1_190 = arith.constant 1 : index
    %c0_191 = arith.constant 0 : index
    %c130_192 = arith.constant 130 : index
    %143 = vector.load %arg1[%c1_190, %c0_191, %c130_192] : memref<2x1x1024xbf16, #tpu.memory_space<vmem>>, vector<1x1x892xbf16>
    %144 = vector.shape_cast %143 : vector<1x1x892xbf16> to vector<1x892xbf16>
    %c22_193 = arith.constant 22 : index
    %c896_194 = arith.constant 896 : index
    %145 = vector.load %arg6[%c22_193, %c896_194] : memref<32x1792xbf16, #tpu.memory_space<vmem>>, vector<1x892xbf16>
    tpu.vector_store %arg6[%c22_193, %c896_194], %144 {strides = array<i32>} : memref<32x1792xbf16, #tpu.memory_space<vmem>>, vector<1x892xbf16>,
    %c1_195 = arith.constant 1 : index
    %c0_196 = arith.constant 0 : index
    %c131_197 = arith.constant 131 : index
    %146 = vector.load %arg1[%c1_195, %c0_196, %c131_197] : memref<2x1x1024xbf16, #tpu.memory_space<vmem>>, vector<1x1x892xbf16>
    %147 = vector.shape_cast %146 : vector<1x1x892xbf16> to vector<1x892xbf16>
    %c23_198 = arith.constant 23 : index
    %c896_199 = arith.constant 896 : index
    %148 = vector.load %arg6[%c23_198, %c896_199] : memref<32x1792xbf16, #tpu.memory_space<vmem>>, vector<1x892xbf16>
    tpu.vector_store %arg6[%c23_198, %c896_199], %147 {strides = array<i32>} : memref<32x1792xbf16, #tpu.memory_space<vmem>>, vector<1x892xbf16>,
    %c1_200 = arith.constant 1 : index
    %c0_201 = arith.constant 0 : index
    %c132_202 = arith.constant 132 : index
    %149 = vector.load %arg1[%c1_200, %c0_201, %c132_202] : memref<2x1x1024xbf16, #tpu.memory_space<vmem>>, vector<1x1x892xbf16>
    %150 = vector.shape_cast %149 : vector<1x1x892xbf16> to vector<1x892xbf16>
    %c24_203 = arith.constant 24 : index
    %c896_204 = arith.constant 896 : index
    %151 = vector.load %arg6[%c24_203, %c896_204] : memref<32x1792xbf16, #tpu.memory_space<vmem>>, vector<1x892xbf16>
    tpu.vector_store %arg6[%c24_203, %c896_204], %150 {strides = array<i32>} : memref<32x1792xbf16, #tpu.memory_space<vmem>>, vector<1x892xbf16>,
    %cst_205 = arith.constant 0.000000e+00 : bf16
    %152 = vector.broadcast %cst_205 : bf16 to vector<32x4xbf16>
    %c0_206 = arith.constant 0 : index
    %c1788 = arith.constant 1788 : index
    %153 = vector.load %arg6[%c0_206, %c1788] : memref<32x1792xbf16, #tpu.memory_space<vmem>>, vector<32x4xbf16>
    tpu.vector_store %arg6[%c0_206, %c1788], %152 {strides = array<i32>} : memref<32x1792xbf16, #tpu.memory_space<vmem>>, vector<32x4xbf16>,
    %cst_207 = arith.constant 0.000000e+00 : bf16
    %154 = vector.broadcast %cst_207 : bf16 to vector<7x1792xbf16>
    %c25 = arith.constant 25 : index
    %c0_208 = arith.constant 0 : index
    %155 = vector.load %arg6[%c25, %c0_208] : memref<32x1792xbf16, #tpu.memory_space<vmem>>, vector<7x1792xbf16>
    tpu.vector_store %arg6[%c25, %c0_208], %154 {strides = array<i32>} : memref<32x1792xbf16, #tpu.memory_space<vmem>>, vector<7x1792xbf16>,
    %c0_209 = arith.constant 0 : index
    %c0_210 = arith.constant 0 : index
    %156 = vector.load %arg2[%c0_209, %c0_210] : memref<16x32xbf16, #tpu.memory_space<vmem>>, vector<16x32xbf16>
    %c0_211 = arith.constant 0 : index
    %c0_212 = arith.constant 0 : index
    %157 = vector.load %arg6[%c0_211, %c0_212] : memref<32x1792xbf16, #tpu.memory_space<vmem>>, vector<32x1792xbf16>
    %cst_213 = arith.constant dense<0.000000e+00> : vector<16x1792xf32>
    %158 = tpu.matmul %156, %157, %cst_213 {dimension_numbers = #tpu.dot_dimension_numbers<[1], [0], [0], [1], [0, 0, 1, 1], [], []>} : vector<16x32xbf16>, vector<32x1792xbf16>, vector<16x1792xf32> -> vector<16x1792xf32>
    %c0_214 = arith.constant 0 : index
    %c0_215 = arith.constant 0 : index
    %159 = vector.load %arg3[%c0_214, %c0_215] : memref<16x1xf32, #tpu.memory_space<vmem>>, vector<16x1xf32>
    %160 = vector.broadcast %159 : vector<16x1xf32> to vector<16x1792xf32>
    %161 = arith.addf %158, %160 : vector<16x1792xf32>
    %cst_216 = arith.constant 0.000000e+00 : f32
    %162 = vector.broadcast %cst_216 : f32 to vector<16x1792xf32>
    %163 = arith.maximumf %161, %162 : vector<16x1792xf32>
    %164 = arith.truncf %163 : vector<16x1792xf32> to vector<16x1792xbf16>
    %c0_217 = arith.constant 0 : index
    %c0_218 = arith.constant 0 : index
    %165 = vector.load %arg7[%c0_217, %c0_218] : memref<16x1792xbf16, #tpu.memory_space<vmem>>, vector<16x1792xbf16>
    tpu.vector_store %arg7[%c0_217, %c0_218], %164 {strides = array<i32>} : memref<16x1792xbf16, #tpu.memory_space<vmem>>, vector<16x1792xbf16>,
    %c0_219 = arith.constant 0 : index
    %c0_220 = arith.constant 0 : index
    %166 = vector.load %arg4[%c0_219, %c0_220] : memref<859x196xbf16, #tpu.memory_space<vmem>>, vector<859x196xbf16>
    %c0_221 = arith.constant 0 : index
    %c0_222 = arith.constant 0 : index
    %167 = vector.load %arg7[%c0_221, %c0_222] : memref<16x1792xbf16, #tpu.memory_space<vmem>>, vector<16x859xbf16>
    %c0_223 = arith.constant 0 : index
    %c1_224 = arith.constant 1 : index
    %168 = vector.load %arg7[%c0_223, %c1_224] : memref<16x1792xbf16, #tpu.memory_space<vmem>>, vector<16x859xbf16>
    %169 = arith.maximumf %167, %168 : vector<16x859xbf16>
    %c0_225 = arith.constant 0 : index
    %c32_226 = arith.constant 32 : index
    %170 = vector.load %arg7[%c0_225, %c32_226] : memref<16x1792xbf16, #tpu.memory_space<vmem>>, vector<16x859xbf16>
    %c0_227 = arith.constant 0 : index
    %c33_228 = arith.constant 33 : index
    %171 = vector.load %arg7[%c0_227, %c33_228] : memref<16x1792xbf16, #tpu.memory_space<vmem>>, vector<16x859xbf16>
    %172 = arith.maximumf %170, %171 : vector<16x859xbf16>
    %173 = arith.maximumf %169, %172 : vector<16x859xbf16>
    %cst_229 = arith.constant dense<0.000000e+00> : vector<16x196xf32>
    %174 = tpu.matmul %173, %166, %cst_229 {dimension_numbers = #tpu.dot_dimension_numbers<[1], [0], [0], [1], [0, 0, 1, 1], [], []>} : vector<16x859xbf16>, vector<859x196xbf16>, vector<16x196xf32> -> vector<16x196xf32>
    %175 = arith.truncf %174 : vector<16x196xf32> to vector<16x196xbf16>
    %c0_230 = arith.constant 0 : index
    %c0_231 = arith.constant 0 : index
    %c0_232 = arith.constant 0 : index
    %176 = vector.load %arg5[%c0_230, %c0_231, %c0_232] : memref<2x16x196xbf16, #tpu.memory_space<vmem>>, vector<1x16x196xbf16>
    %177 = vector.shape_cast %176 : vector<1x16x196xbf16> to vector<16x196xbf16>
    %178 = vector.shape_cast %175 : vector<16x196xbf16> to vector<1x16x196xbf16>
    tpu.vector_store %arg5[%c0_230, %c0_231, %c0_232], %178 {strides = array<i32>} : memref<2x16x196xbf16, #tpu.memory_space<vmem>>, vector<1x16x196xbf16>,
    %c0_233 = arith.constant 0 : index
    %c896_234 = arith.constant 896 : index
    %179 = vector.load %arg7[%c0_233, %c896_234] : memref<16x1792xbf16, #tpu.memory_space<vmem>>, vector<16x859xbf16>
    %c0_235 = arith.constant 0 : index
    %c897 = arith.constant 897 : index
    %180 = vector.load %arg7[%c0_235, %c897] : memref<16x1792xbf16, #tpu.memory_space<vmem>>, vector<16x859xbf16>
    %181 = arith.maximumf %179, %180 : vector<16x859xbf16>
    %c0_236 = arith.constant 0 : index
    %c928 = arith.constant 928 : index
    %182 = vector.load %arg7[%c0_236, %c928] : memref<16x1792xbf16, #tpu.memory_space<vmem>>, vector<16x859xbf16>
    %c0_237 = arith.constant 0 : index
    %c929 = arith.constant 929 : index
    %183 = vector.load %arg7[%c0_237, %c929] : memref<16x1792xbf16, #tpu.memory_space<vmem>>, vector<16x859xbf16>
    %184 = arith.maximumf %182, %183 : vector<16x859xbf16>
    %185 = arith.maximumf %181, %184 : vector<16x859xbf16>
    %cst_238 = arith.constant dense<0.000000e+00> : vector<16x196xf32>
    %186 = tpu.matmul %185, %166, %cst_238 {dimension_numbers = #tpu.dot_dimension_numbers<[1], [0], [0], [1], [0, 0, 1, 1], [], []>} : vector<16x859xbf16>, vector<859x196xbf16>, vector<16x196xf32> -> vector<16x196xf32>
    %187 = arith.truncf %186 : vector<16x196xf32> to vector<16x196xbf16>
    %c1_239 = arith.constant 1 : index
    %c0_240 = arith.constant 0 : index
    %c0_241 = arith.constant 0 : index
    %188 = vector.load %arg5[%c1_239, %c0_240, %c0_241] : memref<2x16x196xbf16, #tpu.memory_space<vmem>>, vector<1x16x196xbf16>
    %189 = vector.shape_cast %188 : vector<1x16x196xbf16> to vector<16x196xbf16>
    %190 = vector.shape_cast %187 : vector<16x196xbf16> to vector<1x16x196xbf16>
    tpu.vector_store %arg5[%c1_239, %c0_240, %c0_241], %190 {strides = array<i32>} : memref<2x16x196xbf16, #tpu.memory_space<vmem>>, vector<1x16x196xbf16>,
    return
  }
  func.func @transform_0(%arg0: i32) -> (i32, i32, i32) {
    %c0_i32 = arith.constant 0 : i32
    %c0_i32_0 = arith.constant 0 : i32
    %c0_i32_1 = arith.constant 0 : i32
    return %arg0, %c0_i32, %c0_i32_0 : i32, i32, i32
  }
  func.func @transform_1(%arg0: i32) -> (i32, i32) {
    %c0_i32 = arith.constant 0 : i32
    %c0_i32_0 = arith.constant 0 : i32
    %c0_i32_1 = arith.constant 0 : i32
    return %c0_i32, %c0_i32_0 : i32, i32
  }
  func.func @transform_2(%arg0: i32) -> (i32, i32) {
    %c0_i32 = arith.constant 0 : i32
    %c0_i32_0 = arith.constant 0 : i32
    %c0_i32_1 = arith.constant 0 : i32
    return %c0_i32, %c0_i32_0 : i32, i32
  }
  func.func @transform_3(%arg0: i32) -> (i32, i32) {
    %c0_i32 = arith.constant 0 : i32
    %c0_i32_0 = arith.constant 0 : i32
    %c0_i32_1 = arith.constant 0 : i32
    return %c0_i32, %c0_i32_0 : i32, i32
  }
  func.func @transform_4(%arg0: i32) -> (i32, i32, i32) {
    %c0_i32 = arith.constant 0 : i32
    %c0_i32_0 = arith.constant 0 : i32
    %c0_i32_1 = arith.constant 0 : i32
    return %arg0, %c0_i32, %c0_i32_0 : i32, i32, i32
  }
}

module attributes {stable_mosaic.version = 11 : i64} {
  func.func @kernel(%arg0: i32, %arg1: memref<2x16x324xbf16, #tpu.memory_space<vmem>>, %arg2: memref<32x400xbf16, #tpu.memory_space<vmem>>, %arg3: memref<32x1xf32, #tpu.memory_space<vmem>>, %arg4: memref<229x49xbf16, #tpu.memory_space<vmem>>, %arg5: memref<2x32x49xbf16, #tpu.memory_space<vmem>>, %arg6: memref<400x512xbf16, #tpu.memory_space<vmem>>, %arg7: memref<32x512xbf16, #tpu.memory_space<vmem>>) attributes {dimension_semantics = [#tpu.dimension_semantics<parallel>], iteration_bounds = array<i64: 1>, scalar_prefetch = 0 : i64, scratch_operands = 2 : i64, tpu.core_type = #tpu.core_type<tc>, window_params = [{transform_indices = @transform_0, window_bounds = array<i64: 2, 16, 324>}, {pipeline_mode = #tpu.pipeline_mode<synchronous>, transform_indices = @transform_1, window_bounds = array<i64: 32, 400>}, {pipeline_mode = #tpu.pipeline_mode<synchronous>, transform_indices = @transform_2, window_bounds = array<i64: 32, 1>}, {pipeline_mode = #tpu.pipeline_mode<synchronous>, transform_indices = @transform_3, window_bounds = array<i64: 229, 49>}, {transform_indices = @transform_4, window_bounds = array<i64: 2, 32, 49>}]} {
    %c0 = arith.constant 0 : index
    %c0_0 = arith.constant 0 : index
    %c0_1 = arith.constant 0 : index
    %0 = vector.load %arg1[%c0, %c0_0, %c0_1] : memref<2x16x324xbf16, #tpu.memory_space<vmem>>, vector<1x16x248xbf16>
    %1 = vector.shape_cast %0 : vector<1x16x248xbf16> to vector<16x248xbf16>
    %c0_2 = arith.constant 0 : index
    %c0_3 = arith.constant 0 : index
    %2 = vector.load %arg6[%c0_2, %c0_3] : memref<400x512xbf16, #tpu.memory_space<vmem>>, vector<16x248xbf16>
    tpu.vector_store %arg6[%c0_2, %c0_3], %1 {strides = array<i32>} : memref<400x512xbf16, #tpu.memory_space<vmem>>, vector<16x248xbf16>,
    %c0_4 = arith.constant 0 : index
    %c0_5 = arith.constant 0 : index
    %c1 = arith.constant 1 : index
    %3 = vector.load %arg1[%c0_4, %c0_5, %c1] : memref<2x16x324xbf16, #tpu.memory_space<vmem>>, vector<1x16x248xbf16>
    %4 = vector.shape_cast %3 : vector<1x16x248xbf16> to vector<16x248xbf16>
    %c16 = arith.constant 16 : index
    %c0_6 = arith.constant 0 : index
    %5 = vector.load %arg6[%c16, %c0_6] : memref<400x512xbf16, #tpu.memory_space<vmem>>, vector<16x248xbf16>
    tpu.vector_store %arg6[%c16, %c0_6], %4 {strides = array<i32>} : memref<400x512xbf16, #tpu.memory_space<vmem>>, vector<16x248xbf16>,
    %c0_7 = arith.constant 0 : index
    %c0_8 = arith.constant 0 : index
    %c2 = arith.constant 2 : index
    %6 = vector.load %arg1[%c0_7, %c0_8, %c2] : memref<2x16x324xbf16, #tpu.memory_space<vmem>>, vector<1x16x248xbf16>
    %7 = vector.shape_cast %6 : vector<1x16x248xbf16> to vector<16x248xbf16>
    %c32 = arith.constant 32 : index
    %c0_9 = arith.constant 0 : index
    %8 = vector.load %arg6[%c32, %c0_9] : memref<400x512xbf16, #tpu.memory_space<vmem>>, vector<16x248xbf16>
    tpu.vector_store %arg6[%c32, %c0_9], %7 {strides = array<i32>} : memref<400x512xbf16, #tpu.memory_space<vmem>>, vector<16x248xbf16>,
    %c0_10 = arith.constant 0 : index
    %c0_11 = arith.constant 0 : index
    %c3 = arith.constant 3 : index
    %9 = vector.load %arg1[%c0_10, %c0_11, %c3] : memref<2x16x324xbf16, #tpu.memory_space<vmem>>, vector<1x16x248xbf16>
    %10 = vector.shape_cast %9 : vector<1x16x248xbf16> to vector<16x248xbf16>
    %c48 = arith.constant 48 : index
    %c0_12 = arith.constant 0 : index
    %11 = vector.load %arg6[%c48, %c0_12] : memref<400x512xbf16, #tpu.memory_space<vmem>>, vector<16x248xbf16>
    tpu.vector_store %arg6[%c48, %c0_12], %10 {strides = array<i32>} : memref<400x512xbf16, #tpu.memory_space<vmem>>, vector<16x248xbf16>,
    %c0_13 = arith.constant 0 : index
    %c0_14 = arith.constant 0 : index
    %c4 = arith.constant 4 : index
    %12 = vector.load %arg1[%c0_13, %c0_14, %c4] : memref<2x16x324xbf16, #tpu.memory_space<vmem>>, vector<1x16x248xbf16>
    %13 = vector.shape_cast %12 : vector<1x16x248xbf16> to vector<16x248xbf16>
    %c64 = arith.constant 64 : index
    %c0_15 = arith.constant 0 : index
    %14 = vector.load %arg6[%c64, %c0_15] : memref<400x512xbf16, #tpu.memory_space<vmem>>, vector<16x248xbf16>
    tpu.vector_store %arg6[%c64, %c0_15], %13 {strides = array<i32>} : memref<400x512xbf16, #tpu.memory_space<vmem>>, vector<16x248xbf16>,
    %c0_16 = arith.constant 0 : index
    %c0_17 = arith.constant 0 : index
    %c18 = arith.constant 18 : index
    %15 = vector.load %arg1[%c0_16, %c0_17, %c18] : memref<2x16x324xbf16, #tpu.memory_space<vmem>>, vector<1x16x248xbf16>
    %16 = vector.shape_cast %15 : vector<1x16x248xbf16> to vector<16x248xbf16>
    %c80 = arith.constant 80 : index
    %c0_18 = arith.constant 0 : index
    %17 = vector.load %arg6[%c80, %c0_18] : memref<400x512xbf16, #tpu.memory_space<vmem>>, vector<16x248xbf16>
    tpu.vector_store %arg6[%c80, %c0_18], %16 {strides = array<i32>} : memref<400x512xbf16, #tpu.memory_space<vmem>>, vector<16x248xbf16>,
    %c0_19 = arith.constant 0 : index
    %c0_20 = arith.constant 0 : index
    %c19 = arith.constant 19 : index
    %18 = vector.load %arg1[%c0_19, %c0_20, %c19] : memref<2x16x324xbf16, #tpu.memory_space<vmem>>, vector<1x16x248xbf16>
    %19 = vector.shape_cast %18 : vector<1x16x248xbf16> to vector<16x248xbf16>
    %c96 = arith.constant 96 : index
    %c0_21 = arith.constant 0 : index
    %20 = vector.load %arg6[%c96, %c0_21] : memref<400x512xbf16, #tpu.memory_space<vmem>>, vector<16x248xbf16>
    tpu.vector_store %arg6[%c96, %c0_21], %19 {strides = array<i32>} : memref<400x512xbf16, #tpu.memory_space<vmem>>, vector<16x248xbf16>,
    %c0_22 = arith.constant 0 : index
    %c0_23 = arith.constant 0 : index
    %c20 = arith.constant 20 : index
    %21 = vector.load %arg1[%c0_22, %c0_23, %c20] : memref<2x16x324xbf16, #tpu.memory_space<vmem>>, vector<1x16x248xbf16>
    %22 = vector.shape_cast %21 : vector<1x16x248xbf16> to vector<16x248xbf16>
    %c112 = arith.constant 112 : index
    %c0_24 = arith.constant 0 : index
    %23 = vector.load %arg6[%c112, %c0_24] : memref<400x512xbf16, #tpu.memory_space<vmem>>, vector<16x248xbf16>
    tpu.vector_store %arg6[%c112, %c0_24], %22 {strides = array<i32>} : memref<400x512xbf16, #tpu.memory_space<vmem>>, vector<16x248xbf16>,
    %c0_25 = arith.constant 0 : index
    %c0_26 = arith.constant 0 : index
    %c21 = arith.constant 21 : index
    %24 = vector.load %arg1[%c0_25, %c0_26, %c21] : memref<2x16x324xbf16, #tpu.memory_space<vmem>>, vector<1x16x248xbf16>
    %25 = vector.shape_cast %24 : vector<1x16x248xbf16> to vector<16x248xbf16>
    %c128 = arith.constant 128 : index
    %c0_27 = arith.constant 0 : index
    %26 = vector.load %arg6[%c128, %c0_27] : memref<400x512xbf16, #tpu.memory_space<vmem>>, vector<16x248xbf16>
    tpu.vector_store %arg6[%c128, %c0_27], %25 {strides = array<i32>} : memref<400x512xbf16, #tpu.memory_space<vmem>>, vector<16x248xbf16>,
    %c0_28 = arith.constant 0 : index
    %c0_29 = arith.constant 0 : index
    %c22 = arith.constant 22 : index
    %27 = vector.load %arg1[%c0_28, %c0_29, %c22] : memref<2x16x324xbf16, #tpu.memory_space<vmem>>, vector<1x16x248xbf16>
    %28 = vector.shape_cast %27 : vector<1x16x248xbf16> to vector<16x248xbf16>
    %c144 = arith.constant 144 : index
    %c0_30 = arith.constant 0 : index
    %29 = vector.load %arg6[%c144, %c0_30] : memref<400x512xbf16, #tpu.memory_space<vmem>>, vector<16x248xbf16>
    tpu.vector_store %arg6[%c144, %c0_30], %28 {strides = array<i32>} : memref<400x512xbf16, #tpu.memory_space<vmem>>, vector<16x248xbf16>,
    %c0_31 = arith.constant 0 : index
    %c0_32 = arith.constant 0 : index
    %c36 = arith.constant 36 : index
    %30 = vector.load %arg1[%c0_31, %c0_32, %c36] : memref<2x16x324xbf16, #tpu.memory_space<vmem>>, vector<1x16x248xbf16>
    %31 = vector.shape_cast %30 : vector<1x16x248xbf16> to vector<16x248xbf16>
    %c160 = arith.constant 160 : index
    %c0_33 = arith.constant 0 : index
    %32 = vector.load %arg6[%c160, %c0_33] : memref<400x512xbf16, #tpu.memory_space<vmem>>, vector<16x248xbf16>
    tpu.vector_store %arg6[%c160, %c0_33], %31 {strides = array<i32>} : memref<400x512xbf16, #tpu.memory_space<vmem>>, vector<16x248xbf16>,
    %c0_34 = arith.constant 0 : index
    %c0_35 = arith.constant 0 : index
    %c37 = arith.constant 37 : index
    %33 = vector.load %arg1[%c0_34, %c0_35, %c37] : memref<2x16x324xbf16, #tpu.memory_space<vmem>>, vector<1x16x248xbf16>
    %34 = vector.shape_cast %33 : vector<1x16x248xbf16> to vector<16x248xbf16>
    %c176 = arith.constant 176 : index
    %c0_36 = arith.constant 0 : index
    %35 = vector.load %arg6[%c176, %c0_36] : memref<400x512xbf16, #tpu.memory_space<vmem>>, vector<16x248xbf16>
    tpu.vector_store %arg6[%c176, %c0_36], %34 {strides = array<i32>} : memref<400x512xbf16, #tpu.memory_space<vmem>>, vector<16x248xbf16>,
    %c0_37 = arith.constant 0 : index
    %c0_38 = arith.constant 0 : index
    %c38 = arith.constant 38 : index
    %36 = vector.load %arg1[%c0_37, %c0_38, %c38] : memref<2x16x324xbf16, #tpu.memory_space<vmem>>, vector<1x16x248xbf16>
    %37 = vector.shape_cast %36 : vector<1x16x248xbf16> to vector<16x248xbf16>
    %c192 = arith.constant 192 : index
    %c0_39 = arith.constant 0 : index
    %38 = vector.load %arg6[%c192, %c0_39] : memref<400x512xbf16, #tpu.memory_space<vmem>>, vector<16x248xbf16>
    tpu.vector_store %arg6[%c192, %c0_39], %37 {strides = array<i32>} : memref<400x512xbf16, #tpu.memory_space<vmem>>, vector<16x248xbf16>,
    %c0_40 = arith.constant 0 : index
    %c0_41 = arith.constant 0 : index
    %c39 = arith.constant 39 : index
    %39 = vector.load %arg1[%c0_40, %c0_41, %c39] : memref<2x16x324xbf16, #tpu.memory_space<vmem>>, vector<1x16x248xbf16>
    %40 = vector.shape_cast %39 : vector<1x16x248xbf16> to vector<16x248xbf16>
    %c208 = arith.constant 208 : index
    %c0_42 = arith.constant 0 : index
    %41 = vector.load %arg6[%c208, %c0_42] : memref<400x512xbf16, #tpu.memory_space<vmem>>, vector<16x248xbf16>
    tpu.vector_store %arg6[%c208, %c0_42], %40 {strides = array<i32>} : memref<400x512xbf16, #tpu.memory_space<vmem>>, vector<16x248xbf16>,
    %c0_43 = arith.constant 0 : index
    %c0_44 = arith.constant 0 : index
    %c40 = arith.constant 40 : index
    %42 = vector.load %arg1[%c0_43, %c0_44, %c40] : memref<2x16x324xbf16, #tpu.memory_space<vmem>>, vector<1x16x248xbf16>
    %43 = vector.shape_cast %42 : vector<1x16x248xbf16> to vector<16x248xbf16>
    %c224 = arith.constant 224 : index
    %c0_45 = arith.constant 0 : index
    %44 = vector.load %arg6[%c224, %c0_45] : memref<400x512xbf16, #tpu.memory_space<vmem>>, vector<16x248xbf16>
    tpu.vector_store %arg6[%c224, %c0_45], %43 {strides = array<i32>} : memref<400x512xbf16, #tpu.memory_space<vmem>>, vector<16x248xbf16>,
    %c0_46 = arith.constant 0 : index
    %c0_47 = arith.constant 0 : index
    %c54 = arith.constant 54 : index
    %45 = vector.load %arg1[%c0_46, %c0_47, %c54] : memref<2x16x324xbf16, #tpu.memory_space<vmem>>, vector<1x16x248xbf16>
    %46 = vector.shape_cast %45 : vector<1x16x248xbf16> to vector<16x248xbf16>
    %c240 = arith.constant 240 : index
    %c0_48 = arith.constant 0 : index
    %47 = vector.load %arg6[%c240, %c0_48] : memref<400x512xbf16, #tpu.memory_space<vmem>>, vector<16x248xbf16>
    tpu.vector_store %arg6[%c240, %c0_48], %46 {strides = array<i32>} : memref<400x512xbf16, #tpu.memory_space<vmem>>, vector<16x248xbf16>,
    %c0_49 = arith.constant 0 : index
    %c0_50 = arith.constant 0 : index
    %c55 = arith.constant 55 : index
    %48 = vector.load %arg1[%c0_49, %c0_50, %c55] : memref<2x16x324xbf16, #tpu.memory_space<vmem>>, vector<1x16x248xbf16>
    %49 = vector.shape_cast %48 : vector<1x16x248xbf16> to vector<16x248xbf16>
    %c256 = arith.constant 256 : index
    %c0_51 = arith.constant 0 : index
    %50 = vector.load %arg6[%c256, %c0_51] : memref<400x512xbf16, #tpu.memory_space<vmem>>, vector<16x248xbf16>
    tpu.vector_store %arg6[%c256, %c0_51], %49 {strides = array<i32>} : memref<400x512xbf16, #tpu.memory_space<vmem>>, vector<16x248xbf16>,
    %c0_52 = arith.constant 0 : index
    %c0_53 = arith.constant 0 : index
    %c56 = arith.constant 56 : index
    %51 = vector.load %arg1[%c0_52, %c0_53, %c56] : memref<2x16x324xbf16, #tpu.memory_space<vmem>>, vector<1x16x248xbf16>
    %52 = vector.shape_cast %51 : vector<1x16x248xbf16> to vector<16x248xbf16>
    %c272 = arith.constant 272 : index
    %c0_54 = arith.constant 0 : index
    %53 = vector.load %arg6[%c272, %c0_54] : memref<400x512xbf16, #tpu.memory_space<vmem>>, vector<16x248xbf16>
    tpu.vector_store %arg6[%c272, %c0_54], %52 {strides = array<i32>} : memref<400x512xbf16, #tpu.memory_space<vmem>>, vector<16x248xbf16>,
    %c0_55 = arith.constant 0 : index
    %c0_56 = arith.constant 0 : index
    %c57 = arith.constant 57 : index
    %54 = vector.load %arg1[%c0_55, %c0_56, %c57] : memref<2x16x324xbf16, #tpu.memory_space<vmem>>, vector<1x16x248xbf16>
    %55 = vector.shape_cast %54 : vector<1x16x248xbf16> to vector<16x248xbf16>
    %c288 = arith.constant 288 : index
    %c0_57 = arith.constant 0 : index
    %56 = vector.load %arg6[%c288, %c0_57] : memref<400x512xbf16, #tpu.memory_space<vmem>>, vector<16x248xbf16>
    tpu.vector_store %arg6[%c288, %c0_57], %55 {strides = array<i32>} : memref<400x512xbf16, #tpu.memory_space<vmem>>, vector<16x248xbf16>,
    %c0_58 = arith.constant 0 : index
    %c0_59 = arith.constant 0 : index
    %c58 = arith.constant 58 : index
    %57 = vector.load %arg1[%c0_58, %c0_59, %c58] : memref<2x16x324xbf16, #tpu.memory_space<vmem>>, vector<1x16x248xbf16>
    %58 = vector.shape_cast %57 : vector<1x16x248xbf16> to vector<16x248xbf16>
    %c304 = arith.constant 304 : index
    %c0_60 = arith.constant 0 : index
    %59 = vector.load %arg6[%c304, %c0_60] : memref<400x512xbf16, #tpu.memory_space<vmem>>, vector<16x248xbf16>
    tpu.vector_store %arg6[%c304, %c0_60], %58 {strides = array<i32>} : memref<400x512xbf16, #tpu.memory_space<vmem>>, vector<16x248xbf16>,
    %c0_61 = arith.constant 0 : index
    %c0_62 = arith.constant 0 : index
    %c72 = arith.constant 72 : index
    %60 = vector.load %arg1[%c0_61, %c0_62, %c72] : memref<2x16x324xbf16, #tpu.memory_space<vmem>>, vector<1x16x248xbf16>
    %61 = vector.shape_cast %60 : vector<1x16x248xbf16> to vector<16x248xbf16>
    %c320 = arith.constant 320 : index
    %c0_63 = arith.constant 0 : index
    %62 = vector.load %arg6[%c320, %c0_63] : memref<400x512xbf16, #tpu.memory_space<vmem>>, vector<16x248xbf16>
    tpu.vector_store %arg6[%c320, %c0_63], %61 {strides = array<i32>} : memref<400x512xbf16, #tpu.memory_space<vmem>>, vector<16x248xbf16>,
    %c0_64 = arith.constant 0 : index
    %c0_65 = arith.constant 0 : index
    %c73 = arith.constant 73 : index
    %63 = vector.load %arg1[%c0_64, %c0_65, %c73] : memref<2x16x324xbf16, #tpu.memory_space<vmem>>, vector<1x16x248xbf16>
    %64 = vector.shape_cast %63 : vector<1x16x248xbf16> to vector<16x248xbf16>
    %c336 = arith.constant 336 : index
    %c0_66 = arith.constant 0 : index
    %65 = vector.load %arg6[%c336, %c0_66] : memref<400x512xbf16, #tpu.memory_space<vmem>>, vector<16x248xbf16>
    tpu.vector_store %arg6[%c336, %c0_66], %64 {strides = array<i32>} : memref<400x512xbf16, #tpu.memory_space<vmem>>, vector<16x248xbf16>,
    %c0_67 = arith.constant 0 : index
    %c0_68 = arith.constant 0 : index
    %c74 = arith.constant 74 : index
    %66 = vector.load %arg1[%c0_67, %c0_68, %c74] : memref<2x16x324xbf16, #tpu.memory_space<vmem>>, vector<1x16x248xbf16>
    %67 = vector.shape_cast %66 : vector<1x16x248xbf16> to vector<16x248xbf16>
    %c352 = arith.constant 352 : index
    %c0_69 = arith.constant 0 : index
    %68 = vector.load %arg6[%c352, %c0_69] : memref<400x512xbf16, #tpu.memory_space<vmem>>, vector<16x248xbf16>
    tpu.vector_store %arg6[%c352, %c0_69], %67 {strides = array<i32>} : memref<400x512xbf16, #tpu.memory_space<vmem>>, vector<16x248xbf16>,
    %c0_70 = arith.constant 0 : index
    %c0_71 = arith.constant 0 : index
    %c75 = arith.constant 75 : index
    %69 = vector.load %arg1[%c0_70, %c0_71, %c75] : memref<2x16x324xbf16, #tpu.memory_space<vmem>>, vector<1x16x248xbf16>
    %70 = vector.shape_cast %69 : vector<1x16x248xbf16> to vector<16x248xbf16>
    %c368 = arith.constant 368 : index
    %c0_72 = arith.constant 0 : index
    %71 = vector.load %arg6[%c368, %c0_72] : memref<400x512xbf16, #tpu.memory_space<vmem>>, vector<16x248xbf16>
    tpu.vector_store %arg6[%c368, %c0_72], %70 {strides = array<i32>} : memref<400x512xbf16, #tpu.memory_space<vmem>>, vector<16x248xbf16>,
    %c0_73 = arith.constant 0 : index
    %c0_74 = arith.constant 0 : index
    %c76 = arith.constant 76 : index
    %72 = vector.load %arg1[%c0_73, %c0_74, %c76] : memref<2x16x324xbf16, #tpu.memory_space<vmem>>, vector<1x16x248xbf16>
    %73 = vector.shape_cast %72 : vector<1x16x248xbf16> to vector<16x248xbf16>
    %c384 = arith.constant 384 : index
    %c0_75 = arith.constant 0 : index
    %74 = vector.load %arg6[%c384, %c0_75] : memref<400x512xbf16, #tpu.memory_space<vmem>>, vector<16x248xbf16>
    tpu.vector_store %arg6[%c384, %c0_75], %73 {strides = array<i32>} : memref<400x512xbf16, #tpu.memory_space<vmem>>, vector<16x248xbf16>,
    %cst = arith.constant 0.000000e+00 : bf16
    %75 = vector.broadcast %cst : bf16 to vector<400x8xbf16>
    %c0_76 = arith.constant 0 : index
    %c248 = arith.constant 248 : index
    %76 = vector.load %arg6[%c0_76, %c248] : memref<400x512xbf16, #tpu.memory_space<vmem>>, vector<400x8xbf16>
    tpu.vector_store %arg6[%c0_76, %c248], %75 {strides = array<i32>} : memref<400x512xbf16, #tpu.memory_space<vmem>>, vector<400x8xbf16>,
    %c1_77 = arith.constant 1 : index
    %c0_78 = arith.constant 0 : index
    %c0_79 = arith.constant 0 : index
    %77 = vector.load %arg1[%c1_77, %c0_78, %c0_79] : memref<2x16x324xbf16, #tpu.memory_space<vmem>>, vector<1x16x248xbf16>
    %78 = vector.shape_cast %77 : vector<1x16x248xbf16> to vector<16x248xbf16>
    %c0_80 = arith.constant 0 : index
    %c256_81 = arith.constant 256 : index
    %79 = vector.load %arg6[%c0_80, %c256_81] : memref<400x512xbf16, #tpu.memory_space<vmem>>, vector<16x248xbf16>
    tpu.vector_store %arg6[%c0_80, %c256_81], %78 {strides = array<i32>} : memref<400x512xbf16, #tpu.memory_space<vmem>>, vector<16x248xbf16>,
    %c1_82 = arith.constant 1 : index
    %c0_83 = arith.constant 0 : index
    %c1_84 = arith.constant 1 : index
    %80 = vector.load %arg1[%c1_82, %c0_83, %c1_84] : memref<2x16x324xbf16, #tpu.memory_space<vmem>>, vector<1x16x248xbf16>
    %81 = vector.shape_cast %80 : vector<1x16x248xbf16> to vector<16x248xbf16>
    %c16_85 = arith.constant 16 : index
    %c256_86 = arith.constant 256 : index
    %82 = vector.load %arg6[%c16_85, %c256_86] : memref<400x512xbf16, #tpu.memory_space<vmem>>, vector<16x248xbf16>
    tpu.vector_store %arg6[%c16_85, %c256_86], %81 {strides = array<i32>} : memref<400x512xbf16, #tpu.memory_space<vmem>>, vector<16x248xbf16>,
    %c1_87 = arith.constant 1 : index
    %c0_88 = arith.constant 0 : index
    %c2_89 = arith.constant 2 : index
    %83 = vector.load %arg1[%c1_87, %c0_88, %c2_89] : memref<2x16x324xbf16, #tpu.memory_space<vmem>>, vector<1x16x248xbf16>
    %84 = vector.shape_cast %83 : vector<1x16x248xbf16> to vector<16x248xbf16>
    %c32_90 = arith.constant 32 : index
    %c256_91 = arith.constant 256 : index
    %85 = vector.load %arg6[%c32_90, %c256_91] : memref<400x512xbf16, #tpu.memory_space<vmem>>, vector<16x248xbf16>
    tpu.vector_store %arg6[%c32_90, %c256_91], %84 {strides = array<i32>} : memref<400x512xbf16, #tpu.memory_space<vmem>>, vector<16x248xbf16>,
    %c1_92 = arith.constant 1 : index
    %c0_93 = arith.constant 0 : index
    %c3_94 = arith.constant 3 : index
    %86 = vector.load %arg1[%c1_92, %c0_93, %c3_94] : memref<2x16x324xbf16, #tpu.memory_space<vmem>>, vector<1x16x248xbf16>
    %87 = vector.shape_cast %86 : vector<1x16x248xbf16> to vector<16x248xbf16>
    %c48_95 = arith.constant 48 : index
    %c256_96 = arith.constant 256 : index
    %88 = vector.load %arg6[%c48_95, %c256_96] : memref<400x512xbf16, #tpu.memory_space<vmem>>, vector<16x248xbf16>
    tpu.vector_store %arg6[%c48_95, %c256_96], %87 {strides = array<i32>} : memref<400x512xbf16, #tpu.memory_space<vmem>>, vector<16x248xbf16>,
    %c1_97 = arith.constant 1 : index
    %c0_98 = arith.constant 0 : index
    %c4_99 = arith.constant 4 : index
    %89 = vector.load %arg1[%c1_97, %c0_98, %c4_99] : memref<2x16x324xbf16, #tpu.memory_space<vmem>>, vector<1x16x248xbf16>
    %90 = vector.shape_cast %89 : vector<1x16x248xbf16> to vector<16x248xbf16>
    %c64_100 = arith.constant 64 : index
    %c256_101 = arith.constant 256 : index
    %91 = vector.load %arg6[%c64_100, %c256_101] : memref<400x512xbf16, #tpu.memory_space<vmem>>, vector<16x248xbf16>
    tpu.vector_store %arg6[%c64_100, %c256_101], %90 {strides = array<i32>} : memref<400x512xbf16, #tpu.memory_space<vmem>>, vector<16x248xbf16>,
    %c1_102 = arith.constant 1 : index
    %c0_103 = arith.constant 0 : index
    %c18_104 = arith.constant 18 : index
    %92 = vector.load %arg1[%c1_102, %c0_103, %c18_104] : memref<2x16x324xbf16, #tpu.memory_space<vmem>>, vector<1x16x248xbf16>
    %93 = vector.shape_cast %92 : vector<1x16x248xbf16> to vector<16x248xbf16>
    %c80_105 = arith.constant 80 : index
    %c256_106 = arith.constant 256 : index
    %94 = vector.load %arg6[%c80_105, %c256_106] : memref<400x512xbf16, #tpu.memory_space<vmem>>, vector<16x248xbf16>
    tpu.vector_store %arg6[%c80_105, %c256_106], %93 {strides = array<i32>} : memref<400x512xbf16, #tpu.memory_space<vmem>>, vector<16x248xbf16>,
    %c1_107 = arith.constant 1 : index
    %c0_108 = arith.constant 0 : index
    %c19_109 = arith.constant 19 : index
    %95 = vector.load %arg1[%c1_107, %c0_108, %c19_109] : memref<2x16x324xbf16, #tpu.memory_space<vmem>>, vector<1x16x248xbf16>
    %96 = vector.shape_cast %95 : vector<1x16x248xbf16> to vector<16x248xbf16>
    %c96_110 = arith.constant 96 : index
    %c256_111 = arith.constant 256 : index
    %97 = vector.load %arg6[%c96_110, %c256_111] : memref<400x512xbf16, #tpu.memory_space<vmem>>, vector<16x248xbf16>
    tpu.vector_store %arg6[%c96_110, %c256_111], %96 {strides = array<i32>} : memref<400x512xbf16, #tpu.memory_space<vmem>>, vector<16x248xbf16>,
    %c1_112 = arith.constant 1 : index
    %c0_113 = arith.constant 0 : index
    %c20_114 = arith.constant 20 : index
    %98 = vector.load %arg1[%c1_112, %c0_113, %c20_114] : memref<2x16x324xbf16, #tpu.memory_space<vmem>>, vector<1x16x248xbf16>
    %99 = vector.shape_cast %98 : vector<1x16x248xbf16> to vector<16x248xbf16>
    %c112_115 = arith.constant 112 : index
    %c256_116 = arith.constant 256 : index
    %100 = vector.load %arg6[%c112_115, %c256_116] : memref<400x512xbf16, #tpu.memory_space<vmem>>, vector<16x248xbf16>
    tpu.vector_store %arg6[%c112_115, %c256_116], %99 {strides = array<i32>} : memref<400x512xbf16, #tpu.memory_space<vmem>>, vector<16x248xbf16>,
    %c1_117 = arith.constant 1 : index
    %c0_118 = arith.constant 0 : index
    %c21_119 = arith.constant 21 : index
    %101 = vector.load %arg1[%c1_117, %c0_118, %c21_119] : memref<2x16x324xbf16, #tpu.memory_space<vmem>>, vector<1x16x248xbf16>
    %102 = vector.shape_cast %101 : vector<1x16x248xbf16> to vector<16x248xbf16>
    %c128_120 = arith.constant 128 : index
    %c256_121 = arith.constant 256 : index
    %103 = vector.load %arg6[%c128_120, %c256_121] : memref<400x512xbf16, #tpu.memory_space<vmem>>, vector<16x248xbf16>
    tpu.vector_store %arg6[%c128_120, %c256_121], %102 {strides = array<i32>} : memref<400x512xbf16, #tpu.memory_space<vmem>>, vector<16x248xbf16>,
    %c1_122 = arith.constant 1 : index
    %c0_123 = arith.constant 0 : index
    %c22_124 = arith.constant 22 : index
    %104 = vector.load %arg1[%c1_122, %c0_123, %c22_124] : memref<2x16x324xbf16, #tpu.memory_space<vmem>>, vector<1x16x248xbf16>
    %105 = vector.shape_cast %104 : vector<1x16x248xbf16> to vector<16x248xbf16>
    %c144_125 = arith.constant 144 : index
    %c256_126 = arith.constant 256 : index
    %106 = vector.load %arg6[%c144_125, %c256_126] : memref<400x512xbf16, #tpu.memory_space<vmem>>, vector<16x248xbf16>
    tpu.vector_store %arg6[%c144_125, %c256_126], %105 {strides = array<i32>} : memref<400x512xbf16, #tpu.memory_space<vmem>>, vector<16x248xbf16>,
    %c1_127 = arith.constant 1 : index
    %c0_128 = arith.constant 0 : index
    %c36_129 = arith.constant 36 : index
    %107 = vector.load %arg1[%c1_127, %c0_128, %c36_129] : memref<2x16x324xbf16, #tpu.memory_space<vmem>>, vector<1x16x248xbf16>
    %108 = vector.shape_cast %107 : vector<1x16x248xbf16> to vector<16x248xbf16>
    %c160_130 = arith.constant 160 : index
    %c256_131 = arith.constant 256 : index
    %109 = vector.load %arg6[%c160_130, %c256_131] : memref<400x512xbf16, #tpu.memory_space<vmem>>, vector<16x248xbf16>
    tpu.vector_store %arg6[%c160_130, %c256_131], %108 {strides = array<i32>} : memref<400x512xbf16, #tpu.memory_space<vmem>>, vector<16x248xbf16>,
    %c1_132 = arith.constant 1 : index
    %c0_133 = arith.constant 0 : index
    %c37_134 = arith.constant 37 : index
    %110 = vector.load %arg1[%c1_132, %c0_133, %c37_134] : memref<2x16x324xbf16, #tpu.memory_space<vmem>>, vector<1x16x248xbf16>
    %111 = vector.shape_cast %110 : vector<1x16x248xbf16> to vector<16x248xbf16>
    %c176_135 = arith.constant 176 : index
    %c256_136 = arith.constant 256 : index
    %112 = vector.load %arg6[%c176_135, %c256_136] : memref<400x512xbf16, #tpu.memory_space<vmem>>, vector<16x248xbf16>
    tpu.vector_store %arg6[%c176_135, %c256_136], %111 {strides = array<i32>} : memref<400x512xbf16, #tpu.memory_space<vmem>>, vector<16x248xbf16>,
    %c1_137 = arith.constant 1 : index
    %c0_138 = arith.constant 0 : index
    %c38_139 = arith.constant 38 : index
    %113 = vector.load %arg1[%c1_137, %c0_138, %c38_139] : memref<2x16x324xbf16, #tpu.memory_space<vmem>>, vector<1x16x248xbf16>
    %114 = vector.shape_cast %113 : vector<1x16x248xbf16> to vector<16x248xbf16>
    %c192_140 = arith.constant 192 : index
    %c256_141 = arith.constant 256 : index
    %115 = vector.load %arg6[%c192_140, %c256_141] : memref<400x512xbf16, #tpu.memory_space<vmem>>, vector<16x248xbf16>
    tpu.vector_store %arg6[%c192_140, %c256_141], %114 {strides = array<i32>} : memref<400x512xbf16, #tpu.memory_space<vmem>>, vector<16x248xbf16>,
    %c1_142 = arith.constant 1 : index
    %c0_143 = arith.constant 0 : index
    %c39_144 = arith.constant 39 : index
    %116 = vector.load %arg1[%c1_142, %c0_143, %c39_144] : memref<2x16x324xbf16, #tpu.memory_space<vmem>>, vector<1x16x248xbf16>
    %117 = vector.shape_cast %116 : vector<1x16x248xbf16> to vector<16x248xbf16>
    %c208_145 = arith.constant 208 : index
    %c256_146 = arith.constant 256 : index
    %118 = vector.load %arg6[%c208_145, %c256_146] : memref<400x512xbf16, #tpu.memory_space<vmem>>, vector<16x248xbf16>
    tpu.vector_store %arg6[%c208_145, %c256_146], %117 {strides = array<i32>} : memref<400x512xbf16, #tpu.memory_space<vmem>>, vector<16x248xbf16>,
    %c1_147 = arith.constant 1 : index
    %c0_148 = arith.constant 0 : index
    %c40_149 = arith.constant 40 : index
    %119 = vector.load %arg1[%c1_147, %c0_148, %c40_149] : memref<2x16x324xbf16, #tpu.memory_space<vmem>>, vector<1x16x248xbf16>
    %120 = vector.shape_cast %119 : vector<1x16x248xbf16> to vector<16x248xbf16>
    %c224_150 = arith.constant 224 : index
    %c256_151 = arith.constant 256 : index
    %121 = vector.load %arg6[%c224_150, %c256_151] : memref<400x512xbf16, #tpu.memory_space<vmem>>, vector<16x248xbf16>
    tpu.vector_store %arg6[%c224_150, %c256_151], %120 {strides = array<i32>} : memref<400x512xbf16, #tpu.memory_space<vmem>>, vector<16x248xbf16>,
    %c1_152 = arith.constant 1 : index
    %c0_153 = arith.constant 0 : index
    %c54_154 = arith.constant 54 : index
    %122 = vector.load %arg1[%c1_152, %c0_153, %c54_154] : memref<2x16x324xbf16, #tpu.memory_space<vmem>>, vector<1x16x248xbf16>
    %123 = vector.shape_cast %122 : vector<1x16x248xbf16> to vector<16x248xbf16>
    %c240_155 = arith.constant 240 : index
    %c256_156 = arith.constant 256 : index
    %124 = vector.load %arg6[%c240_155, %c256_156] : memref<400x512xbf16, #tpu.memory_space<vmem>>, vector<16x248xbf16>
    tpu.vector_store %arg6[%c240_155, %c256_156], %123 {strides = array<i32>} : memref<400x512xbf16, #tpu.memory_space<vmem>>, vector<16x248xbf16>,
    %c1_157 = arith.constant 1 : index
    %c0_158 = arith.constant 0 : index
    %c55_159 = arith.constant 55 : index
    %125 = vector.load %arg1[%c1_157, %c0_158, %c55_159] : memref<2x16x324xbf16, #tpu.memory_space<vmem>>, vector<1x16x248xbf16>
    %126 = vector.shape_cast %125 : vector<1x16x248xbf16> to vector<16x248xbf16>
    %c256_160 = arith.constant 256 : index
    %c256_161 = arith.constant 256 : index
    %127 = vector.load %arg6[%c256_160, %c256_161] : memref<400x512xbf16, #tpu.memory_space<vmem>>, vector<16x248xbf16>
    tpu.vector_store %arg6[%c256_160, %c256_161], %126 {strides = array<i32>} : memref<400x512xbf16, #tpu.memory_space<vmem>>, vector<16x248xbf16>,
    %c1_162 = arith.constant 1 : index
    %c0_163 = arith.constant 0 : index
    %c56_164 = arith.constant 56 : index
    %128 = vector.load %arg1[%c1_162, %c0_163, %c56_164] : memref<2x16x324xbf16, #tpu.memory_space<vmem>>, vector<1x16x248xbf16>
    %129 = vector.shape_cast %128 : vector<1x16x248xbf16> to vector<16x248xbf16>
    %c272_165 = arith.constant 272 : index
    %c256_166 = arith.constant 256 : index
    %130 = vector.load %arg6[%c272_165, %c256_166] : memref<400x512xbf16, #tpu.memory_space<vmem>>, vector<16x248xbf16>
    tpu.vector_store %arg6[%c272_165, %c256_166], %129 {strides = array<i32>} : memref<400x512xbf16, #tpu.memory_space<vmem>>, vector<16x248xbf16>,
    %c1_167 = arith.constant 1 : index
    %c0_168 = arith.constant 0 : index
    %c57_169 = arith.constant 57 : index
    %131 = vector.load %arg1[%c1_167, %c0_168, %c57_169] : memref<2x16x324xbf16, #tpu.memory_space<vmem>>, vector<1x16x248xbf16>
    %132 = vector.shape_cast %131 : vector<1x16x248xbf16> to vector<16x248xbf16>
    %c288_170 = arith.constant 288 : index
    %c256_171 = arith.constant 256 : index
    %133 = vector.load %arg6[%c288_170, %c256_171] : memref<400x512xbf16, #tpu.memory_space<vmem>>, vector<16x248xbf16>
    tpu.vector_store %arg6[%c288_170, %c256_171], %132 {strides = array<i32>} : memref<400x512xbf16, #tpu.memory_space<vmem>>, vector<16x248xbf16>,
    %c1_172 = arith.constant 1 : index
    %c0_173 = arith.constant 0 : index
    %c58_174 = arith.constant 58 : index
    %134 = vector.load %arg1[%c1_172, %c0_173, %c58_174] : memref<2x16x324xbf16, #tpu.memory_space<vmem>>, vector<1x16x248xbf16>
    %135 = vector.shape_cast %134 : vector<1x16x248xbf16> to vector<16x248xbf16>
    %c304_175 = arith.constant 304 : index
    %c256_176 = arith.constant 256 : index
    %136 = vector.load %arg6[%c304_175, %c256_176] : memref<400x512xbf16, #tpu.memory_space<vmem>>, vector<16x248xbf16>
    tpu.vector_store %arg6[%c304_175, %c256_176], %135 {strides = array<i32>} : memref<400x512xbf16, #tpu.memory_space<vmem>>, vector<16x248xbf16>,
    %c1_177 = arith.constant 1 : index
    %c0_178 = arith.constant 0 : index
    %c72_179 = arith.constant 72 : index
    %137 = vector.load %arg1[%c1_177, %c0_178, %c72_179] : memref<2x16x324xbf16, #tpu.memory_space<vmem>>, vector<1x16x248xbf16>
    %138 = vector.shape_cast %137 : vector<1x16x248xbf16> to vector<16x248xbf16>
    %c320_180 = arith.constant 320 : index
    %c256_181 = arith.constant 256 : index
    %139 = vector.load %arg6[%c320_180, %c256_181] : memref<400x512xbf16, #tpu.memory_space<vmem>>, vector<16x248xbf16>
    tpu.vector_store %arg6[%c320_180, %c256_181], %138 {strides = array<i32>} : memref<400x512xbf16, #tpu.memory_space<vmem>>, vector<16x248xbf16>,
    %c1_182 = arith.constant 1 : index
    %c0_183 = arith.constant 0 : index
    %c73_184 = arith.constant 73 : index
    %140 = vector.load %arg1[%c1_182, %c0_183, %c73_184] : memref<2x16x324xbf16, #tpu.memory_space<vmem>>, vector<1x16x248xbf16>
    %141 = vector.shape_cast %140 : vector<1x16x248xbf16> to vector<16x248xbf16>
    %c336_185 = arith.constant 336 : index
    %c256_186 = arith.constant 256 : index
    %142 = vector.load %arg6[%c336_185, %c256_186] : memref<400x512xbf16, #tpu.memory_space<vmem>>, vector<16x248xbf16>
    tpu.vector_store %arg6[%c336_185, %c256_186], %141 {strides = array<i32>} : memref<400x512xbf16, #tpu.memory_space<vmem>>, vector<16x248xbf16>,
    %c1_187 = arith.constant 1 : index
    %c0_188 = arith.constant 0 : index
    %c74_189 = arith.constant 74 : index
    %143 = vector.load %arg1[%c1_187, %c0_188, %c74_189] : memref<2x16x324xbf16, #tpu.memory_space<vmem>>, vector<1x16x248xbf16>
    %144 = vector.shape_cast %143 : vector<1x16x248xbf16> to vector<16x248xbf16>
    %c352_190 = arith.constant 352 : index
    %c256_191 = arith.constant 256 : index
    %145 = vector.load %arg6[%c352_190, %c256_191] : memref<400x512xbf16, #tpu.memory_space<vmem>>, vector<16x248xbf16>
    tpu.vector_store %arg6[%c352_190, %c256_191], %144 {strides = array<i32>} : memref<400x512xbf16, #tpu.memory_space<vmem>>, vector<16x248xbf16>,
    %c1_192 = arith.constant 1 : index
    %c0_193 = arith.constant 0 : index
    %c75_194 = arith.constant 75 : index
    %146 = vector.load %arg1[%c1_192, %c0_193, %c75_194] : memref<2x16x324xbf16, #tpu.memory_space<vmem>>, vector<1x16x248xbf16>
    %147 = vector.shape_cast %146 : vector<1x16x248xbf16> to vector<16x248xbf16>
    %c368_195 = arith.constant 368 : index
    %c256_196 = arith.constant 256 : index
    %148 = vector.load %arg6[%c368_195, %c256_196] : memref<400x512xbf16, #tpu.memory_space<vmem>>, vector<16x248xbf16>
    tpu.vector_store %arg6[%c368_195, %c256_196], %147 {strides = array<i32>} : memref<400x512xbf16, #tpu.memory_space<vmem>>, vector<16x248xbf16>,
    %c1_197 = arith.constant 1 : index
    %c0_198 = arith.constant 0 : index
    %c76_199 = arith.constant 76 : index
    %149 = vector.load %arg1[%c1_197, %c0_198, %c76_199] : memref<2x16x324xbf16, #tpu.memory_space<vmem>>, vector<1x16x248xbf16>
    %150 = vector.shape_cast %149 : vector<1x16x248xbf16> to vector<16x248xbf16>
    %c384_200 = arith.constant 384 : index
    %c256_201 = arith.constant 256 : index
    %151 = vector.load %arg6[%c384_200, %c256_201] : memref<400x512xbf16, #tpu.memory_space<vmem>>, vector<16x248xbf16>
    tpu.vector_store %arg6[%c384_200, %c256_201], %150 {strides = array<i32>} : memref<400x512xbf16, #tpu.memory_space<vmem>>, vector<16x248xbf16>,
    %cst_202 = arith.constant 0.000000e+00 : bf16
    %152 = vector.broadcast %cst_202 : bf16 to vector<400x8xbf16>
    %c0_203 = arith.constant 0 : index
    %c504 = arith.constant 504 : index
    %153 = vector.load %arg6[%c0_203, %c504] : memref<400x512xbf16, #tpu.memory_space<vmem>>, vector<400x8xbf16>
    tpu.vector_store %arg6[%c0_203, %c504], %152 {strides = array<i32>} : memref<400x512xbf16, #tpu.memory_space<vmem>>, vector<400x8xbf16>,
    %c0_204 = arith.constant 0 : index
    %c0_205 = arith.constant 0 : index
    %154 = vector.load %arg2[%c0_204, %c0_205] : memref<32x400xbf16, #tpu.memory_space<vmem>>, vector<32x400xbf16>
    %c0_206 = arith.constant 0 : index
    %c0_207 = arith.constant 0 : index
    %155 = vector.load %arg6[%c0_206, %c0_207] : memref<400x512xbf16, #tpu.memory_space<vmem>>, vector<400x512xbf16>
    %cst_208 = arith.constant dense<0.000000e+00> : vector<32x512xf32>
    %156 = tpu.matmul %154, %155, %cst_208 {dimension_numbers = #tpu.dot_dimension_numbers<[1], [0], [0], [1], [0, 0, 1, 1], [], []>} : vector<32x400xbf16>, vector<400x512xbf16>, vector<32x512xf32> -> vector<32x512xf32>
    %c0_209 = arith.constant 0 : index
    %c0_210 = arith.constant 0 : index
    %157 = vector.load %arg3[%c0_209, %c0_210] : memref<32x1xf32, #tpu.memory_space<vmem>>, vector<32x1xf32>
    %158 = vector.broadcast %157 : vector<32x1xf32> to vector<32x512xf32>
    %159 = arith.addf %156, %158 : vector<32x512xf32>
    %cst_211 = arith.constant 0.000000e+00 : f32
    %160 = vector.broadcast %cst_211 : f32 to vector<32x512xf32>
    %161 = arith.maximumf %159, %160 : vector<32x512xf32>
    %162 = arith.truncf %161 : vector<32x512xf32> to vector<32x512xbf16>
    %c0_212 = arith.constant 0 : index
    %c0_213 = arith.constant 0 : index
    %163 = vector.load %arg7[%c0_212, %c0_213] : memref<32x512xbf16, #tpu.memory_space<vmem>>, vector<32x512xbf16>
    tpu.vector_store %arg7[%c0_212, %c0_213], %162 {strides = array<i32>} : memref<32x512xbf16, #tpu.memory_space<vmem>>, vector<32x512xbf16>,
    %c0_214 = arith.constant 0 : index
    %c0_215 = arith.constant 0 : index
    %164 = vector.load %arg4[%c0_214, %c0_215] : memref<229x49xbf16, #tpu.memory_space<vmem>>, vector<229x49xbf16>
    %c0_216 = arith.constant 0 : index
    %c0_217 = arith.constant 0 : index
    %165 = vector.load %arg7[%c0_216, %c0_217] : memref<32x512xbf16, #tpu.memory_space<vmem>>, vector<32x229xbf16>
    %c0_218 = arith.constant 0 : index
    %c1_219 = arith.constant 1 : index
    %166 = vector.load %arg7[%c0_218, %c1_219] : memref<32x512xbf16, #tpu.memory_space<vmem>>, vector<32x229xbf16>
    %167 = arith.maximumf %165, %166 : vector<32x229xbf16>
    %c0_220 = arith.constant 0 : index
    %c18_221 = arith.constant 18 : index
    %168 = vector.load %arg7[%c0_220, %c18_221] : memref<32x512xbf16, #tpu.memory_space<vmem>>, vector<32x229xbf16>
    %c0_222 = arith.constant 0 : index
    %c19_223 = arith.constant 19 : index
    %169 = vector.load %arg7[%c0_222, %c19_223] : memref<32x512xbf16, #tpu.memory_space<vmem>>, vector<32x229xbf16>
    %170 = arith.maximumf %168, %169 : vector<32x229xbf16>
    %171 = arith.maximumf %167, %170 : vector<32x229xbf16>
    %cst_224 = arith.constant dense<0.000000e+00> : vector<32x49xf32>
    %172 = tpu.matmul %171, %164, %cst_224 {dimension_numbers = #tpu.dot_dimension_numbers<[1], [0], [0], [1], [0, 0, 1, 1], [], []>} : vector<32x229xbf16>, vector<229x49xbf16>, vector<32x49xf32> -> vector<32x49xf32>
    %173 = arith.truncf %172 : vector<32x49xf32> to vector<32x49xbf16>
    %c0_225 = arith.constant 0 : index
    %c0_226 = arith.constant 0 : index
    %c0_227 = arith.constant 0 : index
    %174 = vector.load %arg5[%c0_225, %c0_226, %c0_227] : memref<2x32x49xbf16, #tpu.memory_space<vmem>>, vector<1x32x49xbf16>
    %175 = vector.shape_cast %174 : vector<1x32x49xbf16> to vector<32x49xbf16>
    %176 = vector.shape_cast %173 : vector<32x49xbf16> to vector<1x32x49xbf16>
    tpu.vector_store %arg5[%c0_225, %c0_226, %c0_227], %176 {strides = array<i32>} : memref<2x32x49xbf16, #tpu.memory_space<vmem>>, vector<1x32x49xbf16>,
    %c0_228 = arith.constant 0 : index
    %c256_229 = arith.constant 256 : index
    %177 = vector.load %arg7[%c0_228, %c256_229] : memref<32x512xbf16, #tpu.memory_space<vmem>>, vector<32x229xbf16>
    %c0_230 = arith.constant 0 : index
    %c257 = arith.constant 257 : index
    %178 = vector.load %arg7[%c0_230, %c257] : memref<32x512xbf16, #tpu.memory_space<vmem>>, vector<32x229xbf16>
    %179 = arith.maximumf %177, %178 : vector<32x229xbf16>
    %c0_231 = arith.constant 0 : index
    %c274 = arith.constant 274 : index
    %180 = vector.load %arg7[%c0_231, %c274] : memref<32x512xbf16, #tpu.memory_space<vmem>>, vector<32x229xbf16>
    %c0_232 = arith.constant 0 : index
    %c275 = arith.constant 275 : index
    %181 = vector.load %arg7[%c0_232, %c275] : memref<32x512xbf16, #tpu.memory_space<vmem>>, vector<32x229xbf16>
    %182 = arith.maximumf %180, %181 : vector<32x229xbf16>
    %183 = arith.maximumf %179, %182 : vector<32x229xbf16>
    %cst_233 = arith.constant dense<0.000000e+00> : vector<32x49xf32>
    %184 = tpu.matmul %183, %164, %cst_233 {dimension_numbers = #tpu.dot_dimension_numbers<[1], [0], [0], [1], [0, 0, 1, 1], [], []>} : vector<32x229xbf16>, vector<229x49xbf16>, vector<32x49xf32> -> vector<32x49xf32>
    %185 = arith.truncf %184 : vector<32x49xf32> to vector<32x49xbf16>
    %c1_234 = arith.constant 1 : index
    %c0_235 = arith.constant 0 : index
    %c0_236 = arith.constant 0 : index
    %186 = vector.load %arg5[%c1_234, %c0_235, %c0_236] : memref<2x32x49xbf16, #tpu.memory_space<vmem>>, vector<1x32x49xbf16>
    %187 = vector.shape_cast %186 : vector<1x32x49xbf16> to vector<32x49xbf16>
    %188 = vector.shape_cast %185 : vector<32x49xbf16> to vector<1x32x49xbf16>
    tpu.vector_store %arg5[%c1_234, %c0_235, %c0_236], %188 {strides = array<i32>} : memref<2x32x49xbf16, #tpu.memory_space<vmem>>, vector<1x32x49xbf16>,
    return
  }
  func.func @transform_0(%arg0: i32) -> (i32, i32, i32) {
    %c0_i32 = arith.constant 0 : i32
    %c0_i32_0 = arith.constant 0 : i32
    %c0_i32_1 = arith.constant 0 : i32
    return %arg0, %c0_i32, %c0_i32_0 : i32, i32, i32
  }
  func.func @transform_1(%arg0: i32) -> (i32, i32) {
    %c0_i32 = arith.constant 0 : i32
    %c0_i32_0 = arith.constant 0 : i32
    %c0_i32_1 = arith.constant 0 : i32
    return %c0_i32, %c0_i32_0 : i32, i32
  }
  func.func @transform_2(%arg0: i32) -> (i32, i32) {
    %c0_i32 = arith.constant 0 : i32
    %c0_i32_0 = arith.constant 0 : i32
    %c0_i32_1 = arith.constant 0 : i32
    return %c0_i32, %c0_i32_0 : i32, i32
  }
  func.func @transform_3(%arg0: i32) -> (i32, i32) {
    %c0_i32 = arith.constant 0 : i32
    %c0_i32_0 = arith.constant 0 : i32
    %c0_i32_1 = arith.constant 0 : i32
    return %c0_i32, %c0_i32_0 : i32, i32
  }
  func.func @transform_4(%arg0: i32) -> (i32, i32, i32) {
    %c0_i32 = arith.constant 0 : i32
    %c0_i32_0 = arith.constant 0 : i32
    %c0_i32_1 = arith.constant 0 : i32
    return %arg0, %c0_i32, %c0_i32_0 : i32, i32, i32
  }
}

module attributes {stable_mosaic.version = 11 : i64} {
  func.func @_linear_kernel(%arg0: i32, %arg1: memref<2x1568xbf16, #tpu.memory_space<vmem>>, %arg2: memref<1568x10xbf16, #tpu.memory_space<vmem>>, %arg3: memref<1x10xf32, #tpu.memory_space<vmem>>, %arg4: memref<2x10xf32, #tpu.memory_space<vmem>>) attributes {dimension_semantics = [#tpu.dimension_semantics<parallel>], iteration_bounds = array<i64: 1>, scalar_prefetch = 0 : i64, scratch_operands = 0 : i64, tpu.core_type = #tpu.core_type<tc>, window_params = [{transform_indices = @transform_0, window_bounds = array<i64: 2, 1568>}, {pipeline_mode = #tpu.pipeline_mode<synchronous>, transform_indices = @transform_1, window_bounds = array<i64: 1568, 10>}, {pipeline_mode = #tpu.pipeline_mode<synchronous>, transform_indices = @transform_2, window_bounds = array<i64: 1, 10>}, {transform_indices = @transform_3, window_bounds = array<i64: 2, 10>}]} {
    %c0 = arith.constant 0 : index
    %c0_0 = arith.constant 0 : index
    %0 = vector.load %arg1[%c0, %c0_0] : memref<2x1568xbf16, #tpu.memory_space<vmem>>, vector<2x1568xbf16>
    %c0_1 = arith.constant 0 : index
    %c0_2 = arith.constant 0 : index
    %1 = vector.load %arg2[%c0_1, %c0_2] : memref<1568x10xbf16, #tpu.memory_space<vmem>>, vector<1568x10xbf16>
    %cst = arith.constant dense<0.000000e+00> : vector<2x10xf32>
    %2 = tpu.matmul %0, %1, %cst {dimension_numbers = #tpu.dot_dimension_numbers<[1], [0], [0], [1], [0, 0, 1, 1], [], []>} : vector<2x1568xbf16>, vector<1568x10xbf16>, vector<2x10xf32> -> vector<2x10xf32>
    %c0_3 = arith.constant 0 : index
    %c0_4 = arith.constant 0 : index
    %3 = vector.load %arg3[%c0_3, %c0_4] : memref<1x10xf32, #tpu.memory_space<vmem>>, vector<1x10xf32>
    %4 = vector.broadcast %3 : vector<1x10xf32> to vector<2x10xf32>
    %5 = arith.addf %2, %4 : vector<2x10xf32>
    %c0_5 = arith.constant 0 : index
    %c0_6 = arith.constant 0 : index
    %6 = vector.load %arg4[%c0_5, %c0_6] : memref<2x10xf32, #tpu.memory_space<vmem>>, vector<2x10xf32>
    tpu.vector_store %arg4[%c0_5, %c0_6], %5 {strides = array<i32>} : memref<2x10xf32, #tpu.memory_space<vmem>>, vector<2x10xf32>,
    return
  }
  func.func @transform_0(%arg0: i32) -> (i32, i32) {
    %c0_i32 = arith.constant 0 : i32
    %c0_i32_0 = arith.constant 0 : i32
    return %arg0, %c0_i32 : i32, i32
  }
  func.func @transform_1(%arg0: i32) -> (i32, i32) {
    %c0_i32 = arith.constant 0 : i32
    %c0_i32_0 = arith.constant 0 : i32
    %c0_i32_1 = arith.constant 0 : i32
    return %c0_i32, %c0_i32_0 : i32, i32
  }
  func.func @transform_2(%arg0: i32) -> (i32, i32) {
    %c0_i32 = arith.constant 0 : i32
    %c0_i32_0 = arith.constant 0 : i32
    %c0_i32_1 = arith.constant 0 : i32
    return %c0_i32, %c0_i32_0 : i32, i32
  }
  func.func @transform_3(%arg0: i32) -> (i32, i32) {
    %c0_i32 = arith.constant 0 : i32
    %c0_i32_0 = arith.constant 0 : i32
    return %arg0, %c0_i32 : i32, i32
  }
}

</mosaic_0001>

<llo_original>
// kernel: cnn_forward.5
$region0: #{cnn_forward.5}
  #allocation0 [shape = 'u32[]', space=smem, size = 0x4, offset = 0x4, fixed_abs, tag = 'smem constant byte address 0x4 - core index']
  #allocation1 [shape = 'u32[144,128]{1,0:T(1,128)}', space=vmem, size = 0x12000, scoped, tag = 'internal scratch']
  %s0 = inlined_call_operand.vmem [shape: bf16[2,1568], index: 0, kind: input, shape index: {}]
  %s1 = inlined_call_operand.vmem [shape: bf16[1568,10], index: 1, kind: input, shape index: {}]
  %s2 = inlined_call_operand.vmem [shape: f32[1,10], index: 2, kind: input, shape index: {}]
  %s3 = inlined_call_operand.hbm [shape: f32[2,10], index: 3, kind: output, shape index: {}]
  %s4 = sld [smem:[#allocation0]]
  $region22: #{cnn_forward.5} parent=0
    _
  %s6 = ssub.s32 1, %s4
  %s7 = scalar_select 0, %s6, %s4
  $region1: #{cnn_forward.5} parent=0
    #allocation2 [shape = 'u8[1024]{0}', space=vmem, size = 0x400, scoped, tag = 'output window, operand 0, single buffered']
    #allocation3 [shape = 's32[1]{0}', space=sflag, size = 0x4, scoped, tag = 'scoped memory for cnn_forward.5']
    %8 = vsyncpa [#allocation3], 0
    // Predicated region
    $region2: #{cnn_forward.5} parent=1 // pred_check
      _
    $region3: #{cnn_forward.5} parent=1 // pred_check_branch
      %10 = sbr.rel (0) target = $region5
    $region4: #{cnn_forward.5} parent=1 // pred_region
      _
    $region5: #{cnn_forward.5} parent=1 // pred_fallthru
      _
    // Predicated region
    $region6: #{cnn_forward.5} parent=1 // pred_check
      _
    $region7: #{cnn_forward.5} parent=1 // pred_check_branch
      %12 = sbr.rel (0) target = $region9
    $region8: #{cnn_forward.5} parent=1 // pred_region
      _
    $region9: #{cnn_forward.5} parent=1 // pred_fallthru
      _
    // Predicated region
    $region10: #{cnn_forward.5} parent=1 // pred_check
      _
    $region11: #{cnn_forward.5} parent=1 // pred_check_branch
      %14 = sbr.rel (0) target = $region13
    $region12: #{cnn_forward.5} parent=1 // pred_region
      _
    $region13: #{cnn_forward.5} parent=1 // pred_fallthru
      _
    %v16 = vld [vmem:[%s0] sm:$0xff]
    %v17 = vld [vmem:[%s0 + $0x8] sm:$0x1f]
    %v18 = vld [vmem:[%s1] sm:$0xf]
    %v19 = vld [vmem:[%s1 + $0x4] sm:$0xf]
    %v20 = vld [vmem:[%s1 + $0x8] sm:$0xf]
    %v21 = vld [vmem:[%s1 + $0xc] sm:$0xf]
    %v22 = vld [vmem:[%s1 + $0x10] sm:$0xf]
    %v23 = vld [vmem:[%s1 + $0x14] sm:$0xf]
    %v24 = vld [vmem:[%s1 + $0x18] sm:$0xf]
    %v25 = vld [vmem:[%s1 + $0x1c] sm:$0xf]
    %v26 = vld [vmem:[%s1 + $0x20] sm:$0xf]
    %v27 = vld [vmem:[%s1 + $0x24] sm:$0xf]
    %v28 = vld [vmem:[%s1 + $0x28] sm:$0xf]
    %v29 = vld [vmem:[%s1 + $0x2c] sm:$0xf]
    %v30 = vld [vmem:[%s1 + $0x30] sm:$0xf]
    %v31 = vld [vmem:[%s1 + $0x34] sm:$0xf]
    %v32 = vld [vmem:[%s1 + $0x38] sm:$0xf]
    %v33 = vld [vmem:[%s1 + $0x3c] sm:$0xf]
    %v34 = vld [vmem:[%s1 + $0x40] sm:$0xf]
    %v35 = vld [vmem:[%s1 + $0x44] sm:$0xf]
    %v36 = vld [vmem:[%s1 + $0x48] sm:$0xf]
    %v37 = vld [vmem:[%s1 + $0x4c] sm:$0xf]
    %v38 = vld [vmem:[%s1 + $0x50] sm:$0xf]
    %v39 = vld [vmem:[%s1 + $0x54] sm:$0xf]
    %v40 = vld [vmem:[%s1 + $0x58] sm:$0xf]
    %v41 = vld [vmem:[%s1 + $0x5c] sm:$0xf]
    %v42 = vld [vmem:[%s1 + $0x60] sm:$0xf]
    %v43 = vld [vmem:[%s1 + $0x64] sm:$0xf]
    %v44 = vld [vmem:[%s1 + $0x68] sm:$0xf]
    %v45 = vld [vmem:[%s1 + $0x6c] sm:$0xf]
    %v46 = vld [vmem:[%s1 + $0x70] sm:$0xf]
    %v47 = vld [vmem:[%s1 + $0x74] sm:$0xf]
    %v48 = vld [vmem:[%s1 + $0x78] sm:$0xf]
    %v49 = vld [vmem:[%s1 + $0x7c] sm:$0xf]
    %v50 = vld [vmem:[%s1 + $0x80] sm:$0xf]
    %v51 = vld [vmem:[%s1 + $0x84] sm:$0xf]
    %v52 = vld [vmem:[%s1 + $0x88] sm:$0xf]
    %v53 = vld [vmem:[%s1 + $0x8c] sm:$0xf]
    %v54 = vld [vmem:[%s1 + $0x90] sm:$0xf]
    %v55 = vld [vmem:[%s1 + $0x94] sm:$0xf]
    %v56 = vld [vmem:[%s1 + $0x98] sm:$0xf]
    %v57 = vld [vmem:[%s1 + $0x9c] sm:$0xf]
    %v58 = vld [vmem:[%s1 + $0xa0] sm:$0xf]
    %v59 = vld [vmem:[%s1 + $0xa4] sm:$0xf]
    %v60 = vld [vmem:[%s1 + $0xa8] sm:$0xf]
    %v61 = vld [vmem:[%s1 + $0xac] sm:$0xf]
    %v62 = vld [vmem:[%s1 + $0xb0] sm:$0xf]
    %v63 = vld [vmem:[%s1 + $0xb4] sm:$0xf]
    %v64 = vld [vmem:[%s1 + $0xb8] sm:$0xf]
    %v65 = vld [vmem:[%s1 + $0xbc] sm:$0xf]
    %v66 = vld [vmem:[%s1 + $0xc0] sm:$0xf]
    %v67 = vld [vmem:[%s1 + $0xc4] sm:$0xf]
    %v68 = vld [vmem:[%s1 + $0xc8] sm:$0xf]
    %v69 = vld [vmem:[%s1 + $0xcc] sm:$0xf]
    %v70 = vld [vmem:[%s1 + $0xd0] sm:$0xf]
    %v71 = vld [vmem:[%s1 + $0xd4] sm:$0xf]
    %v72 = vld [vmem:[%s1 + $0xd8] sm:$0xf]
    %v73 = vld [vmem:[%s1 + $0xdc] sm:$0xf]
    %v74 = vld [vmem:[%s1 + $0xe0] sm:$0xf]
    %v75 = vld [vmem:[%s1 + $0xe4] sm:$0xf]
    %v76 = vld [vmem:[%s1 + $0xe8] sm:$0xf]
    %v77 = vld [vmem:[%s1 + $0xec] sm:$0xf]
    %v78 = vld [vmem:[%s1 + $0xf0] sm:$0xf]
    %v79 = vld [vmem:[%s1 + $0xf4] sm:$0xf]
    %v80 = vld [vmem:[%s1 + $0xf8] sm:$0xf]
    %v81 = vld [vmem:[%s1 + $0xfc] sm:$0xf]
    %v82 = vld [vmem:[%s1 + $0x100] sm:$0xf]
    %v83 = vld [vmem:[%s1 + $0x104] sm:$0xf]
    %v84 = vld [vmem:[%s1 + $0x108] sm:$0xf]
    %v85 = vld [vmem:[%s1 + $0x10c] sm:$0xf]
    %v86 = vld [vmem:[%s1 + $0x110] sm:$0xf]
    %v87 = vld [vmem:[%s1 + $0x114] sm:$0xf]
    %v88 = vld [vmem:[%s1 + $0x118] sm:$0xf]
    %v89 = vld [vmem:[%s1 + $0x11c] sm:$0xf]
    %v90 = vld [vmem:[%s1 + $0x120] sm:$0xf]
    %v91 = vld [vmem:[%s1 + $0x124] sm:$0xf]
    %v92 = vld [vmem:[%s1 + $0x128] sm:$0xf]
    %v93 = vld [vmem:[%s1 + $0x12c] sm:$0xf]
    %v94 = vld [vmem:[%s1 + $0x130] sm:$0xf]
    %v95 = vld [vmem:[%s1 + $0x134] sm:$0xf]
    %v96 = vld [vmem:[%s1 + $0x138] sm:$0xf]
    %v97 = vld [vmem:[%s1 + $0x13c] sm:$0xf]
    %v98 = vld [vmem:[%s1 + $0x140] sm:$0xf]
    %v99 = vld [vmem:[%s1 + $0x144] sm:$0xf]
    %v100 = vld [vmem:[%s1 + $0x148] sm:$0xf]
    %v101 = vld [vmem:[%s1 + $0x14c] sm:$0xf]
    %v102 = vld [vmem:[%s1 + $0x150] sm:$0xf]
    %v103 = vld [vmem:[%s1 + $0x154] sm:$0xf]
    %v104 = vld [vmem:[%s1 + $0x158] sm:$0xf]
    %v105 = vld [vmem:[%s1 + $0x15c] sm:$0xf]
    %v106 = vld [vmem:[%s1 + $0x160] sm:$0xf]
    %v107 = vld [vmem:[%s1 + $0x164] sm:$0xf]
    %v108 = vld [vmem:[%s1 + $0x168] sm:$0xf]
    %v109 = vld [vmem:[%s1 + $0x16c] sm:$0xf]
    %v110 = vld [vmem:[%s1 + $0x170] sm:$0xf]
    %v111 = vld [vmem:[%s1 + $0x174] sm:$0xf]
    %v112 = vld [vmem:[%s1 + $0x178] sm:$0xf]
    %v113 = vld [vmem:[%s1 + $0x17c] sm:$0xf]
    %v114 = vld [vmem:[%s1 + $0x180] sm:$0xf]
    %v115 = vld [vmem:[%s1 + $0x184] sm:$0xf]
    %v116 = vld [vmem:[%s1 + $0x188] sm:$0xf]
    %v117 = vld [vmem:[%s1 + $0x18c] sm:$0xf]
    %v118 = vld [vmem:[%s1 + $0x190] sm:$0xf]
    %v119 = vld [vmem:[%s1 + $0x194] sm:$0xf]
    %v120 = vld [vmem:[%s1 + $0x198] sm:$0xf]
    %v121 = vld [vmem:[%s1 + $0x19c] sm:$0xf]
    %v122 = vld [vmem:[%s1 + $0x1a0] sm:$0xf]
    %v123 = vld [vmem:[%s1 + $0x1a4] sm:$0xf]
    %v124 = vld [vmem:[%s1 + $0x1a8] sm:$0xf]
    %v125 = vld [vmem:[%s1 + $0x1ac] sm:$0xf]
    %v126 = vld [vmem:[%s1 + $0x1b0] sm:$0xf]
    %v127 = vld [vmem:[%s1 + $0x1b4] sm:$0xf]
    %v128 = vld [vmem:[%s1 + $0x1b8] sm:$0xf]
    %v129 = vld [vmem:[%s1 + $0x1bc] sm:$0xf]
    %v130 = vld [vmem:[%s1 + $0x1c0] sm:$0xf]
    %v131 = vld [vmem:[%s1 + $0x1c4] sm:$0xf]
    %v132 = vld [vmem:[%s1 + $0x1c8] sm:$0xf]
    %v133 = vld [vmem:[%s1 + $0x1cc] sm:$0xf]
    %v134 = vld [vmem:[%s1 + $0x1d0] sm:$0xf]
    %v135 = vld [vmem:[%s1 + $0x1d4] sm:$0xf]
    %v136 = vld [vmem:[%s1 + $0x1d8] sm:$0xf]
    %v137 = vld [vmem:[%s1 + $0x1dc] sm:$0xf]
    %v138 = vld [vmem:[%s1 + $0x1e0] sm:$0xf]
    %v139 = vld [vmem:[%s1 + $0x1e4] sm:$0xf]
    %v140 = vld [vmem:[%s1 + $0x1e8] sm:$0xf]
    %v141 = vld [vmem:[%s1 + $0x1ec] sm:$0xf]
    %v142 = vld [vmem:[%s1 + $0x1f0] sm:$0xf]
    %v143 = vld [vmem:[%s1 + $0x1f4] sm:$0xf]
    %v144 = vld [vmem:[%s1 + $0x1f8] sm:$0xf]
    %v145 = vld [vmem:[%s1 + $0x1fc] sm:$0xf]
    %v146 = vld [vmem:[%s1 + $0x200] sm:$0xf]
    %v147 = vld [vmem:[%s1 + $0x204] sm:$0xf]
    %v148 = vld [vmem:[%s1 + $0x208] sm:$0xf]
    %v149 = vld [vmem:[%s1 + $0x20c] sm:$0xf]
    %v150 = vld [vmem:[%s1 + $0x210] sm:$0xf]
    %v151 = vld [vmem:[%s1 + $0x214] sm:$0xf]
    %v152 = vld [vmem:[%s1 + $0x218] sm:$0xf]
    %v153 = vld [vmem:[%s1 + $0x21c] sm:$0xf]
    %v154 = vld [vmem:[%s1 + $0x220] sm:$0xf]
    %v155 = vld [vmem:[%s1 + $0x224] sm:$0xf]
    %v156 = vld [vmem:[%s1 + $0x228] sm:$0xf]
    %v157 = vld [vmem:[%s1 + $0x22c] sm:$0xf]
    %v158 = vld [vmem:[%s1 + $0x230] sm:$0xf]
    %v159 = vld [vmem:[%s1 + $0x234] sm:$0xf]
    %v160 = vld [vmem:[%s1 + $0x238] sm:$0xf]
    %v161 = vld [vmem:[%s1 + $0x23c] sm:$0xf]
    %v162 = vld [vmem:[%s1 + $0x240] sm:$0xf]
    %v163 = vld [vmem:[%s1 + $0x244] sm:$0xf]
    %v164 = vld [vmem:[%s1 + $0x248] sm:$0xf]
    %v165 = vld [vmem:[%s1 + $0x24c] sm:$0xf]
    %v166 = vld [vmem:[%s1 + $0x250] sm:$0xf]
    %v167 = vld [vmem:[%s1 + $0x254] sm:$0xf]
    %v168 = vld [vmem:[%s1 + $0x258] sm:$0xf]
    %v169 = vld [vmem:[%s1 + $0x25c] sm:$0xf]
    %v170 = vld [vmem:[%s1 + $0x260] sm:$0xf]
    %v171 = vld [vmem:[%s1 + $0x264] sm:$0xf]
    %v172 = vld [vmem:[%s1 + $0x268] sm:$0xf]
    %v173 = vld [vmem:[%s1 + $0x26c] sm:$0xf]
    %v174 = vld [vmem:[%s1 + $0x270] sm:$0xf]
    %v175 = vld [vmem:[%s1 + $0x274] sm:$0xf]
    %v176 = vld [vmem:[%s1 + $0x278] sm:$0xf]
    %v177 = vld [vmem:[%s1 + $0x27c] sm:$0xf]
    %v178 = vld [vmem:[%s1 + $0x280] sm:$0xf]
    %v179 = vld [vmem:[%s1 + $0x284] sm:$0xf]
    %v180 = vld [vmem:[%s1 + $0x288] sm:$0xf]
    %v181 = vld [vmem:[%s1 + $0x28c] sm:$0xf]
    %v182 = vld [vmem:[%s1 + $0x290] sm:$0xf]
    %v183 = vld [vmem:[%s1 + $0x294] sm:$0xf]
    %v184 = vld [vmem:[%s1 + $0x298] sm:$0xf]
    %v185 = vld [vmem:[%s1 + $0x29c] sm:$0xf]
    %v186 = vld [vmem:[%s1 + $0x2a0] sm:$0xf]
    %v187 = vld [vmem:[%s1 + $0x2a4] sm:$0xf]
    %v188 = vld [vmem:[%s1 + $0x2a8] sm:$0xf]
    %v189 = vld [vmem:[%s1 + $0x2ac] sm:$0xf]
    %v190 = vld [vmem:[%s1 + $0x2b0] sm:$0xf]
    %v191 = vld [vmem:[%s1 + $0x2b4] sm:$0xf]
    %v192 = vld [vmem:[%s1 + $0x2b8] sm:$0xf]
    %v193 = vld [vmem:[%s1 + $0x2bc] sm:$0xf]
    %v194 = vld [vmem:[%s1 + $0x2c0] sm:$0xf]
    %v195 = vld [vmem:[%s1 + $0x2c4] sm:$0xf]
    %v196 = vld [vmem:[%s1 + $0x2c8] sm:$0xf]
    %v197 = vld [vmem:[%s1 + $0x2cc] sm:$0xf]
    %v198 = vld [vmem:[%s1 + $0x2d0] sm:$0xf]
    %v199 = vld [vmem:[%s1 + $0x2d4] sm:$0xf]
    %v200 = vld [vmem:[%s1 + $0x2d8] sm:$0xf]
    %v201 = vld [vmem:[%s1 + $0x2dc] sm:$0xf]
    %v202 = vld [vmem:[%s1 + $0x2e0] sm:$0xf]
    %v203 = vld [vmem:[%s1 + $0x2e4] sm:$0xf]
    %v204 = vld [vmem:[%s1 + $0x2e8] sm:$0xf]
    %v205 = vld [vmem:[%s1 + $0x2ec] sm:$0xf]
    %v206 = vld [vmem:[%s1 + $0x2f0] sm:$0xf]
    %v207 = vld [vmem:[%s1 + $0x2f4] sm:$0xf]
    %v208 = vld [vmem:[%s1 + $0x2f8] sm:$0xf]
    %v209 = vld [vmem:[%s1 + $0x2fc] sm:$0xf]
    %v210 = vld [vmem:[%s1 + $0x300] sm:$0xf]
    %v211 = vld [vmem:[%s1 + $0x304] sm:$0xf]
    %v212 = vld [vmem:[%s1 + $0x308] sm:$0xf]
    %v213 = vld [vmem:[%s1 + $0x30c] sm:$0xf]
    %v214 = vld [vmem:[%s2] sm:$0x1]
    %v216 = vlaneseq
    %v217 = vshrl.u32 %v216, 7
    %v218 = vsub.s32 0, %v217
    %v219 = vrot.slane %v214, %v218
    %v223 = vcombine.high %v16, %v16
    %v225 = vunpack.c.l.s4 1966171168
    %v226 = vunpack.c.0.s8 %v225
    %v227 = vlaneseq
    %v228 = vshrl.u32 %v227, 7
    %v229 = vsub.s32 %v226, %v228
    %v230 = vrot.slane %v16, %v229
    %v232 = vunpack.c.l.s4 1966171168
    %v233 = vunpack.c.0.s8 %v232
    %v234 = vlaneseq
    %v235 = vshrl.u32 %v234, 7
    %v236 = vsub.s32 %v233, %v235
    %v237 = vrot.slane %v223, %v236
    %v238 = vcombine.high %v230, %v230
    %v239 = vcombine.high %v237, %v237
    %v241 = vunpack.c.l.s4 1966171168
    %v242 = vunpack.c.0.s8 %v241
    %v243 = vlaneseq
    %v244 = vshrl.u32 %v243, 7
    %v245 = vsub.s32 %v242, %v244
    %v246 = vrot.slane %v230, %v245
    %v248 = vunpack.c.l.s4 1966171168
    %v249 = vunpack.c.0.s8 %v248
    %v250 = vlaneseq
    %v251 = vshrl.u32 %v250, 7
    %v252 = vsub.s32 %v249, %v251
    %v253 = vrot.slane %v237, %v252
    %v255 = vunpack.c.l.s4 1966171168
    %v256 = vunpack.c.0.s8 %v255
    %v257 = vlaneseq
    %v258 = vshrl.u32 %v257, 7
    %v259 = vsub.s32 %v256, %v258
    %v260 = vrot.slane %v238, %v259
    %v262 = vunpack.c.l.s4 1966171168
    %v263 = vunpack.c.0.s8 %v262
    %v264 = vlaneseq
    %v265 = vshrl.u32 %v264, 7
    %v266 = vsub.s32 %v263, %v265
    %v267 = vrot.slane %v239, %v266
    %v268 = vcombine.high %v246, %v246
    %v269 = vcombine.high %v253, %v253
    %v270 = vcombine.high %v260, %v260
    %v271 = vcombine.high %v267, %v267
    %v272 = vcombine.high %v17, %v17
    %v274 = vunpack.c.l.s4 1966171168
    %v275 = vunpack.c.0.s8 %v274
    %v276 = vlaneseq
    %v277 = vshrl.u32 %v276, 7
    %v278 = vsub.s32 %v275, %v277
    %v279 = vrot.slane %v17, %v278
    %v281 = vunpack.c.l.s4 1966171168
    %v282 = vunpack.c.0.s8 %v281
    %v283 = vlaneseq
    %v284 = vshrl.u32 %v283, 7
    %v285 = vsub.s32 %v282, %v284
    %v286 = vrot.slane %v272, %v285
    %v287 = vcombine.high %v279, %v279
    %v289 = vunpack.c.l.s4 1966171168
    %v290 = vunpack.c.0.s8 %v289
    %v291 = vlaneseq
    %v292 = vshrl.u32 %v291, 7
    %v293 = vsub.s32 %v290, %v292
    %v294 = vrot.slane %v279, %v293
    %v296 = vunpack.c.l.s4 1966171168
    %v297 = vunpack.c.0.s8 %v296
    %v298 = vlaneseq
    %v299 = vshrl.u32 %v298, 7
    %v300 = vsub.s32 %v297, %v299
    %v301 = vrot.slane %v286, %v300
    %v303 = vunpack.c.l.s4 1966171168
    %v304 = vunpack.c.0.s8 %v303
    %v305 = vlaneseq
    %v306 = vshrl.u32 %v305, 7
    %v307 = vsub.s32 %v304, %v306
    %v308 = vrot.slane %v287, %v307
    %v309 = vcombine.high %v294, %v294
    %v310 = vcombine.high %v308, %v308
    %v519 = vunpack.c.l.b16 %v18
    %v520 = vunpack.c.l.b16 %v19
    %v521 = vunpack.c.l.b16 %v20
    %v522 = vunpack.c.l.b16 %v21
    %v523 = vunpack.c.l.b16 %v22
    %v524 = vunpack.c.l.b16 %v23
    %v525 = vunpack.c.l.b16 %v24
    %v526 = vunpack.c.l.b16 %v25
    %v527 = vunpack.c.l.b16 %v26
    %v528 = vunpack.c.l.b16 %v27
    %v529 = vunpack.c.l.b16 %v28
    %v530 = vunpack.c.l.b16 %v29
    %v531 = vunpack.c.l.b16 %v30
    %v532 = vunpack.c.l.b16 %v31
    %v533 = vunpack.c.l.b16 %v32
    %v534 = vunpack.c.l.b16 %v33
    %v535 = vunpack.c.l.b16 %v34
    %v536 = vunpack.c.l.b16 %v35
    %v537 = vunpack.c.l.b16 %v36
    %v538 = vunpack.c.l.b16 %v37
    %v539 = vunpack.c.l.b16 %v38
    %v540 = vunpack.c.l.b16 %v39
    %v541 = vunpack.c.l.b16 %v40
    %v542 = vunpack.c.l.b16 %v41
    %v543 = vunpack.c.l.b16 %v42
    %v544 = vunpack.c.l.b16 %v43
    %v545 = vunpack.c.l.b16 %v44
    %v546 = vunpack.c.l.b16 %v45
    %v547 = vunpack.c.l.b16 %v46
    %v548 = vunpack.c.l.b16 %v47
    %v549 = vunpack.c.l.b16 %v48
    %v550 = vunpack.c.l.b16 %v49
    %v551 = vunpack.c.l.b16 %v50
    %v552 = vunpack.c.l.b16 %v51
    %v553 = vunpack.c.l.b16 %v52
    %v554 = vunpack.c.l.b16 %v53
    %v555 = vunpack.c.l.b16 %v54
    %v556 = vunpack.c.l.b16 %v55
    %v557 = vunpack.c.l.b16 %v56
    %v558 = vunpack.c.l.b16 %v57
    %v559 = vunpack.c.l.b16 %v58
    %v560 = vunpack.c.l.b16 %v59
    %v561 = vunpack.c.l.b16 %v60
    %v562 = vunpack.c.l.b16 %v61
    %v563 = vunpack.c.l.b16 %v62
    %v564 = vunpack.c.l.b16 %v63
    %v565 = vunpack.c.l.b16 %v64
    %v566 = vunpack.c.l.b16 %v65
    %v567 = vunpack.c.l.b16 %v66
    %v568 = vunpack.c.l.b16 %v67
    %v569 = vunpack.c.l.b16 %v68
    %v570 = vunpack.c.l.b16 %v69
    %v571 = vunpack.c.l.b16 %v70
    %v572 = vunpack.c.l.b16 %v71
    %v573 = vunpack.c.l.b16 %v72
    %v574 = vunpack.c.l.b16 %v73
    %v575 = vunpack.c.l.b16 %v74
    %v576 = vunpack.c.l.b16 %v75
    %v577 = vunpack.c.l.b16 %v76
    %v578 = vunpack.c.l.b16 %v77
    %v579 = vunpack.c.l.b16 %v78
    %v580 = vunpack.c.l.b16 %v79
    %v581 = vunpack.c.l.b16 %v80
    %v582 = vunpack.c.l.b16 %v81
    %v583 = vunpack.c.l.b16 %v82
    %v584 = vunpack.c.l.b16 %v83
    %v585 = vunpack.c.l.b16 %v84
    %v586 = vunpack.c.l.b16 %v85
    %v587 = vunpack.c.l.b16 %v86
    %v588 = vunpack.c.l.b16 %v87
    %v589 = vunpack.c.l.b16 %v88
    %v590 = vunpack.c.l.b16 %v89
    %v591 = vunpack.c.l.b16 %v90
    %v592 = vunpack.c.l.b16 %v91
    %v593 = vunpack.c.l.b16 %v92
    %v594 = vunpack.c.l.b16 %v93
    %v595 = vunpack.c.l.b16 %v94
    %v596 = vunpack.c.l.b16 %v95
    %v597 = vunpack.c.l.b16 %v96
    %v598 = vunpack.c.l.b16 %v97
    %v599 = vunpack.c.l.b16 %v98
    %v600 = vunpack.c.l.b16 %v99
    %v601 = vunpack.c.l.b16 %v100
    %v602 = vunpack.c.l.b16 %v101
    %v603 = vunpack.c.l.b16 %v102
    %v604 = vunpack.c.l.b16 %v103
    %v605 = vunpack.c.l.b16 %v104
    %v606 = vunpack.c.l.b16 %v105
    %v607 = vunpack.c.l.b16 %v106
    %v608 = vunpack.c.l.b16 %v107
    %v609 = vunpack.c.l.b16 %v108
    %v610 = vunpack.c.l.b16 %v109
    %v611 = vunpack.c.l.b16 %v110
    %v612 = vunpack.c.l.b16 %v111
    %v613 = vunpack.c.l.b16 %v112
    %v614 = vunpack.c.l.b16 %v113
    %v615 = vunpack.c.l.b16 %v114
    %v616 = vunpack.c.l.b16 %v115
    %v617 = vunpack.c.l.b16 %v116
    %v618 = vunpack.c.l.b16 %v117
    %v619 = vunpack.c.l.b16 %v118
    %v620 = vunpack.c.l.b16 %v119
    %v621 = vunpack.c.l.b16 %v120
    %v622 = vunpack.c.l.b16 %v121
    %v623 = vunpack.c.l.b16 %v122
    %v624 = vunpack.c.l.b16 %v123
    %v625 = vunpack.c.l.b16 %v124
    %v626 = vunpack.c.l.b16 %v125
    %v627 = vunpack.c.l.b16 %v126
    %v628 = vunpack.c.l.b16 %v127
    %v629 = vunpack.c.l.b16 %v128
    %v630 = vunpack.c.l.b16 %v129
    %v631 = vunpack.c.l.b16 %v130
    %v632 = vunpack.c.l.b16 %v131
    %v633 = vunpack.c.l.b16 %v132
    %v634 = vunpack.c.l.b16 %v133
    %v635 = vunpack.c.l.b16 %v134
    %v636 = vunpack.c.l.b16 %v135
    %v637 = vunpack.c.l.b16 %v136
    %v638 = vunpack.c.l.b16 %v137
    %v639 = vunpack.c.l.b16 %v138
    %v640 = vunpack.c.l.b16 %v139
    %v641 = vunpack.c.l.b16 %v140
    %v642 = vunpack.c.l.b16 %v141
    %v643 = vunpack.c.l.b16 %v142
    %v644 = vunpack.c.l.b16 %v143
    %v645 = vunpack.c.l.b16 %v144
    %v646 = vunpack.c.l.b16 %v145
    %v647 = vunpack.c.l.b16 %v146
    %v648 = vunpack.c.l.b16 %v147
    %v649 = vunpack.c.l.b16 %v148
    %v650 = vunpack.c.l.b16 %v149
    %v651 = vunpack.c.l.b16 %v150
    %v652 = vunpack.c.l.b16 %v151
    %v653 = vunpack.c.l.b16 %v152
    %v654 = vunpack.c.l.b16 %v153
    %v655 = vunpack.c.l.b16 %v154
    %v656 = vunpack.c.l.b16 %v155
    %v657 = vunpack.c.l.b16 %v156
    %v658 = vunpack.c.l.b16 %v157
    %v659 = vunpack.c.l.b16 %v158
    %v660 = vunpack.c.l.b16 %v159
    %v661 = vunpack.c.l.b16 %v160
    %v662 = vunpack.c.l.b16 %v161
    %v663 = vunpack.c.l.b16 %v162
    %v664 = vunpack.c.l.b16 %v163
    %v665 = vunpack.c.l.b16 %v164
    %v666 = vunpack.c.l.b16 %v165
    %v667 = vunpack.c.l.b16 %v166
    %v668 = vunpack.c.l.b16 %v167
    %v669 = vunpack.c.l.b16 %v168
    %v670 = vunpack.c.l.b16 %v169
    %v671 = vunpack.c.l.b16 %v170
    %v672 = vunpack.c.l.b16 %v171
    %v673 = vunpack.c.l.b16 %v172
    %v674 = vunpack.c.l.b16 %v173
    %v675 = vunpack.c.l.b16 %v174
    %v676 = vunpack.c.l.b16 %v175
    %v677 = vunpack.c.l.b16 %v176
    %v678 = vunpack.c.l.b16 %v177
    %v679 = vunpack.c.l.b16 %v178
    %v680 = vunpack.c.l.b16 %v179
    %v681 = vunpack.c.l.b16 %v180
    %v682 = vunpack.c.l.b16 %v181
    %v683 = vunpack.c.l.b16 %v182
    %v684 = vunpack.c.l.b16 %v183
    %v685 = vunpack.c.l.b16 %v184
    %v686 = vunpack.c.l.b16 %v185
    %v687 = vunpack.c.l.b16 %v186
    %v688 = vunpack.c.l.b16 %v187
    %v689 = vunpack.c.l.b16 %v188
    %v690 = vunpack.c.l.b16 %v189
    %v691 = vunpack.c.l.b16 %v190
    %v692 = vunpack.c.l.b16 %v191
    %v693 = vunpack.c.l.b16 %v192
    %v694 = vunpack.c.l.b16 %v193
    %v695 = vunpack.c.l.b16 %v194
    %v696 = vunpack.c.l.b16 %v195
    %v697 = vunpack.c.l.b16 %v196
    %v698 = vunpack.c.l.b16 %v197
    %v699 = vunpack.c.l.b16 %v198
    %v700 = vunpack.c.l.b16 %v199
    %v701 = vunpack.c.l.b16 %v200
    %v702 = vunpack.c.l.b16 %v201
    %v703 = vunpack.c.l.b16 %v202
    %v704 = vunpack.c.l.b16 %v203
    %v705 = vunpack.c.l.b16 %v204
    %v706 = vunpack.c.l.b16 %v205
    %v707 = vunpack.c.l.b16 %v206
    %v708 = vunpack.c.l.b16 %v207
    %v709 = vunpack.c.l.b16 %v208
    %v710 = vunpack.c.l.b16 %v209
    %v711 = vunpack.c.l.b16 %v210
    %v712 = vunpack.c.l.b16 %v211
    %v713 = vunpack.c.l.b16 %v212
    %v714 = vunpack.c.l.b16 %v213
    %v715 = vpack.c.b16 %v520, %v519
    %v716 = vpack.c.b16 %v522, %v521
    %v717 = vpack.c.b16 %v524, %v523
    %v718 = vpack.c.b16 %v526, %v525
    %v719 = vpack.c.b16 %v528, %v527
    %v720 = vpack.c.b16 %v530, %v529
    %v721 = vpack.c.b16 %v532, %v531
    %v722 = vpack.c.b16 %v534, %v533
    %v723 = vpack.c.b16 %v536, %v535
    %v724 = vpack.c.b16 %v538, %v537
    %v725 = vpack.c.b16 %v540, %v539
    %v726 = vpack.c.b16 %v542, %v541
    %v727 = vpack.c.b16 %v544, %v543
    %v728 = vpack.c.b16 %v546, %v545
    %v729 = vpack.c.b16 %v548, %v547
    %v730 = vpack.c.b16 %v550, %v549
    %v731 = vpack.c.b16 %v552, %v551
    %v732 = vpack.c.b16 %v554, %v553
    %v733 = vpack.c.b16 %v556, %v555
    %v734 = vpack.c.b16 %v558, %v557
    %v735 = vpack.c.b16 %v560, %v559
    %v736 = vpack.c.b16 %v562, %v561
    %v737 = vpack.c.b16 %v564, %v563
    %v738 = vpack.c.b16 %v566, %v565
    %v739 = vpack.c.b16 %v568, %v567
    %v740 = vpack.c.b16 %v570, %v569
    %v741 = vpack.c.b16 %v572, %v571
    %v742 = vpack.c.b16 %v574, %v573
    %v743 = vpack.c.b16 %v576, %v575
    %v744 = vpack.c.b16 %v578, %v577
    %v745 = vpack.c.b16 %v580, %v579
    %v746 = vpack.c.b16 %v582, %v581
    %v747 = vpack.c.b16 %v584, %v583
    %v748 = vpack.c.b16 %v586, %v585
    %v749 = vpack.c.b16 %v588, %v587
    %v750 = vpack.c.b16 %v590, %v589
    %v751 = vpack.c.b16 %v592, %v591
    %v752 = vpack.c.b16 %v594, %v593
    %v753 = vpack.c.b16 %v596, %v595
    %v754 = vpack.c.b16 %v598, %v597
    %v755 = vpack.c.b16 %v600, %v599
    %v756 = vpack.c.b16 %v602, %v601
    %v757 = vpack.c.b16 %v604, %v603
    %v758 = vpack.c.b16 %v606, %v605
    %v759 = vpack.c.b16 %v608, %v607
    %v760 = vpack.c.b16 %v610, %v609
    %v761 = vpack.c.b16 %v612, %v611
    %v762 = vpack.c.b16 %v614, %v613
    %v763 = vpack.c.b16 %v616, %v615
    %v764 = vpack.c.b16 %v618, %v617
    %v765 = vpack.c.b16 %v620, %v619
    %v766 = vpack.c.b16 %v622, %v621
    %v767 = vpack.c.b16 %v624, %v623
    %v768 = vpack.c.b16 %v626, %v625
    %v769 = vpack.c.b16 %v628, %v627
    %v770 = vpack.c.b16 %v630, %v629
    %v771 = vpack.c.b16 %v632, %v631
    %v772 = vpack.c.b16 %v634, %v633
    %v773 = vpack.c.b16 %v636, %v635
    %v774 = vpack.c.b16 %v638, %v637
    %v775 = vpack.c.b16 %v640, %v639
    %v776 = vpack.c.b16 %v642, %v641
    %v777 = vpack.c.b16 %v644, %v643
    %v778 = vpack.c.b16 %v646, %v645
    %v779 = vpack.c.b16 %v648, %v647
    %v780 = vpack.c.b16 %v650, %v649
    %v781 = vpack.c.b16 %v652, %v651
    %v782 = vpack.c.b16 %v654, %v653
    %v783 = vpack.c.b16 %v656, %v655
    %v784 = vpack.c.b16 %v658, %v657
    %v785 = vpack.c.b16 %v660, %v659
    %v786 = vpack.c.b16 %v662, %v661
    %v787 = vpack.c.b16 %v664, %v663
    %v788 = vpack.c.b16 %v666, %v665
    %v789 = vpack.c.b16 %v668, %v667
    %v790 = vpack.c.b16 %v670, %v669
    %v791 = vpack.c.b16 %v672, %v671
    %v792 = vpack.c.b16 %v674, %v673
    %v793 = vpack.c.b16 %v676, %v675
    %v794 = vpack.c.b16 %v678, %v677
    %v795 = vpack.c.b16 %v680, %v679
    %v796 = vpack.c.b16 %v682, %v681
    %v797 = vpack.c.b16 %v684, %v683
    %v798 = vpack.c.b16 %v686, %v685
    %v799 = vpack.c.b16 %v688, %v687
    %v800 = vpack.c.b16 %v690, %v689
    %v801 = vpack.c.b16 %v692, %v691
    %v802 = vpack.c.b16 %v694, %v693
    %v803 = vpack.c.b16 %v696, %v695
    %v804 = vpack.c.b16 %v698, %v697
    %v805 = vpack.c.b16 %v700, %v699
    %v806 = vpack.c.b16 %v702, %v701
    %v807 = vpack.c.b16 %v704, %v703
    %v808 = vpack.c.b16 %v706, %v705
    %v809 = vpack.c.b16 %v708, %v707
    %v810 = vpack.c.b16 %v710, %v709
    %v811 = vpack.c.b16 %v712, %v711
    %v812 = vpack.c.b16 %v714, %v713
    %vm911 = vcmask 261120
    %v913 = vsel %vm911, %v301, 0
    %915 = vmatprep.subr.bf16.mxu0 0
    %916 = vmatpush1.bf16.msra.mxu0 %v715
    %917 = vmatprep.subr.bf16.mxu0 0
    %918 = vmatpush1.bf16.msra.mxu0 %v716
    %919 = vmatprep.subr.bf16.mxu0 0
    %920 = vmatpush1.bf16.msra.mxu0 %v717
    %921 = vmatprep.subr.bf16.mxu0 0
    %922 = vmatpush1.bf16.msra.mxu0 %v718
    %923 = vmatprep.subr.bf16.mxu0 0
    %924 = vmatpush1.bf16.msra.mxu0 %v719
    %925 = vmatprep.subr.bf16.mxu0 0
    %926 = vmatpush1.bf16.msra.mxu0 %v720
    %927 = vmatprep.subr.bf16.mxu0 0
    %928 = vmatpush1.bf16.msra.mxu0 %v721
    %929 = vmatprep.subr.bf16.mxu0 0
    %930 = vmatpush1.bf16.msra.mxu0 %v722
    %931 = vmatprep.subr.bf16.mxu0 0
    %932 = vmatpush1.bf16.msra.mxu0 %v723
    %933 = vmatprep.subr.bf16.mxu0 0
    %934 = vmatpush1.bf16.msra.mxu0 %v724
    %935 = vmatprep.subr.bf16.mxu0 0
    %936 = vmatpush1.bf16.msra.mxu0 %v725
    %937 = vmatprep.subr.bf16.mxu0 0
    %938 = vmatpush1.bf16.msra.mxu0 %v726
    %939 = vmatprep.subr.bf16.mxu0 0
    %940 = vmatpush1.bf16.msra.mxu0 %v727
    %941 = vmatprep.subr.bf16.mxu0 0
    %942 = vmatpush1.bf16.msra.mxu0 %v728
    %943 = vmatprep.subr.bf16.mxu0 0
    %944 = vmatpush1.bf16.msra.mxu0 %v729
    %945 = vmatprep.subr.bf16.mxu0 0
    %946 = vmatpush1.bf16.msra.mxu0 %v730
    %947 = vmatprep.mubr.bf16.mxu0 %v260
    %948 = vmatmul.mubr.bf16.gmra.mrb[0].mxu0 %v246
    %v949 = vpop.f32.mrb[0].mxu0
    %v950 = vadd.f32 %v219, %v949
    %v951 = vpop.f32.mrb[0].mxu0
    %v952 = vpop.f32.mrb[0].mxu0
    %v953 = vpop.f32.mrb[0].mxu0
    %954 = vdwg.mxu0
    %955 = vmatprep.subr.bf16.mxu0 0
    %956 = vmatpush1.bf16.msra.mxu0 %v731
    %957 = vmatprep.subr.bf16.mxu0 0
    %958 = vmatpush1.bf16.msra.mxu0 %v732
    %959 = vmatprep.subr.bf16.mxu0 0
    %960 = vmatpush1.bf16.msra.mxu0 %v733
    %961 = vmatprep.subr.bf16.mxu0 0
    %962 = vmatpush1.bf16.msra.mxu0 %v734
    %963 = vmatprep.subr.bf16.mxu0 0
    %964 = vmatpush1.bf16.msra.mxu0 %v735
    %965 = vmatprep.subr.bf16.mxu0 0
    %966 = vmatpush1.bf16.msra.mxu0 %v736
    %967 = vmatprep.subr.bf16.mxu0 0
    %968 = vmatpush1.bf16.msra.mxu0 %v737
    %969 = vmatprep.subr.bf16.mxu0 0
    %970 = vmatpush1.bf16.msra.mxu0 %v738
    %971 = vmatprep.subr.bf16.mxu0 0
    %972 = vmatpush1.bf16.msra.mxu0 %v739
    %973 = vmatprep.subr.bf16.mxu0 0
    %974 = vmatpush1.bf16.msra.mxu0 %v740
    %975 = vmatprep.subr.bf16.mxu0 0
    %976 = vmatpush1.bf16.msra.mxu0 %v741
    %977 = vmatprep.subr.bf16.mxu0 0
    %978 = vmatpush1.bf16.msra.mxu0 %v742
    %979 = vmatprep.subr.bf16.mxu0 0
    %980 = vmatpush1.bf16.msra.mxu0 %v743
    %981 = vmatprep.subr.bf16.mxu0 0
    %982 = vmatpush1.bf16.msra.mxu0 %v744
    %983 = vmatprep.subr.bf16.mxu0 0
    %984 = vmatpush1.bf16.msra.mxu0 %v745
    %985 = vmatprep.subr.bf16.mxu0 0
    %986 = vmatpush1.bf16.msra.mxu0 %v746
    %987 = vmatprep.mubr.bf16.mxu0 %v270
    %988 = vmatmul.mubr.bf16.gmra.mrb[0].mxu0 %v268
    %v989 = vpop.f32.mrb[0].mxu0
    %v990 = vadd.f32 %v950, %v989
    %v991 = vpop.f32.mrb[0].mxu0
    %v992 = vpop.f32.mrb[0].mxu0
    %v993 = vpop.f32.mrb[0].mxu0
    %994 = vdwg.mxu0
    %995 = vmatprep.subr.bf16.mxu0 0
    %996 = vmatpush1.bf16.msra.mxu0 %v747
    %997 = vmatprep.subr.bf16.mxu0 0
    %998 = vmatpush1.bf16.msra.mxu0 %v748
    %999 = vmatprep.subr.bf16.mxu0 0
    %1000 = vmatpush1.bf16.msra.mxu0 %v749
    %1001 = vmatprep.subr.bf16.mxu0 0
    %1002 = vmatpush1.bf16.msra.mxu0 %v750
    %1003 = vmatprep.subr.bf16.mxu0 0
    %1004 = vmatpush1.bf16.msra.mxu0 %v751
    %1005 = vmatprep.subr.bf16.mxu0 0
    %1006 = vmatpush1.bf16.msra.mxu0 %v752
    %1007 = vmatprep.subr.bf16.mxu0 0
    %1008 = vmatpush1.bf16.msra.mxu0 %v753
    %1009 = vmatprep.subr.bf16.mxu0 0
    %1010 = vmatpush1.bf16.msra.mxu0 %v754
    %1011 = vmatprep.subr.bf16.mxu0 0
    %1012 = vmatpush1.bf16.msra.mxu0 %v755
    %1013 = vmatprep.subr.bf16.mxu0 0
    %1014 = vmatpush1.bf16.msra.mxu0 %v756
    %1015 = vmatprep.subr.bf16.mxu0 0
    %1016 = vmatpush1.bf16.msra.mxu0 %v757
    %1017 = vmatprep.subr.bf16.mxu0 0
    %1018 = vmatpush1.bf16.msra.mxu0 %v758
    %1019 = vmatprep.subr.bf16.mxu0 0
    %1020 = vmatpush1.bf16.msra.mxu0 %v759
    %1021 = vmatprep.subr.bf16.mxu0 0
    %1022 = vmatpush1.bf16.msra.mxu0 %v760
    %1023 = vmatprep.subr.bf16.mxu0 0
    %1024 = vmatpush1.bf16.msra.mxu0 %v761
    %1025 = vmatprep.subr.bf16.mxu0 0
    %1026 = vmatpush1.bf16.msra.mxu0 %v762
    %1027 = vmatprep.mubr.bf16.mxu0 %v267
    %1028 = vmatmul.mubr.bf16.gmra.mrb[0].mxu0 %v253
    %v1029 = vpop.f32.mrb[0].mxu0
    %v1030 = vadd.f32 %v990, %v1029
    %v1031 = vpop.f32.mrb[0].mxu0
    %v1032 = vpop.f32.mrb[0].mxu0
    %v1033 = vpop.f32.mrb[0].mxu0
    %1034 = vdwg.mxu0
    %1035 = vmatprep.subr.bf16.mxu0 0
    %1036 = vmatpush1.bf16.msra.mxu0 %v763
    %1037 = vmatprep.subr.bf16.mxu0 0
    %1038 = vmatpush1.bf16.msra.mxu0 %v764
    %1039 = vmatprep.subr.bf16.mxu0 0
    %1040 = vmatpush1.bf16.msra.mxu0 %v765
    %1041 = vmatprep.subr.bf16.mxu0 0
    %1042 = vmatpush1.bf16.msra.mxu0 %v766
    %1043 = vmatprep.subr.bf16.mxu0 0
    %1044 = vmatpush1.bf16.msra.mxu0 %v767
    %1045 = vmatprep.subr.bf16.mxu0 0
    %1046 = vmatpush1.bf16.msra.mxu0 %v768
    %1047 = vmatprep.subr.bf16.mxu0 0
    %1048 = vmatpush1.bf16.msra.mxu0 %v769
    %1049 = vmatprep.subr.bf16.mxu0 0
    %1050 = vmatpush1.bf16.msra.mxu0 %v770
    %1051 = vmatprep.subr.bf16.mxu0 0
    %1052 = vmatpush1.bf16.msra.mxu0 %v771
    %1053 = vmatprep.subr.bf16.mxu0 0
    %1054 = vmatpush1.bf16.msra.mxu0 %v772
    %1055 = vmatprep.subr.bf16.mxu0 0
    %1056 = vmatpush1.bf16.msra.mxu0 %v773
    %1057 = vmatprep.subr.bf16.mxu0 0
    %1058 = vmatpush1.bf16.msra.mxu0 %v774
    %1059 = vmatprep.subr.bf16.mxu0 0
    %1060 = vmatpush1.bf16.msra.mxu0 %v775
    %1061 = vmatprep.subr.bf16.mxu0 0
    %1062 = vmatpush1.bf16.msra.mxu0 %v776
    %1063 = vmatprep.subr.bf16.mxu0 0
    %1064 = vmatpush1.bf16.msra.mxu0 %v777
    %1065 = vmatprep.subr.bf16.mxu0 0
    %1066 = vmatpush1.bf16.msra.mxu0 %v778
    %1067 = vmatprep.mubr.bf16.mxu0 %v271
    %1068 = vmatmul.mubr.bf16.gmra.mrb[0].mxu0 %v269
    %v1069 = vpop.f32.mrb[0].mxu0
    %v1070 = vadd.f32 %v1030, %v1069
    %v1071 = vpop.f32.mrb[0].mxu0
    %v1072 = vpop.f32.mrb[0].mxu0
    %v1073 = vpop.f32.mrb[0].mxu0
    %1074 = vdwg.mxu0
    %1075 = vmatprep.subr.bf16.mxu0 0
    %1076 = vmatpush1.bf16.msra.mxu0 %v779
    %1077 = vmatprep.subr.bf16.mxu0 0
    %1078 = vmatpush1.bf16.msra.mxu0 %v780
    %1079 = vmatprep.subr.bf16.mxu0 0
    %1080 = vmatpush1.bf16.msra.mxu0 %v781
    %1081 = vmatprep.subr.bf16.mxu0 0
    %1082 = vmatpush1.bf16.msra.mxu0 %v782
    %1083 = vmatprep.subr.bf16.mxu0 0
    %1084 = vmatpush1.bf16.msra.mxu0 %v783
    %1085 = vmatprep.subr.bf16.mxu0 0
    %1086 = vmatpush1.bf16.msra.mxu0 %v784
    %1087 = vmatprep.subr.bf16.mxu0 0
    %1088 = vmatpush1.bf16.msra.mxu0 %v785
    %1089 = vmatprep.subr.bf16.mxu0 0
    %1090 = vmatpush1.bf16.msra.mxu0 %v786
    %1091 = vmatprep.subr.bf16.mxu0 0
    %1092 = vmatpush1.bf16.msra.mxu0 %v787
    %1093 = vmatprep.subr.bf16.mxu0 0
    %1094 = vmatpush1.bf16.msra.mxu0 %v788
    %1095 = vmatprep.subr.bf16.mxu0 0
    %1096 = vmatpush1.bf16.msra.mxu0 %v789
    %1097 = vmatprep.subr.bf16.mxu0 0
    %1098 = vmatpush1.bf16.msra.mxu0 %v790
    %1099 = vmatprep.subr.bf16.mxu0 0
    %1100 = vmatpush1.bf16.msra.mxu0 %v791
    %1101 = vmatprep.subr.bf16.mxu0 0
    %1102 = vmatpush1.bf16.msra.mxu0 %v792
    %1103 = vmatprep.subr.bf16.mxu0 0
    %1104 = vmatpush1.bf16.msra.mxu0 %v793
    %1105 = vmatprep.subr.bf16.mxu0 0
    %1106 = vmatpush1.bf16.msra.mxu0 %v794
    %1107 = vmatprep.mubr.bf16.mxu0 %v308
    %1108 = vmatmul.mubr.bf16.gmra.mrb[0].mxu0 %v294
    %v1109 = vpop.f32.mrb[0].mxu0
    %v1110 = vadd.f32 %v1070, %v1109
    %v1111 = vpop.f32.mrb[0].mxu0
    %v1112 = vpop.f32.mrb[0].mxu0
    %v1113 = vpop.f32.mrb[0].mxu0
    %1114 = vdwg.mxu0
    %1115 = vmatprep.subr.bf16.mxu0 0
    %1116 = vmatpush1.bf16.msra.mxu0 %v795
    %1117 = vmatprep.subr.bf16.mxu0 0
    %1118 = vmatpush1.bf16.msra.mxu0 %v796
    %1119 = vmatprep.subr.bf16.mxu0 0
    %1120 = vmatpush1.bf16.msra.mxu0 %v797
    %1121 = vmatprep.subr.bf16.mxu0 0
    %1122 = vmatpush1.bf16.msra.mxu0 %v798
    %1123 = vmatprep.subr.bf16.mxu0 0
    %1124 = vmatpush1.bf16.msra.mxu0 %v799
    %1125 = vmatprep.subr.bf16.mxu0 0
    %1126 = vmatpush1.bf16.msra.mxu0 %v800
    %1127 = vmatprep.subr.bf16.mxu0 0
    %1128 = vmatpush1.bf16.msra.mxu0 %v801
    %1129 = vmatprep.subr.bf16.mxu0 0
    %1130 = vmatpush1.bf16.msra.mxu0 %v802
    %1131 = vmatprep.subr.bf16.mxu0 0
    %1132 = vmatpush1.bf16.msra.mxu0 %v803
    %1133 = vmatprep.subr.bf16.mxu0 0
    %1134 = vmatpush1.bf16.msra.mxu0 %v804
    %1135 = vmatprep.subr.bf16.mxu0 0
    %1136 = vmatpush1.bf16.msra.mxu0 %v805
    %1137 = vmatprep.subr.bf16.mxu0 0
    %1138 = vmatpush1.bf16.msra.mxu0 %v806
    %1139 = vmatprep.subr.bf16.mxu0 0
    %1140 = vmatpush1.bf16.msra.mxu0 %v807
    %1141 = vmatprep.subr.bf16.mxu0 0
    %1142 = vmatpush1.bf16.msra.mxu0 %v808
    %1143 = vmatprep.subr.bf16.mxu0 0
    %1144 = vmatpush1.bf16.msra.mxu0 %v809
    %1145 = vmatprep.subr.bf16.mxu0 0
    %1146 = vmatpush1.bf16.msra.mxu0 %v810
    %1147 = vmatprep.mubr.bf16.mxu0 %v310
    %1148 = vmatmul.mubr.bf16.gmra.mrb[0].mxu0 %v309
    %v1149 = vpop.f32.mrb[0].mxu0
    %v1150 = vadd.f32 %v1110, %v1149
    %v1151 = vpop.f32.mrb[0].mxu0
    %v1152 = vpop.f32.mrb[0].mxu0
    %v1153 = vpop.f32.mrb[0].mxu0
    %1154 = vdwg.mxu0
    %1155 = vmatprep.subr.bf16.mxu0 0
    %1156 = vmatpush1.bf16.msra.mxu0 %v811
    %1157 = vmatprep.subr.bf16.mxu0 0
    %1158 = vmatpush1.bf16.msra.mxu0 %v812
    %1159 = vmatprep.subr.bf16.mxu0 0
    %1160 = vmatpush1.bf16.msra.mxu0 0
    %1161 = vmatprep.subr.bf16.mxu0 0
    %1162 = vmatpush1.bf16.msra.mxu0 0
    %1163 = vmatprep.subr.bf16.mxu0 0
    %1164 = vmatpush1.bf16.msra.mxu0 0
    %1165 = vmatprep.subr.bf16.mxu0 0
    %1166 = vmatpush1.bf16.msra.mxu0 0
    %1167 = vmatprep.subr.bf16.mxu0 0
    %1168 = vmatpush1.bf16.msra.mxu0 0
    %1169 = vmatprep.subr.bf16.mxu0 0
    %1170 = vmatpush1.bf16.msra.mxu0 0
    %1171 = vmatprep.subr.bf16.mxu0 0
    %1172 = vmatpush1.bf16.msra.mxu0 0
    %1173 = vmatprep.subr.bf16.mxu0 0
    %1174 = vmatpush1.bf16.msra.mxu0 0
    %1175 = vmatprep.subr.bf16.mxu0 0
    %1176 = vmatpush1.bf16.msra.mxu0 0
    %1177 = vmatprep.subr.bf16.mxu0 0
    %1178 = vmatpush1.bf16.msra.mxu0 0
    %1179 = vmatprep.subr.bf16.mxu0 0
    %1180 = vmatpush1.bf16.msra.mxu0 0
    %1181 = vmatprep.subr.bf16.mxu0 0
    %1182 = vmatpush1.bf16.msra.mxu0 0
    %1183 = vmatprep.subr.bf16.mxu0 0
    %1184 = vmatpush1.bf16.msra.mxu0 0
    %1185 = vmatprep.subr.bf16.mxu0 0
    %1186 = vmatpush1.bf16.msra.mxu0 0
    %1187 = vmatprep.mubr.bf16.mxu0 0
    %1188 = vmatmul.mubr.bf16.gmra.mrb[0].mxu0 %v913
    %v1189 = vpop.f32.mrb[0].mxu0
    %v1190 = vadd.f32 %v1150, %v1189
    %v1191 = vpop.f32.mrb[0].mxu0
    %v1192 = vpop.f32.mrb[0].mxu0
    %v1193 = vpop.f32.mrb[0].mxu0
    %1194 = vdwg.mxu0
    %vm1195 = vcmask 74752
    %1196 = vst.msk [vmem:[#allocation2] sm:$0x3] %vm1195, %v1190
    // Predicated region
    $region14: #{cnn_forward.5} parent=1 // pred_check
      _
    $region15: #{cnn_forward.5} parent=1 // pred_check_branch
      %1198 = sbr.rel (0) target = $region17
    $region16: #{cnn_forward.5} parent=1 // pred_region
      %s1200 = ssub.s32 32, 32
      %1201 = vsyncadd [#allocation3], %s1200
      %s1203 = sshll.u32 [#allocation2], 4
      %s1204 = int_to_ptr.vmem [resolvable:$true] %s1203
      %1206 = dma.vmem_to_hbm [thread:$0]  %s1204, 32, %s3, [#allocation3]
    $region17: #{cnn_forward.5} parent=1 // pred_fallthru
      _
    // Predicated region
    $region18: #{cnn_forward.5} parent=1 // pred_check
      _
    $region19: #{cnn_forward.5} parent=1 // pred_check_branch
      %1208 = sbr.rel (0) target = $region21
    $region20: #{cnn_forward.5} parent=1 // pred_region
      %1209 = dma.done [#allocation3], 32
    $region21: #{cnn_forward.5} parent=1 // pred_fallthru
      _
    %1210 = vsyncpa [#allocation3], 1

// kernel: cnn_forward.4
$region0: #{cnn_forward.4}
  #allocation0 [shape = 'u32[]', space=smem, size = 0x4, offset = 0x4, fixed_abs, tag = 'smem constant byte address 0x4 - core index']
  #allocation1 [shape = 'u32[144,128]{1,0:T(1,128)}', space=vmem, size = 0x12000, scoped, tag = 'internal scratch']
  #allocation2 [shape = 'bf16[400,512]{1,0:T(16,128)(2,1)}', space=vmem, size = 0x64000, scoped, tag = 'scratch operand']
  #allocation3 [shape = 'bf16[32,512]{1,0:T(16,128)(2,1)}', space=vmem, size = 0x8000, scoped, tag = 'scratch operand']
  %s0 = inlined_call_operand.vmem [shape: bf16[2,16,324], index: 0, kind: input, shape index: {}]
  %s1 = inlined_call_operand.vmem [shape: bf16[32,400], index: 1, kind: input, shape index: {}]
  %s2 = inlined_call_operand.vmem [shape: f32[32,1], index: 2, kind: input, shape index: {}]
  %s3 = inlined_call_operand.vmem [shape: bf16[229,49], index: 3, kind: input, shape index: {}]
  %s4 = inlined_call_operand.vmem [shape: bf16[2,32,49], index: 4, kind: output, shape index: {}]
  %s5 = sld [smem:[#allocation0]]
  $region26: #{cnn_forward.4} parent=0
    _
  %s7 = ssub.s32 1, %s5
  %s8 = scalar_select 0, %s7, %s5
  // Predicated region
  $region2: #{cnn_forward.4} parent=0 // pred_check
    _
  $region3: #{cnn_forward.4} parent=0 // pred_check_branch
    %10 = sbr.rel (0) target = $region5
  $region4: #{cnn_forward.4} parent=0 // pred_region
    _
  $region5: #{cnn_forward.4} parent=0 // pred_fallthru
    _
  // Predicated region
  $region6: #{cnn_forward.4} parent=0 // pred_check
    _
  $region7: #{cnn_forward.4} parent=0 // pred_check_branch
    %12 = sbr.rel (0) target = $region9
  $region8: #{cnn_forward.4} parent=0 // pred_region
    _
  $region9: #{cnn_forward.4} parent=0 // pred_fallthru
    _
  // Predicated region
  $region10: #{cnn_forward.4} parent=0 // pred_check
    _
  $region11: #{cnn_forward.4} parent=0 // pred_check_branch
    %14 = sbr.rel (0) target = $region13
  $region12: #{cnn_forward.4} parent=0 // pred_region
    _
  $region13: #{cnn_forward.4} parent=0 // pred_fallthru
    _
  // Predicated region
  $region14: #{cnn_forward.4} parent=0 // pred_check
    _
  $region15: #{cnn_forward.4} parent=0 // pred_check_branch
    %16 = sbr.rel (0) target = $region17
  $region16: #{cnn_forward.4} parent=0 // pred_region
    _
  $region17: #{cnn_forward.4} parent=0 // pred_fallthru
    _
  %v18 = vld [vmem:[%s0] sm:$0xff]
  %v19 = vld [vmem:[%s0 + $0xc] sm:$0xff]
  %v22 = vunpack.c.l.b16 %v18
  %v23 = vunpack.c.h.b16 %v18
  %v24 = vunpack.c.l.b16 %v19
  %v25 = vunpack.c.h.b16 %v19
  %v26 = vpack.c.b16 %v24, %v22
  %v27 = vpack.c.b16 %v25, %v23
  %30 = vst [vmem:[#allocation2] sm:$0xff] %v26
  %vm31 = vcmask 982016
  %32 = vst.msk [vmem:[#allocation2 + $0x8] sm:$0xff] %vm31, %v27
  %v33 = vld [vmem:[%s0] sm:$0xff]
  %v34 = vld [vmem:[%s0 + $0xc] sm:$0xff]
  %v37 = vunpack.c.l.b16 %v33
  %v38 = vunpack.c.h.b16 %v33
  %v39 = vunpack.c.l.b16 %v34
  %v40 = vunpack.c.h.b16 %v34
  %v41 = vpack.c.b16 %v39, %v37
  %v42 = vpack.c.b16 %v40, %v38
  %43 = vrot.lane.b32.xlu0 %v41, 127
  %v44 = vpop.permute.xlu0 %43
  %45 = vrot.lane.b32.xlu0 %v42, 127
  %v46 = vpop.permute.xlu0 %45
  %vm47 = vcmask 1039360
  %v48 = vsel %vm47, %v44, %v46
  %51 = vst [vmem:[#allocation2 + $0x20] sm:$0xff] %v48
  %52 = vst.msk [vmem:[#allocation2 + $0x28] sm:$0xff] %vm31, %v46
  %v53 = vld [vmem:[%s0] sm:$0xff]
  %v54 = vld [vmem:[%s0 + $0xc] sm:$0xff]
  %v57 = vunpack.c.l.b16 %v53
  %v58 = vunpack.c.h.b16 %v53
  %v59 = vunpack.c.l.b16 %v54
  %v60 = vunpack.c.h.b16 %v54
  %v61 = vpack.c.b16 %v59, %v57
  %v62 = vpack.c.b16 %v60, %v58
  %63 = vrot.lane.b32.xlu0 %v61, 126
  %v64 = vpop.permute.xlu0 %63
  %65 = vrot.lane.b32.xlu0 %v62, 126
  %v66 = vpop.permute.xlu0 %65
  %vm67 = vcmask 1031168
  %v68 = vsel %vm67, %v64, %v66
  %71 = vst [vmem:[#allocation2 + $0x40] sm:$0xff] %v68
  %72 = vst.msk [vmem:[#allocation2 + $0x48] sm:$0xff] %vm31, %v66
  %v73 = vld [vmem:[%s0] sm:$0xff]
  %v74 = vld [vmem:[%s0 + $0xc] sm:$0xff]
  %v77 = vunpack.c.l.b16 %v73
  %v78 = vunpack.c.h.b16 %v73
  %v79 = vunpack.c.l.b16 %v74
  %v80 = vunpack.c.h.b16 %v74
  %v81 = vpack.c.b16 %v79, %v77
  %v82 = vpack.c.b16 %v80, %v78
  %83 = vrot.lane.b32.xlu0 %v81, 125
  %v84 = vpop.permute.xlu0 %83
  %85 = vrot.lane.b32.xlu0 %v82, 125
  %v86 = vpop.permute.xlu0 %85
  %vm87 = vcmask 1022976
  %v88 = vsel %vm87, %v84, %v86
  %91 = vst [vmem:[#allocation2 + $0x60] sm:$0xff] %v88
  %92 = vst.msk [vmem:[#allocation2 + $0x68] sm:$0xff] %vm31, %v86
  %v93 = vld [vmem:[%s0] sm:$0xff]
  %v94 = vld [vmem:[%s0 + $0xc] sm:$0xff]
  %v97 = vunpack.c.l.b16 %v93
  %v98 = vunpack.c.h.b16 %v93
  %v99 = vunpack.c.l.b16 %v94
  %v100 = vunpack.c.h.b16 %v94
  %v101 = vpack.c.b16 %v99, %v97
  %v102 = vpack.c.b16 %v100, %v98
  %103 = vrot.lane.b32.xlu0 %v101, 124
  %v104 = vpop.permute.xlu0 %103
  %105 = vrot.lane.b32.xlu0 %v102, 124
  %v106 = vpop.permute.xlu0 %105
  %vm107 = vcmask 1014784
  %v108 = vsel %vm107, %v104, %v106
  %111 = vst [vmem:[#allocation2 + $0x80] sm:$0xff] %v108
  %112 = vst.msk [vmem:[#allocation2 + $0x88] sm:$0xff] %vm31, %v106
  %v113 = vld [vmem:[%s0] sm:$0xff]
  %v114 = vld [vmem:[%s0 + $0x8] sm:$0xf]
  %v115 = vld [vmem:[%s0 + $0xc] sm:$0xff]
  %v116 = vld [vmem:[%s0 + $0x14] sm:$0xf]
  %v121 = vunpack.c.l.b16 %v113
  %v122 = vunpack.c.h.b16 %v113
  %v123 = vunpack.c.l.b16 %v114
  %v124 = vunpack.c.l.b16 %v115
  %v125 = vunpack.c.h.b16 %v115
  %v126 = vunpack.c.l.b16 %v116
  %v127 = vpack.c.b16 %v124, %v121
  %v128 = vpack.c.b16 %v125, %v122
  %v129 = vpack.c.b16 %v126, %v123
  %130 = vrot.lane.b32.xlu0 %v127, 110
  %v131 = vpop.permute.xlu0 %130
  %132 = vrot.lane.b32.xlu0 %v128, 110
  %v133 = vpop.permute.xlu0 %132
  %134 = vrot.lane.b32.xlu0 %v129, 110
  %v135 = vpop.permute.xlu0 %134
  %vm136 = vcmask 900096
  %v137 = vsel %vm136, %v131, %v133
  %v138 = vsel %vm136, %v133, %v135
  %141 = vst [vmem:[#allocation2 + $0xa0] sm:$0xff] %v137
  %142 = vst.msk [vmem:[#allocation2 + $0xa8] sm:$0xff] %vm31, %v138
  %v143 = vld [vmem:[%s0] sm:$0xff]
  %v144 = vld [vmem:[%s0 + $0x8] sm:$0xf]
  %v145 = vld [vmem:[%s0 + $0xc] sm:$0xff]
  %v146 = vld [vmem:[%s0 + $0x14] sm:$0xf]
  %v151 = vunpack.c.l.b16 %v143
  %v152 = vunpack.c.h.b16 %v143
  %v153 = vunpack.c.l.b16 %v144
  %v154 = vunpack.c.l.b16 %v145
  %v155 = vunpack.c.h.b16 %v145
  %v156 = vunpack.c.l.b16 %v146
  %v157 = vpack.c.b16 %v154, %v151
  %v158 = vpack.c.b16 %v155, %v152
  %v159 = vpack.c.b16 %v156, %v153
  %160 = vrot.lane.b32.xlu0 %v157, 109
  %v161 = vpop.permute.xlu0 %160
  %162 = vrot.lane.b32.xlu0 %v158, 109
  %v163 = vpop.permute.xlu0 %162
  %164 = vrot.lane.b32.xlu0 %v159, 109
  %v165 = vpop.permute.xlu0 %164
  %vm166 = vcmask 891904
  %v167 = vsel %vm166, %v161, %v163
  %v168 = vsel %vm166, %v163, %v165
  %171 = vst [vmem:[#allocation2 + $0xc0] sm:$0xff] %v167
  %172 = vst.msk [vmem:[#allocation2 + $0xc8] sm:$0xff] %vm31, %v168
  %v173 = vld [vmem:[%s0] sm:$0xff]
  %v174 = vld [vmem:[%s0 + $0x8] sm:$0xf]
  %v175 = vld [vmem:[%s0 + $0xc] sm:$0xff]
  %v176 = vld [vmem:[%s0 + $0x14] sm:$0xf]
  %v181 = vunpack.c.l.b16 %v173
  %v182 = vunpack.c.h.b16 %v173
  %v183 = vunpack.c.l.b16 %v174
  %v184 = vunpack.c.l.b16 %v175
  %v185 = vunpack.c.h.b16 %v175
  %v186 = vunpack.c.l.b16 %v176
  %v187 = vpack.c.b16 %v184, %v181
  %v188 = vpack.c.b16 %v185, %v182
  %v189 = vpack.c.b16 %v186, %v183
  %190 = vrot.lane.b32.xlu0 %v187, 108
  %v191 = vpop.permute.xlu0 %190
  %192 = vrot.lane.b32.xlu0 %v188, 108
  %v193 = vpop.permute.xlu0 %192
  %194 = vrot.lane.b32.xlu0 %v189, 108
  %v195 = vpop.permute.xlu0 %194
  %vm196 = vcmask 883712
  %v197 = vsel %vm196, %v191, %v193
  %v198 = vsel %vm196, %v193, %v195
  %201 = vst [vmem:[#allocation2 + $0xe0] sm:$0xff] %v197
  %202 = vst.msk [vmem:[#allocation2 + $0xe8] sm:$0xff] %vm31, %v198
  %v203 = vld [vmem:[%s0] sm:$0xff]
  %v204 = vld [vmem:[%s0 + $0x8] sm:$0xf]
  %v205 = vld [vmem:[%s0 + $0xc] sm:$0xff]
  %v206 = vld [vmem:[%s0 + $0x14] sm:$0xf]
  %v211 = vunpack.c.l.b16 %v203
  %v212 = vunpack.c.h.b16 %v203
  %v213 = vunpack.c.l.b16 %v204
  %v214 = vunpack.c.l.b16 %v205
  %v215 = vunpack.c.h.b16 %v205
  %v216 = vunpack.c.l.b16 %v206
  %v217 = vpack.c.b16 %v214, %v211
  %v218 = vpack.c.b16 %v215, %v212
  %v219 = vpack.c.b16 %v216, %v213
  %220 = vrot.lane.b32.xlu0 %v217, 107
  %v221 = vpop.permute.xlu0 %220
  %222 = vrot.lane.b32.xlu0 %v218, 107
  %v223 = vpop.permute.xlu0 %222
  %224 = vrot.lane.b32.xlu0 %v219, 107
  %v225 = vpop.permute.xlu0 %224
  %vm226 = vcmask 875520
  %v227 = vsel %vm226, %v221, %v223
  %v228 = vsel %vm226, %v223, %v225
  %231 = vst [vmem:[#allocation2 + $0x100] sm:$0xff] %v227
  %232 = vst.msk [vmem:[#allocation2 + $0x108] sm:$0xff] %vm31, %v228
  %v233 = vld [vmem:[%s0] sm:$0xff]
  %v234 = vld [vmem:[%s0 + $0x8] sm:$0xf]
  %v235 = vld [vmem:[%s0 + $0xc] sm:$0xff]
  %v236 = vld [vmem:[%s0 + $0x14] sm:$0xf]
  %v241 = vunpack.c.l.b16 %v233
  %v242 = vunpack.c.h.b16 %v233
  %v243 = vunpack.c.l.b16 %v234
  %v244 = vunpack.c.l.b16 %v235
  %v245 = vunpack.c.h.b16 %v235
  %v246 = vunpack.c.l.b16 %v236
  %v247 = vpack.c.b16 %v244, %v241
  %v248 = vpack.c.b16 %v245, %v242
  %v249 = vpack.c.b16 %v246, %v243
  %250 = vrot.lane.b32.xlu0 %v247, 106
  %v251 = vpop.permute.xlu0 %250
  %252 = vrot.lane.b32.xlu0 %v248, 106
  %v253 = vpop.permute.xlu0 %252
  %254 = vrot.lane.b32.xlu0 %v249, 106
  %v255 = vpop.permute.xlu0 %254
  %vm256 = vcmask 867328
  %v257 = vsel %vm256, %v251, %v253
  %v258 = vsel %vm256, %v253, %v255
  %261 = vst [vmem:[#allocation2 + $0x120] sm:$0xff] %v257
  %262 = vst.msk [vmem:[#allocation2 + $0x128] sm:$0xff] %vm31, %v258
  %v263 = vld [vmem:[%s0] sm:$0xff]
  %v264 = vld [vmem:[%s0 + $0x8] sm:$0xf]
  %v265 = vld [vmem:[%s0 + $0xc] sm:$0xff]
  %v266 = vld [vmem:[%s0 + $0x14] sm:$0xf]
  %v271 = vunpack.c.l.b16 %v263
  %v272 = vunpack.c.h.b16 %v263
  %v273 = vunpack.c.l.b16 %v264
  %v274 = vunpack.c.l.b16 %v265
  %v275 = vunpack.c.h.b16 %v265
  %v276 = vunpack.c.l.b16 %v266
  %v277 = vpack.c.b16 %v274, %v271
  %v278 = vpack.c.b16 %v275, %v272
  %v279 = vpack.c.b16 %v276, %v273
  %280 = vrot.lane.b32.xlu0 %v277, 92
  %v281 = vpop.permute.xlu0 %280
  %282 = vrot.lane.b32.xlu0 %v278, 92
  %v283 = vpop.permute.xlu0 %282
  %284 = vrot.lane.b32.xlu0 %v279, 92
  %v285 = vpop.permute.xlu0 %284
  %vm286 = vcmask 752640
  %v287 = vsel %vm286, %v281, %v283
  %v288 = vsel %vm286, %v283, %v285
  %291 = vst [vmem:[#allocation2 + $0x140] sm:$0xff] %v287
  %292 = vst.msk [vmem:[#allocation2 + $0x148] sm:$0xff] %vm31, %v288
  %v293 = vld [vmem:[%s0] sm:$0xff]
  %v294 = vld [vmem:[%s0 + $0x8] sm:$0xf]
  %v295 = vld [vmem:[%s0 + $0xc] sm:$0xff]
  %v296 = vld [vmem:[%s0 + $0x14] sm:$0xf]
  %v301 = vunpack.c.l.b16 %v293
  %v302 = vunpack.c.h.b16 %v293
  %v303 = vunpack.c.l.b16 %v294
  %v304 = vunpack.c.l.b16 %v295
  %v305 = vunpack.c.h.b16 %v295
  %v306 = vunpack.c.l.b16 %v296
  %v307 = vpack.c.b16 %v304, %v301
  %v308 = vpack.c.b16 %v305, %v302
  %v309 = vpack.c.b16 %v306, %v303
  %310 = vrot.lane.b32.xlu0 %v307, 91
  %v311 = vpop.permute.xlu0 %310
  %312 = vrot.lane.b32.xlu0 %v308, 91
  %v313 = vpop.permute.xlu0 %312
  %314 = vrot.lane.b32.xlu0 %v309, 91
  %v315 = vpop.permute.xlu0 %314
  %vm316 = vcmask 744448
  %v317 = vsel %vm316, %v311, %v313
  %v318 = vsel %vm316, %v313, %v315
  %321 = vst [vmem:[#allocation2 + $0x160] sm:$0xff] %v317
  %322 = vst.msk [vmem:[#allocation2 + $0x168] sm:$0xff] %vm31, %v318
  %v323 = vld [vmem:[%s0] sm:$0xff]
  %v324 = vld [vmem:[%s0 + $0x8] sm:$0xf]
  %v325 = vld [vmem:[%s0 + $0xc] sm:$0xff]
  %v326 = vld [vmem:[%s0 + $0x14] sm:$0xf]
  %v331 = vunpack.c.l.b16 %v323
  %v332 = vunpack.c.h.b16 %v323
  %v333 = vunpack.c.l.b16 %v324
  %v334 = vunpack.c.l.b16 %v325
  %v335 = vunpack.c.h.b16 %v325
  %v336 = vunpack.c.l.b16 %v326
  %v337 = vpack.c.b16 %v334, %v331
  %v338 = vpack.c.b16 %v335, %v332
  %v339 = vpack.c.b16 %v336, %v333
  %340 = vrot.lane.b32.xlu0 %v337, 90
  %v341 = vpop.permute.xlu0 %340
  %342 = vrot.lane.b32.xlu0 %v338, 90
  %v343 = vpop.permute.xlu0 %342
  %344 = vrot.lane.b32.xlu0 %v339, 90
  %v345 = vpop.permute.xlu0 %344
  %vm346 = vcmask 736256
  %v347 = vsel %vm346, %v341, %v343
  %v348 = vsel %vm346, %v343, %v345
  %351 = vst [vmem:[#allocation2 + $0x180] sm:$0xff] %v347
  %352 = vst.msk [vmem:[#allocation2 + $0x188] sm:$0xff] %vm31, %v348
  %v353 = vld [vmem:[%s0] sm:$0xff]
  %v354 = vld [vmem:[%s0 + $0x8] sm:$0xf]
  %v355 = vld [vmem:[%s0 + $0xc] sm:$0xff]
  %v356 = vld [vmem:[%s0 + $0x14] sm:$0xf]
  %v361 = vunpack.c.l.b16 %v353
  %v362 = vunpack.c.h.b16 %v353
  %v363 = vunpack.c.l.b16 %v354
  %v364 = vunpack.c.l.b16 %v355
  %v365 = vunpack.c.h.b16 %v355
  %v366 = vunpack.c.l.b16 %v356
  %v367 = vpack.c.b16 %v364, %v361
  %v368 = vpack.c.b16 %v365, %v362
  %v369 = vpack.c.b16 %v366, %v363
  %370 = vrot.lane.b32.xlu0 %v367, 89
  %v371 = vpop.permute.xlu0 %370
  %372 = vrot.lane.b32.xlu0 %v368, 89
  %v373 = vpop.permute.xlu0 %372
  %374 = vrot.lane.b32.xlu0 %v369, 89
  %v375 = vpop.permute.xlu0 %374
  %vm376 = vcmask 728064
  %v377 = vsel %vm376, %v371, %v373
  %v378 = vsel %vm376, %v373, %v375
  %381 = vst [vmem:[#allocation2 + $0x1a0] sm:$0xff] %v377
  %382 = vst.msk [vmem:[#allocation2 + $0x1a8] sm:$0xff] %vm31, %v378
  %v383 = vld [vmem:[%s0] sm:$0xff]
  %v384 = vld [vmem:[%s0 + $0x8] sm:$0xf]
  %v385 = vld [vmem:[%s0 + $0xc] sm:$0xff]
  %v386 = vld [vmem:[%s0 + $0x14] sm:$0xf]
  %v391 = vunpack.c.l.b16 %v383
  %v392 = vunpack.c.h.b16 %v383
  %v393 = vunpack.c.l.b16 %v384
  %v394 = vunpack.c.l.b16 %v385
  %v395 = vunpack.c.h.b16 %v385
  %v396 = vunpack.c.l.b16 %v386
  %v397 = vpack.c.b16 %v394, %v391
  %v398 = vpack.c.b16 %v395, %v392
  %v399 = vpack.c.b16 %v396, %v393
  %400 = vrot.lane.b32.xlu0 %v397, 88
  %v401 = vpop.permute.xlu0 %400
  %402 = vrot.lane.b32.xlu0 %v398, 88
  %v403 = vpop.permute.xlu0 %402
  %404 = vrot.lane.b32.xlu0 %v399, 88
  %v405 = vpop.permute.xlu0 %404
  %vm406 = vcmask 719872
  %v407 = vsel %vm406, %v401, %v403
  %v408 = vsel %vm406, %v403, %v405
  %411 = vst [vmem:[#allocation2 + $0x1c0] sm:$0xff] %v407
  %412 = vst.msk [vmem:[#allocation2 + $0x1c8] sm:$0xff] %vm31, %v408
  %v413 = vld [vmem:[%s0] sm:$0xff]
  %v414 = vld [vmem:[%s0 + $0x8] sm:$0xf]
  %v415 = vld [vmem:[%s0 + $0xc] sm:$0xff]
  %v416 = vld [vmem:[%s0 + $0x14] sm:$0xf]
  %v421 = vunpack.c.l.b16 %v413
  %v422 = vunpack.c.h.b16 %v413
  %v423 = vunpack.c.l.b16 %v414
  %v424 = vunpack.c.l.b16 %v415
  %v425 = vunpack.c.h.b16 %v415
  %v426 = vunpack.c.l.b16 %v416
  %v427 = vpack.c.b16 %v424, %v421
  %v428 = vpack.c.b16 %v425, %v422
  %v429 = vpack.c.b16 %v426, %v423
  %430 = vrot.lane.b32.xlu0 %v427, 74
  %v431 = vpop.permute.xlu0 %430
  %432 = vrot.lane.b32.xlu0 %v428, 74
  %v433 = vpop.permute.xlu0 %432
  %434 = vrot.lane.b32.xlu0 %v429, 74
  %v435 = vpop.permute.xlu0 %434
  %vm436 = vcmask 605184
  %v437 = vsel %vm436, %v431, %v433
  %v438 = vsel %vm436, %v433, %v435
  %441 = vst [vmem:[#allocation2 + $0x1e0] sm:$0xff] %v437
  %442 = vst.msk [vmem:[#allocation2 + $0x1e8] sm:$0xff] %vm31, %v438
  %v443 = vld [vmem:[%s0] sm:$0xff]
  %v444 = vld [vmem:[%s0 + $0x8] sm:$0xf]
  %v445 = vld [vmem:[%s0 + $0xc] sm:$0xff]
  %v446 = vld [vmem:[%s0 + $0x14] sm:$0xf]
  %v451 = vunpack.c.l.b16 %v443
  %v452 = vunpack.c.h.b16 %v443
  %v453 = vunpack.c.l.b16 %v444
  %v454 = vunpack.c.l.b16 %v445
  %v455 = vunpack.c.h.b16 %v445
  %v456 = vunpack.c.l.b16 %v446
  %v457 = vpack.c.b16 %v454, %v451
  %v458 = vpack.c.b16 %v455, %v452
  %v459 = vpack.c.b16 %v456, %v453
  %460 = vrot.lane.b32.xlu0 %v457, 73
  %v461 = vpop.permute.xlu0 %460
  %462 = vrot.lane.b32.xlu0 %v458, 73
  %v463 = vpop.permute.xlu0 %462
  %464 = vrot.lane.b32.xlu0 %v459, 73
  %v465 = vpop.permute.xlu0 %464
  %vm466 = vcmask 596992
  %v467 = vsel %vm466, %v461, %v463
  %v468 = vsel %vm466, %v463, %v465
  %471 = vst [vmem:[#allocation2 + $0x200] sm:$0xff] %v467
  %472 = vst.msk [vmem:[#allocation2 + $0x208] sm:$0xff] %vm31, %v468
  %v473 = vld [vmem:[%s0] sm:$0xff]
  %v474 = vld [vmem:[%s0 + $0x8] sm:$0xf]
  %v475 = vld [vmem:[%s0 + $0xc] sm:$0xff]
  %v476 = vld [vmem:[%s0 + $0x14] sm:$0xf]
  %v481 = vunpack.c.l.b16 %v473
  %v482 = vunpack.c.h.b16 %v473
  %v483 = vunpack.c.l.b16 %v474
  %v484 = vunpack.c.l.b16 %v475
  %v485 = vunpack.c.h.b16 %v475
  %v486 = vunpack.c.l.b16 %v476
  %v487 = vpack.c.b16 %v484, %v481
  %v488 = vpack.c.b16 %v485, %v482
  %v489 = vpack.c.b16 %v486, %v483
  %490 = vrot.lane.b32.xlu0 %v487, 72
  %v491 = vpop.permute.xlu0 %490
  %492 = vrot.lane.b32.xlu0 %v488, 72
  %v493 = vpop.permute.xlu0 %492
  %494 = vrot.lane.b32.xlu0 %v489, 72
  %v495 = vpop.permute.xlu0 %494
  %vm496 = vcmask 588800
  %v497 = vsel %vm496, %v491, %v493
  %v498 = vsel %vm496, %v493, %v495
  %501 = vst [vmem:[#allocation2 + $0x220] sm:$0xff] %v497
  %502 = vst.msk [vmem:[#allocation2 + $0x228] sm:$0xff] %vm31, %v498
  %v503 = vld [vmem:[%s0] sm:$0xff]
  %v504 = vld [vmem:[%s0 + $0x8] sm:$0xf]
  %v505 = vld [vmem:[%s0 + $0xc] sm:$0xff]
  %v506 = vld [vmem:[%s0 + $0x14] sm:$0xf]
  %v511 = vunpack.c.l.b16 %v503
  %v512 = vunpack.c.h.b16 %v503
  %v513 = vunpack.c.l.b16 %v504
  %v514 = vunpack.c.l.b16 %v505
  %v515 = vunpack.c.h.b16 %v505
  %v516 = vunpack.c.l.b16 %v506
  %v517 = vpack.c.b16 %v514, %v511
  %v518 = vpack.c.b16 %v515, %v512
  %v519 = vpack.c.b16 %v516, %v513
  %520 = vrot.lane.b32.xlu0 %v517, 71
  %v521 = vpop.permute.xlu0 %520
  %522 = vrot.lane.b32.xlu0 %v518, 71
  %v523 = vpop.permute.xlu0 %522
  %524 = vrot.lane.b32.xlu0 %v519, 71
  %v525 = vpop.permute.xlu0 %524
  %vm526 = vcmask 580608
  %v527 = vsel %vm526, %v521, %v523
  %v528 = vsel %vm526, %v523, %v525
  %531 = vst [vmem:[#allocation2 + $0x240] sm:$0xff] %v527
  %532 = vst.msk [vmem:[#allocation2 + $0x248] sm:$0xff] %vm31, %v528
  %v533 = vld [vmem:[%s0] sm:$0xff]
  %v534 = vld [vmem:[%s0 + $0x8] sm:$0xf]
  %v535 = vld [vmem:[%s0 + $0xc] sm:$0xff]
  %v536 = vld [vmem:[%s0 + $0x14] sm:$0xf]
  %v541 = vunpack.c.l.b16 %v533
  %v542 = vunpack.c.h.b16 %v533
  %v543 = vunpack.c.l.b16 %v534
  %v544 = vunpack.c.l.b16 %v535
  %v545 = vunpack.c.h.b16 %v535
  %v546 = vunpack.c.l.b16 %v536
  %v547 = vpack.c.b16 %v544, %v541
  %v548 = vpack.c.b16 %v545, %v542
  %v549 = vpack.c.b16 %v546, %v543
  %550 = vrot.lane.b32.xlu0 %v547, 70
  %v551 = vpop.permute.xlu0 %550
  %552 = vrot.lane.b32.xlu0 %v548, 70
  %v553 = vpop.permute.xlu0 %552
  %554 = vrot.lane.b32.xlu0 %v549, 70
  %v555 = vpop.permute.xlu0 %554
  %vm556 = vcmask 572416
  %v557 = vsel %vm556, %v551, %v553
  %v558 = vsel %vm556, %v553, %v555
  %561 = vst [vmem:[#allocation2 + $0x260] sm:$0xff] %v557
  %562 = vst.msk [vmem:[#allocation2 + $0x268] sm:$0xff] %vm31, %v558
  %v563 = vld [vmem:[%s0] sm:$0xff]
  %v564 = vld [vmem:[%s0 + $0x8] sm:$0xf]
  %v565 = vld [vmem:[%s0 + $0xc] sm:$0xff]
  %v566 = vld [vmem:[%s0 + $0x14] sm:$0xf]
  %v571 = vunpack.c.l.b16 %v563
  %v572 = vunpack.c.h.b16 %v563
  %v573 = vunpack.c.l.b16 %v564
  %v574 = vunpack.c.l.b16 %v565
  %v575 = vunpack.c.h.b16 %v565
  %v576 = vunpack.c.l.b16 %v566
  %v577 = vpack.c.b16 %v574, %v571
  %v578 = vpack.c.b16 %v575, %v572
  %v579 = vpack.c.b16 %v576, %v573
  %580 = vrot.lane.b32.xlu0 %v577, 56
  %v581 = vpop.permute.xlu0 %580
  %582 = vrot.lane.b32.xlu0 %v578, 56
  %v583 = vpop.permute.xlu0 %582
  %584 = vrot.lane.b32.xlu0 %v579, 56
  %v585 = vpop.permute.xlu0 %584
  %vm586 = vcmask 457728
  %v587 = vsel %vm586, %v581, %v583
  %v588 = vsel %vm586, %v583, %v585
  %591 = vst [vmem:[#allocation2 + $0x280] sm:$0xff] %v587
  %592 = vst.msk [vmem:[#allocation2 + $0x288] sm:$0xff] %vm31, %v588
  %v593 = vld [vmem:[%s0] sm:$0xff]
  %v594 = vld [vmem:[%s0 + $0x8] sm:$0xf]
  %v595 = vld [vmem:[%s0 + $0xc] sm:$0xff]
  %v596 = vld [vmem:[%s0 + $0x14] sm:$0xf]
  %v601 = vunpack.c.l.b16 %v593
  %v602 = vunpack.c.h.b16 %v593
  %v603 = vunpack.c.l.b16 %v594
  %v604 = vunpack.c.l.b16 %v595
  %v605 = vunpack.c.h.b16 %v595
  %v606 = vunpack.c.l.b16 %v596
  %v607 = vpack.c.b16 %v604, %v601
  %v608 = vpack.c.b16 %v605, %v602
  %v609 = vpack.c.b16 %v606, %v603
  %610 = vrot.lane.b32.xlu0 %v607, 55
  %v611 = vpop.permute.xlu0 %610
  %612 = vrot.lane.b32.xlu0 %v608, 55
  %v613 = vpop.permute.xlu0 %612
  %614 = vrot.lane.b32.xlu0 %v609, 55
  %v615 = vpop.permute.xlu0 %614
  %vm616 = vcmask 449536
  %v617 = vsel %vm616, %v611, %v613
  %v618 = vsel %vm616, %v613, %v615
  %621 = vst [vmem:[#allocation2 + $0x2a0] sm:$0xff] %v617
  %622 = vst.msk [vmem:[#allocation2 + $0x2a8] sm:$0xff] %vm31, %v618
  %v623 = vld [vmem:[%s0] sm:$0xff]
  %v624 = vld [vmem:[%s0 + $0x8] sm:$0xf]
  %v625 = vld [vmem:[%s0 + $0xc] sm:$0xff]
  %v626 = vld [vmem:[%s0 + $0x14] sm:$0xf]
  %v631 = vunpack.c.l.b16 %v623
  %v632 = vunpack.c.h.b16 %v623
  %v633 = vunpack.c.l.b16 %v624
  %v634 = vunpack.c.l.b16 %v625
  %v635 = vunpack.c.h.b16 %v625
  %v636 = vunpack.c.l.b16 %v626
  %v637 = vpack.c.b16 %v634, %v631
  %v638 = vpack.c.b16 %v635, %v632
  %v639 = vpack.c.b16 %v636, %v633
  %640 = vrot.lane.b32.xlu0 %v637, 54
  %v641 = vpop.permute.xlu0 %640
  %642 = vrot.lane.b32.xlu0 %v638, 54
  %v643 = vpop.permute.xlu0 %642
  %644 = vrot.lane.b32.xlu0 %v639, 54
  %v645 = vpop.permute.xlu0 %644
  %vm646 = vcmask 441344
  %v647 = vsel %vm646, %v641, %v643
  %v648 = vsel %vm646, %v643, %v645
  %651 = vst [vmem:[#allocation2 + $0x2c0] sm:$0xff] %v647
  %652 = vst.msk [vmem:[#allocation2 + $0x2c8] sm:$0xff] %vm31, %v648
  %v653 = vld [vmem:[%s0] sm:$0xff]
  %v654 = vld [vmem:[%s0 + $0x8] sm:$0xf]
  %v655 = vld [vmem:[%s0 + $0xc] sm:$0xff]
  %v656 = vld [vmem:[%s0 + $0x14] sm:$0xf]
  %v661 = vunpack.c.l.b16 %v653
  %v662 = vunpack.c.h.b16 %v653
  %v663 = vunpack.c.l.b16 %v654
  %v664 = vunpack.c.l.b16 %v655
  %v665 = vunpack.c.h.b16 %v655
  %v666 = vunpack.c.l.b16 %v656
  %v667 = vpack.c.b16 %v664, %v661
  %v668 = vpack.c.b16 %v665, %v662
  %v669 = vpack.c.b16 %v666, %v663
  %670 = vrot.lane.b32.xlu0 %v667, 53
  %v671 = vpop.permute.xlu0 %670
  %672 = vrot.lane.b32.xlu0 %v668, 53
  %v673 = vpop.permute.xlu0 %672
  %674 = vrot.lane.b32.xlu0 %v669, 53
  %v675 = vpop.permute.xlu0 %674
  %vm676 = vcmask 433152
  %v677 = vsel %vm676, %v671, %v673
  %v678 = vsel %vm676, %v673, %v675
  %681 = vst [vmem:[#allocation2 + $0x2e0] sm:$0xff] %v677
  %682 = vst.msk [vmem:[#allocation2 + $0x2e8] sm:$0xff] %vm31, %v678
  %v683 = vld [vmem:[%s0] sm:$0xff]
  %v684 = vld [vmem:[%s0 + $0x8] sm:$0xf]
  %v685 = vld [vmem:[%s0 + $0xc] sm:$0xff]
  %v686 = vld [vmem:[%s0 + $0x14] sm:$0xf]
  %v691 = vunpack.c.l.b16 %v683
  %v692 = vunpack.c.h.b16 %v683
  %v693 = vunpack.c.l.b16 %v684
  %v694 = vunpack.c.l.b16 %v685
  %v695 = vunpack.c.h.b16 %v685
  %v696 = vunpack.c.l.b16 %v686
  %v697 = vpack.c.b16 %v694, %v691
  %v698 = vpack.c.b16 %v695, %v692
  %v699 = vpack.c.b16 %v696, %v693
  %700 = vrot.lane.b32.xlu0 %v697, 52
  %v701 = vpop.permute.xlu0 %700
  %702 = vrot.lane.b32.xlu0 %v698, 52
  %v703 = vpop.permute.xlu0 %702
  %704 = vrot.lane.b32.xlu0 %v699, 52
  %v705 = vpop.permute.xlu0 %704
  %vm706 = vcmask 424960
  %v707 = vsel %vm706, %v701, %v703
  %v708 = vsel %vm706, %v703, %v705
  %711 = vst [vmem:[#allocation2 + $0x300] sm:$0xff] %v707
  %712 = vst.msk [vmem:[#allocation2 + $0x308] sm:$0xff] %vm31, %v708
  %vm713 = vcmask 1048512
  %714 = vst.msk [vmem:[#allocation2 + $0x8] sm:$0xff] %vm713, 0
  %715 = vst.msk [vmem:[#allocation2 + $0x28] sm:$0xff] %vm713, 0
  %716 = vst.msk [vmem:[#allocation2 + $0x48] sm:$0xff] %vm713, 0
  %717 = vst.msk [vmem:[#allocation2 + $0x68] sm:$0xff] %vm713, 0
  %718 = vst.msk [vmem:[#allocation2 + $0x88] sm:$0xff] %vm713, 0
  %719 = vst.msk [vmem:[#allocation2 + $0xa8] sm:$0xff] %vm713, 0
  %720 = vst.msk [vmem:[#allocation2 + $0xc8] sm:$0xff] %vm713, 0
  %721 = vst.msk [vmem:[#allocation2 + $0xe8] sm:$0xff] %vm713, 0
  %722 = vst.msk [vmem:[#allocation2 + $0x108] sm:$0xff] %vm713, 0
  %723 = vst.msk [vmem:[#allocation2 + $0x128] sm:$0xff] %vm713, 0
  %724 = vst.msk [vmem:[#allocation2 + $0x148] sm:$0xff] %vm713, 0
  %725 = vst.msk [vmem:[#allocation2 + $0x168] sm:$0xff] %vm713, 0
  %726 = vst.msk [vmem:[#allocation2 + $0x188] sm:$0xff] %vm713, 0
  %727 = vst.msk [vmem:[#allocation2 + $0x1a8] sm:$0xff] %vm713, 0
  %728 = vst.msk [vmem:[#allocation2 + $0x1c8] sm:$0xff] %vm713, 0
  %729 = vst.msk [vmem:[#allocation2 + $0x1e8] sm:$0xff] %vm713, 0
  %730 = vst.msk [vmem:[#allocation2 + $0x208] sm:$0xff] %vm713, 0
  %731 = vst.msk [vmem:[#allocation2 + $0x228] sm:$0xff] %vm713, 0
  %732 = vst.msk [vmem:[#allocation2 + $0x248] sm:$0xff] %vm713, 0
  %733 = vst.msk [vmem:[#allocation2 + $0x268] sm:$0xff] %vm713, 0
  %734 = vst.msk [vmem:[#allocation2 + $0x288] sm:$0xff] %vm713, 0
  %735 = vst.msk [vmem:[#allocation2 + $0x2a8] sm:$0xff] %vm713, 0
  %736 = vst.msk [vmem:[#allocation2 + $0x2c8] sm:$0xff] %vm713, 0
  %737 = vst.msk [vmem:[#allocation2 + $0x2e8] sm:$0xff] %vm713, 0
  %738 = vst.msk [vmem:[#allocation2 + $0x308] sm:$0xff] %vm713, 0
  %s739 = scalar_lea.vmem %s0, 24
  %v740 = vld [vmem:[%s739] sm:$0xff]
  %v741 = vld [vmem:[%s739 + $0xc] sm:$0xff]
  %v744 = vunpack.c.l.b16 %v740
  %v745 = vunpack.c.h.b16 %v740
  %v746 = vunpack.c.l.b16 %v741
  %v747 = vunpack.c.h.b16 %v741
  %v748 = vpack.c.b16 %v746, %v744
  %v749 = vpack.c.b16 %v747, %v745
  %752 = vst [vmem:[#allocation2 + $0x10] sm:$0xff] %v748
  %753 = vst.msk [vmem:[#allocation2 + $0x18] sm:$0xff] %vm31, %v749
  %v754 = vld [vmem:[%s739] sm:$0xff]
  %v755 = vld [vmem:[%s739 + $0xc] sm:$0xff]
  %v758 = vunpack.c.l.b16 %v754
  %v759 = vunpack.c.h.b16 %v754
  %v760 = vunpack.c.l.b16 %v755
  %v761 = vunpack.c.h.b16 %v755
  %v762 = vpack.c.b16 %v760, %v758
  %v763 = vpack.c.b16 %v761, %v759
  %764 = vrot.lane.b32.xlu0 %v762, 127
  %v765 = vpop.permute.xlu0 %764
  %766 = vrot.lane.b32.xlu0 %v763, 127
  %v767 = vpop.permute.xlu0 %766
  %v768 = vsel %vm47, %v765, %v767
  %771 = vst [vmem:[#allocation2 + $0x30] sm:$0xff] %v768
  %772 = vst.msk [vmem:[#allocation2 + $0x38] sm:$0xff] %vm31, %v767
  %v773 = vld [vmem:[%s739] sm:$0xff]
  %v774 = vld [vmem:[%s739 + $0xc] sm:$0xff]
  %v777 = vunpack.c.l.b16 %v773
  %v778 = vunpack.c.h.b16 %v773
  %v779 = vunpack.c.l.b16 %v774
  %v780 = vunpack.c.h.b16 %v774
  %v781 = vpack.c.b16 %v779, %v777
  %v782 = vpack.c.b16 %v780, %v778
  %783 = vrot.lane.b32.xlu0 %v781, 126
  %v784 = vpop.permute.xlu0 %783
  %785 = vrot.lane.b32.xlu0 %v782, 126
  %v786 = vpop.permute.xlu0 %785
  %v787 = vsel %vm67, %v784, %v786
  %790 = vst [vmem:[#allocation2 + $0x50] sm:$0xff] %v787
  %791 = vst.msk [vmem:[#allocation2 + $0x58] sm:$0xff] %vm31, %v786
  %v792 = vld [vmem:[%s739] sm:$0xff]
  %v793 = vld [vmem:[%s739 + $0xc] sm:$0xff]
  %v796 = vunpack.c.l.b16 %v792
  %v797 = vunpack.c.h.b16 %v792
  %v798 = vunpack.c.l.b16 %v793
  %v799 = vunpack.c.h.b16 %v793
  %v800 = vpack.c.b16 %v798, %v796
  %v801 = vpack.c.b16 %v799, %v797
  %802 = vrot.lane.b32.xlu0 %v800, 125
  %v803 = vpop.permute.xlu0 %802
  %804 = vrot.lane.b32.xlu0 %v801, 125
  %v805 = vpop.permute.xlu0 %804
  %v806 = vsel %vm87, %v803, %v805
  %809 = vst [vmem:[#allocation2 + $0x70] sm:$0xff] %v806
  %810 = vst.msk [vmem:[#allocation2 + $0x78] sm:$0xff] %vm31, %v805
  %v811 = vld [vmem:[%s739] sm:$0xff]
  %v812 = vld [vmem:[%s739 + $0xc] sm:$0xff]
  %v815 = vunpack.c.l.b16 %v811
  %v816 = vunpack.c.h.b16 %v811
  %v817 = vunpack.c.l.b16 %v812
  %v818 = vunpack.c.h.b16 %v812
  %v819 = vpack.c.b16 %v817, %v815
  %v820 = vpack.c.b16 %v818, %v816
  %821 = vrot.lane.b32.xlu0 %v819, 124
  %v822 = vpop.permute.xlu0 %821
  %823 = vrot.lane.b32.xlu0 %v820, 124
  %v824 = vpop.permute.xlu0 %823
  %v825 = vsel %vm107, %v822, %v824
  %828 = vst [vmem:[#allocation2 + $0x90] sm:$0xff] %v825
  %829 = vst.msk [vmem:[#allocation2 + $0x98] sm:$0xff] %vm31, %v824
  %v830 = vld [vmem:[%s739] sm:$0xff]
  %v831 = vld [vmem:[%s739 + $0x8] sm:$0xf]
  %v832 = vld [vmem:[%s739 + $0xc] sm:$0xff]
  %v833 = vld [vmem:[%s739 + $0x14] sm:$0xf]
  %v838 = vunpack.c.l.b16 %v830
  %v839 = vunpack.c.h.b16 %v830
  %v840 = vunpack.c.l.b16 %v831
  %v841 = vunpack.c.l.b16 %v832
  %v842 = vunpack.c.h.b16 %v832
  %v843 = vunpack.c.l.b16 %v833
  %v844 = vpack.c.b16 %v841, %v838
  %v845 = vpack.c.b16 %v842, %v839
  %v846 = vpack.c.b16 %v843, %v840
  %847 = vrot.lane.b32.xlu0 %v844, 110
  %v848 = vpop.permute.xlu0 %847
  %849 = vrot.lane.b32.xlu0 %v845, 110
  %v850 = vpop.permute.xlu0 %849
  %851 = vrot.lane.b32.xlu0 %v846, 110
  %v852 = vpop.permute.xlu0 %851
  %v853 = vsel %vm136, %v848, %v850
  %v854 = vsel %vm136, %v850, %v852
  %857 = vst [vmem:[#allocation2 + $0xb0] sm:$0xff] %v853
  %858 = vst.msk [vmem:[#allocation2 + $0xb8] sm:$0xff] %vm31, %v854
  %v859 = vld [vmem:[%s739] sm:$0xff]
  %v860 = vld [vmem:[%s739 + $0x8] sm:$0xf]
  %v861 = vld [vmem:[%s739 + $0xc] sm:$0xff]
  %v862 = vld [vmem:[%s739 + $0x14] sm:$0xf]
  %v867 = vunpack.c.l.b16 %v859
  %v868 = vunpack.c.h.b16 %v859
  %v869 = vunpack.c.l.b16 %v860
  %v870 = vunpack.c.l.b16 %v861
  %v871 = vunpack.c.h.b16 %v861
  %v872 = vunpack.c.l.b16 %v862
  %v873 = vpack.c.b16 %v870, %v867
  %v874 = vpack.c.b16 %v871, %v868
  %v875 = vpack.c.b16 %v872, %v869
  %876 = vrot.lane.b32.xlu0 %v873, 109
  %v877 = vpop.permute.xlu0 %876
  %878 = vrot.lane.b32.xlu0 %v874, 109
  %v879 = vpop.permute.xlu0 %878
  %880 = vrot.lane.b32.xlu0 %v875, 109
  %v881 = vpop.permute.xlu0 %880
  %v882 = vsel %vm166, %v877, %v879
  %v883 = vsel %vm166, %v879, %v881
  %886 = vst [vmem:[#allocation2 + $0xd0] sm:$0xff] %v882
  %887 = vst.msk [vmem:[#allocation2 + $0xd8] sm:$0xff] %vm31, %v883
  %v888 = vld [vmem:[%s739] sm:$0xff]
  %v889 = vld [vmem:[%s739 + $0x8] sm:$0xf]
  %v890 = vld [vmem:[%s739 + $0xc] sm:$0xff]
  %v891 = vld [vmem:[%s739 + $0x14] sm:$0xf]
  %v896 = vunpack.c.l.b16 %v888
  %v897 = vunpack.c.h.b16 %v888
  %v898 = vunpack.c.l.b16 %v889
  %v899 = vunpack.c.l.b16 %v890
  %v900 = vunpack.c.h.b16 %v890
  %v901 = vunpack.c.l.b16 %v891
  %v902 = vpack.c.b16 %v899, %v896
  %v903 = vpack.c.b16 %v900, %v897
  %v904 = vpack.c.b16 %v901, %v898
  %905 = vrot.lane.b32.xlu0 %v902, 108
  %v906 = vpop.permute.xlu0 %905
  %907 = vrot.lane.b32.xlu0 %v903, 108
  %v908 = vpop.permute.xlu0 %907
  %909 = vrot.lane.b32.xlu0 %v904, 108
  %v910 = vpop.permute.xlu0 %909
  %v911 = vsel %vm196, %v906, %v908
  %v912 = vsel %vm196, %v908, %v910
  %915 = vst [vmem:[#allocation2 + $0xf0] sm:$0xff] %v911
  %916 = vst.msk [vmem:[#allocation2 + $0xf8] sm:$0xff] %vm31, %v912
  %v917 = vld [vmem:[%s739] sm:$0xff]
  %v918 = vld [vmem:[%s739 + $0x8] sm:$0xf]
  %v919 = vld [vmem:[%s739 + $0xc] sm:$0xff]
  %v920 = vld [vmem:[%s739 + $0x14] sm:$0xf]
  %v925 = vunpack.c.l.b16 %v917
  %v926 = vunpack.c.h.b16 %v917
  %v927 = vunpack.c.l.b16 %v918
  %v928 = vunpack.c.l.b16 %v919
  %v929 = vunpack.c.h.b16 %v919
  %v930 = vunpack.c.l.b16 %v920
  %v931 = vpack.c.b16 %v928, %v925
  %v932 = vpack.c.b16 %v929, %v926
  %v933 = vpack.c.b16 %v930, %v927
  %934 = vrot.lane.b32.xlu0 %v931, 107
  %v935 = vpop.permute.xlu0 %934
  %936 = vrot.lane.b32.xlu0 %v932, 107
  %v937 = vpop.permute.xlu0 %936
  %938 = vrot.lane.b32.xlu0 %v933, 107
  %v939 = vpop.permute.xlu0 %938
  %v940 = vsel %vm226, %v935, %v937
  %v941 = vsel %vm226, %v937, %v939
  %944 = vst [vmem:[#allocation2 + $0x110] sm:$0xff] %v940
  %945 = vst.msk [vmem:[#allocation2 + $0x118] sm:$0xff] %vm31, %v941
  %v946 = vld [vmem:[%s739] sm:$0xff]
  %v947 = vld [vmem:[%s739 + $0x8] sm:$0xf]
  %v948 = vld [vmem:[%s739 + $0xc] sm:$0xff]
  %v949 = vld [vmem:[%s739 + $0x14] sm:$0xf]
  %v954 = vunpack.c.l.b16 %v946
  %v955 = vunpack.c.h.b16 %v946
  %v956 = vunpack.c.l.b16 %v947
  %v957 = vunpack.c.l.b16 %v948
  %v958 = vunpack.c.h.b16 %v948
  %v959 = vunpack.c.l.b16 %v949
  %v960 = vpack.c.b16 %v957, %v954
  %v961 = vpack.c.b16 %v958, %v955
  %v962 = vpack.c.b16 %v959, %v956
  %963 = vrot.lane.b32.xlu0 %v960, 106
  %v964 = vpop.permute.xlu0 %963
  %965 = vrot.lane.b32.xlu0 %v961, 106
  %v966 = vpop.permute.xlu0 %965
  %967 = vrot.lane.b32.xlu0 %v962, 106
  %v968 = vpop.permute.xlu0 %967
  %v969 = vsel %vm256, %v964, %v966
  %v970 = vsel %vm256, %v966, %v968
  %973 = vst [vmem:[#allocation2 + $0x130] sm:$0xff] %v969
  %974 = vst.msk [vmem:[#allocation2 + $0x138] sm:$0xff] %vm31, %v970
  %v975 = vld [vmem:[%s739] sm:$0xff]
  %v976 = vld [vmem:[%s739 + $0x8] sm:$0xf]
  %v977 = vld [vmem:[%s739 + $0xc] sm:$0xff]
  %v978 = vld [vmem:[%s739 + $0x14] sm:$0xf]
  %v983 = vunpack.c.l.b16 %v975
  %v984 = vunpack.c.h.b16 %v975
  %v985 = vunpack.c.l.b16 %v976
  %v986 = vunpack.c.l.b16 %v977
  %v987 = vunpack.c.h.b16 %v977
  %v988 = vunpack.c.l.b16 %v978
  %v989 = vpack.c.b16 %v986, %v983
  %v990 = vpack.c.b16 %v987, %v984
  %v991 = vpack.c.b16 %v988, %v985
  %992 = vrot.lane.b32.xlu0 %v989, 92
  %v993 = vpop.permute.xlu0 %992
  %994 = vrot.lane.b32.xlu0 %v990, 92
  %v995 = vpop.permute.xlu0 %994
  %996 = vrot.lane.b32.xlu0 %v991, 92
  %v997 = vpop.permute.xlu0 %996
  %v998 = vsel %vm286, %v993, %v995
  %v999 = vsel %vm286, %v995, %v997
  %1002 = vst [vmem:[#allocation2 + $0x150] sm:$0xff] %v998
  %1003 = vst.msk [vmem:[#allocation2 + $0x158] sm:$0xff] %vm31, %v999
  %v1004 = vld [vmem:[%s739] sm:$0xff]
  %v1005 = vld [vmem:[%s739 + $0x8] sm:$0xf]
  %v1006 = vld [vmem:[%s739 + $0xc] sm:$0xff]
  %v1007 = vld [vmem:[%s739 + $0x14] sm:$0xf]
  %v1012 = vunpack.c.l.b16 %v1004
  %v1013 = vunpack.c.h.b16 %v1004
  %v1014 = vunpack.c.l.b16 %v1005
  %v1015 = vunpack.c.l.b16 %v1006
  %v1016 = vunpack.c.h.b16 %v1006
  %v1017 = vunpack.c.l.b16 %v1007
  %v1018 = vpack.c.b16 %v1015, %v1012
  %v1019 = vpack.c.b16 %v1016, %v1013
  %v1020 = vpack.c.b16 %v1017, %v1014
  %1021 = vrot.lane.b32.xlu0 %v1018, 91
  %v1022 = vpop.permute.xlu0 %1021
  %1023 = vrot.lane.b32.xlu0 %v1019, 91
  %v1024 = vpop.permute.xlu0 %1023
  %1025 = vrot.lane.b32.xlu0 %v1020, 91
  %v1026 = vpop.permute.xlu0 %1025
  %v1027 = vsel %vm316, %v1022, %v1024
  %v1028 = vsel %vm316, %v1024, %v1026
  %1031 = vst [vmem:[#allocation2 + $0x170] sm:$0xff] %v1027
  %1032 = vst.msk [vmem:[#allocation2 + $0x178] sm:$0xff] %vm31, %v1028
  %v1033 = vld [vmem:[%s739] sm:$0xff]
  %v1034 = vld [vmem:[%s739 + $0x8] sm:$0xf]
  %v1035 = vld [vmem:[%s739 + $0xc] sm:$0xff]
  %v1036 = vld [vmem:[%s739 + $0x14] sm:$0xf]
  %v1041 = vunpack.c.l.b16 %v1033
  %v1042 = vunpack.c.h.b16 %v1033
  %v1043 = vunpack.c.l.b16 %v1034
  %v1044 = vunpack.c.l.b16 %v1035
  %v1045 = vunpack.c.h.b16 %v1035
  %v1046 = vunpack.c.l.b16 %v1036
  %v1047 = vpack.c.b16 %v1044, %v1041
  %v1048 = vpack.c.b16 %v1045, %v1042
  %v1049 = vpack.c.b16 %v1046, %v1043
  %1050 = vrot.lane.b32.xlu0 %v1047, 90
  %v1051 = vpop.permute.xlu0 %1050
  %1052 = vrot.lane.b32.xlu0 %v1048, 90
  %v1053 = vpop.permute.xlu0 %1052
  %1054 = vrot.lane.b32.xlu0 %v1049, 90
  %v1055 = vpop.permute.xlu0 %1054
  %v1056 = vsel %vm346, %v1051, %v1053
  %v1057 = vsel %vm346, %v1053, %v1055
  %1060 = vst [vmem:[#allocation2 + $0x190] sm:$0xff] %v1056
  %1061 = vst.msk [vmem:[#allocation2 + $0x198] sm:$0xff] %vm31, %v1057
  %v1062 = vld [vmem:[%s739] sm:$0xff]
  %v1063 = vld [vmem:[%s739 + $0x8] sm:$0xf]
  %v1064 = vld [vmem:[%s739 + $0xc] sm:$0xff]
  %v1065 = vld [vmem:[%s739 + $0x14] sm:$0xf]
  %v1070 = vunpack.c.l.b16 %v1062
  %v1071 = vunpack.c.h.b16 %v1062
  %v1072 = vunpack.c.l.b16 %v1063
  %v1073 = vunpack.c.l.b16 %v1064
  %v1074 = vunpack.c.h.b16 %v1064
  %v1075 = vunpack.c.l.b16 %v1065
  %v1076 = vpack.c.b16 %v1073, %v1070
  %v1077 = vpack.c.b16 %v1074, %v1071
  %v1078 = vpack.c.b16 %v1075, %v1072
  %1079 = vrot.lane.b32.xlu0 %v1076, 89
  %v1080 = vpop.permute.xlu0 %1079
  %1081 = vrot.lane.b32.xlu0 %v1077, 89
  %v1082 = vpop.permute.xlu0 %1081
  %1083 = vrot.lane.b32.xlu0 %v1078, 89
  %v1084 = vpop.permute.xlu0 %1083
  %v1085 = vsel %vm376, %v1080, %v1082
  %v1086 = vsel %vm376, %v1082, %v1084
  %1089 = vst [vmem:[#allocation2 + $0x1b0] sm:$0xff] %v1085
  %1090 = vst.msk [vmem:[#allocation2 + $0x1b8] sm:$0xff] %vm31, %v1086
  %v1091 = vld [vmem:[%s739] sm:$0xff]
  %v1092 = vld [vmem:[%s739 + $0x8] sm:$0xf]
  %v1093 = vld [vmem:[%s739 + $0xc] sm:$0xff]
  %v1094 = vld [vmem:[%s739 + $0x14] sm:$0xf]
  %v1099 = vunpack.c.l.b16 %v1091
  %v1100 = vunpack.c.h.b16 %v1091
  %v1101 = vunpack.c.l.b16 %v1092
  %v1102 = vunpack.c.l.b16 %v1093
  %v1103 = vunpack.c.h.b16 %v1093
  %v1104 = vunpack.c.l.b16 %v1094
  %v1105 = vpack.c.b16 %v1102, %v1099
  %v1106 = vpack.c.b16 %v1103, %v1100
  %v1107 = vpack.c.b16 %v1104, %v1101
  %1108 = vrot.lane.b32.xlu0 %v1105, 88
  %v1109 = vpop.permute.xlu0 %1108
  %1110 = vrot.lane.b32.xlu0 %v1106, 88
  %v1111 = vpop.permute.xlu0 %1110
  %1112 = vrot.lane.b32.xlu0 %v1107, 88
  %v1113 = vpop.permute.xlu0 %1112
  %v1114 = vsel %vm406, %v1109, %v1111
  %v1115 = vsel %vm406, %v1111, %v1113
  %1118 = vst [vmem:[#allocation2 + $0x1d0] sm:$0xff] %v1114
  %1119 = vst.msk [vmem:[#allocation2 + $0x1d8] sm:$0xff] %vm31, %v1115
  %v1120 = vld [vmem:[%s739] sm:$0xff]
  %v1121 = vld [vmem:[%s739 + $0x8] sm:$0xf]
  %v1122 = vld [vmem:[%s739 + $0xc] sm:$0xff]
  %v1123 = vld [vmem:[%s739 + $0x14] sm:$0xf]
  %v1128 = vunpack.c.l.b16 %v1120
  %v1129 = vunpack.c.h.b16 %v1120
  %v1130 = vunpack.c.l.b16 %v1121
  %v1131 = vunpack.c.l.b16 %v1122
  %v1132 = vunpack.c.h.b16 %v1122
  %v1133 = vunpack.c.l.b16 %v1123
  %v1134 = vpack.c.b16 %v1131, %v1128
  %v1135 = vpack.c.b16 %v1132, %v1129
  %v1136 = vpack.c.b16 %v1133, %v1130
  %1137 = vrot.lane.b32.xlu0 %v1134, 74
  %v1138 = vpop.permute.xlu0 %1137
  %1139 = vrot.lane.b32.xlu0 %v1135, 74
  %v1140 = vpop.permute.xlu0 %1139
  %1141 = vrot.lane.b32.xlu0 %v1136, 74
  %v1142 = vpop.permute.xlu0 %1141
  %v1143 = vsel %vm436, %v1138, %v1140
  %v1144 = vsel %vm436, %v1140, %v1142
  %1147 = vst [vmem:[#allocation2 + $0x1f0] sm:$0xff] %v1143
  %1148 = vst.msk [vmem:[#allocation2 + $0x1f8] sm:$0xff] %vm31, %v1144
  %v1149 = vld [vmem:[%s739] sm:$0xff]
  %v1150 = vld [vmem:[%s739 + $0x8] sm:$0xf]
  %v1151 = vld [vmem:[%s739 + $0xc] sm:$0xff]
  %v1152 = vld [vmem:[%s739 + $0x14] sm:$0xf]
  %v1157 = vunpack.c.l.b16 %v1149
  %v1158 = vunpack.c.h.b16 %v1149
  %v1159 = vunpack.c.l.b16 %v1150
  %v1160 = vunpack.c.l.b16 %v1151
  %v1161 = vunpack.c.h.b16 %v1151
  %v1162 = vunpack.c.l.b16 %v1152
  %v1163 = vpack.c.b16 %v1160, %v1157
  %v1164 = vpack.c.b16 %v1161, %v1158
  %v1165 = vpack.c.b16 %v1162, %v1159
  %1166 = vrot.lane.b32.xlu0 %v1163, 73
  %v1167 = vpop.permute.xlu0 %1166
  %1168 = vrot.lane.b32.xlu0 %v1164, 73
  %v1169 = vpop.permute.xlu0 %1168
  %1170 = vrot.lane.b32.xlu0 %v1165, 73
  %v1171 = vpop.permute.xlu0 %1170
  %v1172 = vsel %vm466, %v1167, %v1169
  %v1173 = vsel %vm466, %v1169, %v1171
  %1176 = vst [vmem:[#allocation2 + $0x210] sm:$0xff] %v1172
  %1177 = vst.msk [vmem:[#allocation2 + $0x218] sm:$0xff] %vm31, %v1173
  %v1178 = vld [vmem:[%s739] sm:$0xff]
  %v1179 = vld [vmem:[%s739 + $0x8] sm:$0xf]
  %v1180 = vld [vmem:[%s739 + $0xc] sm:$0xff]
  %v1181 = vld [vmem:[%s739 + $0x14] sm:$0xf]
  %v1186 = vunpack.c.l.b16 %v1178
  %v1187 = vunpack.c.h.b16 %v1178
  %v1188 = vunpack.c.l.b16 %v1179
  %v1189 = vunpack.c.l.b16 %v1180
  %v1190 = vunpack.c.h.b16 %v1180
  %v1191 = vunpack.c.l.b16 %v1181
  %v1192 = vpack.c.b16 %v1189, %v1186
  %v1193 = vpack.c.b16 %v1190, %v1187
  %v1194 = vpack.c.b16 %v1191, %v1188
  %1195 = vrot.lane.b32.xlu0 %v1192, 72
  %v1196 = vpop.permute.xlu0 %1195
  %1197 = vrot.lane.b32.xlu0 %v1193, 72
  %v1198 = vpop.permute.xlu0 %1197
  %1199 = vrot.lane.b32.xlu0 %v1194, 72
  %v1200 = vpop.permute.xlu0 %1199
  %v1201 = vsel %vm496, %v1196, %v1198
  %v1202 = vsel %vm496, %v1198, %v1200
  %1205 = vst [vmem:[#allocation2 + $0x230] sm:$0xff] %v1201
  %1206 = vst.msk [vmem:[#allocation2 + $0x238] sm:$0xff] %vm31, %v1202
  %v1207 = vld [vmem:[%s739] sm:$0xff]
  %v1208 = vld [vmem:[%s739 + $0x8] sm:$0xf]
  %v1209 = vld [vmem:[%s739 + $0xc] sm:$0xff]
  %v1210 = vld [vmem:[%s739 + $0x14] sm:$0xf]
  %v1215 = vunpack.c.l.b16 %v1207
  %v1216 = vunpack.c.h.b16 %v1207
  %v1217 = vunpack.c.l.b16 %v1208
  %v1218 = vunpack.c.l.b16 %v1209
  %v1219 = vunpack.c.h.b16 %v1209
  %v1220 = vunpack.c.l.b16 %v1210
  %v1221 = vpack.c.b16 %v1218, %v1215
  %v1222 = vpack.c.b16 %v1219, %v1216
  %v1223 = vpack.c.b16 %v1220, %v1217
  %1224 = vrot.lane.b32.xlu0 %v1221, 71
  %v1225 = vpop.permute.xlu0 %1224
  %1226 = vrot.lane.b32.xlu0 %v1222, 71
  %v1227 = vpop.permute.xlu0 %1226
  %1228 = vrot.lane.b32.xlu0 %v1223, 71
  %v1229 = vpop.permute.xlu0 %1228
  %v1230 = vsel %vm526, %v1225, %v1227
  %v1231 = vsel %vm526, %v1227, %v1229
  %1234 = vst [vmem:[#allocation2 + $0x250] sm:$0xff] %v1230
  %1235 = vst.msk [vmem:[#allocation2 + $0x258] sm:$0xff] %vm31, %v1231
  %v1236 = vld [vmem:[%s739] sm:$0xff]
  %v1237 = vld [vmem:[%s739 + $0x8] sm:$0xf]
  %v1238 = vld [vmem:[%s739 + $0xc] sm:$0xff]
  %v1239 = vld [vmem:[%s739 + $0x14] sm:$0xf]
  %v1244 = vunpack.c.l.b16 %v1236
  %v1245 = vunpack.c.h.b16 %v1236
  %v1246 = vunpack.c.l.b16 %v1237
  %v1247 = vunpack.c.l.b16 %v1238
  %v1248 = vunpack.c.h.b16 %v1238
  %v1249 = vunpack.c.l.b16 %v1239
  %v1250 = vpack.c.b16 %v1247, %v1244
  %v1251 = vpack.c.b16 %v1248, %v1245
  %v1252 = vpack.c.b16 %v1249, %v1246
  %1253 = vrot.lane.b32.xlu0 %v1250, 70
  %v1254 = vpop.permute.xlu0 %1253
  %1255 = vrot.lane.b32.xlu0 %v1251, 70
  %v1256 = vpop.permute.xlu0 %1255
  %1257 = vrot.lane.b32.xlu0 %v1252, 70
  %v1258 = vpop.permute.xlu0 %1257
  %v1259 = vsel %vm556, %v1254, %v1256
  %v1260 = vsel %vm556, %v1256, %v1258
  %1263 = vst [vmem:[#allocation2 + $0x270] sm:$0xff] %v1259
  %1264 = vst.msk [vmem:[#allocation2 + $0x278] sm:$0xff] %vm31, %v1260
  %v1265 = vld [vmem:[%s739] sm:$0xff]
  %v1266 = vld [vmem:[%s739 + $0x8] sm:$0xf]
  %v1267 = vld [vmem:[%s739 + $0xc] sm:$0xff]
  %v1268 = vld [vmem:[%s739 + $0x14] sm:$0xf]
  %v1273 = vunpack.c.l.b16 %v1265
  %v1274 = vunpack.c.h.b16 %v1265
  %v1275 = vunpack.c.l.b16 %v1266
  %v1276 = vunpack.c.l.b16 %v1267
  %v1277 = vunpack.c.h.b16 %v1267
  %v1278 = vunpack.c.l.b16 %v1268
  %v1279 = vpack.c.b16 %v1276, %v1273
  %v1280 = vpack.c.b16 %v1277, %v1274
  %v1281 = vpack.c.b16 %v1278, %v1275
  %1282 = vrot.lane.b32.xlu0 %v1279, 56
  %v1283 = vpop.permute.xlu0 %1282
  %1284 = vrot.lane.b32.xlu0 %v1280, 56
  %v1285 = vpop.permute.xlu0 %1284
  %1286 = vrot.lane.b32.xlu0 %v1281, 56
  %v1287 = vpop.permute.xlu0 %1286
  %v1288 = vsel %vm586, %v1283, %v1285
  %v1289 = vsel %vm586, %v1285, %v1287
  %1292 = vst [vmem:[#allocation2 + $0x290] sm:$0xff] %v1288
  %1293 = vst.msk [vmem:[#allocation2 + $0x298] sm:$0xff] %vm31, %v1289
  %v1294 = vld [vmem:[%s739] sm:$0xff]
  %v1295 = vld [vmem:[%s739 + $0x8] sm:$0xf]
  %v1296 = vld [vmem:[%s739 + $0xc] sm:$0xff]
  %v1297 = vld [vmem:[%s739 + $0x14] sm:$0xf]
  %v1302 = vunpack.c.l.b16 %v1294
  %v1303 = vunpack.c.h.b16 %v1294
  %v1304 = vunpack.c.l.b16 %v1295
  %v1305 = vunpack.c.l.b16 %v1296
  %v1306 = vunpack.c.h.b16 %v1296
  %v1307 = vunpack.c.l.b16 %v1297
  %v1308 = vpack.c.b16 %v1305, %v1302
  %v1309 = vpack.c.b16 %v1306, %v1303
  %v1310 = vpack.c.b16 %v1307, %v1304
  %1311 = vrot.lane.b32.xlu0 %v1308, 55
  %v1312 = vpop.permute.xlu0 %1311
  %1313 = vrot.lane.b32.xlu0 %v1309, 55
  %v1314 = vpop.permute.xlu0 %1313
  %1315 = vrot.lane.b32.xlu0 %v1310, 55
  %v1316 = vpop.permute.xlu0 %1315
  %v1317 = vsel %vm616, %v1312, %v1314
  %v1318 = vsel %vm616, %v1314, %v1316
  %1321 = vst [vmem:[#allocation2 + $0x2b0] sm:$0xff] %v1317
  %1322 = vst.msk [vmem:[#allocation2 + $0x2b8] sm:$0xff] %vm31, %v1318
  %v1323 = vld [vmem:[%s739] sm:$0xff]
  %v1324 = vld [vmem:[%s739 + $0x8] sm:$0xf]
  %v1325 = vld [vmem:[%s739 + $0xc] sm:$0xff]
  %v1326 = vld [vmem:[%s739 + $0x14] sm:$0xf]
  %v1331 = vunpack.c.l.b16 %v1323
  %v1332 = vunpack.c.h.b16 %v1323
  %v1333 = vunpack.c.l.b16 %v1324
  %v1334 = vunpack.c.l.b16 %v1325
  %v1335 = vunpack.c.h.b16 %v1325
  %v1336 = vunpack.c.l.b16 %v1326
  %v1337 = vpack.c.b16 %v1334, %v1331
  %v1338 = vpack.c.b16 %v1335, %v1332
  %v1339 = vpack.c.b16 %v1336, %v1333
  %1340 = vrot.lane.b32.xlu0 %v1337, 54
  %v1341 = vpop.permute.xlu0 %1340
  %1342 = vrot.lane.b32.xlu0 %v1338, 54
  %v1343 = vpop.permute.xlu0 %1342
  %1344 = vrot.lane.b32.xlu0 %v1339, 54
  %v1345 = vpop.permute.xlu0 %1344
  %v1346 = vsel %vm646, %v1341, %v1343
  %v1347 = vsel %vm646, %v1343, %v1345
  %1350 = vst [vmem:[#allocation2 + $0x2d0] sm:$0xff] %v1346
  %1351 = vst.msk [vmem:[#allocation2 + $0x2d8] sm:$0xff] %vm31, %v1347
  %v1352 = vld [vmem:[%s739] sm:$0xff]
  %v1353 = vld [vmem:[%s739 + $0x8] sm:$0xf]
  %v1354 = vld [vmem:[%s739 + $0xc] sm:$0xff]
  %v1355 = vld [vmem:[%s739 + $0x14] sm:$0xf]
  %v1360 = vunpack.c.l.b16 %v1352
  %v1361 = vunpack.c.h.b16 %v1352
  %v1362 = vunpack.c.l.b16 %v1353
  %v1363 = vunpack.c.l.b16 %v1354
  %v1364 = vunpack.c.h.b16 %v1354
  %v1365 = vunpack.c.l.b16 %v1355
  %v1366 = vpack.c.b16 %v1363, %v1360
  %v1367 = vpack.c.b16 %v1364, %v1361
  %v1368 = vpack.c.b16 %v1365, %v1362
  %1369 = vrot.lane.b32.xlu0 %v1366, 53
  %v1370 = vpop.permute.xlu0 %1369
  %1371 = vrot.lane.b32.xlu0 %v1367, 53
  %v1372 = vpop.permute.xlu0 %1371
  %1373 = vrot.lane.b32.xlu0 %v1368, 53
  %v1374 = vpop.permute.xlu0 %1373
  %v1375 = vsel %vm676, %v1370, %v1372
  %v1376 = vsel %vm676, %v1372, %v1374
  %1379 = vst [vmem:[#allocation2 + $0x2f0] sm:$0xff] %v1375
  %1380 = vst.msk [vmem:[#allocation2 + $0x2f8] sm:$0xff] %vm31, %v1376
  %v1381 = vld [vmem:[%s739] sm:$0xff]
  %v1382 = vld [vmem:[%s739 + $0x8] sm:$0xf]
  %v1383 = vld [vmem:[%s739 + $0xc] sm:$0xff]
  %v1384 = vld [vmem:[%s739 + $0x14] sm:$0xf]
  %v1389 = vunpack.c.l.b16 %v1381
  %v1390 = vunpack.c.h.b16 %v1381
  %v1391 = vunpack.c.l.b16 %v1382
  %v1392 = vunpack.c.l.b16 %v1383
  %v1393 = vunpack.c.h.b16 %v1383
  %v1394 = vunpack.c.l.b16 %v1384
  %v1395 = vpack.c.b16 %v1392, %v1389
  %v1396 = vpack.c.b16 %v1393, %v1390
  %v1397 = vpack.c.b16 %v1394, %v1391
  %1398 = vrot.lane.b32.xlu0 %v1395, 52
  %v1399 = vpop.permute.xlu0 %1398
  %1400 = vrot.lane.b32.xlu0 %v1396, 52
  %v1401 = vpop.permute.xlu0 %1400
  %1402 = vrot.lane.b32.xlu0 %v1397, 52
  %v1403 = vpop.permute.xlu0 %1402
  %v1404 = vsel %vm706, %v1399, %v1401
  %v1405 = vsel %vm706, %v1401, %v1403
  %1408 = vst [vmem:[#allocation2 + $0x310] sm:$0xff] %v1404
  %1409 = vst.msk [vmem:[#allocation2 + $0x318] sm:$0xff] %vm31, %v1405
  %1410 = vst.msk [vmem:[#allocation2 + $0x18] sm:$0xff] %vm713, 0
  %1411 = vst.msk [vmem:[#allocation2 + $0x38] sm:$0xff] %vm713, 0
  %1412 = vst.msk [vmem:[#allocation2 + $0x58] sm:$0xff] %vm713, 0
  %1413 = vst.msk [vmem:[#allocation2 + $0x78] sm:$0xff] %vm713, 0
  %1414 = vst.msk [vmem:[#allocation2 + $0x98] sm:$0xff] %vm713, 0
  %1415 = vst.msk [vmem:[#allocation2 + $0xb8] sm:$0xff] %vm713, 0
  %1416 = vst.msk [vmem:[#allocation2 + $0xd8] sm:$0xff] %vm713, 0
  %1417 = vst.msk [vmem:[#allocation2 + $0xf8] sm:$0xff] %vm713, 0
  %1418 = vst.msk [vmem:[#allocation2 + $0x118] sm:$0xff] %vm713, 0
  %1419 = vst.msk [vmem:[#allocation2 + $0x138] sm:$0xff] %vm713, 0
  %1420 = vst.msk [vmem:[#allocation2 + $0x158] sm:$0xff] %vm713, 0
  %1421 = vst.msk [vmem:[#allocation2 + $0x178] sm:$0xff] %vm713, 0
  %1422 = vst.msk [vmem:[#allocation2 + $0x198] sm:$0xff] %vm713, 0
  %1423 = vst.msk [vmem:[#allocation2 + $0x1b8] sm:$0xff] %vm713, 0
  %1424 = vst.msk [vmem:[#allocation2 + $0x1d8] sm:$0xff] %vm713, 0
  %1425 = vst.msk [vmem:[#allocation2 + $0x1f8] sm:$0xff] %vm713, 0
  %1426 = vst.msk [vmem:[#allocation2 + $0x218] sm:$0xff] %vm713, 0
  %1427 = vst.msk [vmem:[#allocation2 + $0x238] sm:$0xff] %vm713, 0
  %1428 = vst.msk [vmem:[#allocation2 + $0x258] sm:$0xff] %vm713, 0
  %1429 = vst.msk [vmem:[#allocation2 + $0x278] sm:$0xff] %vm713, 0
  %1430 = vst.msk [vmem:[#allocation2 + $0x298] sm:$0xff] %vm713, 0
  %1431 = vst.msk [vmem:[#allocation2 + $0x2b8] sm:$0xff] %vm713, 0
  %1432 = vst.msk [vmem:[#allocation2 + $0x2d8] sm:$0xff] %vm713, 0
  %1433 = vst.msk [vmem:[#allocation2 + $0x2f8] sm:$0xff] %vm713, 0
  %1434 = vst.msk [vmem:[#allocation2 + $0x318] sm:$0xff] %vm713, 0
  %v1435 = vld [vmem:[%s1] sm:$0xff]
  %v1436 = vld [vmem:[%s1 + $0x8] sm:$0xff]
  %v1437 = vld [vmem:[%s1 + $0x10] sm:$0xff]
  %v1438 = vld [vmem:[%s1 + $0x18] sm:$0xff]
  %v1439 = vld [vmem:[%s1 + $0x20] sm:$0xff]
  %v1440 = vld [vmem:[%s1 + $0x28] sm:$0xff]
  %v1441 = vld [vmem:[%s1 + $0x30] sm:$0xff]
  %v1442 = vld [vmem:[%s1 + $0x38] sm:$0xff]
  %v1443 = vld [vmem:[#allocation2] sm:$0xff]
  %v1444 = vld [vmem:[#allocation2 + $0x8] sm:$0xff]
  %v1445 = vld [vmem:[#allocation2 + $0x10] sm:$0xff]
  %v1446 = vld [vmem:[#allocation2 + $0x18] sm:$0xff]
  %v1447 = vld [vmem:[#allocation2 + $0x20] sm:$0xff]
  %v1448 = vld [vmem:[#allocation2 + $0x28] sm:$0xff]
  %v1449 = vld [vmem:[#allocation2 + $0x30] sm:$0xff]
  %v1450 = vld [vmem:[#allocation2 + $0x38] sm:$0xff]
  %v1451 = vld [vmem:[#allocation2 + $0x40] sm:$0xff]
  %v1452 = vld [vmem:[#allocation2 + $0x48] sm:$0xff]
  %v1453 = vld [vmem:[#allocation2 + $0x50] sm:$0xff]
  %v1454 = vld [vmem:[#allocation2 + $0x58] sm:$0xff]
  %v1455 = vld [vmem:[#allocation2 + $0x60] sm:$0xff]
  %v1456 = vld [vmem:[#allocation2 + $0x68] sm:$0xff]
  %v1457 = vld [vmem:[#allocation2 + $0x70] sm:$0xff]
  %v1458 = vld [vmem:[#allocation2 + $0x78] sm:$0xff]
  %v1459 = vld [vmem:[#allocation2 + $0x80] sm:$0xff]
  %v1460 = vld [vmem:[#allocation2 + $0x88] sm:$0xff]
  %v1461 = vld [vmem:[#allocation2 + $0x90] sm:$0xff]
  %v1462 = vld [vmem:[#allocation2 + $0x98] sm:$0xff]
  %v1463 = vld [vmem:[#allocation2 + $0xa0] sm:$0xff]
  %v1464 = vld [vmem:[#allocation2 + $0xa8] sm:$0xff]
  %v1465 = vld [vmem:[#allocation2 + $0xb0] sm:$0xff]
  %v1466 = vld [vmem:[#allocation2 + $0xb8] sm:$0xff]
  %v1467 = vld [vmem:[#allocation2 + $0xc0] sm:$0xff]
  %v1468 = vld [vmem:[#allocation2 + $0xc8] sm:$0xff]
  %v1469 = vld [vmem:[#allocation2 + $0xd0] sm:$0xff]
  %v1470 = vld [vmem:[#allocation2 + $0xd8] sm:$0xff]
  %v1471 = vld [vmem:[#allocation2 + $0xe0] sm:$0xff]
  %v1472 = vld [vmem:[#allocation2 + $0xe8] sm:$0xff]
  %v1473 = vld [vmem:[#allocation2 + $0xf0] sm:$0xff]
  %v1474 = vld [vmem:[#allocation2 + $0xf8] sm:$0xff]
  %v1475 = vld [vmem:[#allocation2 + $0x100] sm:$0xff]
  %v1476 = vld [vmem:[#allocation2 + $0x108] sm:$0xff]
  %v1477 = vld [vmem:[#allocation2 + $0x110] sm:$0xff]
  %v1478 = vld [vmem:[#allocation2 + $0x118] sm:$0xff]
  %v1479 = vld [vmem:[#allocation2 + $0x120] sm:$0xff]
  %v1480 = vld [vmem:[#allocation2 + $0x128] sm:$0xff]
  %v1481 = vld [vmem:[#allocation2 + $0x130] sm:$0xff]
  %v1482 = vld [vmem:[#allocation2 + $0x138] sm:$0xff]
  %v1483 = vld [vmem:[#allocation2 + $0x140] sm:$0xff]
  %v1484 = vld [vmem:[#allocation2 + $0x148] sm:$0xff]
  %v1485 = vld [vmem:[#allocation2 + $0x150] sm:$0xff]
  %v1486 = vld [vmem:[#allocation2 + $0x158] sm:$0xff]
  %v1487 = vld [vmem:[#allocation2 + $0x160] sm:$0xff]
  %v1488 = vld [vmem:[#allocation2 + $0x168] sm:$0xff]
  %v1489 = vld [vmem:[#allocation2 + $0x170] sm:$0xff]
  %v1490 = vld [vmem:[#allocation2 + $0x178] sm:$0xff]
  %v1491 = vld [vmem:[#allocation2 + $0x180] sm:$0xff]
  %v1492 = vld [vmem:[#allocation2 + $0x188] sm:$0xff]
  %v1493 = vld [vmem:[#allocation2 + $0x190] sm:$0xff]
  %v1494 = vld [vmem:[#allocation2 + $0x198] sm:$0xff]
  %v1495 = vld [vmem:[#allocation2 + $0x1a0] sm:$0xff]
  %v1496 = vld [vmem:[#allocation2 + $0x1a8] sm:$0xff]
  %v1497 = vld [vmem:[#allocation2 + $0x1b0] sm:$0xff]
  %v1498 = vld [vmem:[#allocation2 + $0x1b8] sm:$0xff]
  %v1499 = vld [vmem:[#allocation2 + $0x1c0] sm:$0xff]
  %v1500 = vld [vmem:[#allocation2 + $0x1c8] sm:$0xff]
  %v1501 = vld [vmem:[#allocation2 + $0x1d0] sm:$0xff]
  %v1502 = vld [vmem:[#allocation2 + $0x1d8] sm:$0xff]
  %v1503 = vld [vmem:[#allocation2 + $0x1e0] sm:$0xff]
  %v1504 = vld [vmem:[#allocation2 + $0x1e8] sm:$0xff]
  %v1505 = vld [vmem:[#allocation2 + $0x1f0] sm:$0xff]
  %v1506 = vld [vmem:[#allocation2 + $0x1f8] sm:$0xff]
  %v1507 = vld [vmem:[#allocation2 + $0x200] sm:$0xff]
  %v1508 = vld [vmem:[#allocation2 + $0x208] sm:$0xff]
  %v1509 = vld [vmem:[#allocation2 + $0x210] sm:$0xff]
  %v1510 = vld [vmem:[#allocation2 + $0x218] sm:$0xff]
  %v1511 = vld [vmem:[#allocation2 + $0x220] sm:$0xff]
  %v1512 = vld [vmem:[#allocation2 + $0x228] sm:$0xff]
  %v1513 = vld [vmem:[#allocation2 + $0x230] sm:$0xff]
  %v1514 = vld [vmem:[#allocation2 + $0x238] sm:$0xff]
  %v1515 = vld [vmem:[#allocation2 + $0x240] sm:$0xff]
  %v1516 = vld [vmem:[#allocation2 + $0x248] sm:$0xff]
  %v1517 = vld [vmem:[#allocation2 + $0x250] sm:$0xff]
  %v1518 = vld [vmem:[#allocation2 + $0x258] sm:$0xff]
  %v1519 = vld [vmem:[#allocation2 + $0x260] sm:$0xff]
  %v1520 = vld [vmem:[#allocation2 + $0x268] sm:$0xff]
  %v1521 = vld [vmem:[#allocation2 + $0x270] sm:$0xff]
  %v1522 = vld [vmem:[#allocation2 + $0x278] sm:$0xff]
  %v1523 = vld [vmem:[#allocation2 + $0x280] sm:$0xff]
  %v1524 = vld [vmem:[#allocation2 + $0x288] sm:$0xff]
  %v1525 = vld [vmem:[#allocation2 + $0x290] sm:$0xff]
  %v1526 = vld [vmem:[#allocation2 + $0x298] sm:$0xff]
  %v1527 = vld [vmem:[#allocation2 + $0x2a0] sm:$0xff]
  %v1528 = vld [vmem:[#allocation2 + $0x2a8] sm:$0xff]
  %v1529 = vld [vmem:[#allocation2 + $0x2b0] sm:$0xff]
  %v1530 = vld [vmem:[#allocation2 + $0x2b8] sm:$0xff]
  %v1531 = vld [vmem:[#allocation2 + $0x2c0] sm:$0xff]
  %v1532 = vld [vmem:[#allocation2 + $0x2c8] sm:$0xff]
  %v1533 = vld [vmem:[#allocation2 + $0x2d0] sm:$0xff]
  %v1534 = vld [vmem:[#allocation2 + $0x2d8] sm:$0xff]
  %v1535 = vld [vmem:[#allocation2 + $0x2e0] sm:$0xff]
  %v1536 = vld [vmem:[#allocation2 + $0x2e8] sm:$0xff]
  %v1537 = vld [vmem:[#allocation2 + $0x2f0] sm:$0xff]
  %v1538 = vld [vmem:[#allocation2 + $0x2f8] sm:$0xff]
  %v1539 = vld [vmem:[#allocation2 + $0x300] sm:$0xff]
  %v1540 = vld [vmem:[#allocation2 + $0x308] sm:$0xff]
  %v1541 = vld [vmem:[#allocation2 + $0x310] sm:$0xff]
  %v1542 = vld [vmem:[#allocation2 + $0x318] sm:$0xff]
  %v1543 = vld [vmem:[%s2] sm:$0xff]
  %v1544 = vld [vmem:[%s2 + $0x8] sm:$0xff]
  %v1545 = vld [vmem:[%s2 + $0x10] sm:$0xff]
  %v1546 = vld [vmem:[%s2 + $0x18] sm:$0xff]
  %1548 = vset.pattern.permute.xlu0 0
  %1549 = vperm.xlu0 %1548, %v1543
  %v1550 = vpop.permute.xlu0 %1549
  %1553 = vset.pattern.permute.xlu0 0
  %1554 = vperm.xlu0 %1553, %v1544
  %v1555 = vpop.permute.xlu0 %1554
  %1558 = vset.pattern.permute.xlu0 0
  %1559 = vperm.xlu0 %1558, %v1545
  %v1560 = vpop.permute.xlu0 %1559
  %1563 = vset.pattern.permute.xlu0 0
  %1564 = vperm.xlu0 %1563, %v1546
  %v1565 = vpop.permute.xlu0 %1564
  %v1575 = vunpack.c.l.b16 %v1435
  %v1576 = vunpack.c.h.b16 %v1435
  %v1577 = vunpack.c.l.b16 %v1436
  %v1578 = vunpack.c.h.b16 %v1436
  %v1579 = vunpack.c.l.b16 %v1437
  %v1580 = vunpack.c.h.b16 %v1437
  %v1581 = vunpack.c.l.b16 %v1438
  %v1582 = vunpack.c.h.b16 %v1438
  %v1583 = vunpack.c.l.b16 %v1439
  %v1584 = vunpack.c.h.b16 %v1439
  %v1585 = vunpack.c.l.b16 %v1440
  %v1586 = vunpack.c.h.b16 %v1440
  %v1587 = vunpack.c.l.b16 %v1441
  %v1588 = vunpack.c.h.b16 %v1441
  %v1589 = vunpack.c.l.b16 %v1442
  %v1590 = vunpack.c.h.b16 %v1442
  %v1591 = vpack.c.b16 %v1579, %v1575
  %v1592 = vpack.c.b16 %v1580, %v1576
  %v1593 = vpack.c.b16 %v1581, %v1577
  %v1594 = vpack.c.b16 %v1582, %v1578
  %v1595 = vpack.c.b16 %v1587, %v1583
  %v1596 = vpack.c.b16 %v1588, %v1584
  %v1597 = vpack.c.b16 %v1589, %v1585
  %v1598 = vpack.c.b16 %v1590, %v1586
  %vm1605 = vcmask 130048
  %v1607 = vsel %vm1605, %v1594, 0
  %v1610 = vsel %vm1605, %v1598, 0
  %1612 = vmatprep.subr.bf16.mxu0 %v1444
  %1613 = vmatpush1.bf16.msra.mxu0 %v1443
  %1614 = vmatprep.subr.bf16.mxu0 %v1448
  %1615 = vmatpush1.bf16.msra.mxu0 %v1447
  %1616 = vmatprep.subr.bf16.mxu0 %v1452
  %1617 = vmatpush1.bf16.msra.mxu0 %v1451
  %1618 = vmatprep.subr.bf16.mxu0 %v1456
  %1619 = vmatpush1.bf16.msra.mxu0 %v1455
  %1620 = vmatprep.subr.bf16.mxu0 %v1460
  %1621 = vmatpush1.bf16.msra.mxu0 %v1459
  %1622 = vmatprep.subr.bf16.mxu0 %v1464
  %1623 = vmatpush1.bf16.msra.mxu0 %v1463
  %1624 = vmatprep.subr.bf16.mxu0 %v1468
  %1625 = vmatpush1.bf16.msra.mxu0 %v1467
  %1626 = vmatprep.subr.bf16.mxu0 %v1472
  %1627 = vmatpush1.bf16.msra.mxu0 %v1471
  %1628 = vmatprep.subr.bf16.mxu0 %v1476
  %1629 = vmatpush1.bf16.msra.mxu0 %v1475
  %1630 = vmatprep.subr.bf16.mxu0 %v1480
  %1631 = vmatpush1.bf16.msra.mxu0 %v1479
  %1632 = vmatprep.subr.bf16.mxu0 %v1484
  %1633 = vmatpush1.bf16.msra.mxu0 %v1483
  %1634 = vmatprep.subr.bf16.mxu0 %v1488
  %1635 = vmatpush1.bf16.msra.mxu0 %v1487
  %1636 = vmatprep.subr.bf16.mxu0 %v1492
  %1637 = vmatpush1.bf16.msra.mxu0 %v1491
  %1638 = vmatprep.subr.bf16.mxu0 %v1496
  %1639 = vmatpush1.bf16.msra.mxu0 %v1495
  %1640 = vmatprep.subr.bf16.mxu0 %v1500
  %1641 = vmatpush1.bf16.msra.mxu0 %v1499
  %1642 = vmatprep.subr.bf16.mxu0 %v1504
  %1643 = vmatpush1.bf16.msra.mxu0 %v1503
  %1644 = vmatprep.mubr.bf16.mxu0 %v1592
  %1645 = vmatmul.mubr.bf16.gmra.mrb[0].mxu0 %v1591
  %v1646 = vpop.f32.mrb[0].mxu0
  %v1647 = vadd.f32 %v1550, %v1646
  %v1648 = vpop.f32.mrb[0].mxu0
  %v1649 = vadd.f32 %v1550, %v1648
  %v1650 = vpop.f32.mrb[0].mxu0
  %v1651 = vadd.f32 %v1555, %v1650
  %v1652 = vpop.f32.mrb[0].mxu0
  %v1653 = vadd.f32 %v1555, %v1652
  %1654 = vmatprep.mubr.bf16.mxu0 %v1596
  %1655 = vmatmul.mubr.bf16.gmra.mrb[0].mxu0 %v1595
  %v1656 = vpop.f32.mrb[0].mxu0
  %v1657 = vadd.f32 %v1560, %v1656
  %v1658 = vpop.f32.mrb[0].mxu0
  %v1659 = vadd.f32 %v1560, %v1658
  %v1660 = vpop.f32.mrb[0].mxu0
  %v1661 = vadd.f32 %v1565, %v1660
  %v1662 = vpop.f32.mrb[0].mxu0
  %v1663 = vadd.f32 %v1565, %v1662
  %1664 = vdwg.mxu0
  %1665 = vmatprep.subr.bf16.mxu0 %v1508
  %1666 = vmatpush1.bf16.msra.mxu0 %v1507
  %1667 = vmatprep.subr.bf16.mxu0 %v1512
  %1668 = vmatpush1.bf16.msra.mxu0 %v1511
  %1669 = vmatprep.subr.bf16.mxu0 %v1516
  %1670 = vmatpush1.bf16.msra.mxu0 %v1515
  %1671 = vmatprep.subr.bf16.mxu0 %v1520
  %1672 = vmatpush1.bf16.msra.mxu0 %v1519
  %1673 = vmatprep.subr.bf16.mxu0 %v1524
  %1674 = vmatpush1.bf16.msra.mxu0 %v1523
  %1675 = vmatprep.subr.bf16.mxu0 %v1528
  %1676 = vmatpush1.bf16.msra.mxu0 %v1527
  %1677 = vmatprep.subr.bf16.mxu0 %v1532
  %1678 = vmatpush1.bf16.msra.mxu0 %v1531
  %1679 = vmatprep.subr.bf16.mxu0 %v1536
  %1680 = vmatpush1.bf16.msra.mxu0 %v1535
  %1681 = vmatprep.subr.bf16.mxu0 %v1540
  %1682 = vmatpush1.bf16.msra.mxu0 %v1539
  %1683 = vmatprep.subr.bf16.mxu0 0
  %1684 = vmatpush1.bf16.msra.mxu0 0
  %1685 = vmatprep.subr.bf16.mxu0 0
  %1686 = vmatpush1.bf16.msra.mxu0 0
  %1687 = vmatprep.subr.bf16.mxu0 0
  %1688 = vmatpush1.bf16.msra.mxu0 0
  %1689 = vmatprep.subr.bf16.mxu0 0
  %1690 = vmatpush1.bf16.msra.mxu0 0
  %1691 = vmatprep.subr.bf16.mxu0 0
  %1692 = vmatpush1.bf16.msra.mxu0 0
  %1693 = vmatprep.subr.bf16.mxu0 0
  %1694 = vmatpush1.bf16.msra.mxu0 0
  %1695 = vmatprep.subr.bf16.mxu0 0
  %1696 = vmatpush1.bf16.msra.mxu0 0
  %1697 = vmatprep.mubr.bf16.mxu0 %v1607
  %1698 = vmatmul.mubr.bf16.gmra.mrb[0].mxu0 %v1593
  %v1699 = vpop.f32.mrb[0].mxu0
  %v1700 = vadd.f32 %v1647, %v1699
  %v1701 = vpop.f32.mrb[0].mxu0
  %v1702 = vadd.f32 %v1649, %v1701
  %v1703 = vpop.f32.mrb[0].mxu0
  %v1704 = vadd.f32 %v1651, %v1703
  %v1705 = vpop.f32.mrb[0].mxu0
  %v1706 = vadd.f32 %v1653, %v1705
  %1707 = vmatprep.mubr.bf16.mxu0 %v1610
  %1708 = vmatmul.mubr.bf16.gmra.mrb[0].mxu0 %v1597
  %v1709 = vpop.f32.mrb[0].mxu0
  %v1710 = vadd.f32 %v1657, %v1709
  %v1711 = vpop.f32.mrb[0].mxu0
  %v1712 = vadd.f32 %v1659, %v1711
  %v1713 = vpop.f32.mrb[0].mxu0
  %v1714 = vadd.f32 %v1661, %v1713
  %v1715 = vpop.f32.mrb[0].mxu0
  %v1716 = vadd.f32 %v1663, %v1715
  %1717 = vdwg.mxu0
  %1718 = vmatprep.subr.bf16.mxu0 %v1446
  %1719 = vmatpush1.bf16.msra.mxu0 %v1445
  %1720 = vmatprep.subr.bf16.mxu0 %v1450
  %1721 = vmatpush1.bf16.msra.mxu0 %v1449
  %1722 = vmatprep.subr.bf16.mxu0 %v1454
  %1723 = vmatpush1.bf16.msra.mxu0 %v1453
  %1724 = vmatprep.subr.bf16.mxu0 %v1458
  %1725 = vmatpush1.bf16.msra.mxu0 %v1457
  %1726 = vmatprep.subr.bf16.mxu0 %v1462
  %1727 = vmatpush1.bf16.msra.mxu0 %v1461
  %1728 = vmatprep.subr.bf16.mxu0 %v1466
  %1729 = vmatpush1.bf16.msra.mxu0 %v1465
  %1730 = vmatprep.subr.bf16.mxu0 %v1470
  %1731 = vmatpush1.bf16.msra.mxu0 %v1469
  %1732 = vmatprep.subr.bf16.mxu0 %v1474
  %1733 = vmatpush1.bf16.msra.mxu0 %v1473
  %1734 = vmatprep.subr.bf16.mxu0 %v1478
  %1735 = vmatpush1.bf16.msra.mxu0 %v1477
  %1736 = vmatprep.subr.bf16.mxu0 %v1482
  %1737 = vmatpush1.bf16.msra.mxu0 %v1481
  %1738 = vmatprep.subr.bf16.mxu0 %v1486
  %1739 = vmatpush1.bf16.msra.mxu0 %v1485
  %1740 = vmatprep.subr.bf16.mxu0 %v1490
  %1741 = vmatpush1.bf16.msra.mxu0 %v1489
  %1742 = vmatprep.subr.bf16.mxu0 %v1494
  %1743 = vmatpush1.bf16.msra.mxu0 %v1493
  %1744 = vmatprep.subr.bf16.mxu0 %v1498
  %1745 = vmatpush1.bf16.msra.mxu0 %v1497
  %1746 = vmatprep.subr.bf16.mxu0 %v1502
  %1747 = vmatpush1.bf16.msra.mxu0 %v1501
  %1748 = vmatprep.subr.bf16.mxu0 %v1506
  %1749 = vmatpush1.bf16.msra.mxu0 %v1505
  %1750 = vmatprep.mubr.bf16.mxu0 %v1592
  %1751 = vmatmul.mubr.bf16.gmra.mrb[0].mxu0 %v1591
  %v1752 = vpop.f32.mrb[0].mxu0
  %v1753 = vadd.f32 %v1550, %v1752
  %v1754 = vpop.f32.mrb[0].mxu0
  %v1755 = vadd.f32 %v1550, %v1754
  %v1756 = vpop.f32.mrb[0].mxu0
  %v1757 = vadd.f32 %v1555, %v1756
  %v1758 = vpop.f32.mrb[0].mxu0
  %v1759 = vadd.f32 %v1555, %v1758
  %1760 = vmatprep.mubr.bf16.mxu0 %v1596
  %1761 = vmatmul.mubr.bf16.gmra.mrb[0].mxu0 %v1595
  %v1762 = vpop.f32.mrb[0].mxu0
  %v1763 = vadd.f32 %v1560, %v1762
  %v1764 = vpop.f32.mrb[0].mxu0
  %v1765 = vadd.f32 %v1560, %v1764
  %v1766 = vpop.f32.mrb[0].mxu0
  %v1767 = vadd.f32 %v1565, %v1766
  %v1768 = vpop.f32.mrb[0].mxu0
  %v1769 = vadd.f32 %v1565, %v1768
  %1770 = vdwg.mxu0
  %1771 = vmatprep.subr.bf16.mxu0 %v1510
  %1772 = vmatpush1.bf16.msra.mxu0 %v1509
  %1773 = vmatprep.subr.bf16.mxu0 %v1514
  %1774 = vmatpush1.bf16.msra.mxu0 %v1513
  %1775 = vmatprep.subr.bf16.mxu0 %v1518
  %1776 = vmatpush1.bf16.msra.mxu0 %v1517
  %1777 = vmatprep.subr.bf16.mxu0 %v1522
  %1778 = vmatpush1.bf16.msra.mxu0 %v1521
  %1779 = vmatprep.subr.bf16.mxu0 %v1526
  %1780 = vmatpush1.bf16.msra.mxu0 %v1525
  %1781 = vmatprep.subr.bf16.mxu0 %v1530
  %1782 = vmatpush1.bf16.msra.mxu0 %v1529
  %1783 = vmatprep.subr.bf16.mxu0 %v1534
  %1784 = vmatpush1.bf16.msra.mxu0 %v1533
  %1785 = vmatprep.subr.bf16.mxu0 %v1538
  %1786 = vmatpush1.bf16.msra.mxu0 %v1537
  %1787 = vmatprep.subr.bf16.mxu0 %v1542
  %1788 = vmatpush1.bf16.msra.mxu0 %v1541
  %1789 = vmatprep.subr.bf16.mxu0 0
  %1790 = vmatpush1.bf16.msra.mxu0 0
  %1791 = vmatprep.subr.bf16.mxu0 0
  %1792 = vmatpush1.bf16.msra.mxu0 0
  %1793 = vmatprep.subr.bf16.mxu0 0
  %1794 = vmatpush1.bf16.msra.mxu0 0
  %1795 = vmatprep.subr.bf16.mxu0 0
  %1796 = vmatpush1.bf16.msra.mxu0 0
  %1797 = vmatprep.subr.bf16.mxu0 0
  %1798 = vmatpush1.bf16.msra.mxu0 0
  %1799 = vmatprep.subr.bf16.mxu0 0
  %1800 = vmatpush1.bf16.msra.mxu0 0
  %1801 = vmatprep.subr.bf16.mxu0 0
  %1802 = vmatpush1.bf16.msra.mxu0 0
  %1803 = vmatprep.mubr.bf16.mxu0 %v1607
  %1804 = vmatmul.mubr.bf16.gmra.mrb[0].mxu0 %v1593
  %v1805 = vpop.f32.mrb[0].mxu0
  %v1806 = vadd.f32 %v1753, %v1805
  %v1807 = vpop.f32.mrb[0].mxu0
  %v1808 = vadd.f32 %v1755, %v1807
  %v1809 = vpop.f32.mrb[0].mxu0
  %v1810 = vadd.f32 %v1757, %v1809
  %v1811 = vpop.f32.mrb[0].mxu0
  %v1812 = vadd.f32 %v1759, %v1811
  %1813 = vmatprep.mubr.bf16.mxu0 %v1610
  %1814 = vmatmul.mubr.bf16.gmra.mrb[0].mxu0 %v1597
  %v1815 = vpop.f32.mrb[0].mxu0
  %v1816 = vadd.f32 %v1763, %v1815
  %v1817 = vpop.f32.mrb[0].mxu0
  %v1818 = vadd.f32 %v1765, %v1817
  %v1819 = vpop.f32.mrb[0].mxu0
  %v1820 = vadd.f32 %v1767, %v1819
  %v1821 = vpop.f32.mrb[0].mxu0
  %v1822 = vadd.f32 %v1769, %v1821
  %1823 = vdwg.mxu0
  %v1824 = vmax.f32 %v1700, 0.0
  %v1825 = vmax.f32 %v1702, 0.0
  %v1826 = vmax.f32 %v1806, 0.0
  %v1827 = vmax.f32 %v1808, 0.0
  %v1828 = vmax.f32 %v1704, 0.0
  %v1829 = vmax.f32 %v1706, 0.0
  %v1830 = vmax.f32 %v1810, 0.0
  %v1831 = vmax.f32 %v1812, 0.0
  %v1832 = vmax.f32 %v1710, 0.0
  %v1833 = vmax.f32 %v1712, 0.0
  %v1834 = vmax.f32 %v1816, 0.0
  %v1835 = vmax.f32 %v1818, 0.0
  %v1836 = vmax.f32 %v1714, 0.0
  %v1837 = vmax.f32 %v1716, 0.0
  %v1838 = vmax.f32 %v1820, 0.0
  %v1839 = vmax.f32 %v1822, 0.0
  %v1840 = vpack.c.bf16 %v1828, %v1824
  %v1841 = vpack.c.bf16 %v1829, %v1825
  %v1842 = vpack.c.bf16 %v1830, %v1826
  %v1843 = vpack.c.bf16 %v1831, %v1827
  %v1844 = vpack.c.bf16 %v1836, %v1832
  %v1845 = vpack.c.bf16 %v1837, %v1833
  %v1846 = vpack.c.bf16 %v1838, %v1834
  %v1847 = vpack.c.bf16 %v1839, %v1835
  %1848 = vst [vmem:[#allocation3] sm:$0xff] %v1840
  %1849 = vst [vmem:[#allocation3 + $0x8] sm:$0xff] %v1841
  %1850 = vst [vmem:[#allocation3 + $0x10] sm:$0xff] %v1842
  %1851 = vst [vmem:[#allocation3 + $0x18] sm:$0xff] %v1843
  %1852 = vst [vmem:[#allocation3 + $0x20] sm:$0xff] %v1844
  %1853 = vst [vmem:[#allocation3 + $0x28] sm:$0xff] %v1845
  %1854 = vst [vmem:[#allocation3 + $0x30] sm:$0xff] %v1846
  %1855 = vst [vmem:[#allocation3 + $0x38] sm:$0xff] %v1847
  %v1856 = vld [vmem:[%s3] sm:$0xf]
  %v1857 = vld [vmem:[%s3 + $0x4] sm:$0xf]
  %v1858 = vld [vmem:[%s3 + $0x8] sm:$0xf]
  %v1859 = vld [vmem:[%s3 + $0xc] sm:$0xf]
  %v1860 = vld [vmem:[%s3 + $0x10] sm:$0xf]
  %v1861 = vld [vmem:[%s3 + $0x14] sm:$0xf]
  %v1862 = vld [vmem:[%s3 + $0x18] sm:$0xf]
  %v1863 = vld [vmem:[%s3 + $0x1c] sm:$0xf]
  %v1864 = vld [vmem:[%s3 + $0x20] sm:$0xf]
  %v1865 = vld [vmem:[%s3 + $0x24] sm:$0xf]
  %v1866 = vld [vmem:[%s3 + $0x28] sm:$0xf]
  %v1867 = vld [vmem:[%s3 + $0x2c] sm:$0xf]
  %v1868 = vld [vmem:[%s3 + $0x30] sm:$0xf]
  %v1869 = vld [vmem:[%s3 + $0x34] sm:$0xf]
  %v1870 = vld [vmem:[%s3 + $0x38] sm:$0xf]
  %v1871 = vld [vmem:[%s3 + $0x3c] sm:$0xf]
  %v1872 = vld [vmem:[%s3 + $0x40] sm:$0xf]
  %v1873 = vld [vmem:[%s3 + $0x44] sm:$0xf]
  %v1874 = vld [vmem:[%s3 + $0x48] sm:$0xf]
  %v1875 = vld [vmem:[%s3 + $0x4c] sm:$0xf]
  %v1876 = vld [vmem:[%s3 + $0x50] sm:$0xf]
  %v1877 = vld [vmem:[%s3 + $0x54] sm:$0xf]
  %v1878 = vld [vmem:[%s3 + $0x58] sm:$0xf]
  %v1879 = vld [vmem:[%s3 + $0x5c] sm:$0xf]
  %v1880 = vld [vmem:[%s3 + $0x60] sm:$0xf]
  %v1881 = vld [vmem:[%s3 + $0x64] sm:$0xf]
  %v1882 = vld [vmem:[%s3 + $0x68] sm:$0xf]
  %v1883 = vld [vmem:[%s3 + $0x6c] sm:$0xf]
  %v1884 = vld [vmem:[%s3 + $0x70] sm:$0x7]
  %v1885 = vld [vmem:[#allocation3] sm:$0xff]
  %v1886 = vld [vmem:[#allocation3 + $0x8] sm:$0xff]
  %v1887 = vld [vmem:[#allocation3 + $0x20] sm:$0xff]
  %v1888 = vld [vmem:[#allocation3 + $0x28] sm:$0xff]
  %1893 = vrot.lane.b32.xlu0 %v1885, 127
  %v1894 = vpop.permute.xlu0 %1893
  %1895 = vrot.lane.b32.xlu0 %v1886, 127
  %v1896 = vpop.permute.xlu0 %1895
  %1897 = vrot.lane.b32.xlu0 %v1887, 127
  %v1898 = vpop.permute.xlu0 %1897
  %1899 = vrot.lane.b32.xlu0 %v1888, 127
  %v1900 = vpop.permute.xlu0 %1899
  %v1901 = vsel %vm47, %v1894, %v1896
  %v1902 = vsel %vm47, %v1898, %v1900
  %v1907 = vmax.bf16 %v1885, %v1901
  %v1908 = vmax.bf16 %v1886, %v1896
  %v1909 = vmax.bf16 %v1887, %v1902
  %v1910 = vmax.bf16 %v1888, %v1900
  %1915 = vrot.lane.b32.xlu0 %v1907, 110
  %v1916 = vpop.permute.xlu0 %1915
  %1917 = vrot.lane.b32.xlu0 %v1908, 110
  %v1918 = vpop.permute.xlu0 %1917
  %1919 = vrot.lane.b32.xlu0 %v1909, 110
  %v1920 = vpop.permute.xlu0 %1919
  %1921 = vrot.lane.b32.xlu0 %v1910, 110
  %v1922 = vpop.permute.xlu0 %1921
  %v1923 = vsel %vm136, %v1916, %v1918
  %v1924 = vsel %vm136, %v1920, %v1922
  %v1929 = vmax.bf16 %v1907, %v1923
  %v1930 = vmax.bf16 %v1908, %v1918
  %v1931 = vmax.bf16 %v1909, %v1924
  %v1932 = vmax.bf16 %v1910, %v1922
  %v1962 = vunpack.c.l.b16 %v1856
  %v1963 = vunpack.c.l.b16 %v1857
  %v1964 = vunpack.c.l.b16 %v1858
  %v1965 = vunpack.c.l.b16 %v1859
  %v1966 = vunpack.c.l.b16 %v1860
  %v1967 = vunpack.c.l.b16 %v1861
  %v1968 = vunpack.c.l.b16 %v1862
  %v1969 = vunpack.c.l.b16 %v1863
  %v1970 = vunpack.c.l.b16 %v1864
  %v1971 = vunpack.c.l.b16 %v1865
  %v1972 = vunpack.c.l.b16 %v1866
  %v1973 = vunpack.c.l.b16 %v1867
  %v1974 = vunpack.c.l.b16 %v1868
  %v1975 = vunpack.c.l.b16 %v1869
  %v1976 = vunpack.c.l.b16 %v1870
  %v1977 = vunpack.c.l.b16 %v1871
  %v1978 = vunpack.c.l.b16 %v1872
  %v1979 = vunpack.c.l.b16 %v1873
  %v1980 = vunpack.c.l.b16 %v1874
  %v1981 = vunpack.c.l.b16 %v1875
  %v1982 = vunpack.c.l.b16 %v1876
  %v1983 = vunpack.c.l.b16 %v1877
  %v1984 = vunpack.c.l.b16 %v1878
  %v1985 = vunpack.c.l.b16 %v1879
  %v1986 = vunpack.c.l.b16 %v1880
  %v1987 = vunpack.c.l.b16 %v1881
  %v1988 = vunpack.c.l.b16 %v1882
  %v1989 = vunpack.c.l.b16 %v1883
  %v1990 = vunpack.c.l.b16 %v1884
  %v1991 = vpack.c.b16 %v1963, %v1962
  %v1992 = vpack.c.b16 %v1965, %v1964
  %v1993 = vpack.c.b16 %v1967, %v1966
  %v1994 = vpack.c.b16 %v1969, %v1968
  %v1995 = vpack.c.b16 %v1971, %v1970
  %v1996 = vpack.c.b16 %v1973, %v1972
  %v1997 = vpack.c.b16 %v1975, %v1974
  %v1998 = vpack.c.b16 %v1977, %v1976
  %v1999 = vpack.c.b16 %v1979, %v1978
  %v2000 = vpack.c.b16 %v1981, %v1980
  %v2001 = vpack.c.b16 %v1983, %v1982
  %v2002 = vpack.c.b16 %v1985, %v1984
  %v2003 = vpack.c.b16 %v1987, %v1986
  %v2004 = vpack.c.b16 %v1989, %v1988
  %v2005 = vpack.c.b16 %v1990, %v1990
  %vm2020 = vcmask 826368
  %v2022 = vsel %vm2020, %v1930, 0
  %v2025 = vsel %vm2020, %v1932, 0
  %vm2027 = vcmask 1041408
  %vm2028 = vcmask 1042432
  %v2029 = vsel %vm2027, 4294967295, 65535
  %v2030 = vsel %vm2028, %v2029, 0
  %v2032 = vand.u32 %v2005, %v2030
  %2034 = vmatprep.subr.bf16.mxu0 0
  %2035 = vmatpush1.bf16.msra.mxu0 %v1991
  %2036 = vmatprep.subr.bf16.mxu0 0
  %2037 = vmatpush1.bf16.msra.mxu0 %v1992
  %2038 = vmatprep.subr.bf16.mxu0 0
  %2039 = vmatpush1.bf16.msra.mxu0 %v1993
  %2040 = vmatprep.subr.bf16.mxu0 0
  %2041 = vmatpush1.bf16.msra.mxu0 %v1994
  %2042 = vmatprep.subr.bf16.mxu0 0
  %2043 = vmatpush1.bf16.msra.mxu0 %v1995
  %2044 = vmatprep.subr.bf16.mxu0 0
  %2045 = vmatpush1.bf16.msra.mxu0 %v1996
  %2046 = vmatprep.subr.bf16.mxu0 0
  %2047 = vmatpush1.bf16.msra.mxu0 %v1997
  %2048 = vmatprep.subr.bf16.mxu0 0
  %2049 = vmatpush1.bf16.msra.mxu0 %v1998
  %2050 = vmatprep.subr.bf16.mxu0 0
  %2051 = vmatpush1.bf16.msra.mxu0 %v1999
  %2052 = vmatprep.subr.bf16.mxu0 0
  %2053 = vmatpush1.bf16.msra.mxu0 %v2000
  %2054 = vmatprep.subr.bf16.mxu0 0
  %2055 = vmatpush1.bf16.msra.mxu0 %v2001
  %2056 = vmatprep.subr.bf16.mxu0 0
  %2057 = vmatpush1.bf16.msra.mxu0 %v2002
  %2058 = vmatprep.subr.bf16.mxu0 0
  %2059 = vmatpush1.bf16.msra.mxu0 %v2003
  %2060 = vmatprep.subr.bf16.mxu0 0
  %2061 = vmatpush1.bf16.msra.mxu0 %v2004
  %2062 = vmatprep.subr.bf16.mxu0 0
  %2063 = vmatpush1.bf16.msra.mxu0 %v2032
  %2064 = vmatprep.subr.bf16.mxu0 0
  %2065 = vmatpush1.bf16.msra.mxu0 0
  %2066 = vmatprep.mubr.bf16.mxu0 %v2022
  %2067 = vmatmul.mubr.bf16.gmra.mrb[0].mxu0 %v1929
  %v2068 = vpop.f32.mrb[0].mxu0
  %v2069 = vadd.f32 0.0, %v2068
  %v2070 = vpop.f32.mrb[0].mxu0
  %v2071 = vpop.f32.mrb[0].mxu0
  %v2072 = vadd.f32 0.0, %v2071
  %v2073 = vpop.f32.mrb[0].mxu0
  %2074 = vmatprep.mubr.bf16.mxu0 %v2025
  %2075 = vmatmul.mubr.bf16.gmra.mrb[0].mxu0 %v1931
  %v2076 = vpop.f32.mrb[0].mxu0
  %v2077 = vadd.f32 0.0, %v2076
  %v2078 = vpop.f32.mrb[0].mxu0
  %v2079 = vpop.f32.mrb[0].mxu0
  %v2080 = vadd.f32 0.0, %v2079
  %v2081 = vpop.f32.mrb[0].mxu0
  %2082 = vdwg.mxu0
  %v2083 = vpack.c.bf16 %v2072, %v2069
  %v2084 = vpack.c.bf16 %v2080, %v2077
  %v2087 = vunpack.c.l.b16 %v2083
  %v2088 = vunpack.c.h.b16 %v2083
  %v2089 = vunpack.c.l.b16 %v2084
  %v2090 = vunpack.c.h.b16 %v2084
  %v2091 = vpack.c.b16 %v2087, %v2087
  %v2092 = vpack.c.b16 %v2088, %v2088
  %v2093 = vpack.c.b16 %v2089, %v2089
  %v2094 = vpack.c.b16 %v2090, %v2090
  %vm2099 = vcmask 396288
  %2100 = vst.msk [vmem:[%s4] sm:$0xf] %vm2099, %v2091
  %2101 = vst.msk [vmem:[%s4 + $0x4] sm:$0xf] %vm2099, %v2092
  %2102 = vst.msk [vmem:[%s4 + $0x8] sm:$0xf] %vm2099, %v2093
  %2103 = vst.msk [vmem:[%s4 + $0xc] sm:$0xf] %vm2099, %v2094
  %v2104 = vld [vmem:[#allocation3 + $0x10] sm:$0xff]
  %v2105 = vld [vmem:[#allocation3 + $0x18] sm:$0xff]
  %v2106 = vld [vmem:[#allocation3 + $0x30] sm:$0xff]
  %v2107 = vld [vmem:[#allocation3 + $0x38] sm:$0xff]
  %2112 = vrot.lane.b32.xlu0 %v2104, 127
  %v2113 = vpop.permute.xlu0 %2112
  %2114 = vrot.lane.b32.xlu0 %v2105, 127
  %v2115 = vpop.permute.xlu0 %2114
  %2116 = vrot.lane.b32.xlu0 %v2106, 127
  %v2117 = vpop.permute.xlu0 %2116
  %2118 = vrot.lane.b32.xlu0 %v2107, 127
  %v2119 = vpop.permute.xlu0 %2118
  %v2120 = vsel %vm47, %v2113, %v2115
  %v2121 = vsel %vm47, %v2117, %v2119
  %v2126 = vmax.bf16 %v2104, %v2120
  %v2127 = vmax.bf16 %v2105, %v2115
  %v2128 = vmax.bf16 %v2106, %v2121
  %v2129 = vmax.bf16 %v2107, %v2119
  %2134 = vrot.lane.b32.xlu0 %v2126, 110
  %v2135 = vpop.permute.xlu0 %2134
  %2136 = vrot.lane.b32.xlu0 %v2127, 110
  %v2137 = vpop.permute.xlu0 %2136
  %2138 = vrot.lane.b32.xlu0 %v2128, 110
  %v2139 = vpop.permute.xlu0 %2138
  %2140 = vrot.lane.b32.xlu0 %v2129, 110
  %v2141 = vpop.permute.xlu0 %2140
  %v2142 = vsel %vm136, %v2135, %v2137
  %v2143 = vsel %vm136, %v2139, %v2141
  %v2148 = vmax.bf16 %v2126, %v2142
  %v2149 = vmax.bf16 %v2127, %v2137
  %v2150 = vmax.bf16 %v2128, %v2143
  %v2151 = vmax.bf16 %v2129, %v2141
  %v2153 = vsel %vm2020, %v2149, 0
  %v2156 = vsel %vm2020, %v2151, 0
  %2158 = vmatprep.subr.bf16.mxu0 0
  %2159 = vmatpush1.bf16.msra.mxu0 %v1991
  %2160 = vmatprep.subr.bf16.mxu0 0
  %2161 = vmatpush1.bf16.msra.mxu0 %v1992
  %2162 = vmatprep.subr.bf16.mxu0 0
  %2163 = vmatpush1.bf16.msra.mxu0 %v1993
  %2164 = vmatprep.subr.bf16.mxu0 0
  %2165 = vmatpush1.bf16.msra.mxu0 %v1994
  %2166 = vmatprep.subr.bf16.mxu0 0
  %2167 = vmatpush1.bf16.msra.mxu0 %v1995
  %2168 = vmatprep.subr.bf16.mxu0 0
  %2169 = vmatpush1.bf16.msra.mxu0 %v1996
  %2170 = vmatprep.subr.bf16.mxu0 0
  %2171 = vmatpush1.bf16.msra.mxu0 %v1997
  %2172 = vmatprep.subr.bf16.mxu0 0
  %2173 = vmatpush1.bf16.msra.mxu0 %v1998
  %2174 = vmatprep.subr.bf16.mxu0 0
  %2175 = vmatpush1.bf16.msra.mxu0 %v1999
  %2176 = vmatprep.subr.bf16.mxu0 0
  %2177 = vmatpush1.bf16.msra.mxu0 %v2000
  %2178 = vmatprep.subr.bf16.mxu0 0
  %2179 = vmatpush1.bf16.msra.mxu0 %v2001
  %2180 = vmatprep.subr.bf16.mxu0 0
  %2181 = vmatpush1.bf16.msra.mxu0 %v2002
  %2182 = vmatprep.subr.bf16.mxu0 0
  %2183 = vmatpush1.bf16.msra.mxu0 %v2003
  %2184 = vmatprep.subr.bf16.mxu0 0
  %2185 = vmatpush1.bf16.msra.mxu0 %v2004
  %2186 = vmatprep.subr.bf16.mxu0 0
  %2187 = vmatpush1.bf16.msra.mxu0 %v2032
  %2188 = vmatprep.subr.bf16.mxu0 0
  %2189 = vmatpush1.bf16.msra.mxu0 0
  %2190 = vmatprep.mubr.bf16.mxu0 %v2153
  %2191 = vmatmul.mubr.bf16.gmra.mrb[0].mxu0 %v2148
  %v2192 = vpop.f32.mrb[0].mxu0
  %v2193 = vadd.f32 0.0, %v2192
  %v2194 = vpop.f32.mrb[0].mxu0
  %v2195 = vpop.f32.mrb[0].mxu0
  %v2196 = vadd.f32 0.0, %v2195
  %v2197 = vpop.f32.mrb[0].mxu0
  %2198 = vmatprep.mubr.bf16.mxu0 %v2156
  %2199 = vmatmul.mubr.bf16.gmra.mrb[0].mxu0 %v2150
  %v2200 = vpop.f32.mrb[0].mxu0
  %v2201 = vadd.f32 0.0, %v2200
  %v2202 = vpop.f32.mrb[0].mxu0
  %v2203 = vpop.f32.mrb[0].mxu0
  %v2204 = vadd.f32 0.0, %v2203
  %v2205 = vpop.f32.mrb[0].mxu0
  %2206 = vdwg.mxu0
  %v2207 = vpack.c.bf16 %v2196, %v2193
  %v2208 = vpack.c.bf16 %v2204, %v2201
  %v2211 = vunpack.c.l.b16 %v2207
  %v2212 = vunpack.c.h.b16 %v2207
  %v2213 = vunpack.c.l.b16 %v2208
  %v2214 = vunpack.c.h.b16 %v2208
  %v2215 = vpack.c.b16 %v2211, %v2211
  %v2216 = vpack.c.b16 %v2212, %v2212
  %v2217 = vpack.c.b16 %v2213, %v2213
  %v2218 = vpack.c.b16 %v2214, %v2214
  %s2223 = scalar_lea.vmem %s4, 16
  %2224 = vst.msk [vmem:[%s2223] sm:$0xf] %vm2099, %v2215
  %2225 = vst.msk [vmem:[%s2223 + $0x4] sm:$0xf] %vm2099, %v2216
  %2226 = vst.msk [vmem:[%s2223 + $0x8] sm:$0xf] %vm2099, %v2217
  %2227 = vst.msk [vmem:[%s2223 + $0xc] sm:$0xf] %vm2099, %v2218
  // Predicated region
  $region18: #{cnn_forward.4} parent=0 // pred_check
    _
  $region19: #{cnn_forward.4} parent=0 // pred_check_branch
    %2229 = sbr.rel (0) target = $region21
  $region20: #{cnn_forward.4} parent=0 // pred_region
    _
  $region21: #{cnn_forward.4} parent=0 // pred_fallthru
    _
  // Predicated region
  $region22: #{cnn_forward.4} parent=0 // pred_check
    _
  $region23: #{cnn_forward.4} parent=0 // pred_check_branch
    %2231 = sbr.rel (0) target = $region25
  $region24: #{cnn_forward.4} parent=0 // pred_region
    _
  $region25: #{cnn_forward.4} parent=0 // pred_fallthru
    _

// kernel: cnn_forward.3
$region0: #{cnn_forward.3}
  #allocation0 [shape = 'u32[]', space=smem, size = 0x4, offset = 0x4, fixed_abs, tag = 'smem constant byte address 0x4 - core index']
  #allocation1 [shape = 'u32[144,128]{1,0:T(1,128)}', space=vmem, size = 0x12000, scoped, tag = 'internal scratch']
  #allocation2 [shape = 'bf16[32,1792]{1,0:T(16,128)(2,1)}', space=vmem, size = 0x1c000, scoped, tag = 'scratch operand']
  #allocation3 [shape = 'bf16[16,1792]{1,0:T(16,128)(2,1)}', space=vmem, size = 0xe000, scoped, tag = 'scratch operand']
  %s0 = inlined_call_operand.vmem [shape: bf16[2,1,1024], index: 0, kind: input, shape index: {}]
  %s1 = inlined_call_operand.vmem [shape: bf16[16,32], index: 1, kind: input, shape index: {}]
  %s2 = inlined_call_operand.vmem [shape: f32[16,1], index: 2, kind: input, shape index: {}]
  %s3 = inlined_call_operand.hbm [shape: bf16[859,196], index: 3, kind: input, shape index: {}]
  %s4 = inlined_call_operand.vmem [shape: bf16[2,16,196], index: 4, kind: output, shape index: {}]
  %s5 = sld [smem:[#allocation0]]
  $region30: #{cnn_forward.3} parent=0
    _
  %s7 = ssub.s32 1, %s5
  %s8 = scalar_select 0, %s7, %s5
  $region1: #{cnn_forward.3} parent=0
    #allocation4 [shape = 'u8[442368]{0}', space=vmem, size = 0x6c000, scoped, tag = 'input window, operand 3, single buffered']
    #allocation5 [shape = 's32[1]{0}', space=sflag, size = 0x4, scoped, tag = 'scoped memory for cnn_forward.3']
    %9 = vsyncpa [#allocation5], 0
    // Predicated region
    $region2: #{cnn_forward.3} parent=1 // pred_check
      _
    $region3: #{cnn_forward.3} parent=1 // pred_check_branch
      %11 = sbr.rel (0) target = $region5
    $region4: #{cnn_forward.3} parent=1 // pred_region
      _
    $region5: #{cnn_forward.3} parent=1 // pred_fallthru
      _
    // Predicated region
    $region6: #{cnn_forward.3} parent=1 // pred_check
      _
    $region7: #{cnn_forward.3} parent=1 // pred_check_branch
      %13 = sbr.rel (0) target = $region9
    $region8: #{cnn_forward.3} parent=1 // pred_region
      _
    $region9: #{cnn_forward.3} parent=1 // pred_fallthru
      _
    // Predicated region
    $region10: #{cnn_forward.3} parent=1 // pred_check
      _
    $region11: #{cnn_forward.3} parent=1 // pred_check_branch
      %15 = sbr.rel (0) target = $region13
    $region12: #{cnn_forward.3} parent=1 // pred_region
      _
    $region13: #{cnn_forward.3} parent=1 // pred_fallthru
      _
    // Predicated region
    $region14: #{cnn_forward.3} parent=1 // pred_check
      _
    $region15: #{cnn_forward.3} parent=1 // pred_check_branch
      %17 = sbr.rel (0) target = $region17
    $region16: #{cnn_forward.3} parent=1 // pred_region
      %s19 = ssub.s32 13824, 13824
      %20 = vsyncadd [#allocation5], %s19
      %s21 = sshll.u32 [#allocation4], 4
      %s22 = int_to_ptr.vmem [resolvable:$true] %s21
      %27 = dma.hbm_to_vmem [thread:$0]  %s3, 13824, %s22, [#allocation5], 128, 128, 8
    $region17: #{cnn_forward.3} parent=1 // pred_fallthru
      _
    // Predicated region
    $region18: #{cnn_forward.3} parent=1 // pred_check
      _
    $region19: #{cnn_forward.3} parent=1 // pred_check_branch
      %29 = sbr.rel (0) target = $region21
    $region20: #{cnn_forward.3} parent=1 // pred_region
      %30 = dma.done [#allocation5], 13824
    $region21: #{cnn_forward.3} parent=1 // pred_fallthru
      _
    %v32 = vld [vmem:[%s0] sm:$0x7f]
    %v34 = vcombine.high %v32, %v32
    %v36 = vunpack.c.l.s4 1966171168
    %v37 = vunpack.c.0.s8 %v36
    %v38 = vlaneseq
    %v39 = vshrl.u32 %v38, 7
    %v40 = vsub.s32 %v37, %v39
    %v41 = vrot.slane %v32, %v40
    %v43 = vunpack.c.l.s4 1966171168
    %v44 = vunpack.c.0.s8 %v43
    %v45 = vlaneseq
    %v46 = vshrl.u32 %v45, 7
    %v47 = vsub.s32 %v44, %v46
    %v48 = vrot.slane %v34, %v47
    %v49 = vcombine.high %v41, %v41
    %v50 = vcombine.high %v48, %v48
    %v52 = vunpack.c.l.s4 1966171168
    %v53 = vunpack.c.0.s8 %v52
    %v54 = vlaneseq
    %v55 = vshrl.u32 %v54, 7
    %v56 = vsub.s32 %v53, %v55
    %v57 = vrot.slane %v41, %v56
    %v59 = vunpack.c.l.s4 1966171168
    %v60 = vunpack.c.0.s8 %v59
    %v61 = vlaneseq
    %v62 = vshrl.u32 %v61, 7
    %v63 = vsub.s32 %v60, %v62
    %v64 = vrot.slane %v48, %v63
    %v66 = vunpack.c.l.s4 1966171168
    %v67 = vunpack.c.0.s8 %v66
    %v68 = vlaneseq
    %v69 = vshrl.u32 %v68, 7
    %v70 = vsub.s32 %v67, %v69
    %v71 = vrot.slane %v49, %v70
    %v73 = vunpack.c.l.s4 1966171168
    %v74 = vunpack.c.0.s8 %v73
    %v75 = vlaneseq
    %v76 = vshrl.u32 %v75, 7
    %v77 = vsub.s32 %v74, %v76
    %v78 = vrot.slane %v50, %v77
    %v79 = vcombine.high %v57, %v57
    %v80 = vcombine.high %v64, %v64
    %v81 = vcombine.high %v71, %v71
    %vm89 = vcmask 1040384
    %vm90 = vsmask.f32 256
    %vm91 = vmand %vm89, %vm90
    %v92 = vld [vmem:[#allocation2] sm:$0x1]
    %v93 = vsel %vm91, %v57, %v92
    %94 = vst [vmem:[#allocation2] sm:$0x1] %v93
    %v95 = vld [vmem:[#allocation2 + $0x8] sm:$0x1]
    %v96 = vsel %vm91, %v71, %v95
    %97 = vst [vmem:[#allocation2 + $0x8] sm:$0x1] %v96
    %v98 = vld [vmem:[#allocation2 + $0x10] sm:$0x1]
    %v99 = vsel %vm91, %v79, %v98
    %100 = vst [vmem:[#allocation2 + $0x10] sm:$0x1] %v99
    %v101 = vld [vmem:[#allocation2 + $0x18] sm:$0x1]
    %v102 = vsel %vm91, %v81, %v101
    %103 = vst [vmem:[#allocation2 + $0x18] sm:$0x1] %v102
    %v104 = vld [vmem:[#allocation2 + $0x20] sm:$0x1]
    %v105 = vsel %vm91, %v64, %v104
    %106 = vst [vmem:[#allocation2 + $0x20] sm:$0x1] %v105
    %v107 = vld [vmem:[#allocation2 + $0x28] sm:$0x1]
    %v108 = vsel %vm91, %v78, %v107
    %109 = vst [vmem:[#allocation2 + $0x28] sm:$0x1] %v108
    %vm110 = vcmask 1007616
    %vm111 = vmand %vm110, %vm90
    %v112 = vld [vmem:[#allocation2 + $0x30] sm:$0x1]
    %v113 = vsel %vm111, %v80, %v112
    %114 = vst [vmem:[#allocation2 + $0x30] sm:$0x1] %v113
    %v115 = vld [vmem:[%s0] sm:$0x7f]
    %v117 = vcombine.high %v115, %v115
    %v119 = vunpack.c.l.s4 1966171168
    %v120 = vunpack.c.0.s8 %v119
    %v121 = vlaneseq
    %v122 = vshrl.u32 %v121, 7
    %v123 = vsub.s32 %v120, %v122
    %v124 = vrot.slane %v115, %v123
    %v126 = vunpack.c.l.s4 1966171168
    %v127 = vunpack.c.0.s8 %v126
    %v128 = vlaneseq
    %v129 = vshrl.u32 %v128, 7
    %v130 = vsub.s32 %v127, %v129
    %v131 = vrot.slane %v117, %v130
    %v132 = vcombine.high %v124, %v124
    %v133 = vcombine.high %v131, %v131
    %v135 = vunpack.c.l.s4 1966171168
    %v136 = vunpack.c.0.s8 %v135
    %v137 = vlaneseq
    %v138 = vshrl.u32 %v137, 7
    %v139 = vsub.s32 %v136, %v138
    %v140 = vrot.slane %v124, %v139
    %v142 = vunpack.c.l.s4 1966171168
    %v143 = vunpack.c.0.s8 %v142
    %v144 = vlaneseq
    %v145 = vshrl.u32 %v144, 7
    %v146 = vsub.s32 %v143, %v145
    %v147 = vrot.slane %v131, %v146
    %v149 = vunpack.c.l.s4 1966171168
    %v150 = vunpack.c.0.s8 %v149
    %v151 = vlaneseq
    %v152 = vshrl.u32 %v151, 7
    %v153 = vsub.s32 %v150, %v152
    %v154 = vrot.slane %v132, %v153
    %v156 = vunpack.c.l.s4 1966171168
    %v157 = vunpack.c.0.s8 %v156
    %v158 = vlaneseq
    %v159 = vshrl.u32 %v158, 7
    %v160 = vsub.s32 %v157, %v159
    %v161 = vrot.slane %v133, %v160
    %v162 = vcombine.high %v140, %v140
    %v163 = vcombine.high %v147, %v147
    %v164 = vcombine.high %v154, %v154
    %v166 = vshll.u32 %v140, 16
    %v169 = vshll.u32 %v154, 16
    %v172 = vshll.u32 %v162, 16
    %v175 = vshll.u32 %v164, 16
    %v178 = vshll.u32 %v147, 16
    %v181 = vshll.u32 %v161, 16
    %v184 = vshll.u32 %v163, 16
    %186 = vrot.lane.b32.xlu0 %v166, 127
    %v187 = vpop.permute.xlu0 %186
    %188 = vrot.lane.b32.xlu0 %v169, 127
    %v189 = vpop.permute.xlu0 %188
    %190 = vrot.lane.b32.xlu0 %v172, 127
    %v191 = vpop.permute.xlu0 %190
    %192 = vrot.lane.b32.xlu0 %v175, 127
    %v193 = vpop.permute.xlu0 %192
    %194 = vrot.lane.b32.xlu0 %v178, 127
    %v195 = vpop.permute.xlu0 %194
    %196 = vrot.lane.b32.xlu0 %v181, 127
    %v197 = vpop.permute.xlu0 %196
    %198 = vrot.lane.b32.xlu0 %v184, 127
    %v199 = vpop.permute.xlu0 %198
    %vm200 = vcmask 1039360
    %v201 = vsel %vm200, %v187, %v189
    %v202 = vsel %vm200, %v189, %v191
    %v203 = vsel %vm200, %v191, %v193
    %v204 = vsel %vm200, %v193, %v195
    %v205 = vsel %vm200, %v195, %v197
    %v206 = vsel %vm200, %v197, %v199
    %vm214 = vsmask.f32 7938
    %vm215 = vmand %vm89, %vm214
    %v216 = vld [vmem:[#allocation2] sm:$0x1]
    %v217 = vsel %vm215, %v201, %v216
    %218 = vst [vmem:[#allocation2] sm:$0x1] %v217
    %v219 = vld [vmem:[#allocation2 + $0x8] sm:$0x1]
    %v220 = vsel %vm215, %v202, %v219
    %221 = vst [vmem:[#allocation2 + $0x8] sm:$0x1] %v220
    %v222 = vld [vmem:[#allocation2 + $0x10] sm:$0x1]
    %v223 = vsel %vm215, %v203, %v222
    %224 = vst [vmem:[#allocation2 + $0x10] sm:$0x1] %v223
    %v225 = vld [vmem:[#allocation2 + $0x18] sm:$0x1]
    %v226 = vsel %vm215, %v204, %v225
    %227 = vst [vmem:[#allocation2 + $0x18] sm:$0x1] %v226
    %v228 = vld [vmem:[#allocation2 + $0x20] sm:$0x1]
    %v229 = vsel %vm215, %v205, %v228
    %230 = vst [vmem:[#allocation2 + $0x20] sm:$0x1] %v229
    %v231 = vld [vmem:[#allocation2 + $0x28] sm:$0x1]
    %v232 = vsel %vm215, %v206, %v231
    %233 = vst [vmem:[#allocation2 + $0x28] sm:$0x1] %v232
    %vm234 = vmand %vm110, %vm214
    %v235 = vld [vmem:[#allocation2 + $0x30] sm:$0x1]
    %v236 = vsel %vm234, %v199, %v235
    %237 = vst [vmem:[#allocation2 + $0x30] sm:$0x1] %v236
    %v238 = vld [vmem:[%s0] sm:$0x7f]
    %v240 = vcombine.low %v238, %v238
    %v242 = vunpack.c.l.s4 1966171168
    %v243 = vunpack.c.0.s8 %v242
    %v244 = vlaneseq
    %v245 = vshrl.u32 %v244, 7
    %v246 = vsub.s32 %v243, %v245
    %v247 = vrot.slane %v240, %v246
    %v249 = vunpack.c.l.s4 1966171168
    %v250 = vunpack.c.0.s8 %v249
    %v251 = vlaneseq
    %v252 = vshrl.u32 %v251, 7
    %v253 = vsub.s32 %v250, %v252
    %v254 = vrot.slane %v238, %v253
    %v255 = vcombine.high %v247, %v247
    %v256 = vcombine.high %v254, %v254
    %v258 = vunpack.c.l.s4 1966171168
    %v259 = vunpack.c.0.s8 %v258
    %v260 = vlaneseq
    %v261 = vshrl.u32 %v260, 7
    %v262 = vsub.s32 %v259, %v261
    %v263 = vrot.slane %v247, %v262
    %v265 = vunpack.c.l.s4 1966171168
    %v266 = vunpack.c.0.s8 %v265
    %v267 = vlaneseq
    %v268 = vshrl.u32 %v267, 7
    %v269 = vsub.s32 %v266, %v268
    %v270 = vrot.slane %v254, %v269
    %v272 = vunpack.c.l.s4 1966171168
    %v273 = vunpack.c.0.s8 %v272
    %v274 = vlaneseq
    %v275 = vshrl.u32 %v274, 7
    %v276 = vsub.s32 %v273, %v275
    %v277 = vrot.slane %v255, %v276
    %v279 = vunpack.c.l.s4 1966171168
    %v280 = vunpack.c.0.s8 %v279
    %v281 = vlaneseq
    %v282 = vshrl.u32 %v281, 7
    %v283 = vsub.s32 %v280, %v282
    %v284 = vrot.slane %v256, %v283
    %v285 = vcombine.high %v263, %v263
    %v286 = vcombine.high %v270, %v270
    %v287 = vcombine.high %v277, %v277
    %288 = vrot.lane.b32.xlu0 %v263, 126
    %v289 = vpop.permute.xlu0 %288
    %290 = vrot.lane.b32.xlu0 %v277, 126
    %v291 = vpop.permute.xlu0 %290
    %292 = vrot.lane.b32.xlu0 %v285, 126
    %v293 = vpop.permute.xlu0 %292
    %294 = vrot.lane.b32.xlu0 %v287, 126
    %v295 = vpop.permute.xlu0 %294
    %296 = vrot.lane.b32.xlu0 %v270, 126
    %v297 = vpop.permute.xlu0 %296
    %298 = vrot.lane.b32.xlu0 %v284, 126
    %v299 = vpop.permute.xlu0 %298
    %300 = vrot.lane.b32.xlu0 %v286, 126
    %v301 = vpop.permute.xlu0 %300
    %vm302 = vcmask 1031168
    %v303 = vsel %vm302, %v289, %v291
    %v304 = vsel %vm302, %v291, %v293
    %v305 = vsel %vm302, %v293, %v295
    %v306 = vsel %vm302, %v295, %v297
    %v307 = vsel %vm302, %v297, %v299
    %v308 = vsel %vm302, %v299, %v301
    %vm316 = vcmask 1041409
    %vm317 = vsmask.f32 1280
    %vm318 = vmand %vm316, %vm317
    %v319 = vld [vmem:[#allocation2] sm:$0x2]
    %v320 = vsel %vm318, %v303, %v319
    %321 = vst [vmem:[#allocation2] sm:$0x2] %v320
    %v322 = vld [vmem:[#allocation2 + $0x8] sm:$0x2]
    %v323 = vsel %vm318, %v304, %v322
    %324 = vst [vmem:[#allocation2 + $0x8] sm:$0x2] %v323
    %v325 = vld [vmem:[#allocation2 + $0x10] sm:$0x2]
    %v326 = vsel %vm318, %v305, %v325
    %327 = vst [vmem:[#allocation2 + $0x10] sm:$0x2] %v326
    %v328 = vld [vmem:[#allocation2 + $0x18] sm:$0x2]
    %v329 = vsel %vm318, %v306, %v328
    %330 = vst [vmem:[#allocation2 + $0x18] sm:$0x2] %v329
    %v331 = vld [vmem:[#allocation2 + $0x20] sm:$0x2]
    %v332 = vsel %vm318, %v307, %v331
    %333 = vst [vmem:[#allocation2 + $0x20] sm:$0x2] %v332
    %v334 = vld [vmem:[#allocation2 + $0x28] sm:$0x2]
    %v335 = vsel %vm318, %v308, %v334
    %336 = vst [vmem:[#allocation2 + $0x28] sm:$0x2] %v335
    %vm337 = vcmask 1008641
    %vm338 = vmand %vm337, %vm317
    %v339 = vld [vmem:[#allocation2 + $0x30] sm:$0x2]
    %v340 = vsel %vm338, %v301, %v339
    %341 = vst [vmem:[#allocation2 + $0x30] sm:$0x2] %v340
    %v342 = vld [vmem:[%s0] sm:$0x7f]
    %v344 = vcombine.high %v342, %v342
    %v346 = vunpack.c.l.s4 1966171168
    %v347 = vunpack.c.0.s8 %v346
    %v348 = vlaneseq
    %v349 = vshrl.u32 %v348, 7
    %v350 = vsub.s32 %v347, %v349
    %v351 = vrot.slane %v342, %v350
    %v353 = vunpack.c.l.s4 1966171168
    %v354 = vunpack.c.0.s8 %v353
    %v355 = vlaneseq
    %v356 = vshrl.u32 %v355, 7
    %v357 = vsub.s32 %v354, %v356
    %v358 = vrot.slane %v344, %v357
    %v359 = vcombine.high %v351, %v351
    %v360 = vcombine.high %v358, %v358
    %v362 = vunpack.c.l.s4 1966171168
    %v363 = vunpack.c.0.s8 %v362
    %v364 = vlaneseq
    %v365 = vshrl.u32 %v364, 7
    %v366 = vsub.s32 %v363, %v365
    %v367 = vrot.slane %v351, %v366
    %v369 = vunpack.c.l.s4 1966171168
    %v370 = vunpack.c.0.s8 %v369
    %v371 = vlaneseq
    %v372 = vshrl.u32 %v371, 7
    %v373 = vsub.s32 %v370, %v372
    %v374 = vrot.slane %v358, %v373
    %v376 = vunpack.c.l.s4 1966171168
    %v377 = vunpack.c.0.s8 %v376
    %v378 = vlaneseq
    %v379 = vshrl.u32 %v378, 7
    %v380 = vsub.s32 %v377, %v379
    %v381 = vrot.slane %v359, %v380
    %v383 = vunpack.c.l.s4 1966171168
    %v384 = vunpack.c.0.s8 %v383
    %v385 = vlaneseq
    %v386 = vshrl.u32 %v385, 7
    %v387 = vsub.s32 %v384, %v386
    %v388 = vrot.slane %v360, %v387
    %v389 = vcombine.high %v367, %v367
    %v390 = vcombine.high %v374, %v374
    %v391 = vcombine.high %v381, %v381
    %v393 = vshll.u32 %v367, 16
    %v395 = vrot.slane %v393, 7
    %v397 = vshll.u32 %v381, 16
    %v399 = vrot.slane %v397, 7
    %v401 = vshll.u32 %v389, 16
    %v403 = vrot.slane %v401, 7
    %v405 = vshll.u32 %v391, 16
    %v407 = vrot.slane %v405, 7
    %v409 = vshll.u32 %v374, 16
    %v411 = vrot.slane %v409, 7
    %v413 = vshll.u32 %v388, 16
    %v415 = vrot.slane %v413, 7
    %v417 = vshll.u32 %v390, 16
    %v419 = vrot.slane %v417, 7
    %420 = vrot.lane.b32.xlu0 %v395, 125
    %v421 = vpop.permute.xlu0 %420
    %422 = vrot.lane.b32.xlu0 %v399, 125
    %v423 = vpop.permute.xlu0 %422
    %424 = vrot.lane.b32.xlu0 %v403, 125
    %v425 = vpop.permute.xlu0 %424
    %426 = vrot.lane.b32.xlu0 %v407, 125
    %v427 = vpop.permute.xlu0 %426
    %428 = vrot.lane.b32.xlu0 %v411, 125
    %v429 = vpop.permute.xlu0 %428
    %430 = vrot.lane.b32.xlu0 %v415, 125
    %v431 = vpop.permute.xlu0 %430
    %432 = vrot.lane.b32.xlu0 %v419, 125
    %v433 = vpop.permute.xlu0 %432
    %vm434 = vcmask 1022976
    %v435 = vsel %vm434, %v421, %v423
    %v436 = vsel %vm434, %v423, %v425
    %v437 = vsel %vm434, %v425, %v427
    %v438 = vsel %vm434, %v427, %v429
    %v439 = vsel %vm434, %v429, %v431
    %v440 = vsel %vm434, %v431, %v433
    %vm448 = vsmask.f32 7942
    %vm449 = vmand %vm316, %vm448
    %v450 = vld [vmem:[#allocation2] sm:$0x2]
    %v451 = vsel %vm449, %v435, %v450
    %452 = vst [vmem:[#allocation2] sm:$0x2] %v451
    %v453 = vld [vmem:[#allocation2 + $0x8] sm:$0x2]
    %v454 = vsel %vm449, %v436, %v453
    %455 = vst [vmem:[#allocation2 + $0x8] sm:$0x2] %v454
    %v456 = vld [vmem:[#allocation2 + $0x10] sm:$0x2]
    %v457 = vsel %vm449, %v437, %v456
    %458 = vst [vmem:[#allocation2 + $0x10] sm:$0x2] %v457
    %v459 = vld [vmem:[#allocation2 + $0x18] sm:$0x2]
    %v460 = vsel %vm449, %v438, %v459
    %461 = vst [vmem:[#allocation2 + $0x18] sm:$0x2] %v460
    %v462 = vld [vmem:[#allocation2 + $0x20] sm:$0x2]
    %v463 = vsel %vm449, %v439, %v462
    %464 = vst [vmem:[#allocation2 + $0x20] sm:$0x2] %v463
    %v465 = vld [vmem:[#allocation2 + $0x28] sm:$0x2]
    %v466 = vsel %vm449, %v440, %v465
    %467 = vst [vmem:[#allocation2 + $0x28] sm:$0x2] %v466
    %vm468 = vmand %vm337, %vm448
    %v469 = vld [vmem:[#allocation2 + $0x30] sm:$0x2]
    %v470 = vsel %vm468, %v433, %v469
    %471 = vst [vmem:[#allocation2 + $0x30] sm:$0x2] %v470
    %v472 = vld [vmem:[%s0] sm:$0x7f]
    %v474 = vcombine.high %v472, %v472
    %v476 = vunpack.c.l.s4 1966171168
    %v477 = vunpack.c.0.s8 %v476
    %v478 = vlaneseq
    %v479 = vshrl.u32 %v478, 7
    %v480 = vsub.s32 %v477, %v479
    %v481 = vrot.slane %v472, %v480
    %v483 = vunpack.c.l.s4 1966171168
    %v484 = vunpack.c.0.s8 %v483
    %v485 = vlaneseq
    %v486 = vshrl.u32 %v485, 7
    %v487 = vsub.s32 %v484, %v486
    %v488 = vrot.slane %v474, %v487
    %v489 = vcombine.low %v481, %v481
    %v490 = vcombine.low %v488, %v488
    %v492 = vunpack.c.l.s4 1966171168
    %v493 = vunpack.c.0.s8 %v492
    %v494 = vlaneseq
    %v495 = vshrl.u32 %v494, 7
    %v496 = vsub.s32 %v493, %v495
    %v497 = vrot.slane %v489, %v496
    %v499 = vunpack.c.l.s4 1966171168
    %v500 = vunpack.c.0.s8 %v499
    %v501 = vlaneseq
    %v502 = vshrl.u32 %v501, 7
    %v503 = vsub.s32 %v500, %v502
    %v504 = vrot.slane %v490, %v503
    %v506 = vunpack.c.l.s4 1966171168
    %v507 = vunpack.c.0.s8 %v506
    %v508 = vlaneseq
    %v509 = vshrl.u32 %v508, 7
    %v510 = vsub.s32 %v507, %v509
    %v511 = vrot.slane %v481, %v510
    %v513 = vunpack.c.l.s4 1966171168
    %v514 = vunpack.c.0.s8 %v513
    %v515 = vlaneseq
    %v516 = vshrl.u32 %v515, 7
    %v517 = vsub.s32 %v514, %v516
    %v518 = vrot.slane %v488, %v517
    %v519 = vcombine.high %v497, %v497
    %v520 = vcombine.high %v504, %v504
    %v521 = vcombine.high %v511, %v511
    %522 = vrot.lane.b32.xlu0 %v497, 124
    %v523 = vpop.permute.xlu0 %522
    %524 = vrot.lane.b32.xlu0 %v511, 124
    %v525 = vpop.permute.xlu0 %524
    %526 = vrot.lane.b32.xlu0 %v519, 124
    %v527 = vpop.permute.xlu0 %526
    %528 = vrot.lane.b32.xlu0 %v521, 124
    %v529 = vpop.permute.xlu0 %528
    %530 = vrot.lane.b32.xlu0 %v504, 124
    %v531 = vpop.permute.xlu0 %530
    %532 = vrot.lane.b32.xlu0 %v518, 124
    %v533 = vpop.permute.xlu0 %532
    %534 = vrot.lane.b32.xlu0 %v520, 124
    %v535 = vpop.permute.xlu0 %534
    %vm536 = vcmask 1014784
    %v537 = vsel %vm536, %v523, %v525
    %v538 = vsel %vm536, %v525, %v527
    %v539 = vsel %vm536, %v527, %v529
    %v540 = vsel %vm536, %v529, %v531
    %v541 = vsel %vm536, %v531, %v533
    %v542 = vsel %vm536, %v533, %v535
    %vm550 = vcmask 1042434
    %vm551 = vsmask.f32 2304
    %vm552 = vmand %vm550, %vm551
    %v553 = vld [vmem:[#allocation2] sm:$0x4]
    %v554 = vsel %vm552, %v537, %v553
    %555 = vst [vmem:[#allocation2] sm:$0x4] %v554
    %v556 = vld [vmem:[#allocation2 + $0x8] sm:$0x4]
    %v557 = vsel %vm552, %v538, %v556
    %558 = vst [vmem:[#allocation2 + $0x8] sm:$0x4] %v557
    %v559 = vld [vmem:[#allocation2 + $0x10] sm:$0x4]
    %v560 = vsel %vm552, %v539, %v559
    %561 = vst [vmem:[#allocation2 + $0x10] sm:$0x4] %v560
    %v562 = vld [vmem:[#allocation2 + $0x18] sm:$0x4]
    %v563 = vsel %vm552, %v540, %v562
    %564 = vst [vmem:[#allocation2 + $0x18] sm:$0x4] %v563
    %v565 = vld [vmem:[#allocation2 + $0x20] sm:$0x4]
    %v566 = vsel %vm552, %v541, %v565
    %567 = vst [vmem:[#allocation2 + $0x20] sm:$0x4] %v566
    %v568 = vld [vmem:[#allocation2 + $0x28] sm:$0x4]
    %v569 = vsel %vm552, %v542, %v568
    %570 = vst [vmem:[#allocation2 + $0x28] sm:$0x4] %v569
    %vm571 = vcmask 1009666
    %vm572 = vmand %vm571, %vm551
    %v573 = vld [vmem:[#allocation2 + $0x30] sm:$0x4]
    %v574 = vsel %vm572, %v535, %v573
    %575 = vst [vmem:[#allocation2 + $0x30] sm:$0x4] %v574
    %v576 = vld [vmem:[%s0] sm:$0xff]
    %v578 = vcombine.high %v576, %v576
    %v580 = vunpack.c.l.s4 1966171168
    %v581 = vunpack.c.0.s8 %v580
    %v582 = vlaneseq
    %v583 = vshrl.u32 %v582, 7
    %v584 = vsub.s32 %v581, %v583
    %v585 = vrot.slane %v576, %v584
    %v587 = vunpack.c.l.s4 1966171168
    %v588 = vunpack.c.0.s8 %v587
    %v589 = vlaneseq
    %v590 = vshrl.u32 %v589, 7
    %v591 = vsub.s32 %v588, %v590
    %v592 = vrot.slane %v578, %v591
    %v593 = vcombine.high %v585, %v585
    %v594 = vcombine.high %v592, %v592
    %v596 = vunpack.c.l.s4 1966171168
    %v597 = vunpack.c.0.s8 %v596
    %v598 = vlaneseq
    %v599 = vshrl.u32 %v598, 7
    %v600 = vsub.s32 %v597, %v599
    %v601 = vrot.slane %v585, %v600
    %v603 = vunpack.c.l.s4 1966171168
    %v604 = vunpack.c.0.s8 %v603
    %v605 = vlaneseq
    %v606 = vshrl.u32 %v605, 7
    %v607 = vsub.s32 %v604, %v606
    %v608 = vrot.slane %v592, %v607
    %v610 = vunpack.c.l.s4 1966171168
    %v611 = vunpack.c.0.s8 %v610
    %v612 = vlaneseq
    %v613 = vshrl.u32 %v612, 7
    %v614 = vsub.s32 %v611, %v613
    %v615 = vrot.slane %v593, %v614
    %v617 = vunpack.c.l.s4 1966171168
    %v618 = vunpack.c.0.s8 %v617
    %v619 = vlaneseq
    %v620 = vshrl.u32 %v619, 7
    %v621 = vsub.s32 %v618, %v620
    %v622 = vrot.slane %v594, %v621
    %v623 = vcombine.high %v601, %v601
    %v624 = vcombine.high %v608, %v608
    %v625 = vcombine.high %v615, %v615
    %v626 = vcombine.high %v622, %v622
    %v628 = vshll.u32 %v601, 16
    %v630 = vrot.slane %v628, 6
    %v632 = vshll.u32 %v615, 16
    %v634 = vrot.slane %v632, 6
    %v636 = vshll.u32 %v623, 16
    %v638 = vrot.slane %v636, 6
    %v640 = vshll.u32 %v625, 16
    %v642 = vrot.slane %v640, 6
    %v644 = vshll.u32 %v608, 16
    %v646 = vrot.slane %v644, 6
    %v648 = vshll.u32 %v622, 16
    %v650 = vrot.slane %v648, 6
    %v652 = vshll.u32 %v624, 16
    %v654 = vrot.slane %v652, 6
    %v656 = vshll.u32 %v626, 16
    %v658 = vrot.slane %v656, 6
    %659 = vrot.lane.b32.xlu0 %v630, 96
    %v660 = vpop.permute.xlu0 %659
    %661 = vrot.lane.b32.xlu0 %v634, 96
    %v662 = vpop.permute.xlu0 %661
    %663 = vrot.lane.b32.xlu0 %v638, 96
    %v664 = vpop.permute.xlu0 %663
    %665 = vrot.lane.b32.xlu0 %v642, 96
    %v666 = vpop.permute.xlu0 %665
    %667 = vrot.lane.b32.xlu0 %v646, 96
    %v668 = vpop.permute.xlu0 %667
    %669 = vrot.lane.b32.xlu0 %v650, 96
    %v670 = vpop.permute.xlu0 %669
    %671 = vrot.lane.b32.xlu0 %v654, 96
    %v672 = vpop.permute.xlu0 %671
    %673 = vrot.lane.b32.xlu0 %v658, 96
    %v674 = vpop.permute.xlu0 %673
    %vm675 = vcmask 785408
    %v676 = vsel %vm675, %v660, %v662
    %v677 = vsel %vm675, %v662, %v664
    %v678 = vsel %vm675, %v664, %v666
    %v679 = vsel %vm675, %v666, %v668
    %v680 = vsel %vm675, %v668, %v670
    %v681 = vsel %vm675, %v670, %v672
    %v682 = vsel %vm675, %v672, %v674
    %vm690 = vsmask.f32 7946
    %vm691 = vmand %vm550, %vm690
    %v692 = vld [vmem:[#allocation2] sm:$0x4]
    %v693 = vsel %vm691, %v676, %v692
    %694 = vst [vmem:[#allocation2] sm:$0x4] %v693
    %v695 = vld [vmem:[#allocation2 + $0x8] sm:$0x4]
    %v696 = vsel %vm691, %v677, %v695
    %697 = vst [vmem:[#allocation2 + $0x8] sm:$0x4] %v696
    %v698 = vld [vmem:[#allocation2 + $0x10] sm:$0x4]
    %v699 = vsel %vm691, %v678, %v698
    %700 = vst [vmem:[#allocation2 + $0x10] sm:$0x4] %v699
    %v701 = vld [vmem:[#allocation2 + $0x18] sm:$0x4]
    %v702 = vsel %vm691, %v679, %v701
    %703 = vst [vmem:[#allocation2 + $0x18] sm:$0x4] %v702
    %v704 = vld [vmem:[#allocation2 + $0x20] sm:$0x4]
    %v705 = vsel %vm691, %v680, %v704
    %706 = vst [vmem:[#allocation2 + $0x20] sm:$0x4] %v705
    %v707 = vld [vmem:[#allocation2 + $0x28] sm:$0x4]
    %v708 = vsel %vm691, %v681, %v707
    %709 = vst [vmem:[#allocation2 + $0x28] sm:$0x4] %v708
    %vm710 = vmand %vm571, %vm690
    %v711 = vld [vmem:[#allocation2 + $0x30] sm:$0x4]
    %v712 = vsel %vm710, %v682, %v711
    %713 = vst [vmem:[#allocation2 + $0x30] sm:$0x4] %v712
    %v714 = vld [vmem:[%s0] sm:$0xff]
    %v716 = vcombine.low %v714, %v714
    %v718 = vunpack.c.l.s4 1966171168
    %v719 = vunpack.c.0.s8 %v718
    %v720 = vlaneseq
    %v721 = vshrl.u32 %v720, 7
    %v722 = vsub.s32 %v719, %v721
    %v723 = vrot.slane %v716, %v722
    %v725 = vunpack.c.l.s4 1966171168
    %v726 = vunpack.c.0.s8 %v725
    %v727 = vlaneseq
    %v728 = vshrl.u32 %v727, 7
    %v729 = vsub.s32 %v726, %v728
    %v730 = vrot.slane %v714, %v729
    %v731 = vcombine.low %v723, %v723
    %v732 = vcombine.low %v730, %v730
    %v734 = vunpack.c.l.s4 1966171168
    %v735 = vunpack.c.0.s8 %v734
    %v736 = vlaneseq
    %v737 = vshrl.u32 %v736, 7
    %v738 = vsub.s32 %v735, %v737
    %v739 = vrot.slane %v731, %v738
    %v741 = vunpack.c.l.s4 1966171168
    %v742 = vunpack.c.0.s8 %v741
    %v743 = vlaneseq
    %v744 = vshrl.u32 %v743, 7
    %v745 = vsub.s32 %v742, %v744
    %v746 = vrot.slane %v732, %v745
    %v748 = vunpack.c.l.s4 1966171168
    %v749 = vunpack.c.0.s8 %v748
    %v750 = vlaneseq
    %v751 = vshrl.u32 %v750, 7
    %v752 = vsub.s32 %v749, %v751
    %v753 = vrot.slane %v723, %v752
    %v755 = vunpack.c.l.s4 1966171168
    %v756 = vunpack.c.0.s8 %v755
    %v757 = vlaneseq
    %v758 = vshrl.u32 %v757, 7
    %v759 = vsub.s32 %v756, %v758
    %v760 = vrot.slane %v730, %v759
    %v761 = vcombine.high %v739, %v739
    %v762 = vcombine.high %v746, %v746
    %v763 = vcombine.high %v753, %v753
    %v764 = vcombine.high %v760, %v760
    %765 = vrot.lane.b32.xlu0 %v739, 95
    %v766 = vpop.permute.xlu0 %765
    %767 = vrot.lane.b32.xlu0 %v753, 95
    %v768 = vpop.permute.xlu0 %767
    %769 = vrot.lane.b32.xlu0 %v761, 95
    %v770 = vpop.permute.xlu0 %769
    %771 = vrot.lane.b32.xlu0 %v763, 95
    %v772 = vpop.permute.xlu0 %771
    %773 = vrot.lane.b32.xlu0 %v746, 95
    %v774 = vpop.permute.xlu0 %773
    %775 = vrot.lane.b32.xlu0 %v760, 95
    %v776 = vpop.permute.xlu0 %775
    %777 = vrot.lane.b32.xlu0 %v762, 95
    %v778 = vpop.permute.xlu0 %777
    %779 = vrot.lane.b32.xlu0 %v764, 95
    %v780 = vpop.permute.xlu0 %779
    %vm781 = vcmask 777216
    %v782 = vsel %vm781, %v766, %v768
    %v783 = vsel %vm781, %v768, %v770
    %v784 = vsel %vm781, %v770, %v772
    %v785 = vsel %vm781, %v772, %v774
    %v786 = vsel %vm781, %v774, %v776
    %v787 = vsel %vm781, %v776, %v778
    %v788 = vsel %vm781, %v778, %v780
    %vm796 = vcmask 1043459
    %vm797 = vsmask.f32 3328
    %vm798 = vmand %vm796, %vm797
    %v799 = vld [vmem:[#allocation2] sm:$0x8]
    %v800 = vsel %vm798, %v782, %v799
    %801 = vst [vmem:[#allocation2] sm:$0x8] %v800
    %v802 = vld [vmem:[#allocation2 + $0x8] sm:$0x8]
    %v803 = vsel %vm798, %v783, %v802
    %804 = vst [vmem:[#allocation2 + $0x8] sm:$0x8] %v803
    %v805 = vld [vmem:[#allocation2 + $0x10] sm:$0x8]
    %v806 = vsel %vm798, %v784, %v805
    %807 = vst [vmem:[#allocation2 + $0x10] sm:$0x8] %v806
    %v808 = vld [vmem:[#allocation2 + $0x18] sm:$0x8]
    %v809 = vsel %vm798, %v785, %v808
    %810 = vst [vmem:[#allocation2 + $0x18] sm:$0x8] %v809
    %v811 = vld [vmem:[#allocation2 + $0x20] sm:$0x8]
    %v812 = vsel %vm798, %v786, %v811
    %813 = vst [vmem:[#allocation2 + $0x20] sm:$0x8] %v812
    %v814 = vld [vmem:[#allocation2 + $0x28] sm:$0x8]
    %v815 = vsel %vm798, %v787, %v814
    %816 = vst [vmem:[#allocation2 + $0x28] sm:$0x8] %v815
    %vm817 = vcmask 1010691
    %vm818 = vmand %vm817, %vm797
    %v819 = vld [vmem:[#allocation2 + $0x30] sm:$0x8]
    %v820 = vsel %vm818, %v788, %v819
    %821 = vst [vmem:[#allocation2 + $0x30] sm:$0x8] %v820
    %v822 = vld [vmem:[%s0] sm:$0xff]
    %v824 = vcombine.high %v822, %v822
    %v826 = vunpack.c.l.s4 1966171168
    %v827 = vunpack.c.0.s8 %v826
    %v828 = vlaneseq
    %v829 = vshrl.u32 %v828, 7
    %v830 = vsub.s32 %v827, %v829
    %v831 = vrot.slane %v822, %v830
    %v833 = vunpack.c.l.s4 1966171168
    %v834 = vunpack.c.0.s8 %v833
    %v835 = vlaneseq
    %v836 = vshrl.u32 %v835, 7
    %v837 = vsub.s32 %v834, %v836
    %v838 = vrot.slane %v824, %v837
    %v839 = vcombine.high %v831, %v831
    %v840 = vcombine.high %v838, %v838
    %v842 = vunpack.c.l.s4 1966171168
    %v843 = vunpack.c.0.s8 %v842
    %v844 = vlaneseq
    %v845 = vshrl.u32 %v844, 7
    %v846 = vsub.s32 %v843, %v845
    %v847 = vrot.slane %v831, %v846
    %v849 = vunpack.c.l.s4 1966171168
    %v850 = vunpack.c.0.s8 %v849
    %v851 = vlaneseq
    %v852 = vshrl.u32 %v851, 7
    %v853 = vsub.s32 %v850, %v852
    %v854 = vrot.slane %v838, %v853
    %v856 = vunpack.c.l.s4 1966171168
    %v857 = vunpack.c.0.s8 %v856
    %v858 = vlaneseq
    %v859 = vshrl.u32 %v858, 7
    %v860 = vsub.s32 %v857, %v859
    %v861 = vrot.slane %v839, %v860
    %v863 = vunpack.c.l.s4 1966171168
    %v864 = vunpack.c.0.s8 %v863
    %v865 = vlaneseq
    %v866 = vshrl.u32 %v865, 7
    %v867 = vsub.s32 %v864, %v866
    %v868 = vrot.slane %v840, %v867
    %v869 = vcombine.high %v847, %v847
    %v870 = vcombine.high %v854, %v854
    %v871 = vcombine.high %v861, %v861
    %v872 = vcombine.high %v868, %v868
    %v874 = vshll.u32 %v847, 16
    %v876 = vrot.slane %v874, 5
    %v878 = vshll.u32 %v861, 16
    %v880 = vrot.slane %v878, 5
    %v882 = vshll.u32 %v869, 16
    %v884 = vrot.slane %v882, 5
    %v886 = vshll.u32 %v871, 16
    %v888 = vrot.slane %v886, 5
    %v890 = vshll.u32 %v854, 16
    %v892 = vrot.slane %v890, 5
    %v894 = vshll.u32 %v868, 16
    %v896 = vrot.slane %v894, 5
    %v898 = vshll.u32 %v870, 16
    %v900 = vrot.slane %v898, 5
    %v902 = vshll.u32 %v872, 16
    %v904 = vrot.slane %v902, 5
    %905 = vrot.lane.b32.xlu0 %v876, 94
    %v906 = vpop.permute.xlu0 %905
    %907 = vrot.lane.b32.xlu0 %v880, 94
    %v908 = vpop.permute.xlu0 %907
    %909 = vrot.lane.b32.xlu0 %v884, 94
    %v910 = vpop.permute.xlu0 %909
    %911 = vrot.lane.b32.xlu0 %v888, 94
    %v912 = vpop.permute.xlu0 %911
    %913 = vrot.lane.b32.xlu0 %v892, 94
    %v914 = vpop.permute.xlu0 %913
    %915 = vrot.lane.b32.xlu0 %v896, 94
    %v916 = vpop.permute.xlu0 %915
    %917 = vrot.lane.b32.xlu0 %v900, 94
    %v918 = vpop.permute.xlu0 %917
    %919 = vrot.lane.b32.xlu0 %v904, 94
    %v920 = vpop.permute.xlu0 %919
    %vm921 = vcmask 769024
    %v922 = vsel %vm921, %v906, %v908
    %v923 = vsel %vm921, %v908, %v910
    %v924 = vsel %vm921, %v910, %v912
    %v925 = vsel %vm921, %v912, %v914
    %v926 = vsel %vm921, %v914, %v916
    %v927 = vsel %vm921, %v916, %v918
    %v928 = vsel %vm921, %v918, %v920
    %vm936 = vsmask.f32 7950
    %vm937 = vmand %vm796, %vm936
    %v938 = vld [vmem:[#allocation2] sm:$0x8]
    %v939 = vsel %vm937, %v922, %v938
    %940 = vst [vmem:[#allocation2] sm:$0x8] %v939
    %v941 = vld [vmem:[#allocation2 + $0x8] sm:$0x8]
    %v942 = vsel %vm937, %v923, %v941
    %943 = vst [vmem:[#allocation2 + $0x8] sm:$0x8] %v942
    %v944 = vld [vmem:[#allocation2 + $0x10] sm:$0x8]
    %v945 = vsel %vm937, %v924, %v944
    %946 = vst [vmem:[#allocation2 + $0x10] sm:$0x8] %v945
    %v947 = vld [vmem:[#allocation2 + $0x18] sm:$0x8]
    %v948 = vsel %vm937, %v925, %v947
    %949 = vst [vmem:[#allocation2 + $0x18] sm:$0x8] %v948
    %v950 = vld [vmem:[#allocation2 + $0x20] sm:$0x8]
    %v951 = vsel %vm937, %v926, %v950
    %952 = vst [vmem:[#allocation2 + $0x20] sm:$0x8] %v951
    %v953 = vld [vmem:[#allocation2 + $0x28] sm:$0x8]
    %v954 = vsel %vm937, %v927, %v953
    %955 = vst [vmem:[#allocation2 + $0x28] sm:$0x8] %v954
    %vm956 = vmand %vm817, %vm936
    %v957 = vld [vmem:[#allocation2 + $0x30] sm:$0x8]
    %v958 = vsel %vm956, %v928, %v957
    %959 = vst [vmem:[#allocation2 + $0x30] sm:$0x8] %v958
    %v960 = vld [vmem:[%s0] sm:$0xff]
    %v962 = vcombine.high %v960, %v960
    %v964 = vunpack.c.l.s4 1966171168
    %v965 = vunpack.c.0.s8 %v964
    %v966 = vlaneseq
    %v967 = vshrl.u32 %v966, 7
    %v968 = vsub.s32 %v965, %v967
    %v969 = vrot.slane %v960, %v968
    %v971 = vunpack.c.l.s4 1966171168
    %v972 = vunpack.c.0.s8 %v971
    %v973 = vlaneseq
    %v974 = vshrl.u32 %v973, 7
    %v975 = vsub.s32 %v972, %v974
    %v976 = vrot.slane %v962, %v975
    %v977 = vcombine.high %v969, %v969
    %v978 = vcombine.high %v976, %v976
    %v980 = vunpack.c.l.s4 1966171168
    %v981 = vunpack.c.0.s8 %v980
    %v982 = vlaneseq
    %v983 = vshrl.u32 %v982, 7
    %v984 = vsub.s32 %v981, %v983
    %v985 = vrot.slane %v969, %v984
    %v987 = vunpack.c.l.s4 1966171168
    %v988 = vunpack.c.0.s8 %v987
    %v989 = vlaneseq
    %v990 = vshrl.u32 %v989, 7
    %v991 = vsub.s32 %v988, %v990
    %v992 = vrot.slane %v976, %v991
    %v994 = vunpack.c.l.s4 1966171168
    %v995 = vunpack.c.0.s8 %v994
    %v996 = vlaneseq
    %v997 = vshrl.u32 %v996, 7
    %v998 = vsub.s32 %v995, %v997
    %v999 = vrot.slane %v977, %v998
    %v1001 = vunpack.c.l.s4 1966171168
    %v1002 = vunpack.c.0.s8 %v1001
    %v1003 = vlaneseq
    %v1004 = vshrl.u32 %v1003, 7
    %v1005 = vsub.s32 %v1002, %v1004
    %v1006 = vrot.slane %v978, %v1005
    %v1007 = vcombine.low %v985, %v985
    %v1008 = vcombine.low %v992, %v992
    %v1009 = vcombine.low %v999, %v999
    %v1010 = vcombine.low %v1006, %v1006
    %1011 = vrot.lane.b32.xlu0 %v1007, 93
    %v1012 = vpop.permute.xlu0 %1011
    %1013 = vrot.lane.b32.xlu0 %v1009, 93
    %v1014 = vpop.permute.xlu0 %1013
    %1015 = vrot.lane.b32.xlu0 %v985, 93
    %v1016 = vpop.permute.xlu0 %1015
    %1017 = vrot.lane.b32.xlu0 %v999, 93
    %v1018 = vpop.permute.xlu0 %1017
    %1019 = vrot.lane.b32.xlu0 %v1008, 93
    %v1020 = vpop.permute.xlu0 %1019
    %1021 = vrot.lane.b32.xlu0 %v1010, 93
    %v1022 = vpop.permute.xlu0 %1021
    %1023 = vrot.lane.b32.xlu0 %v992, 93
    %v1024 = vpop.permute.xlu0 %1023
    %1025 = vrot.lane.b32.xlu0 %v1006, 93
    %v1026 = vpop.permute.xlu0 %1025
    %vm1027 = vcmask 760832
    %v1028 = vsel %vm1027, %v1012, %v1014
    %v1029 = vsel %vm1027, %v1014, %v1016
    %v1030 = vsel %vm1027, %v1016, %v1018
    %v1031 = vsel %vm1027, %v1018, %v1020
    %v1032 = vsel %vm1027, %v1020, %v1022
    %v1033 = vsel %vm1027, %v1022, %v1024
    %v1034 = vsel %vm1027, %v1024, %v1026
    %vm1042 = vcmask 1044484
    %vm1043 = vsmask.f32 4352
    %vm1044 = vmand %vm1042, %vm1043
    %v1045 = vld [vmem:[#allocation2] sm:$0x10]
    %v1046 = vsel %vm1044, %v1028, %v1045
    %1047 = vst [vmem:[#allocation2] sm:$0x10] %v1046
    %v1048 = vld [vmem:[#allocation2 + $0x8] sm:$0x10]
    %v1049 = vsel %vm1044, %v1029, %v1048
    %1050 = vst [vmem:[#allocation2 + $0x8] sm:$0x10] %v1049
    %v1051 = vld [vmem:[#allocation2 + $0x10] sm:$0x10]
    %v1052 = vsel %vm1044, %v1030, %v1051
    %1053 = vst [vmem:[#allocation2 + $0x10] sm:$0x10] %v1052
    %v1054 = vld [vmem:[#allocation2 + $0x18] sm:$0x10]
    %v1055 = vsel %vm1044, %v1031, %v1054
    %1056 = vst [vmem:[#allocation2 + $0x18] sm:$0x10] %v1055
    %v1057 = vld [vmem:[#allocation2 + $0x20] sm:$0x10]
    %v1058 = vsel %vm1044, %v1032, %v1057
    %1059 = vst [vmem:[#allocation2 + $0x20] sm:$0x10] %v1058
    %v1060 = vld [vmem:[#allocation2 + $0x28] sm:$0x10]
    %v1061 = vsel %vm1044, %v1033, %v1060
    %1062 = vst [vmem:[#allocation2 + $0x28] sm:$0x10] %v1061
    %vm1063 = vcmask 1011716
    %vm1064 = vmand %vm1063, %vm1043
    %v1065 = vld [vmem:[#allocation2 + $0x30] sm:$0x10]
    %v1066 = vsel %vm1064, %v1034, %v1065
    %1067 = vst [vmem:[#allocation2 + $0x30] sm:$0x10] %v1066
    %v1068 = vld [vmem:[%s0] sm:$0xff]
    %v1070 = vcombine.high %v1068, %v1068
    %v1072 = vunpack.c.l.s4 1966171168
    %v1073 = vunpack.c.0.s8 %v1072
    %v1074 = vlaneseq
    %v1075 = vshrl.u32 %v1074, 7
    %v1076 = vsub.s32 %v1073, %v1075
    %v1077 = vrot.slane %v1068, %v1076
    %v1079 = vunpack.c.l.s4 1966171168
    %v1080 = vunpack.c.0.s8 %v1079
    %v1081 = vlaneseq
    %v1082 = vshrl.u32 %v1081, 7
    %v1083 = vsub.s32 %v1080, %v1082
    %v1084 = vrot.slane %v1070, %v1083
    %v1085 = vcombine.high %v1077, %v1077
    %v1086 = vcombine.high %v1084, %v1084
    %v1088 = vunpack.c.l.s4 1966171168
    %v1089 = vunpack.c.0.s8 %v1088
    %v1090 = vlaneseq
    %v1091 = vshrl.u32 %v1090, 7
    %v1092 = vsub.s32 %v1089, %v1091
    %v1093 = vrot.slane %v1077, %v1092
    %v1095 = vunpack.c.l.s4 1966171168
    %v1096 = vunpack.c.0.s8 %v1095
    %v1097 = vlaneseq
    %v1098 = vshrl.u32 %v1097, 7
    %v1099 = vsub.s32 %v1096, %v1098
    %v1100 = vrot.slane %v1084, %v1099
    %v1102 = vunpack.c.l.s4 1966171168
    %v1103 = vunpack.c.0.s8 %v1102
    %v1104 = vlaneseq
    %v1105 = vshrl.u32 %v1104, 7
    %v1106 = vsub.s32 %v1103, %v1105
    %v1107 = vrot.slane %v1085, %v1106
    %v1109 = vunpack.c.l.s4 1966171168
    %v1110 = vunpack.c.0.s8 %v1109
    %v1111 = vlaneseq
    %v1112 = vshrl.u32 %v1111, 7
    %v1113 = vsub.s32 %v1110, %v1112
    %v1114 = vrot.slane %v1086, %v1113
    %v1115 = vcombine.high %v1093, %v1093
    %v1116 = vcombine.high %v1100, %v1100
    %v1117 = vcombine.high %v1107, %v1107
    %v1118 = vcombine.high %v1114, %v1114
    %v1120 = vshll.u32 %v1093, 16
    %v1122 = vrot.slane %v1120, 4
    %v1124 = vshll.u32 %v1107, 16
    %v1126 = vrot.slane %v1124, 4
    %v1128 = vshll.u32 %v1115, 16
    %v1130 = vrot.slane %v1128, 4
    %v1132 = vshll.u32 %v1117, 16
    %v1134 = vrot.slane %v1132, 4
    %v1136 = vshll.u32 %v1100, 16
    %v1138 = vrot.slane %v1136, 4
    %v1140 = vshll.u32 %v1114, 16
    %v1142 = vrot.slane %v1140, 4
    %v1144 = vshll.u32 %v1116, 16
    %v1146 = vrot.slane %v1144, 4
    %v1148 = vshll.u32 %v1118, 16
    %v1150 = vrot.slane %v1148, 4
    %1151 = vrot.lane.b32.xlu0 %v1122, 92
    %v1152 = vpop.permute.xlu0 %1151
    %1153 = vrot.lane.b32.xlu0 %v1126, 92
    %v1154 = vpop.permute.xlu0 %1153
    %1155 = vrot.lane.b32.xlu0 %v1130, 92
    %v1156 = vpop.permute.xlu0 %1155
    %1157 = vrot.lane.b32.xlu0 %v1134, 92
    %v1158 = vpop.permute.xlu0 %1157
    %1159 = vrot.lane.b32.xlu0 %v1138, 92
    %v1160 = vpop.permute.xlu0 %1159
    %1161 = vrot.lane.b32.xlu0 %v1142, 92
    %v1162 = vpop.permute.xlu0 %1161
    %1163 = vrot.lane.b32.xlu0 %v1146, 92
    %v1164 = vpop.permute.xlu0 %1163
    %1165 = vrot.lane.b32.xlu0 %v1150, 92
    %v1166 = vpop.permute.xlu0 %1165
    %vm1167 = vcmask 752640
    %v1168 = vsel %vm1167, %v1152, %v1154
    %v1169 = vsel %vm1167, %v1154, %v1156
    %v1170 = vsel %vm1167, %v1156, %v1158
    %v1171 = vsel %vm1167, %v1158, %v1160
    %v1172 = vsel %vm1167, %v1160, %v1162
    %v1173 = vsel %vm1167, %v1162, %v1164
    %v1174 = vsel %vm1167, %v1164, %v1166
    %vm1182 = vsmask.f32 7954
    %vm1183 = vmand %vm1042, %vm1182
    %v1184 = vld [vmem:[#allocation2] sm:$0x10]
    %v1185 = vsel %vm1183, %v1168, %v1184
    %1186 = vst [vmem:[#allocation2] sm:$0x10] %v1185
    %v1187 = vld [vmem:[#allocation2 + $0x8] sm:$0x10]
    %v1188 = vsel %vm1183, %v1169, %v1187
    %1189 = vst [vmem:[#allocation2 + $0x8] sm:$0x10] %v1188
    %v1190 = vld [vmem:[#allocation2 + $0x10] sm:$0x10]
    %v1191 = vsel %vm1183, %v1170, %v1190
    %1192 = vst [vmem:[#allocation2 + $0x10] sm:$0x10] %v1191
    %v1193 = vld [vmem:[#allocation2 + $0x18] sm:$0x10]
    %v1194 = vsel %vm1183, %v1171, %v1193
    %1195 = vst [vmem:[#allocation2 + $0x18] sm:$0x10] %v1194
    %v1196 = vld [vmem:[#allocation2 + $0x20] sm:$0x10]
    %v1197 = vsel %vm1183, %v1172, %v1196
    %1198 = vst [vmem:[#allocation2 + $0x20] sm:$0x10] %v1197
    %v1199 = vld [vmem:[#allocation2 + $0x28] sm:$0x10]
    %v1200 = vsel %vm1183, %v1173, %v1199
    %1201 = vst [vmem:[#allocation2 + $0x28] sm:$0x10] %v1200
    %vm1202 = vmand %vm1063, %vm1182
    %v1203 = vld [vmem:[#allocation2 + $0x30] sm:$0x10]
    %v1204 = vsel %vm1202, %v1174, %v1203
    %1205 = vst [vmem:[#allocation2 + $0x30] sm:$0x10] %v1204
    %v1206 = vld [vmem:[%s0] sm:$0xff]
    %v1208 = vcombine.low %v1206, %v1206
    %v1210 = vunpack.c.l.s4 1966171168
    %v1211 = vunpack.c.0.s8 %v1210
    %v1212 = vlaneseq
    %v1213 = vshrl.u32 %v1212, 7
    %v1214 = vsub.s32 %v1211, %v1213
    %v1215 = vrot.slane %v1208, %v1214
    %v1217 = vunpack.c.l.s4 1966171168
    %v1218 = vunpack.c.0.s8 %v1217
    %v1219 = vlaneseq
    %v1220 = vshrl.u32 %v1219, 7
    %v1221 = vsub.s32 %v1218, %v1220
    %v1222 = vrot.slane %v1206, %v1221
    %v1223 = vcombine.high %v1215, %v1215
    %v1224 = vcombine.high %v1222, %v1222
    %v1226 = vunpack.c.l.s4 1966171168
    %v1227 = vunpack.c.0.s8 %v1226
    %v1228 = vlaneseq
    %v1229 = vshrl.u32 %v1228, 7
    %v1230 = vsub.s32 %v1227, %v1229
    %v1231 = vrot.slane %v1215, %v1230
    %v1233 = vunpack.c.l.s4 1966171168
    %v1234 = vunpack.c.0.s8 %v1233
    %v1235 = vlaneseq
    %v1236 = vshrl.u32 %v1235, 7
    %v1237 = vsub.s32 %v1234, %v1236
    %v1238 = vrot.slane %v1222, %v1237
    %v1240 = vunpack.c.l.s4 1966171168
    %v1241 = vunpack.c.0.s8 %v1240
    %v1242 = vlaneseq
    %v1243 = vshrl.u32 %v1242, 7
    %v1244 = vsub.s32 %v1241, %v1243
    %v1245 = vrot.slane %v1223, %v1244
    %v1247 = vunpack.c.l.s4 1966171168
    %v1248 = vunpack.c.0.s8 %v1247
    %v1249 = vlaneseq
    %v1250 = vshrl.u32 %v1249, 7
    %v1251 = vsub.s32 %v1248, %v1250
    %v1252 = vrot.slane %v1224, %v1251
    %v1253 = vcombine.low %v1231, %v1231
    %v1254 = vcombine.low %v1238, %v1238
    %v1255 = vcombine.low %v1245, %v1245
    %v1256 = vcombine.low %v1252, %v1252
    %1257 = vrot.lane.b32.xlu0 %v1253, 64
    %v1258 = vpop.permute.xlu0 %1257
    %1259 = vrot.lane.b32.xlu0 %v1255, 64
    %v1260 = vpop.permute.xlu0 %1259
    %1261 = vrot.lane.b32.xlu0 %v1231, 64
    %v1262 = vpop.permute.xlu0 %1261
    %1263 = vrot.lane.b32.xlu0 %v1245, 64
    %v1264 = vpop.permute.xlu0 %1263
    %1265 = vrot.lane.b32.xlu0 %v1254, 64
    %v1266 = vpop.permute.xlu0 %1265
    %1267 = vrot.lane.b32.xlu0 %v1256, 64
    %v1268 = vpop.permute.xlu0 %1267
    %1269 = vrot.lane.b32.xlu0 %v1238, 64
    %v1270 = vpop.permute.xlu0 %1269
    %1271 = vrot.lane.b32.xlu0 %v1252, 64
    %v1272 = vpop.permute.xlu0 %1271
    %vm1273 = vcmask 523264
    %v1274 = vsel %vm1273, %v1258, %v1260
    %v1275 = vsel %vm1273, %v1260, %v1262
    %v1276 = vsel %vm1273, %v1262, %v1264
    %v1277 = vsel %vm1273, %v1264, %v1266
    %v1278 = vsel %vm1273, %v1266, %v1268
    %v1279 = vsel %vm1273, %v1268, %v1270
    %v1280 = vsel %vm1273, %v1270, %v1272
    %vm1288 = vcmask 1045509
    %vm1289 = vsmask.f32 5376
    %vm1290 = vmand %vm1288, %vm1289
    %v1291 = vld [vmem:[#allocation2] sm:$0x20]
    %v1292 = vsel %vm1290, %v1274, %v1291
    %1293 = vst [vmem:[#allocation2] sm:$0x20] %v1292
    %v1294 = vld [vmem:[#allocation2 + $0x8] sm:$0x20]
    %v1295 = vsel %vm1290, %v1275, %v1294
    %1296 = vst [vmem:[#allocation2 + $0x8] sm:$0x20] %v1295
    %v1297 = vld [vmem:[#allocation2 + $0x10] sm:$0x20]
    %v1298 = vsel %vm1290, %v1276, %v1297
    %1299 = vst [vmem:[#allocation2 + $0x10] sm:$0x20] %v1298
    %v1300 = vld [vmem:[#allocation2 + $0x18] sm:$0x20]
    %v1301 = vsel %vm1290, %v1277, %v1300
    %1302 = vst [vmem:[#allocation2 + $0x18] sm:$0x20] %v1301
    %v1303 = vld [vmem:[#allocation2 + $0x20] sm:$0x20]
    %v1304 = vsel %vm1290, %v1278, %v1303
    %1305 = vst [vmem:[#allocation2 + $0x20] sm:$0x20] %v1304
    %v1306 = vld [vmem:[#allocation2 + $0x28] sm:$0x20]
    %v1307 = vsel %vm1290, %v1279, %v1306
    %1308 = vst [vmem:[#allocation2 + $0x28] sm:$0x20] %v1307
    %vm1309 = vcmask 1012741
    %vm1310 = vmand %vm1309, %vm1289
    %v1311 = vld [vmem:[#allocation2 + $0x30] sm:$0x20]
    %v1312 = vsel %vm1310, %v1280, %v1311
    %1313 = vst [vmem:[#allocation2 + $0x30] sm:$0x20] %v1312
    %v1314 = vld [vmem:[%s0] sm:$0xff]
    %v1316 = vcombine.high %v1314, %v1314
    %v1318 = vunpack.c.l.s4 1966171168
    %v1319 = vunpack.c.0.s8 %v1318
    %v1320 = vlaneseq
    %v1321 = vshrl.u32 %v1320, 7
    %v1322 = vsub.s32 %v1319, %v1321
    %v1323 = vrot.slane %v1314, %v1322
    %v1325 = vunpack.c.l.s4 1966171168
    %v1326 = vunpack.c.0.s8 %v1325
    %v1327 = vlaneseq
    %v1328 = vshrl.u32 %v1327, 7
    %v1329 = vsub.s32 %v1326, %v1328
    %v1330 = vrot.slane %v1316, %v1329
    %v1331 = vcombine.high %v1323, %v1323
    %v1332 = vcombine.high %v1330, %v1330
    %v1334 = vunpack.c.l.s4 1966171168
    %v1335 = vunpack.c.0.s8 %v1334
    %v1336 = vlaneseq
    %v1337 = vshrl.u32 %v1336, 7
    %v1338 = vsub.s32 %v1335, %v1337
    %v1339 = vrot.slane %v1323, %v1338
    %v1341 = vunpack.c.l.s4 1966171168
    %v1342 = vunpack.c.0.s8 %v1341
    %v1343 = vlaneseq
    %v1344 = vshrl.u32 %v1343, 7
    %v1345 = vsub.s32 %v1342, %v1344
    %v1346 = vrot.slane %v1330, %v1345
    %v1348 = vunpack.c.l.s4 1966171168
    %v1349 = vunpack.c.0.s8 %v1348
    %v1350 = vlaneseq
    %v1351 = vshrl.u32 %v1350, 7
    %v1352 = vsub.s32 %v1349, %v1351
    %v1353 = vrot.slane %v1331, %v1352
    %v1355 = vunpack.c.l.s4 1966171168
    %v1356 = vunpack.c.0.s8 %v1355
    %v1357 = vlaneseq
    %v1358 = vshrl.u32 %v1357, 7
    %v1359 = vsub.s32 %v1356, %v1358
    %v1360 = vrot.slane %v1332, %v1359
    %v1361 = vcombine.high %v1339, %v1339
    %v1362 = vcombine.high %v1346, %v1346
    %v1363 = vcombine.high %v1353, %v1353
    %v1364 = vcombine.high %v1360, %v1360
    %v1366 = vshll.u32 %v1339, 16
    %v1368 = vrot.slane %v1366, 3
    %v1370 = vshll.u32 %v1353, 16
    %v1372 = vrot.slane %v1370, 3
    %v1374 = vshll.u32 %v1361, 16
    %v1376 = vrot.slane %v1374, 3
    %v1378 = vshll.u32 %v1363, 16
    %v1380 = vrot.slane %v1378, 3
    %v1382 = vshll.u32 %v1346, 16
    %v1384 = vrot.slane %v1382, 3
    %v1386 = vshll.u32 %v1360, 16
    %v1388 = vrot.slane %v1386, 3
    %v1390 = vshll.u32 %v1362, 16
    %v1392 = vrot.slane %v1390, 3
    %v1394 = vshll.u32 %v1364, 16
    %v1396 = vrot.slane %v1394, 3
    %1397 = vrot.lane.b32.xlu0 %v1368, 63
    %v1398 = vpop.permute.xlu0 %1397
    %1399 = vrot.lane.b32.xlu0 %v1372, 63
    %v1400 = vpop.permute.xlu0 %1399
    %1401 = vrot.lane.b32.xlu0 %v1376, 63
    %v1402 = vpop.permute.xlu0 %1401
    %1403 = vrot.lane.b32.xlu0 %v1380, 63
    %v1404 = vpop.permute.xlu0 %1403
    %1405 = vrot.lane.b32.xlu0 %v1384, 63
    %v1406 = vpop.permute.xlu0 %1405
    %1407 = vrot.lane.b32.xlu0 %v1388, 63
    %v1408 = vpop.permute.xlu0 %1407
    %1409 = vrot.lane.b32.xlu0 %v1392, 63
    %v1410 = vpop.permute.xlu0 %1409
    %1411 = vrot.lane.b32.xlu0 %v1396, 63
    %v1412 = vpop.permute.xlu0 %1411
    %vm1413 = vcmask 515072
    %v1414 = vsel %vm1413, %v1398, %v1400
    %v1415 = vsel %vm1413, %v1400, %v1402
    %v1416 = vsel %vm1413, %v1402, %v1404
    %v1417 = vsel %vm1413, %v1404, %v1406
    %v1418 = vsel %vm1413, %v1406, %v1408
    %v1419 = vsel %vm1413, %v1408, %v1410
    %v1420 = vsel %vm1413, %v1410, %v1412
    %vm1428 = vsmask.f32 7958
    %vm1429 = vmand %vm1288, %vm1428
    %v1430 = vld [vmem:[#allocation2] sm:$0x20]
    %v1431 = vsel %vm1429, %v1414, %v1430
    %1432 = vst [vmem:[#allocation2] sm:$0x20] %v1431
    %v1433 = vld [vmem:[#allocation2 + $0x8] sm:$0x20]
    %v1434 = vsel %vm1429, %v1415, %v1433
    %1435 = vst [vmem:[#allocation2 + $0x8] sm:$0x20] %v1434
    %v1436 = vld [vmem:[#allocation2 + $0x10] sm:$0x20]
    %v1437 = vsel %vm1429, %v1416, %v1436
    %1438 = vst [vmem:[#allocation2 + $0x10] sm:$0x20] %v1437
    %v1439 = vld [vmem:[#allocation2 + $0x18] sm:$0x20]
    %v1440 = vsel %vm1429, %v1417, %v1439
    %1441 = vst [vmem:[#allocation2 + $0x18] sm:$0x20] %v1440
    %v1442 = vld [vmem:[#allocation2 + $0x20] sm:$0x20]
    %v1443 = vsel %vm1429, %v1418, %v1442
    %1444 = vst [vmem:[#allocation2 + $0x20] sm:$0x20] %v1443
    %v1445 = vld [vmem:[#allocation2 + $0x28] sm:$0x20]
    %v1446 = vsel %vm1429, %v1419, %v1445
    %1447 = vst [vmem:[#allocation2 + $0x28] sm:$0x20] %v1446
    %vm1448 = vmand %vm1309, %vm1428
    %v1449 = vld [vmem:[#allocation2 + $0x30] sm:$0x20]
    %v1450 = vsel %vm1448, %v1420, %v1449
    %1451 = vst [vmem:[#allocation2 + $0x30] sm:$0x20] %v1450
    %v1452 = vld [vmem:[%s0] sm:$0xff]
    %v1454 = vcombine.high %v1452, %v1452
    %v1456 = vunpack.c.l.s4 1966171168
    %v1457 = vunpack.c.0.s8 %v1456
    %v1458 = vlaneseq
    %v1459 = vshrl.u32 %v1458, 7
    %v1460 = vsub.s32 %v1457, %v1459
    %v1461 = vrot.slane %v1452, %v1460
    %v1463 = vunpack.c.l.s4 1966171168
    %v1464 = vunpack.c.0.s8 %v1463
    %v1465 = vlaneseq
    %v1466 = vshrl.u32 %v1465, 7
    %v1467 = vsub.s32 %v1464, %v1466
    %v1468 = vrot.slane %v1454, %v1467
    %v1469 = vcombine.low %v1461, %v1461
    %v1470 = vcombine.low %v1468, %v1468
    %v1472 = vunpack.c.l.s4 1966171168
    %v1473 = vunpack.c.0.s8 %v1472
    %v1474 = vlaneseq
    %v1475 = vshrl.u32 %v1474, 7
    %v1476 = vsub.s32 %v1473, %v1475
    %v1477 = vrot.slane %v1469, %v1476
    %v1479 = vunpack.c.l.s4 1966171168
    %v1480 = vunpack.c.0.s8 %v1479
    %v1481 = vlaneseq
    %v1482 = vshrl.u32 %v1481, 7
    %v1483 = vsub.s32 %v1480, %v1482
    %v1484 = vrot.slane %v1470, %v1483
    %v1486 = vunpack.c.l.s4 1966171168
    %v1487 = vunpack.c.0.s8 %v1486
    %v1488 = vlaneseq
    %v1489 = vshrl.u32 %v1488, 7
    %v1490 = vsub.s32 %v1487, %v1489
    %v1491 = vrot.slane %v1461, %v1490
    %v1493 = vunpack.c.l.s4 1966171168
    %v1494 = vunpack.c.0.s8 %v1493
    %v1495 = vlaneseq
    %v1496 = vshrl.u32 %v1495, 7
    %v1497 = vsub.s32 %v1494, %v1496
    %v1498 = vrot.slane %v1468, %v1497
    %v1499 = vcombine.low %v1477, %v1477
    %v1500 = vcombine.low %v1484, %v1484
    %v1501 = vcombine.low %v1491, %v1491
    %v1502 = vcombine.low %v1498, %v1498
    %1503 = vrot.lane.b32.xlu0 %v1499, 62
    %v1504 = vpop.permute.xlu0 %1503
    %1505 = vrot.lane.b32.xlu0 %v1501, 62
    %v1506 = vpop.permute.xlu0 %1505
    %1507 = vrot.lane.b32.xlu0 %v1477, 62
    %v1508 = vpop.permute.xlu0 %1507
    %1509 = vrot.lane.b32.xlu0 %v1491, 62
    %v1510 = vpop.permute.xlu0 %1509
    %1511 = vrot.lane.b32.xlu0 %v1500, 62
    %v1512 = vpop.permute.xlu0 %1511
    %1513 = vrot.lane.b32.xlu0 %v1502, 62
    %v1514 = vpop.permute.xlu0 %1513
    %1515 = vrot.lane.b32.xlu0 %v1484, 62
    %v1516 = vpop.permute.xlu0 %1515
    %1517 = vrot.lane.b32.xlu0 %v1498, 62
    %v1518 = vpop.permute.xlu0 %1517
    %vm1519 = vcmask 506880
    %v1520 = vsel %vm1519, %v1504, %v1506
    %v1521 = vsel %vm1519, %v1506, %v1508
    %v1522 = vsel %vm1519, %v1508, %v1510
    %v1523 = vsel %vm1519, %v1510, %v1512
    %v1524 = vsel %vm1519, %v1512, %v1514
    %v1525 = vsel %vm1519, %v1514, %v1516
    %v1526 = vsel %vm1519, %v1516, %v1518
    %vm1534 = vcmask 1046534
    %vm1535 = vsmask.f32 6400
    %vm1536 = vmand %vm1534, %vm1535
    %v1537 = vld [vmem:[#allocation2] sm:$0x40]
    %v1538 = vsel %vm1536, %v1520, %v1537
    %1539 = vst [vmem:[#allocation2] sm:$0x40] %v1538
    %v1540 = vld [vmem:[#allocation2 + $0x8] sm:$0x40]
    %v1541 = vsel %vm1536, %v1521, %v1540
    %1542 = vst [vmem:[#allocation2 + $0x8] sm:$0x40] %v1541
    %v1543 = vld [vmem:[#allocation2 + $0x10] sm:$0x40]
    %v1544 = vsel %vm1536, %v1522, %v1543
    %1545 = vst [vmem:[#allocation2 + $0x10] sm:$0x40] %v1544
    %v1546 = vld [vmem:[#allocation2 + $0x18] sm:$0x40]
    %v1547 = vsel %vm1536, %v1523, %v1546
    %1548 = vst [vmem:[#allocation2 + $0x18] sm:$0x40] %v1547
    %v1549 = vld [vmem:[#allocation2 + $0x20] sm:$0x40]
    %v1550 = vsel %vm1536, %v1524, %v1549
    %1551 = vst [vmem:[#allocation2 + $0x20] sm:$0x40] %v1550
    %v1552 = vld [vmem:[#allocation2 + $0x28] sm:$0x40]
    %v1553 = vsel %vm1536, %v1525, %v1552
    %1554 = vst [vmem:[#allocation2 + $0x28] sm:$0x40] %v1553
    %vm1555 = vcmask 1013766
    %vm1556 = vmand %vm1555, %vm1535
    %v1557 = vld [vmem:[#allocation2 + $0x30] sm:$0x40]
    %v1558 = vsel %vm1556, %v1526, %v1557
    %1559 = vst [vmem:[#allocation2 + $0x30] sm:$0x40] %v1558
    %v1560 = vld [vmem:[%s0] sm:$0xff]
    %v1562 = vcombine.high %v1560, %v1560
    %v1564 = vunpack.c.l.s4 1966171168
    %v1565 = vunpack.c.0.s8 %v1564
    %v1566 = vlaneseq
    %v1567 = vshrl.u32 %v1566, 7
    %v1568 = vsub.s32 %v1565, %v1567
    %v1569 = vrot.slane %v1560, %v1568
    %v1571 = vunpack.c.l.s4 1966171168
    %v1572 = vunpack.c.0.s8 %v1571
    %v1573 = vlaneseq
    %v1574 = vshrl.u32 %v1573, 7
    %v1575 = vsub.s32 %v1572, %v1574
    %v1576 = vrot.slane %v1562, %v1575
    %v1577 = vcombine.high %v1569, %v1569
    %v1578 = vcombine.high %v1576, %v1576
    %v1580 = vunpack.c.l.s4 1966171168
    %v1581 = vunpack.c.0.s8 %v1580
    %v1582 = vlaneseq
    %v1583 = vshrl.u32 %v1582, 7
    %v1584 = vsub.s32 %v1581, %v1583
    %v1585 = vrot.slane %v1569, %v1584
    %v1587 = vunpack.c.l.s4 1966171168
    %v1588 = vunpack.c.0.s8 %v1587
    %v1589 = vlaneseq
    %v1590 = vshrl.u32 %v1589, 7
    %v1591 = vsub.s32 %v1588, %v1590
    %v1592 = vrot.slane %v1576, %v1591
    %v1594 = vunpack.c.l.s4 1966171168
    %v1595 = vunpack.c.0.s8 %v1594
    %v1596 = vlaneseq
    %v1597 = vshrl.u32 %v1596, 7
    %v1598 = vsub.s32 %v1595, %v1597
    %v1599 = vrot.slane %v1577, %v1598
    %v1601 = vunpack.c.l.s4 1966171168
    %v1602 = vunpack.c.0.s8 %v1601
    %v1603 = vlaneseq
    %v1604 = vshrl.u32 %v1603, 7
    %v1605 = vsub.s32 %v1602, %v1604
    %v1606 = vrot.slane %v1578, %v1605
    %v1607 = vcombine.high %v1585, %v1585
    %v1608 = vcombine.high %v1592, %v1592
    %v1609 = vcombine.high %v1599, %v1599
    %v1610 = vcombine.high %v1606, %v1606
    %v1612 = vshll.u32 %v1585, 16
    %v1614 = vrot.slane %v1612, 2
    %v1616 = vshll.u32 %v1599, 16
    %v1618 = vrot.slane %v1616, 2
    %v1620 = vshll.u32 %v1607, 16
    %v1622 = vrot.slane %v1620, 2
    %v1624 = vshll.u32 %v1609, 16
    %v1626 = vrot.slane %v1624, 2
    %v1628 = vshll.u32 %v1592, 16
    %v1630 = vrot.slane %v1628, 2
    %v1632 = vshll.u32 %v1606, 16
    %v1634 = vrot.slane %v1632, 2
    %v1636 = vshll.u32 %v1608, 16
    %v1638 = vrot.slane %v1636, 2
    %v1640 = vshll.u32 %v1610, 16
    %v1642 = vrot.slane %v1640, 2
    %1643 = vrot.lane.b32.xlu0 %v1614, 61
    %v1644 = vpop.permute.xlu0 %1643
    %1645 = vrot.lane.b32.xlu0 %v1618, 61
    %v1646 = vpop.permute.xlu0 %1645
    %1647 = vrot.lane.b32.xlu0 %v1622, 61
    %v1648 = vpop.permute.xlu0 %1647
    %1649 = vrot.lane.b32.xlu0 %v1626, 61
    %v1650 = vpop.permute.xlu0 %1649
    %1651 = vrot.lane.b32.xlu0 %v1630, 61
    %v1652 = vpop.permute.xlu0 %1651
    %1653 = vrot.lane.b32.xlu0 %v1634, 61
    %v1654 = vpop.permute.xlu0 %1653
    %1655 = vrot.lane.b32.xlu0 %v1638, 61
    %v1656 = vpop.permute.xlu0 %1655
    %1657 = vrot.lane.b32.xlu0 %v1642, 61
    %v1658 = vpop.permute.xlu0 %1657
    %vm1659 = vcmask 498688
    %v1660 = vsel %vm1659, %v1644, %v1646
    %v1661 = vsel %vm1659, %v1646, %v1648
    %v1662 = vsel %vm1659, %v1648, %v1650
    %v1663 = vsel %vm1659, %v1650, %v1652
    %v1664 = vsel %vm1659, %v1652, %v1654
    %v1665 = vsel %vm1659, %v1654, %v1656
    %v1666 = vsel %vm1659, %v1656, %v1658
    %vm1674 = vsmask.f32 7962
    %vm1675 = vmand %vm1534, %vm1674
    %v1676 = vld [vmem:[#allocation2] sm:$0x40]
    %v1677 = vsel %vm1675, %v1660, %v1676
    %1678 = vst [vmem:[#allocation2] sm:$0x40] %v1677
    %v1679 = vld [vmem:[#allocation2 + $0x8] sm:$0x40]
    %v1680 = vsel %vm1675, %v1661, %v1679
    %1681 = vst [vmem:[#allocation2 + $0x8] sm:$0x40] %v1680
    %v1682 = vld [vmem:[#allocation2 + $0x10] sm:$0x40]
    %v1683 = vsel %vm1675, %v1662, %v1682
    %1684 = vst [vmem:[#allocation2 + $0x10] sm:$0x40] %v1683
    %v1685 = vld [vmem:[#allocation2 + $0x18] sm:$0x40]
    %v1686 = vsel %vm1675, %v1663, %v1685
    %1687 = vst [vmem:[#allocation2 + $0x18] sm:$0x40] %v1686
    %v1688 = vld [vmem:[#allocation2 + $0x20] sm:$0x40]
    %v1689 = vsel %vm1675, %v1664, %v1688
    %1690 = vst [vmem:[#allocation2 + $0x20] sm:$0x40] %v1689
    %v1691 = vld [vmem:[#allocation2 + $0x28] sm:$0x40]
    %v1692 = vsel %vm1675, %v1665, %v1691
    %1693 = vst [vmem:[#allocation2 + $0x28] sm:$0x40] %v1692
    %vm1694 = vmand %vm1555, %vm1674
    %v1695 = vld [vmem:[#allocation2 + $0x30] sm:$0x40]
    %v1696 = vsel %vm1694, %v1666, %v1695
    %1697 = vst [vmem:[#allocation2 + $0x30] sm:$0x40] %v1696
    %v1698 = vld [vmem:[%s0] sm:$0xff]
    %v1700 = vcombine.low %v1698, %v1698
    %v1702 = vunpack.c.l.s4 1966171168
    %v1703 = vunpack.c.0.s8 %v1702
    %v1704 = vlaneseq
    %v1705 = vshrl.u32 %v1704, 7
    %v1706 = vsub.s32 %v1703, %v1705
    %v1707 = vrot.slane %v1700, %v1706
    %v1709 = vunpack.c.l.s4 1966171168
    %v1710 = vunpack.c.0.s8 %v1709
    %v1711 = vlaneseq
    %v1712 = vshrl.u32 %v1711, 7
    %v1713 = vsub.s32 %v1710, %v1712
    %v1714 = vrot.slane %v1698, %v1713
    %v1715 = vcombine.low %v1707, %v1707
    %v1716 = vcombine.low %v1714, %v1714
    %v1718 = vunpack.c.l.s4 1966171168
    %v1719 = vunpack.c.0.s8 %v1718
    %v1720 = vlaneseq
    %v1721 = vshrl.u32 %v1720, 7
    %v1722 = vsub.s32 %v1719, %v1721
    %v1723 = vrot.slane %v1715, %v1722
    %v1725 = vunpack.c.l.s4 1966171168
    %v1726 = vunpack.c.0.s8 %v1725
    %v1727 = vlaneseq
    %v1728 = vshrl.u32 %v1727, 7
    %v1729 = vsub.s32 %v1726, %v1728
    %v1730 = vrot.slane %v1716, %v1729
    %v1732 = vunpack.c.l.s4 1966171168
    %v1733 = vunpack.c.0.s8 %v1732
    %v1734 = vlaneseq
    %v1735 = vshrl.u32 %v1734, 7
    %v1736 = vsub.s32 %v1733, %v1735
    %v1737 = vrot.slane %v1707, %v1736
    %v1739 = vunpack.c.l.s4 1966171168
    %v1740 = vunpack.c.0.s8 %v1739
    %v1741 = vlaneseq
    %v1742 = vshrl.u32 %v1741, 7
    %v1743 = vsub.s32 %v1740, %v1742
    %v1744 = vrot.slane %v1714, %v1743
    %v1745 = vcombine.low %v1723, %v1723
    %v1746 = vcombine.low %v1730, %v1730
    %v1747 = vcombine.low %v1737, %v1737
    %v1748 = vcombine.low %v1744, %v1744
    %1749 = vrot.lane.b32.xlu0 %v1745, 60
    %v1750 = vpop.permute.xlu0 %1749
    %1751 = vrot.lane.b32.xlu0 %v1747, 60
    %v1752 = vpop.permute.xlu0 %1751
    %1753 = vrot.lane.b32.xlu0 %v1723, 60
    %v1754 = vpop.permute.xlu0 %1753
    %1755 = vrot.lane.b32.xlu0 %v1737, 60
    %v1756 = vpop.permute.xlu0 %1755
    %1757 = vrot.lane.b32.xlu0 %v1746, 60
    %v1758 = vpop.permute.xlu0 %1757
    %1759 = vrot.lane.b32.xlu0 %v1748, 60
    %v1760 = vpop.permute.xlu0 %1759
    %1761 = vrot.lane.b32.xlu0 %v1730, 60
    %v1762 = vpop.permute.xlu0 %1761
    %1763 = vrot.lane.b32.xlu0 %v1744, 60
    %v1764 = vpop.permute.xlu0 %1763
    %vm1765 = vcmask 490496
    %v1766 = vsel %vm1765, %v1750, %v1752
    %v1767 = vsel %vm1765, %v1752, %v1754
    %v1768 = vsel %vm1765, %v1754, %v1756
    %v1769 = vsel %vm1765, %v1756, %v1758
    %v1770 = vsel %vm1765, %v1758, %v1760
    %v1771 = vsel %vm1765, %v1760, %v1762
    %v1772 = vsel %vm1765, %v1762, %v1764
    %vm1780 = vcmask 1047559
    %vm1781 = vsmask.f32 7424
    %vm1782 = vmand %vm1780, %vm1781
    %v1783 = vld [vmem:[#allocation2] sm:$0x80]
    %v1784 = vsel %vm1782, %v1766, %v1783
    %1785 = vst [vmem:[#allocation2] sm:$0x80] %v1784
    %v1786 = vld [vmem:[#allocation2 + $0x8] sm:$0x80]
    %v1787 = vsel %vm1782, %v1767, %v1786
    %1788 = vst [vmem:[#allocation2 + $0x8] sm:$0x80] %v1787
    %v1789 = vld [vmem:[#allocation2 + $0x10] sm:$0x80]
    %v1790 = vsel %vm1782, %v1768, %v1789
    %1791 = vst [vmem:[#allocation2 + $0x10] sm:$0x80] %v1790
    %v1792 = vld [vmem:[#allocation2 + $0x18] sm:$0x80]
    %v1793 = vsel %vm1782, %v1769, %v1792
    %1794 = vst [vmem:[#allocation2 + $0x18] sm:$0x80] %v1793
    %v1795 = vld [vmem:[#allocation2 + $0x20] sm:$0x80]
    %v1796 = vsel %vm1782, %v1770, %v1795
    %1797 = vst [vmem:[#allocation2 + $0x20] sm:$0x80] %v1796
    %v1798 = vld [vmem:[#allocation2 + $0x28] sm:$0x80]
    %v1799 = vsel %vm1782, %v1771, %v1798
    %1800 = vst [vmem:[#allocation2 + $0x28] sm:$0x80] %v1799
    %vm1801 = vcmask 1014791
    %vm1802 = vmand %vm1801, %vm1781
    %v1803 = vld [vmem:[#allocation2 + $0x30] sm:$0x80]
    %v1804 = vsel %vm1802, %v1772, %v1803
    %1805 = vst [vmem:[#allocation2 + $0x30] sm:$0x80] %v1804
    %v1806 = vld [vmem:[%s0] sm:$0xff]
    %v1808 = vcombine.high %v1806, %v1806
    %v1810 = vunpack.c.l.s4 1966171168
    %v1811 = vunpack.c.0.s8 %v1810
    %v1812 = vlaneseq
    %v1813 = vshrl.u32 %v1812, 7
    %v1814 = vsub.s32 %v1811, %v1813
    %v1815 = vrot.slane %v1806, %v1814
    %v1817 = vunpack.c.l.s4 1966171168
    %v1818 = vunpack.c.0.s8 %v1817
    %v1819 = vlaneseq
    %v1820 = vshrl.u32 %v1819, 7
    %v1821 = vsub.s32 %v1818, %v1820
    %v1822 = vrot.slane %v1808, %v1821
    %v1823 = vcombine.high %v1815, %v1815
    %v1824 = vcombine.high %v1822, %v1822
    %v1826 = vunpack.c.l.s4 1966171168
    %v1827 = vunpack.c.0.s8 %v1826
    %v1828 = vlaneseq
    %v1829 = vshrl.u32 %v1828, 7
    %v1830 = vsub.s32 %v1827, %v1829
    %v1831 = vrot.slane %v1815, %v1830
    %v1833 = vunpack.c.l.s4 1966171168
    %v1834 = vunpack.c.0.s8 %v1833
    %v1835 = vlaneseq
    %v1836 = vshrl.u32 %v1835, 7
    %v1837 = vsub.s32 %v1834, %v1836
    %v1838 = vrot.slane %v1822, %v1837
    %v1840 = vunpack.c.l.s4 1966171168
    %v1841 = vunpack.c.0.s8 %v1840
    %v1842 = vlaneseq
    %v1843 = vshrl.u32 %v1842, 7
    %v1844 = vsub.s32 %v1841, %v1843
    %v1845 = vrot.slane %v1823, %v1844
    %v1847 = vunpack.c.l.s4 1966171168
    %v1848 = vunpack.c.0.s8 %v1847
    %v1849 = vlaneseq
    %v1850 = vshrl.u32 %v1849, 7
    %v1851 = vsub.s32 %v1848, %v1850
    %v1852 = vrot.slane %v1824, %v1851
    %v1853 = vcombine.high %v1831, %v1831
    %v1854 = vcombine.high %v1838, %v1838
    %v1855 = vcombine.high %v1845, %v1845
    %v1856 = vcombine.high %v1852, %v1852
    %v1858 = vshll.u32 %v1831, 16
    %v1860 = vrot.slane %v1858, 1
    %v1862 = vshll.u32 %v1845, 16
    %v1864 = vrot.slane %v1862, 1
    %v1866 = vshll.u32 %v1853, 16
    %v1868 = vrot.slane %v1866, 1
    %v1870 = vshll.u32 %v1855, 16
    %v1872 = vrot.slane %v1870, 1
    %v1874 = vshll.u32 %v1838, 16
    %v1876 = vrot.slane %v1874, 1
    %v1878 = vshll.u32 %v1852, 16
    %v1880 = vrot.slane %v1878, 1
    %v1882 = vshll.u32 %v1854, 16
    %v1884 = vrot.slane %v1882, 1
    %v1886 = vshll.u32 %v1856, 16
    %v1888 = vrot.slane %v1886, 1
    %1889 = vrot.lane.b32.xlu0 %v1860, 32
    %v1890 = vpop.permute.xlu0 %1889
    %1891 = vrot.lane.b32.xlu0 %v1864, 32
    %v1892 = vpop.permute.xlu0 %1891
    %1893 = vrot.lane.b32.xlu0 %v1868, 32
    %v1894 = vpop.permute.xlu0 %1893
    %1895 = vrot.lane.b32.xlu0 %v1872, 32
    %v1896 = vpop.permute.xlu0 %1895
    %1897 = vrot.lane.b32.xlu0 %v1876, 32
    %v1898 = vpop.permute.xlu0 %1897
    %1899 = vrot.lane.b32.xlu0 %v1880, 32
    %v1900 = vpop.permute.xlu0 %1899
    %1901 = vrot.lane.b32.xlu0 %v1884, 32
    %v1902 = vpop.permute.xlu0 %1901
    %1903 = vrot.lane.b32.xlu0 %v1888, 32
    %v1904 = vpop.permute.xlu0 %1903
    %vm1905 = vcmask 261120
    %v1906 = vsel %vm1905, %v1890, %v1892
    %v1907 = vsel %vm1905, %v1892, %v1894
    %v1908 = vsel %vm1905, %v1894, %v1896
    %v1909 = vsel %vm1905, %v1896, %v1898
    %v1910 = vsel %vm1905, %v1898, %v1900
    %v1911 = vsel %vm1905, %v1900, %v1902
    %v1912 = vsel %vm1905, %v1902, %v1904
    %vm1920 = vsmask.f32 7966
    %vm1921 = vmand %vm1780, %vm1920
    %v1922 = vld [vmem:[#allocation2] sm:$0x80]
    %v1923 = vsel %vm1921, %v1906, %v1922
    %1924 = vst [vmem:[#allocation2] sm:$0x80] %v1923
    %v1925 = vld [vmem:[#allocation2 + $0x8] sm:$0x80]
    %v1926 = vsel %vm1921, %v1907, %v1925
    %1927 = vst [vmem:[#allocation2 + $0x8] sm:$0x80] %v1926
    %v1928 = vld [vmem:[#allocation2 + $0x10] sm:$0x80]
    %v1929 = vsel %vm1921, %v1908, %v1928
    %1930 = vst [vmem:[#allocation2 + $0x10] sm:$0x80] %v1929
    %v1931 = vld [vmem:[#allocation2 + $0x18] sm:$0x80]
    %v1932 = vsel %vm1921, %v1909, %v1931
    %1933 = vst [vmem:[#allocation2 + $0x18] sm:$0x80] %v1932
    %v1934 = vld [vmem:[#allocation2 + $0x20] sm:$0x80]
    %v1935 = vsel %vm1921, %v1910, %v1934
    %1936 = vst [vmem:[#allocation2 + $0x20] sm:$0x80] %v1935
    %v1937 = vld [vmem:[#allocation2 + $0x28] sm:$0x80]
    %v1938 = vsel %vm1921, %v1911, %v1937
    %1939 = vst [vmem:[#allocation2 + $0x28] sm:$0x80] %v1938
    %vm1940 = vmand %vm1801, %vm1920
    %v1941 = vld [vmem:[#allocation2 + $0x30] sm:$0x80]
    %v1942 = vsel %vm1940, %v1912, %v1941
    %1943 = vst [vmem:[#allocation2 + $0x30] sm:$0x80] %v1942
    %v1944 = vld [vmem:[%s0] sm:$0xff]
    %v1946 = vcombine.high %v1944, %v1944
    %v1948 = vunpack.c.l.s4 1966171168
    %v1949 = vunpack.c.0.s8 %v1948
    %v1950 = vlaneseq
    %v1951 = vshrl.u32 %v1950, 7
    %v1952 = vsub.s32 %v1949, %v1951
    %v1953 = vrot.slane %v1944, %v1952
    %v1955 = vunpack.c.l.s4 1966171168
    %v1956 = vunpack.c.0.s8 %v1955
    %v1957 = vlaneseq
    %v1958 = vshrl.u32 %v1957, 7
    %v1959 = vsub.s32 %v1956, %v1958
    %v1960 = vrot.slane %v1946, %v1959
    %v1961 = vcombine.high %v1953, %v1953
    %v1962 = vcombine.high %v1960, %v1960
    %v1964 = vunpack.c.l.s4 1966171168
    %v1965 = vunpack.c.0.s8 %v1964
    %v1966 = vlaneseq
    %v1967 = vshrl.u32 %v1966, 7
    %v1968 = vsub.s32 %v1965, %v1967
    %v1969 = vrot.slane %v1953, %v1968
    %v1971 = vunpack.c.l.s4 1966171168
    %v1972 = vunpack.c.0.s8 %v1971
    %v1973 = vlaneseq
    %v1974 = vshrl.u32 %v1973, 7
    %v1975 = vsub.s32 %v1972, %v1974
    %v1976 = vrot.slane %v1960, %v1975
    %v1978 = vunpack.c.l.s4 1966171168
    %v1979 = vunpack.c.0.s8 %v1978
    %v1980 = vlaneseq
    %v1981 = vshrl.u32 %v1980, 7
    %v1982 = vsub.s32 %v1979, %v1981
    %v1983 = vrot.slane %v1961, %v1982
    %v1985 = vunpack.c.l.s4 1966171168
    %v1986 = vunpack.c.0.s8 %v1985
    %v1987 = vlaneseq
    %v1988 = vshrl.u32 %v1987, 7
    %v1989 = vsub.s32 %v1986, %v1988
    %v1990 = vrot.slane %v1962, %v1989
    %v1991 = vcombine.high %v1969, %v1969
    %v1992 = vcombine.high %v1976, %v1976
    %v1993 = vcombine.high %v1983, %v1983
    %v1994 = vcombine.high %v1990, %v1990
    %1995 = vrot.lane.b32.xlu0 %v1969, 31
    %v1996 = vpop.permute.xlu0 %1995
    %1997 = vrot.lane.b32.xlu0 %v1983, 31
    %v1998 = vpop.permute.xlu0 %1997
    %1999 = vrot.lane.b32.xlu0 %v1991, 31
    %v2000 = vpop.permute.xlu0 %1999
    %2001 = vrot.lane.b32.xlu0 %v1993, 31
    %v2002 = vpop.permute.xlu0 %2001
    %2003 = vrot.lane.b32.xlu0 %v1976, 31
    %v2004 = vpop.permute.xlu0 %2003
    %2005 = vrot.lane.b32.xlu0 %v1990, 31
    %v2006 = vpop.permute.xlu0 %2005
    %2007 = vrot.lane.b32.xlu0 %v1992, 31
    %v2008 = vpop.permute.xlu0 %2007
    %2009 = vrot.lane.b32.xlu0 %v1994, 31
    %v2010 = vpop.permute.xlu0 %2009
    %vm2011 = vcmask 252928
    %v2012 = vsel %vm2011, %v1996, %v1998
    %v2013 = vsel %vm2011, %v1998, %v2000
    %v2014 = vsel %vm2011, %v2000, %v2002
    %v2015 = vsel %vm2011, %v2002, %v2004
    %v2016 = vsel %vm2011, %v2004, %v2006
    %v2017 = vsel %vm2011, %v2006, %v2008
    %v2018 = vsel %vm2011, %v2008, %v2010
    %v2026 = vld [vmem:[#allocation2 + $0x70] sm:$0x1]
    %v2027 = vsel %vm91, %v2012, %v2026
    %2028 = vst [vmem:[#allocation2 + $0x70] sm:$0x1] %v2027
    %v2029 = vld [vmem:[#allocation2 + $0x78] sm:$0x1]
    %v2030 = vsel %vm91, %v2013, %v2029
    %2031 = vst [vmem:[#allocation2 + $0x78] sm:$0x1] %v2030
    %v2032 = vld [vmem:[#allocation2 + $0x80] sm:$0x1]
    %v2033 = vsel %vm91, %v2014, %v2032
    %2034 = vst [vmem:[#allocation2 + $0x80] sm:$0x1] %v2033
    %v2035 = vld [vmem:[#allocation2 + $0x88] sm:$0x1]
    %v2036 = vsel %vm91, %v2015, %v2035
    %2037 = vst [vmem:[#allocation2 + $0x88] sm:$0x1] %v2036
    %v2038 = vld [vmem:[#allocation2 + $0x90] sm:$0x1]
    %v2039 = vsel %vm91, %v2016, %v2038
    %2040 = vst [vmem:[#allocation2 + $0x90] sm:$0x1] %v2039
    %v2041 = vld [vmem:[#allocation2 + $0x98] sm:$0x1]
    %v2042 = vsel %vm91, %v2017, %v2041
    %2043 = vst [vmem:[#allocation2 + $0x98] sm:$0x1] %v2042
    %v2044 = vld [vmem:[#allocation2 + $0xa0] sm:$0x1]
    %v2045 = vsel %vm111, %v2018, %v2044
    %2046 = vst [vmem:[#allocation2 + $0xa0] sm:$0x1] %v2045
    %v2047 = vld [vmem:[%s0] sm:$0xff]
    %v2049 = vcombine.high %v2047, %v2047
    %v2051 = vunpack.c.l.s4 1966171168
    %v2052 = vunpack.c.0.s8 %v2051
    %v2053 = vlaneseq
    %v2054 = vshrl.u32 %v2053, 7
    %v2055 = vsub.s32 %v2052, %v2054
    %v2056 = vrot.slane %v2047, %v2055
    %v2058 = vunpack.c.l.s4 1966171168
    %v2059 = vunpack.c.0.s8 %v2058
    %v2060 = vlaneseq
    %v2061 = vshrl.u32 %v2060, 7
    %v2062 = vsub.s32 %v2059, %v2061
    %v2063 = vrot.slane %v2049, %v2062
    %v2064 = vcombine.high %v2056, %v2056
    %v2065 = vcombine.high %v2063, %v2063
    %v2067 = vunpack.c.l.s4 1966171168
    %v2068 = vunpack.c.0.s8 %v2067
    %v2069 = vlaneseq
    %v2070 = vshrl.u32 %v2069, 7
    %v2071 = vsub.s32 %v2068, %v2070
    %v2072 = vrot.slane %v2056, %v2071
    %v2074 = vunpack.c.l.s4 1966171168
    %v2075 = vunpack.c.0.s8 %v2074
    %v2076 = vlaneseq
    %v2077 = vshrl.u32 %v2076, 7
    %v2078 = vsub.s32 %v2075, %v2077
    %v2079 = vrot.slane %v2063, %v2078
    %v2081 = vunpack.c.l.s4 1966171168
    %v2082 = vunpack.c.0.s8 %v2081
    %v2083 = vlaneseq
    %v2084 = vshrl.u32 %v2083, 7
    %v2085 = vsub.s32 %v2082, %v2084
    %v2086 = vrot.slane %v2064, %v2085
    %v2088 = vunpack.c.l.s4 1966171168
    %v2089 = vunpack.c.0.s8 %v2088
    %v2090 = vlaneseq
    %v2091 = vshrl.u32 %v2090, 7
    %v2092 = vsub.s32 %v2089, %v2091
    %v2093 = vrot.slane %v2065, %v2092
    %v2094 = vcombine.high %v2072, %v2072
    %v2095 = vcombine.high %v2079, %v2079
    %v2096 = vcombine.high %v2086, %v2086
    %v2097 = vcombine.high %v2093, %v2093
    %v2099 = vshll.u32 %v2072, 16
    %v2102 = vshll.u32 %v2086, 16
    %v2105 = vshll.u32 %v2094, 16
    %v2108 = vshll.u32 %v2096, 16
    %v2111 = vshll.u32 %v2079, 16
    %v2114 = vshll.u32 %v2093, 16
    %v2117 = vshll.u32 %v2095, 16
    %v2120 = vshll.u32 %v2097, 16
    %2122 = vrot.lane.b32.xlu0 %v2099, 30
    %v2123 = vpop.permute.xlu0 %2122
    %2124 = vrot.lane.b32.xlu0 %v2102, 30
    %v2125 = vpop.permute.xlu0 %2124
    %2126 = vrot.lane.b32.xlu0 %v2105, 30
    %v2127 = vpop.permute.xlu0 %2126
    %2128 = vrot.lane.b32.xlu0 %v2108, 30
    %v2129 = vpop.permute.xlu0 %2128
    %2130 = vrot.lane.b32.xlu0 %v2111, 30
    %v2131 = vpop.permute.xlu0 %2130
    %2132 = vrot.lane.b32.xlu0 %v2114, 30
    %v2133 = vpop.permute.xlu0 %2132
    %2134 = vrot.lane.b32.xlu0 %v2117, 30
    %v2135 = vpop.permute.xlu0 %2134
    %2136 = vrot.lane.b32.xlu0 %v2120, 30
    %v2137 = vpop.permute.xlu0 %2136
    %vm2138 = vcmask 244736
    %v2139 = vsel %vm2138, %v2123, %v2125
    %v2140 = vsel %vm2138, %v2125, %v2127
    %v2141 = vsel %vm2138, %v2127, %v2129
    %v2142 = vsel %vm2138, %v2129, %v2131
    %v2143 = vsel %vm2138, %v2131, %v2133
    %v2144 = vsel %vm2138, %v2133, %v2135
    %v2145 = vsel %vm2138, %v2135, %v2137
    %v2153 = vld [vmem:[#allocation2 + $0x70] sm:$0x1]
    %v2154 = vsel %vm215, %v2139, %v2153
    %2155 = vst [vmem:[#allocation2 + $0x70] sm:$0x1] %v2154
    %v2156 = vld [vmem:[#allocation2 + $0x78] sm:$0x1]
    %v2157 = vsel %vm215, %v2140, %v2156
    %2158 = vst [vmem:[#allocation2 + $0x78] sm:$0x1] %v2157
    %v2159 = vld [vmem:[#allocation2 + $0x80] sm:$0x1]
    %v2160 = vsel %vm215, %v2141, %v2159
    %2161 = vst [vmem:[#allocation2 + $0x80] sm:$0x1] %v2160
    %v2162 = vld [vmem:[#allocation2 + $0x88] sm:$0x1]
    %v2163 = vsel %vm215, %v2142, %v2162
    %2164 = vst [vmem:[#allocation2 + $0x88] sm:$0x1] %v2163
    %v2165 = vld [vmem:[#allocation2 + $0x90] sm:$0x1]
    %v2166 = vsel %vm215, %v2143, %v2165
    %2167 = vst [vmem:[#allocation2 + $0x90] sm:$0x1] %v2166
    %v2168 = vld [vmem:[#allocation2 + $0x98] sm:$0x1]
    %v2169 = vsel %vm215, %v2144, %v2168
    %2170 = vst [vmem:[#allocation2 + $0x98] sm:$0x1] %v2169
    %v2171 = vld [vmem:[#allocation2 + $0xa0] sm:$0x1]
    %v2172 = vsel %vm234, %v2145, %v2171
    %2173 = vst [vmem:[#allocation2 + $0xa0] sm:$0x1] %v2172
    %v2174 = vld [vmem:[%s0] sm:$0xff]
    %v2176 = vcombine.low %v2174, %v2174
    %v2178 = vunpack.c.l.s4 1966171168
    %v2179 = vunpack.c.0.s8 %v2178
    %v2180 = vlaneseq
    %v2181 = vshrl.u32 %v2180, 7
    %v2182 = vsub.s32 %v2179, %v2181
    %v2183 = vrot.slane %v2176, %v2182
    %v2185 = vunpack.c.l.s4 1966171168
    %v2186 = vunpack.c.0.s8 %v2185
    %v2187 = vlaneseq
    %v2188 = vshrl.u32 %v2187, 7
    %v2189 = vsub.s32 %v2186, %v2188
    %v2190 = vrot.slane %v2174, %v2189
    %v2191 = vcombine.high %v2183, %v2183
    %v2192 = vcombine.high %v2190, %v2190
    %v2194 = vunpack.c.l.s4 1966171168
    %v2195 = vunpack.c.0.s8 %v2194
    %v2196 = vlaneseq
    %v2197 = vshrl.u32 %v2196, 7
    %v2198 = vsub.s32 %v2195, %v2197
    %v2199 = vrot.slane %v2183, %v2198
    %v2201 = vunpack.c.l.s4 1966171168
    %v2202 = vunpack.c.0.s8 %v2201
    %v2203 = vlaneseq
    %v2204 = vshrl.u32 %v2203, 7
    %v2205 = vsub.s32 %v2202, %v2204
    %v2206 = vrot.slane %v2190, %v2205
    %v2208 = vunpack.c.l.s4 1966171168
    %v2209 = vunpack.c.0.s8 %v2208
    %v2210 = vlaneseq
    %v2211 = vshrl.u32 %v2210, 7
    %v2212 = vsub.s32 %v2209, %v2211
    %v2213 = vrot.slane %v2191, %v2212
    %v2215 = vunpack.c.l.s4 1966171168
    %v2216 = vunpack.c.0.s8 %v2215
    %v2217 = vlaneseq
    %v2218 = vshrl.u32 %v2217, 7
    %v2219 = vsub.s32 %v2216, %v2218
    %v2220 = vrot.slane %v2192, %v2219
    %v2221 = vcombine.high %v2199, %v2199
    %v2222 = vcombine.high %v2206, %v2206
    %v2223 = vcombine.high %v2213, %v2213
    %v2224 = vcombine.high %v2220, %v2220
    %2225 = vrot.lane.b32.xlu0 %v2199, 29
    %v2226 = vpop.permute.xlu0 %2225
    %2227 = vrot.lane.b32.xlu0 %v2213, 29
    %v2228 = vpop.permute.xlu0 %2227
    %2229 = vrot.lane.b32.xlu0 %v2221, 29
    %v2230 = vpop.permute.xlu0 %2229
    %2231 = vrot.lane.b32.xlu0 %v2223, 29
    %v2232 = vpop.permute.xlu0 %2231
    %2233 = vrot.lane.b32.xlu0 %v2206, 29
    %v2234 = vpop.permute.xlu0 %2233
    %2235 = vrot.lane.b32.xlu0 %v2220, 29
    %v2236 = vpop.permute.xlu0 %2235
    %2237 = vrot.lane.b32.xlu0 %v2222, 29
    %v2238 = vpop.permute.xlu0 %2237
    %2239 = vrot.lane.b32.xlu0 %v2224, 29
    %v2240 = vpop.permute.xlu0 %2239
    %vm2241 = vcmask 236544
    %v2242 = vsel %vm2241, %v2226, %v2228
    %v2243 = vsel %vm2241, %v2228, %v2230
    %v2244 = vsel %vm2241, %v2230, %v2232
    %v2245 = vsel %vm2241, %v2232, %v2234
    %v2246 = vsel %vm2241, %v2234, %v2236
    %v2247 = vsel %vm2241, %v2236, %v2238
    %v2248 = vsel %vm2241, %v2238, %v2240
    %v2256 = vld [vmem:[#allocation2 + $0x70] sm:$0x2]
    %v2257 = vsel %vm318, %v2242, %v2256
    %2258 = vst [vmem:[#allocation2 + $0x70] sm:$0x2] %v2257
    %v2259 = vld [vmem:[#allocation2 + $0x78] sm:$0x2]
    %v2260 = vsel %vm318, %v2243, %v2259
    %2261 = vst [vmem:[#allocation2 + $0x78] sm:$0x2] %v2260
    %v2262 = vld [vmem:[#allocation2 + $0x80] sm:$0x2]
    %v2263 = vsel %vm318, %v2244, %v2262
    %2264 = vst [vmem:[#allocation2 + $0x80] sm:$0x2] %v2263
    %v2265 = vld [vmem:[#allocation2 + $0x88] sm:$0x2]
    %v2266 = vsel %vm318, %v2245, %v2265
    %2267 = vst [vmem:[#allocation2 + $0x88] sm:$0x2] %v2266
    %v2268 = vld [vmem:[#allocation2 + $0x90] sm:$0x2]
    %v2269 = vsel %vm318, %v2246, %v2268
    %2270 = vst [vmem:[#allocation2 + $0x90] sm:$0x2] %v2269
    %v2271 = vld [vmem:[#allocation2 + $0x98] sm:$0x2]
    %v2272 = vsel %vm318, %v2247, %v2271
    %2273 = vst [vmem:[#allocation2 + $0x98] sm:$0x2] %v2272
    %v2274 = vld [vmem:[#allocation2 + $0xa0] sm:$0x2]
    %v2275 = vsel %vm338, %v2248, %v2274
    %2276 = vst [vmem:[#allocation2 + $0xa0] sm:$0x2] %v2275
    %v2277 = vld [vmem:[%s0] sm:$0xff]
    %v2279 = vcombine.high %v2277, %v2277
    %v2281 = vunpack.c.l.s4 1966171168
    %v2282 = vunpack.c.0.s8 %v2281
    %v2283 = vlaneseq
    %v2284 = vshrl.u32 %v2283, 7
    %v2285 = vsub.s32 %v2282, %v2284
    %v2286 = vrot.slane %v2277, %v2285
    %v2288 = vunpack.c.l.s4 1966171168
    %v2289 = vunpack.c.0.s8 %v2288
    %v2290 = vlaneseq
    %v2291 = vshrl.u32 %v2290, 7
    %v2292 = vsub.s32 %v2289, %v2291
    %v2293 = vrot.slane %v2279, %v2292
    %v2294 = vcombine.high %v2286, %v2286
    %v2295 = vcombine.high %v2293, %v2293
    %v2297 = vunpack.c.l.s4 1966171168
    %v2298 = vunpack.c.0.s8 %v2297
    %v2299 = vlaneseq
    %v2300 = vshrl.u32 %v2299, 7
    %v2301 = vsub.s32 %v2298, %v2300
    %v2302 = vrot.slane %v2286, %v2301
    %v2304 = vunpack.c.l.s4 1966171168
    %v2305 = vunpack.c.0.s8 %v2304
    %v2306 = vlaneseq
    %v2307 = vshrl.u32 %v2306, 7
    %v2308 = vsub.s32 %v2305, %v2307
    %v2309 = vrot.slane %v2293, %v2308
    %v2311 = vunpack.c.l.s4 1966171168
    %v2312 = vunpack.c.0.s8 %v2311
    %v2313 = vlaneseq
    %v2314 = vshrl.u32 %v2313, 7
    %v2315 = vsub.s32 %v2312, %v2314
    %v2316 = vrot.slane %v2294, %v2315
    %v2318 = vunpack.c.l.s4 1966171168
    %v2319 = vunpack.c.0.s8 %v2318
    %v2320 = vlaneseq
    %v2321 = vshrl.u32 %v2320, 7
    %v2322 = vsub.s32 %v2319, %v2321
    %v2323 = vrot.slane %v2295, %v2322
    %v2324 = vcombine.high %v2302, %v2302
    %v2325 = vcombine.high %v2309, %v2309
    %v2326 = vcombine.high %v2316, %v2316
    %v2327 = vcombine.high %v2323, %v2323
    %v2329 = vshll.u32 %v2302, 16
    %v2331 = vrot.slane %v2329, 7
    %v2333 = vshll.u32 %v2316, 16
    %v2335 = vrot.slane %v2333, 7
    %v2337 = vshll.u32 %v2324, 16
    %v2339 = vrot.slane %v2337, 7
    %v2341 = vshll.u32 %v2326, 16
    %v2343 = vrot.slane %v2341, 7
    %v2345 = vshll.u32 %v2309, 16
    %v2347 = vrot.slane %v2345, 7
    %v2349 = vshll.u32 %v2323, 16
    %v2351 = vrot.slane %v2349, 7
    %v2353 = vshll.u32 %v2325, 16
    %v2355 = vrot.slane %v2353, 7
    %v2357 = vshll.u32 %v2327, 16
    %v2359 = vrot.slane %v2357, 7
    %2360 = vrot.lane.b32.xlu0 %v2331, 28
    %v2361 = vpop.permute.xlu0 %2360
    %2362 = vrot.lane.b32.xlu0 %v2335, 28
    %v2363 = vpop.permute.xlu0 %2362
    %2364 = vrot.lane.b32.xlu0 %v2339, 28
    %v2365 = vpop.permute.xlu0 %2364
    %2366 = vrot.lane.b32.xlu0 %v2343, 28
    %v2367 = vpop.permute.xlu0 %2366
    %2368 = vrot.lane.b32.xlu0 %v2347, 28
    %v2369 = vpop.permute.xlu0 %2368
    %2370 = vrot.lane.b32.xlu0 %v2351, 28
    %v2371 = vpop.permute.xlu0 %2370
    %2372 = vrot.lane.b32.xlu0 %v2355, 28
    %v2373 = vpop.permute.xlu0 %2372
    %2374 = vrot.lane.b32.xlu0 %v2359, 28
    %v2375 = vpop.permute.xlu0 %2374
    %vm2376 = vcmask 228352
    %v2377 = vsel %vm2376, %v2361, %v2363
    %v2378 = vsel %vm2376, %v2363, %v2365
    %v2379 = vsel %vm2376, %v2365, %v2367
    %v2380 = vsel %vm2376, %v2367, %v2369
    %v2381 = vsel %vm2376, %v2369, %v2371
    %v2382 = vsel %vm2376, %v2371, %v2373
    %v2383 = vsel %vm2376, %v2373, %v2375
    %v2391 = vld [vmem:[#allocation2 + $0x70] sm:$0x2]
    %v2392 = vsel %vm449, %v2377, %v2391
    %2393 = vst [vmem:[#allocation2 + $0x70] sm:$0x2] %v2392
    %v2394 = vld [vmem:[#allocation2 + $0x78] sm:$0x2]
    %v2395 = vsel %vm449, %v2378, %v2394
    %2396 = vst [vmem:[#allocation2 + $0x78] sm:$0x2] %v2395
    %v2397 = vld [vmem:[#allocation2 + $0x80] sm:$0x2]
    %v2398 = vsel %vm449, %v2379, %v2397
    %2399 = vst [vmem:[#allocation2 + $0x80] sm:$0x2] %v2398
    %v2400 = vld [vmem:[#allocation2 + $0x88] sm:$0x2]
    %v2401 = vsel %vm449, %v2380, %v2400
    %2402 = vst [vmem:[#allocation2 + $0x88] sm:$0x2] %v2401
    %v2403 = vld [vmem:[#allocation2 + $0x90] sm:$0x2]
    %v2404 = vsel %vm449, %v2381, %v2403
    %2405 = vst [vmem:[#allocation2 + $0x90] sm:$0x2] %v2404
    %v2406 = vld [vmem:[#allocation2 + $0x98] sm:$0x2]
    %v2407 = vsel %vm449, %v2382, %v2406
    %2408 = vst [vmem:[#allocation2 + $0x98] sm:$0x2] %v2407
    %v2409 = vld [vmem:[#allocation2 + $0xa0] sm:$0x2]
    %v2410 = vsel %vm468, %v2383, %v2409
    %2411 = vst [vmem:[#allocation2 + $0xa0] sm:$0x2] %v2410
    %v2412 = vld [vmem:[%s0 + $0x1] sm:$0x7f]
    %v2414 = vcombine.high %v2412, %v2412
    %v2416 = vunpack.c.l.s4 1966171168
    %v2417 = vunpack.c.0.s8 %v2416
    %v2418 = vlaneseq
    %v2419 = vshrl.u32 %v2418, 7
    %v2420 = vsub.s32 %v2417, %v2419
    %v2421 = vrot.slane %v2412, %v2420
    %v2423 = vunpack.c.l.s4 1966171168
    %v2424 = vunpack.c.0.s8 %v2423
    %v2425 = vlaneseq
    %v2426 = vshrl.u32 %v2425, 7
    %v2427 = vsub.s32 %v2424, %v2426
    %v2428 = vrot.slane %v2414, %v2427
    %v2429 = vcombine.low %v2421, %v2421
    %v2430 = vcombine.low %v2428, %v2428
    %v2432 = vunpack.c.l.s4 1966171168
    %v2433 = vunpack.c.0.s8 %v2432
    %v2434 = vlaneseq
    %v2435 = vshrl.u32 %v2434, 7
    %v2436 = vsub.s32 %v2433, %v2435
    %v2437 = vrot.slane %v2429, %v2436
    %v2439 = vunpack.c.l.s4 1966171168
    %v2440 = vunpack.c.0.s8 %v2439
    %v2441 = vlaneseq
    %v2442 = vshrl.u32 %v2441, 7
    %v2443 = vsub.s32 %v2440, %v2442
    %v2444 = vrot.slane %v2430, %v2443
    %v2446 = vunpack.c.l.s4 1966171168
    %v2447 = vunpack.c.0.s8 %v2446
    %v2448 = vlaneseq
    %v2449 = vshrl.u32 %v2448, 7
    %v2450 = vsub.s32 %v2447, %v2449
    %v2451 = vrot.slane %v2421, %v2450
    %v2453 = vunpack.c.l.s4 1966171168
    %v2454 = vunpack.c.0.s8 %v2453
    %v2455 = vlaneseq
    %v2456 = vshrl.u32 %v2455, 7
    %v2457 = vsub.s32 %v2454, %v2456
    %v2458 = vrot.slane %v2428, %v2457
    %v2459 = vcombine.high %v2437, %v2437
    %v2460 = vcombine.high %v2444, %v2444
    %v2461 = vcombine.high %v2451, %v2451
    %v2469 = vld [vmem:[#allocation2 + $0x70] sm:$0x4]
    %v2470 = vsel %vm552, %v2437, %v2469
    %2471 = vst [vmem:[#allocation2 + $0x70] sm:$0x4] %v2470
    %v2472 = vld [vmem:[#allocation2 + $0x78] sm:$0x4]
    %v2473 = vsel %vm552, %v2451, %v2472
    %2474 = vst [vmem:[#allocation2 + $0x78] sm:$0x4] %v2473
    %v2475 = vld [vmem:[#allocation2 + $0x80] sm:$0x4]
    %v2476 = vsel %vm552, %v2459, %v2475
    %2477 = vst [vmem:[#allocation2 + $0x80] sm:$0x4] %v2476
    %v2478 = vld [vmem:[#allocation2 + $0x88] sm:$0x4]
    %v2479 = vsel %vm552, %v2461, %v2478
    %2480 = vst [vmem:[#allocation2 + $0x88] sm:$0x4] %v2479
    %v2481 = vld [vmem:[#allocation2 + $0x90] sm:$0x4]
    %v2482 = vsel %vm552, %v2444, %v2481
    %2483 = vst [vmem:[#allocation2 + $0x90] sm:$0x4] %v2482
    %v2484 = vld [vmem:[#allocation2 + $0x98] sm:$0x4]
    %v2485 = vsel %vm552, %v2458, %v2484
    %2486 = vst [vmem:[#allocation2 + $0x98] sm:$0x4] %v2485
    %v2487 = vld [vmem:[#allocation2 + $0xa0] sm:$0x4]
    %v2488 = vsel %vm572, %v2460, %v2487
    %2489 = vst [vmem:[#allocation2 + $0xa0] sm:$0x4] %v2488
    %v2490 = vld [vmem:[%s0 + $0x1] sm:$0x7f]
    %v2492 = vcombine.high %v2490, %v2490
    %v2494 = vunpack.c.l.s4 1966171168
    %v2495 = vunpack.c.0.s8 %v2494
    %v2496 = vlaneseq
    %v2497 = vshrl.u32 %v2496, 7
    %v2498 = vsub.s32 %v2495, %v2497
    %v2499 = vrot.slane %v2490, %v2498
    %v2501 = vunpack.c.l.s4 1966171168
    %v2502 = vunpack.c.0.s8 %v2501
    %v2503 = vlaneseq
    %v2504 = vshrl.u32 %v2503, 7
    %v2505 = vsub.s32 %v2502, %v2504
    %v2506 = vrot.slane %v2492, %v2505
    %v2507 = vcombine.high %v2499, %v2499
    %v2508 = vcombine.high %v2506, %v2506
    %v2510 = vunpack.c.l.s4 1966171168
    %v2511 = vunpack.c.0.s8 %v2510
    %v2512 = vlaneseq
    %v2513 = vshrl.u32 %v2512, 7
    %v2514 = vsub.s32 %v2511, %v2513
    %v2515 = vrot.slane %v2499, %v2514
    %v2517 = vunpack.c.l.s4 1966171168
    %v2518 = vunpack.c.0.s8 %v2517
    %v2519 = vlaneseq
    %v2520 = vshrl.u32 %v2519, 7
    %v2521 = vsub.s32 %v2518, %v2520
    %v2522 = vrot.slane %v2506, %v2521
    %v2524 = vunpack.c.l.s4 1966171168
    %v2525 = vunpack.c.0.s8 %v2524
    %v2526 = vlaneseq
    %v2527 = vshrl.u32 %v2526, 7
    %v2528 = vsub.s32 %v2525, %v2527
    %v2529 = vrot.slane %v2507, %v2528
    %v2531 = vunpack.c.l.s4 1966171168
    %v2532 = vunpack.c.0.s8 %v2531
    %v2533 = vlaneseq
    %v2534 = vshrl.u32 %v2533, 7
    %v2535 = vsub.s32 %v2532, %v2534
    %v2536 = vrot.slane %v2508, %v2535
    %v2537 = vcombine.high %v2515, %v2515
    %v2538 = vcombine.high %v2522, %v2522
    %v2539 = vcombine.high %v2529, %v2529
    %v2541 = vshll.u32 %v2515, 16
    %v2543 = vrot.slane %v2541, 6
    %v2545 = vshll.u32 %v2529, 16
    %v2547 = vrot.slane %v2545, 6
    %v2549 = vshll.u32 %v2537, 16
    %v2551 = vrot.slane %v2549, 6
    %v2553 = vshll.u32 %v2539, 16
    %v2555 = vrot.slane %v2553, 6
    %v2557 = vshll.u32 %v2522, 16
    %v2559 = vrot.slane %v2557, 6
    %v2561 = vshll.u32 %v2536, 16
    %v2563 = vrot.slane %v2561, 6
    %v2565 = vshll.u32 %v2538, 16
    %v2567 = vrot.slane %v2565, 6
    %2568 = vrot.lane.b32.xlu0 %v2543, 127
    %v2569 = vpop.permute.xlu0 %2568
    %2570 = vrot.lane.b32.xlu0 %v2547, 127
    %v2571 = vpop.permute.xlu0 %2570
    %2572 = vrot.lane.b32.xlu0 %v2551, 127
    %v2573 = vpop.permute.xlu0 %2572
    %2574 = vrot.lane.b32.xlu0 %v2555, 127
    %v2575 = vpop.permute.xlu0 %2574
    %2576 = vrot.lane.b32.xlu0 %v2559, 127
    %v2577 = vpop.permute.xlu0 %2576
    %2578 = vrot.lane.b32.xlu0 %v2563, 127
    %v2579 = vpop.permute.xlu0 %2578
    %2580 = vrot.lane.b32.xlu0 %v2567, 127
    %v2581 = vpop.permute.xlu0 %2580
    %v2582 = vsel %vm200, %v2569, %v2571
    %v2583 = vsel %vm200, %v2571, %v2573
    %v2584 = vsel %vm200, %v2573, %v2575
    %v2585 = vsel %vm200, %v2575, %v2577
    %v2586 = vsel %vm200, %v2577, %v2579
    %v2587 = vsel %vm200, %v2579, %v2581
    %v2595 = vld [vmem:[#allocation2 + $0x70] sm:$0x4]
    %v2596 = vsel %vm691, %v2582, %v2595
    %2597 = vst [vmem:[#allocation2 + $0x70] sm:$0x4] %v2596
    %v2598 = vld [vmem:[#allocation2 + $0x78] sm:$0x4]
    %v2599 = vsel %vm691, %v2583, %v2598
    %2600 = vst [vmem:[#allocation2 + $0x78] sm:$0x4] %v2599
    %v2601 = vld [vmem:[#allocation2 + $0x80] sm:$0x4]
    %v2602 = vsel %vm691, %v2584, %v2601
    %2603 = vst [vmem:[#allocation2 + $0x80] sm:$0x4] %v2602
    %v2604 = vld [vmem:[#allocation2 + $0x88] sm:$0x4]
    %v2605 = vsel %vm691, %v2585, %v2604
    %2606 = vst [vmem:[#allocation2 + $0x88] sm:$0x4] %v2605
    %v2607 = vld [vmem:[#allocation2 + $0x90] sm:$0x4]
    %v2608 = vsel %vm691, %v2586, %v2607
    %2609 = vst [vmem:[#allocation2 + $0x90] sm:$0x4] %v2608
    %v2610 = vld [vmem:[#allocation2 + $0x98] sm:$0x4]
    %v2611 = vsel %vm691, %v2587, %v2610
    %2612 = vst [vmem:[#allocation2 + $0x98] sm:$0x4] %v2611
    %v2613 = vld [vmem:[#allocation2 + $0xa0] sm:$0x4]
    %v2614 = vsel %vm710, %v2581, %v2613
    %2615 = vst [vmem:[#allocation2 + $0xa0] sm:$0x4] %v2614
    %v2616 = vld [vmem:[%s0 + $0x1] sm:$0x7f]
    %v2618 = vcombine.low %v2616, %v2616
    %v2620 = vunpack.c.l.s4 1966171168
    %v2621 = vunpack.c.0.s8 %v2620
    %v2622 = vlaneseq
    %v2623 = vshrl.u32 %v2622, 7
    %v2624 = vsub.s32 %v2621, %v2623
    %v2625 = vrot.slane %v2618, %v2624
    %v2627 = vunpack.c.l.s4 1966171168
    %v2628 = vunpack.c.0.s8 %v2627
    %v2629 = vlaneseq
    %v2630 = vshrl.u32 %v2629, 7
    %v2631 = vsub.s32 %v2628, %v2630
    %v2632 = vrot.slane %v2616, %v2631
    %v2633 = vcombine.low %v2625, %v2625
    %v2634 = vcombine.low %v2632, %v2632
    %v2636 = vunpack.c.l.s4 1966171168
    %v2637 = vunpack.c.0.s8 %v2636
    %v2638 = vlaneseq
    %v2639 = vshrl.u32 %v2638, 7
    %v2640 = vsub.s32 %v2637, %v2639
    %v2641 = vrot.slane %v2633, %v2640
    %v2643 = vunpack.c.l.s4 1966171168
    %v2644 = vunpack.c.0.s8 %v2643
    %v2645 = vlaneseq
    %v2646 = vshrl.u32 %v2645, 7
    %v2647 = vsub.s32 %v2644, %v2646
    %v2648 = vrot.slane %v2634, %v2647
    %v2650 = vunpack.c.l.s4 1966171168
    %v2651 = vunpack.c.0.s8 %v2650
    %v2652 = vlaneseq
    %v2653 = vshrl.u32 %v2652, 7
    %v2654 = vsub.s32 %v2651, %v2653
    %v2655 = vrot.slane %v2625, %v2654
    %v2657 = vunpack.c.l.s4 1966171168
    %v2658 = vunpack.c.0.s8 %v2657
    %v2659 = vlaneseq
    %v2660 = vshrl.u32 %v2659, 7
    %v2661 = vsub.s32 %v2658, %v2660
    %v2662 = vrot.slane %v2632, %v2661
    %v2663 = vcombine.high %v2641, %v2641
    %v2664 = vcombine.high %v2648, %v2648
    %v2665 = vcombine.high %v2655, %v2655
    %2666 = vrot.lane.b32.xlu0 %v2641, 126
    %v2667 = vpop.permute.xlu0 %2666
    %2668 = vrot.lane.b32.xlu0 %v2655, 126
    %v2669 = vpop.permute.xlu0 %2668
    %2670 = vrot.lane.b32.xlu0 %v2663, 126
    %v2671 = vpop.permute.xlu0 %2670
    %2672 = vrot.lane.b32.xlu0 %v2665, 126
    %v2673 = vpop.permute.xlu0 %2672
    %2674 = vrot.lane.b32.xlu0 %v2648, 126
    %v2675 = vpop.permute.xlu0 %2674
    %2676 = vrot.lane.b32.xlu0 %v2662, 126
    %v2677 = vpop.permute.xlu0 %2676
    %2678 = vrot.lane.b32.xlu0 %v2664, 126
    %v2679 = vpop.permute.xlu0 %2678
    %v2680 = vsel %vm302, %v2667, %v2669
    %v2681 = vsel %vm302, %v2669, %v2671
    %v2682 = vsel %vm302, %v2671, %v2673
    %v2683 = vsel %vm302, %v2673, %v2675
    %v2684 = vsel %vm302, %v2675, %v2677
    %v2685 = vsel %vm302, %v2677, %v2679
    %v2693 = vld [vmem:[#allocation2 + $0x70] sm:$0x8]
    %v2694 = vsel %vm798, %v2680, %v2693
    %2695 = vst [vmem:[#allocation2 + $0x70] sm:$0x8] %v2694
    %v2696 = vld [vmem:[#allocation2 + $0x78] sm:$0x8]
    %v2697 = vsel %vm798, %v2681, %v2696
    %2698 = vst [vmem:[#allocation2 + $0x78] sm:$0x8] %v2697
    %v2699 = vld [vmem:[#allocation2 + $0x80] sm:$0x8]
    %v2700 = vsel %vm798, %v2682, %v2699
    %2701 = vst [vmem:[#allocation2 + $0x80] sm:$0x8] %v2700
    %v2702 = vld [vmem:[#allocation2 + $0x88] sm:$0x8]
    %v2703 = vsel %vm798, %v2683, %v2702
    %2704 = vst [vmem:[#allocation2 + $0x88] sm:$0x8] %v2703
    %v2705 = vld [vmem:[#allocation2 + $0x90] sm:$0x8]
    %v2706 = vsel %vm798, %v2684, %v2705
    %2707 = vst [vmem:[#allocation2 + $0x90] sm:$0x8] %v2706
    %v2708 = vld [vmem:[#allocation2 + $0x98] sm:$0x8]
    %v2709 = vsel %vm798, %v2685, %v2708
    %2710 = vst [vmem:[#allocation2 + $0x98] sm:$0x8] %v2709
    %v2711 = vld [vmem:[#allocation2 + $0xa0] sm:$0x8]
    %v2712 = vsel %vm818, %v2679, %v2711
    %2713 = vst [vmem:[#allocation2 + $0xa0] sm:$0x8] %v2712
    %v2714 = vld [vmem:[%s0 + $0x1] sm:$0x7f]
    %v2716 = vcombine.high %v2714, %v2714
    %v2718 = vunpack.c.l.s4 1966171168
    %v2719 = vunpack.c.0.s8 %v2718
    %v2720 = vlaneseq
    %v2721 = vshrl.u32 %v2720, 7
    %v2722 = vsub.s32 %v2719, %v2721
    %v2723 = vrot.slane %v2714, %v2722
    %v2725 = vunpack.c.l.s4 1966171168
    %v2726 = vunpack.c.0.s8 %v2725
    %v2727 = vlaneseq
    %v2728 = vshrl.u32 %v2727, 7
    %v2729 = vsub.s32 %v2726, %v2728
    %v2730 = vrot.slane %v2716, %v2729
    %v2731 = vcombine.high %v2723, %v2723
    %v2732 = vcombine.high %v2730, %v2730
    %v2734 = vunpack.c.l.s4 1966171168
    %v2735 = vunpack.c.0.s8 %v2734
    %v2736 = vlaneseq
    %v2737 = vshrl.u32 %v2736, 7
    %v2738 = vsub.s32 %v2735, %v2737
    %v2739 = vrot.slane %v2723, %v2738
    %v2741 = vunpack.c.l.s4 1966171168
    %v2742 = vunpack.c.0.s8 %v2741
    %v2743 = vlaneseq
    %v2744 = vshrl.u32 %v2743, 7
    %v2745 = vsub.s32 %v2742, %v2744
    %v2746 = vrot.slane %v2730, %v2745
    %v2748 = vunpack.c.l.s4 1966171168
    %v2749 = vunpack.c.0.s8 %v2748
    %v2750 = vlaneseq
    %v2751 = vshrl.u32 %v2750, 7
    %v2752 = vsub.s32 %v2749, %v2751
    %v2753 = vrot.slane %v2731, %v2752
    %v2755 = vunpack.c.l.s4 1966171168
    %v2756 = vunpack.c.0.s8 %v2755
    %v2757 = vlaneseq
    %v2758 = vshrl.u32 %v2757, 7
    %v2759 = vsub.s32 %v2756, %v2758
    %v2760 = vrot.slane %v2732, %v2759
    %v2761 = vcombine.high %v2739, %v2739
    %v2762 = vcombine.high %v2746, %v2746
    %v2763 = vcombine.high %v2753, %v2753
    %v2765 = vshll.u32 %v2739, 16
    %v2767 = vrot.slane %v2765, 5
    %v2769 = vshll.u32 %v2753, 16
    %v2771 = vrot.slane %v2769, 5
    %v2773 = vshll.u32 %v2761, 16
    %v2775 = vrot.slane %v2773, 5
    %v2777 = vshll.u32 %v2763, 16
    %v2779 = vrot.slane %v2777, 5
    %v2781 = vshll.u32 %v2746, 16
    %v2783 = vrot.slane %v2781, 5
    %v2785 = vshll.u32 %v2760, 16
    %v2787 = vrot.slane %v2785, 5
    %v2789 = vshll.u32 %v2762, 16
    %v2791 = vrot.slane %v2789, 5
    %2792 = vrot.lane.b32.xlu0 %v2767, 125
    %v2793 = vpop.permute.xlu0 %2792
    %2794 = vrot.lane.b32.xlu0 %v2771, 125
    %v2795 = vpop.permute.xlu0 %2794
    %2796 = vrot.lane.b32.xlu0 %v2775, 125
    %v2797 = vpop.permute.xlu0 %2796
    %2798 = vrot.lane.b32.xlu0 %v2779, 125
    %v2799 = vpop.permute.xlu0 %2798
    %2800 = vrot.lane.b32.xlu0 %v2783, 125
    %v2801 = vpop.permute.xlu0 %2800
    %2802 = vrot.lane.b32.xlu0 %v2787, 125
    %v2803 = vpop.permute.xlu0 %2802
    %2804 = vrot.lane.b32.xlu0 %v2791, 125
    %v2805 = vpop.permute.xlu0 %2804
    %v2806 = vsel %vm434, %v2793, %v2795
    %v2807 = vsel %vm434, %v2795, %v2797
    %v2808 = vsel %vm434, %v2797, %v2799
    %v2809 = vsel %vm434, %v2799, %v2801
    %v2810 = vsel %vm434, %v2801, %v2803
    %v2811 = vsel %vm434, %v2803, %v2805
    %v2819 = vld [vmem:[#allocation2 + $0x70] sm:$0x8]
    %v2820 = vsel %vm937, %v2806, %v2819
    %2821 = vst [vmem:[#allocation2 + $0x70] sm:$0x8] %v2820
    %v2822 = vld [vmem:[#allocation2 + $0x78] sm:$0x8]
    %v2823 = vsel %vm937, %v2807, %v2822
    %2824 = vst [vmem:[#allocation2 + $0x78] sm:$0x8] %v2823
    %v2825 = vld [vmem:[#allocation2 + $0x80] sm:$0x8]
    %v2826 = vsel %vm937, %v2808, %v2825
    %2827 = vst [vmem:[#allocation2 + $0x80] sm:$0x8] %v2826
    %v2828 = vld [vmem:[#allocation2 + $0x88] sm:$0x8]
    %v2829 = vsel %vm937, %v2809, %v2828
    %2830 = vst [vmem:[#allocation2 + $0x88] sm:$0x8] %v2829
    %v2831 = vld [vmem:[#allocation2 + $0x90] sm:$0x8]
    %v2832 = vsel %vm937, %v2810, %v2831
    %2833 = vst [vmem:[#allocation2 + $0x90] sm:$0x8] %v2832
    %v2834 = vld [vmem:[#allocation2 + $0x98] sm:$0x8]
    %v2835 = vsel %vm937, %v2811, %v2834
    %2836 = vst [vmem:[#allocation2 + $0x98] sm:$0x8] %v2835
    %v2837 = vld [vmem:[#allocation2 + $0xa0] sm:$0x8]
    %v2838 = vsel %vm956, %v2805, %v2837
    %2839 = vst [vmem:[#allocation2 + $0xa0] sm:$0x8] %v2838
    %v2840 = vld [vmem:[%s0 + $0x1] sm:$0x7f]
    %v2842 = vcombine.high %v2840, %v2840
    %v2844 = vunpack.c.l.s4 1966171168
    %v2845 = vunpack.c.0.s8 %v2844
    %v2846 = vlaneseq
    %v2847 = vshrl.u32 %v2846, 7
    %v2848 = vsub.s32 %v2845, %v2847
    %v2849 = vrot.slane %v2840, %v2848
    %v2851 = vunpack.c.l.s4 1966171168
    %v2852 = vunpack.c.0.s8 %v2851
    %v2853 = vlaneseq
    %v2854 = vshrl.u32 %v2853, 7
    %v2855 = vsub.s32 %v2852, %v2854
    %v2856 = vrot.slane %v2842, %v2855
    %v2857 = vcombine.high %v2849, %v2849
    %v2858 = vcombine.high %v2856, %v2856
    %v2860 = vunpack.c.l.s4 1966171168
    %v2861 = vunpack.c.0.s8 %v2860
    %v2862 = vlaneseq
    %v2863 = vshrl.u32 %v2862, 7
    %v2864 = vsub.s32 %v2861, %v2863
    %v2865 = vrot.slane %v2849, %v2864
    %v2867 = vunpack.c.l.s4 1966171168
    %v2868 = vunpack.c.0.s8 %v2867
    %v2869 = vlaneseq
    %v2870 = vshrl.u32 %v2869, 7
    %v2871 = vsub.s32 %v2868, %v2870
    %v2872 = vrot.slane %v2856, %v2871
    %v2874 = vunpack.c.l.s4 1966171168
    %v2875 = vunpack.c.0.s8 %v2874
    %v2876 = vlaneseq
    %v2877 = vshrl.u32 %v2876, 7
    %v2878 = vsub.s32 %v2875, %v2877
    %v2879 = vrot.slane %v2857, %v2878
    %v2881 = vunpack.c.l.s4 1966171168
    %v2882 = vunpack.c.0.s8 %v2881
    %v2883 = vlaneseq
    %v2884 = vshrl.u32 %v2883, 7
    %v2885 = vsub.s32 %v2882, %v2884
    %v2886 = vrot.slane %v2858, %v2885
    %v2887 = vcombine.low %v2865, %v2865
    %v2888 = vcombine.low %v2872, %v2872
    %v2889 = vcombine.low %v2879, %v2879
    %v2890 = vcombine.low %v2886, %v2886
    %2891 = vrot.lane.b32.xlu0 %v2887, 124
    %v2892 = vpop.permute.xlu0 %2891
    %2893 = vrot.lane.b32.xlu0 %v2889, 124
    %v2894 = vpop.permute.xlu0 %2893
    %2895 = vrot.lane.b32.xlu0 %v2865, 124
    %v2896 = vpop.permute.xlu0 %2895
    %2897 = vrot.lane.b32.xlu0 %v2879, 124
    %v2898 = vpop.permute.xlu0 %2897
    %2899 = vrot.lane.b32.xlu0 %v2888, 124
    %v2900 = vpop.permute.xlu0 %2899
    %2901 = vrot.lane.b32.xlu0 %v2890, 124
    %v2902 = vpop.permute.xlu0 %2901
    %2903 = vrot.lane.b32.xlu0 %v2872, 124
    %v2904 = vpop.permute.xlu0 %2903
    %v2905 = vsel %vm536, %v2892, %v2894
    %v2906 = vsel %vm536, %v2894, %v2896
    %v2907 = vsel %vm536, %v2896, %v2898
    %v2908 = vsel %vm536, %v2898, %v2900
    %v2909 = vsel %vm536, %v2900, %v2902
    %v2910 = vsel %vm536, %v2902, %v2904
    %v2918 = vld [vmem:[#allocation2 + $0x70] sm:$0x10]
    %v2919 = vsel %vm1044, %v2905, %v2918
    %2920 = vst [vmem:[#allocation2 + $0x70] sm:$0x10] %v2919
    %v2921 = vld [vmem:[#allocation2 + $0x78] sm:$0x10]
    %v2922 = vsel %vm1044, %v2906, %v2921
    %2923 = vst [vmem:[#allocation2 + $0x78] sm:$0x10] %v2922
    %v2924 = vld [vmem:[#allocation2 + $0x80] sm:$0x10]
    %v2925 = vsel %vm1044, %v2907, %v2924
    %2926 = vst [vmem:[#allocation2 + $0x80] sm:$0x10] %v2925
    %v2927 = vld [vmem:[#allocation2 + $0x88] sm:$0x10]
    %v2928 = vsel %vm1044, %v2908, %v2927
    %2929 = vst [vmem:[#allocation2 + $0x88] sm:$0x10] %v2928
    %v2930 = vld [vmem:[#allocation2 + $0x90] sm:$0x10]
    %v2931 = vsel %vm1044, %v2909, %v2930
    %2932 = vst [vmem:[#allocation2 + $0x90] sm:$0x10] %v2931
    %v2933 = vld [vmem:[#allocation2 + $0x98] sm:$0x10]
    %v2934 = vsel %vm1044, %v2910, %v2933
    %2935 = vst [vmem:[#allocation2 + $0x98] sm:$0x10] %v2934
    %v2936 = vld [vmem:[#allocation2 + $0xa0] sm:$0x10]
    %v2937 = vsel %vm1064, %v2904, %v2936
    %2938 = vst [vmem:[#allocation2 + $0xa0] sm:$0x10] %v2937
    %vm2939 = vcmask 1048544
    %2940 = vst.msk [vmem:[#allocation2 + $0x30] sm:$0xff] %vm2939, 0
    %2941 = vst.msk [vmem:[#allocation2 + $0xa0] sm:$0xff] %vm2939, 0
    %s2942 = scalar_lea.vmem %s0, 8
    %v2943 = vld [vmem:[%s2942] sm:$0x7f]
    %v2945 = vcombine.high %v2943, %v2943
    %v2947 = vunpack.c.l.s4 1966171168
    %v2948 = vunpack.c.0.s8 %v2947
    %v2949 = vlaneseq
    %v2950 = vshrl.u32 %v2949, 7
    %v2951 = vsub.s32 %v2948, %v2950
    %v2952 = vrot.slane %v2943, %v2951
    %v2954 = vunpack.c.l.s4 1966171168
    %v2955 = vunpack.c.0.s8 %v2954
    %v2956 = vlaneseq
    %v2957 = vshrl.u32 %v2956, 7
    %v2958 = vsub.s32 %v2955, %v2957
    %v2959 = vrot.slane %v2945, %v2958
    %v2960 = vcombine.high %v2952, %v2952
    %v2961 = vcombine.high %v2959, %v2959
    %v2963 = vunpack.c.l.s4 1966171168
    %v2964 = vunpack.c.0.s8 %v2963
    %v2965 = vlaneseq
    %v2966 = vshrl.u32 %v2965, 7
    %v2967 = vsub.s32 %v2964, %v2966
    %v2968 = vrot.slane %v2952, %v2967
    %v2970 = vunpack.c.l.s4 1966171168
    %v2971 = vunpack.c.0.s8 %v2970
    %v2972 = vlaneseq
    %v2973 = vshrl.u32 %v2972, 7
    %v2974 = vsub.s32 %v2971, %v2973
    %v2975 = vrot.slane %v2959, %v2974
    %v2977 = vunpack.c.l.s4 1966171168
    %v2978 = vunpack.c.0.s8 %v2977
    %v2979 = vlaneseq
    %v2980 = vshrl.u32 %v2979, 7
    %v2981 = vsub.s32 %v2978, %v2980
    %v2982 = vrot.slane %v2960, %v2981
    %v2984 = vunpack.c.l.s4 1966171168
    %v2985 = vunpack.c.0.s8 %v2984
    %v2986 = vlaneseq
    %v2987 = vshrl.u32 %v2986, 7
    %v2988 = vsub.s32 %v2985, %v2987
    %v2989 = vrot.slane %v2961, %v2988
    %v2990 = vcombine.high %v2968, %v2968
    %v2991 = vcombine.high %v2975, %v2975
    %v2992 = vcombine.high %v2982, %v2982
    %v3000 = vld [vmem:[#allocation2 + $0x38] sm:$0x1]
    %v3001 = vsel %vm91, %v2968, %v3000
    %3002 = vst [vmem:[#allocation2 + $0x38] sm:$0x1] %v3001
    %v3003 = vld [vmem:[#allocation2 + $0x40] sm:$0x1]
    %v3004 = vsel %vm91, %v2982, %v3003
    %3005 = vst [vmem:[#allocation2 + $0x40] sm:$0x1] %v3004
    %v3006 = vld [vmem:[#allocation2 + $0x48] sm:$0x1]
    %v3007 = vsel %vm91, %v2990, %v3006
    %3008 = vst [vmem:[#allocation2 + $0x48] sm:$0x1] %v3007
    %v3009 = vld [vmem:[#allocation2 + $0x50] sm:$0x1]
    %v3010 = vsel %vm91, %v2992, %v3009
    %3011 = vst [vmem:[#allocation2 + $0x50] sm:$0x1] %v3010
    %v3012 = vld [vmem:[#allocation2 + $0x58] sm:$0x1]
    %v3013 = vsel %vm91, %v2975, %v3012
    %3014 = vst [vmem:[#allocation2 + $0x58] sm:$0x1] %v3013
    %v3015 = vld [vmem:[#allocation2 + $0x60] sm:$0x1]
    %v3016 = vsel %vm91, %v2989, %v3015
    %3017 = vst [vmem:[#allocation2 + $0x60] sm:$0x1] %v3016
    %v3018 = vld [vmem:[#allocation2 + $0x68] sm:$0x1]
    %v3019 = vsel %vm111, %v2991, %v3018
    %3020 = vst [vmem:[#allocation2 + $0x68] sm:$0x1] %v3019
    %v3021 = vld [vmem:[%s2942] sm:$0x7f]
    %v3023 = vcombine.high %v3021, %v3021
    %v3025 = vunpack.c.l.s4 1966171168
    %v3026 = vunpack.c.0.s8 %v3025
    %v3027 = vlaneseq
    %v3028 = vshrl.u32 %v3027, 7
    %v3029 = vsub.s32 %v3026, %v3028
    %v3030 = vrot.slane %v3021, %v3029
    %v3032 = vunpack.c.l.s4 1966171168
    %v3033 = vunpack.c.0.s8 %v3032
    %v3034 = vlaneseq
    %v3035 = vshrl.u32 %v3034, 7
    %v3036 = vsub.s32 %v3033, %v3035
    %v3037 = vrot.slane %v3023, %v3036
    %v3038 = vcombine.high %v3030, %v3030
    %v3039 = vcombine.high %v3037, %v3037
    %v3041 = vunpack.c.l.s4 1966171168
    %v3042 = vunpack.c.0.s8 %v3041
    %v3043 = vlaneseq
    %v3044 = vshrl.u32 %v3043, 7
    %v3045 = vsub.s32 %v3042, %v3044
    %v3046 = vrot.slane %v3030, %v3045
    %v3048 = vunpack.c.l.s4 1966171168
    %v3049 = vunpack.c.0.s8 %v3048
    %v3050 = vlaneseq
    %v3051 = vshrl.u32 %v3050, 7
    %v3052 = vsub.s32 %v3049, %v3051
    %v3053 = vrot.slane %v3037, %v3052
    %v3055 = vunpack.c.l.s4 1966171168
    %v3056 = vunpack.c.0.s8 %v3055
    %v3057 = vlaneseq
    %v3058 = vshrl.u32 %v3057, 7
    %v3059 = vsub.s32 %v3056, %v3058
    %v3060 = vrot.slane %v3038, %v3059
    %v3062 = vunpack.c.l.s4 1966171168
    %v3063 = vunpack.c.0.s8 %v3062
    %v3064 = vlaneseq
    %v3065 = vshrl.u32 %v3064, 7
    %v3066 = vsub.s32 %v3063, %v3065
    %v3067 = vrot.slane %v3039, %v3066
    %v3068 = vcombine.high %v3046, %v3046
    %v3069 = vcombine.high %v3053, %v3053
    %v3070 = vcombine.high %v3060, %v3060
    %v3072 = vshll.u32 %v3046, 16
    %v3075 = vshll.u32 %v3060, 16
    %v3078 = vshll.u32 %v3068, 16
    %v3081 = vshll.u32 %v3070, 16
    %v3084 = vshll.u32 %v3053, 16
    %v3087 = vshll.u32 %v3067, 16
    %v3090 = vshll.u32 %v3069, 16
    %3092 = vrot.lane.b32.xlu0 %v3072, 127
    %v3093 = vpop.permute.xlu0 %3092
    %3094 = vrot.lane.b32.xlu0 %v3075, 127
    %v3095 = vpop.permute.xlu0 %3094
    %3096 = vrot.lane.b32.xlu0 %v3078, 127
    %v3097 = vpop.permute.xlu0 %3096
    %3098 = vrot.lane.b32.xlu0 %v3081, 127
    %v3099 = vpop.permute.xlu0 %3098
    %3100 = vrot.lane.b32.xlu0 %v3084, 127
    %v3101 = vpop.permute.xlu0 %3100
    %3102 = vrot.lane.b32.xlu0 %v3087, 127
    %v3103 = vpop.permute.xlu0 %3102
    %3104 = vrot.lane.b32.xlu0 %v3090, 127
    %v3105 = vpop.permute.xlu0 %3104
    %v3106 = vsel %vm200, %v3093, %v3095
    %v3107 = vsel %vm200, %v3095, %v3097
    %v3108 = vsel %vm200, %v3097, %v3099
    %v3109 = vsel %vm200, %v3099, %v3101
    %v3110 = vsel %vm200, %v3101, %v3103
    %v3111 = vsel %vm200, %v3103, %v3105
    %v3119 = vld [vmem:[#allocation2 + $0x38] sm:$0x1]
    %v3120 = vsel %vm215, %v3106, %v3119
    %3121 = vst [vmem:[#allocation2 + $0x38] sm:$0x1] %v3120
    %v3122 = vld [vmem:[#allocation2 + $0x40] sm:$0x1]
    %v3123 = vsel %vm215, %v3107, %v3122
    %3124 = vst [vmem:[#allocation2 + $0x40] sm:$0x1] %v3123
    %v3125 = vld [vmem:[#allocation2 + $0x48] sm:$0x1]
    %v3126 = vsel %vm215, %v3108, %v3125
    %3127 = vst [vmem:[#allocation2 + $0x48] sm:$0x1] %v3126
    %v3128 = vld [vmem:[#allocation2 + $0x50] sm:$0x1]
    %v3129 = vsel %vm215, %v3109, %v3128
    %3130 = vst [vmem:[#allocation2 + $0x50] sm:$0x1] %v3129
    %v3131 = vld [vmem:[#allocation2 + $0x58] sm:$0x1]
    %v3132 = vsel %vm215, %v3110, %v3131
    %3133 = vst [vmem:[#allocation2 + $0x58] sm:$0x1] %v3132
    %v3134 = vld [vmem:[#allocation2 + $0x60] sm:$0x1]
    %v3135 = vsel %vm215, %v3111, %v3134
    %3136 = vst [vmem:[#allocation2 + $0x60] sm:$0x1] %v3135
    %v3137 = vld [vmem:[#allocation2 + $0x68] sm:$0x1]
    %v3138 = vsel %vm234, %v3105, %v3137
    %3139 = vst [vmem:[#allocation2 + $0x68] sm:$0x1] %v3138
    %v3140 = vld [vmem:[%s2942] sm:$0x7f]
    %v3142 = vcombine.low %v3140, %v3140
    %v3144 = vunpack.c.l.s4 1966171168
    %v3145 = vunpack.c.0.s8 %v3144
    %v3146 = vlaneseq
    %v3147 = vshrl.u32 %v3146, 7
    %v3148 = vsub.s32 %v3145, %v3147
    %v3149 = vrot.slane %v3142, %v3148
    %v3151 = vunpack.c.l.s4 1966171168
    %v3152 = vunpack.c.0.s8 %v3151
    %v3153 = vlaneseq
    %v3154 = vshrl.u32 %v3153, 7
    %v3155 = vsub.s32 %v3152, %v3154
    %v3156 = vrot.slane %v3140, %v3155
    %v3157 = vcombine.high %v3149, %v3149
    %v3158 = vcombine.high %v3156, %v3156
    %v3160 = vunpack.c.l.s4 1966171168
    %v3161 = vunpack.c.0.s8 %v3160
    %v3162 = vlaneseq
    %v3163 = vshrl.u32 %v3162, 7
    %v3164 = vsub.s32 %v3161, %v3163
    %v3165 = vrot.slane %v3149, %v3164
    %v3167 = vunpack.c.l.s4 1966171168
    %v3168 = vunpack.c.0.s8 %v3167
    %v3169 = vlaneseq
    %v3170 = vshrl.u32 %v3169, 7
    %v3171 = vsub.s32 %v3168, %v3170
    %v3172 = vrot.slane %v3156, %v3171
    %v3174 = vunpack.c.l.s4 1966171168
    %v3175 = vunpack.c.0.s8 %v3174
    %v3176 = vlaneseq
    %v3177 = vshrl.u32 %v3176, 7
    %v3178 = vsub.s32 %v3175, %v3177
    %v3179 = vrot.slane %v3157, %v3178
    %v3181 = vunpack.c.l.s4 1966171168
    %v3182 = vunpack.c.0.s8 %v3181
    %v3183 = vlaneseq
    %v3184 = vshrl.u32 %v3183, 7
    %v3185 = vsub.s32 %v3182, %v3184
    %v3186 = vrot.slane %v3158, %v3185
    %v3187 = vcombine.high %v3165, %v3165
    %v3188 = vcombine.high %v3172, %v3172
    %v3189 = vcombine.high %v3179, %v3179
    %3190 = vrot.lane.b32.xlu0 %v3165, 126
    %v3191 = vpop.permute.xlu0 %3190
    %3192 = vrot.lane.b32.xlu0 %v3179, 126
    %v3193 = vpop.permute.xlu0 %3192
    %3194 = vrot.lane.b32.xlu0 %v3187, 126
    %v3195 = vpop.permute.xlu0 %3194
    %3196 = vrot.lane.b32.xlu0 %v3189, 126
    %v3197 = vpop.permute.xlu0 %3196
    %3198 = vrot.lane.b32.xlu0 %v3172, 126
    %v3199 = vpop.permute.xlu0 %3198
    %3200 = vrot.lane.b32.xlu0 %v3186, 126
    %v3201 = vpop.permute.xlu0 %3200
    %3202 = vrot.lane.b32.xlu0 %v3188, 126
    %v3203 = vpop.permute.xlu0 %3202
    %v3204 = vsel %vm302, %v3191, %v3193
    %v3205 = vsel %vm302, %v3193, %v3195
    %v3206 = vsel %vm302, %v3195, %v3197
    %v3207 = vsel %vm302, %v3197, %v3199
    %v3208 = vsel %vm302, %v3199, %v3201
    %v3209 = vsel %vm302, %v3201, %v3203
    %v3217 = vld [vmem:[#allocation2 + $0x38] sm:$0x2]
    %v3218 = vsel %vm318, %v3204, %v3217
    %3219 = vst [vmem:[#allocation2 + $0x38] sm:$0x2] %v3218
    %v3220 = vld [vmem:[#allocation2 + $0x40] sm:$0x2]
    %v3221 = vsel %vm318, %v3205, %v3220
    %3222 = vst [vmem:[#allocation2 + $0x40] sm:$0x2] %v3221
    %v3223 = vld [vmem:[#allocation2 + $0x48] sm:$0x2]
    %v3224 = vsel %vm318, %v3206, %v3223
    %3225 = vst [vmem:[#allocation2 + $0x48] sm:$0x2] %v3224
    %v3226 = vld [vmem:[#allocation2 + $0x50] sm:$0x2]
    %v3227 = vsel %vm318, %v3207, %v3226
    %3228 = vst [vmem:[#allocation2 + $0x50] sm:$0x2] %v3227
    %v3229 = vld [vmem:[#allocation2 + $0x58] sm:$0x2]
    %v3230 = vsel %vm318, %v3208, %v3229
    %3231 = vst [vmem:[#allocation2 + $0x58] sm:$0x2] %v3230
    %v3232 = vld [vmem:[#allocation2 + $0x60] sm:$0x2]
    %v3233 = vsel %vm318, %v3209, %v3232
    %3234 = vst [vmem:[#allocation2 + $0x60] sm:$0x2] %v3233
    %v3235 = vld [vmem:[#allocation2 + $0x68] sm:$0x2]
    %v3236 = vsel %vm338, %v3203, %v3235
    %3237 = vst [vmem:[#allocation2 + $0x68] sm:$0x2] %v3236
    %v3238 = vld [vmem:[%s2942] sm:$0x7f]
    %v3240 = vcombine.high %v3238, %v3238
    %v3242 = vunpack.c.l.s4 1966171168
    %v3243 = vunpack.c.0.s8 %v3242
    %v3244 = vlaneseq
    %v3245 = vshrl.u32 %v3244, 7
    %v3246 = vsub.s32 %v3243, %v3245
    %v3247 = vrot.slane %v3238, %v3246
    %v3249 = vunpack.c.l.s4 1966171168
    %v3250 = vunpack.c.0.s8 %v3249
    %v3251 = vlaneseq
    %v3252 = vshrl.u32 %v3251, 7
    %v3253 = vsub.s32 %v3250, %v3252
    %v3254 = vrot.slane %v3240, %v3253
    %v3255 = vcombine.high %v3247, %v3247
    %v3256 = vcombine.high %v3254, %v3254
    %v3258 = vunpack.c.l.s4 1966171168
    %v3259 = vunpack.c.0.s8 %v3258
    %v3260 = vlaneseq
    %v3261 = vshrl.u32 %v3260, 7
    %v3262 = vsub.s32 %v3259, %v3261
    %v3263 = vrot.slane %v3247, %v3262
    %v3265 = vunpack.c.l.s4 1966171168
    %v3266 = vunpack.c.0.s8 %v3265
    %v3267 = vlaneseq
    %v3268 = vshrl.u32 %v3267, 7
    %v3269 = vsub.s32 %v3266, %v3268
    %v3270 = vrot.slane %v3254, %v3269
    %v3272 = vunpack.c.l.s4 1966171168
    %v3273 = vunpack.c.0.s8 %v3272
    %v3274 = vlaneseq
    %v3275 = vshrl.u32 %v3274, 7
    %v3276 = vsub.s32 %v3273, %v3275
    %v3277 = vrot.slane %v3255, %v3276
    %v3279 = vunpack.c.l.s4 1966171168
    %v3280 = vunpack.c.0.s8 %v3279
    %v3281 = vlaneseq
    %v3282 = vshrl.u32 %v3281, 7
    %v3283 = vsub.s32 %v3280, %v3282
    %v3284 = vrot.slane %v3256, %v3283
    %v3285 = vcombine.high %v3263, %v3263
    %v3286 = vcombine.high %v3270, %v3270
    %v3287 = vcombine.high %v3277, %v3277
    %v3289 = vshll.u32 %v3263, 16
    %v3291 = vrot.slane %v3289, 7
    %v3293 = vshll.u32 %v3277, 16
    %v3295 = vrot.slane %v3293, 7
    %v3297 = vshll.u32 %v3285, 16
    %v3299 = vrot.slane %v3297, 7
    %v3301 = vshll.u32 %v3287, 16
    %v3303 = vrot.slane %v3301, 7
    %v3305 = vshll.u32 %v3270, 16
    %v3307 = vrot.slane %v3305, 7
    %v3309 = vshll.u32 %v3284, 16
    %v3311 = vrot.slane %v3309, 7
    %v3313 = vshll.u32 %v3286, 16
    %v3315 = vrot.slane %v3313, 7
    %3316 = vrot.lane.b32.xlu0 %v3291, 125
    %v3317 = vpop.permute.xlu0 %3316
    %3318 = vrot.lane.b32.xlu0 %v3295, 125
    %v3319 = vpop.permute.xlu0 %3318
    %3320 = vrot.lane.b32.xlu0 %v3299, 125
    %v3321 = vpop.permute.xlu0 %3320
    %3322 = vrot.lane.b32.xlu0 %v3303, 125
    %v3323 = vpop.permute.xlu0 %3322
    %3324 = vrot.lane.b32.xlu0 %v3307, 125
    %v3325 = vpop.permute.xlu0 %3324
    %3326 = vrot.lane.b32.xlu0 %v3311, 125
    %v3327 = vpop.permute.xlu0 %3326
    %3328 = vrot.lane.b32.xlu0 %v3315, 125
    %v3329 = vpop.permute.xlu0 %3328
    %v3330 = vsel %vm434, %v3317, %v3319
    %v3331 = vsel %vm434, %v3319, %v3321
    %v3332 = vsel %vm434, %v3321, %v3323
    %v3333 = vsel %vm434, %v3323, %v3325
    %v3334 = vsel %vm434, %v3325, %v3327
    %v3335 = vsel %vm434, %v3327, %v3329
    %v3343 = vld [vmem:[#allocation2 + $0x38] sm:$0x2]
    %v3344 = vsel %vm449, %v3330, %v3343
    %3345 = vst [vmem:[#allocation2 + $0x38] sm:$0x2] %v3344
    %v3346 = vld [vmem:[#allocation2 + $0x40] sm:$0x2]
    %v3347 = vsel %vm449, %v3331, %v3346
    %3348 = vst [vmem:[#allocation2 + $0x40] sm:$0x2] %v3347
    %v3349 = vld [vmem:[#allocation2 + $0x48] sm:$0x2]
    %v3350 = vsel %vm449, %v3332, %v3349
    %3351 = vst [vmem:[#allocation2 + $0x48] sm:$0x2] %v3350
    %v3352 = vld [vmem:[#allocation2 + $0x50] sm:$0x2]
    %v3353 = vsel %vm449, %v3333, %v3352
    %3354 = vst [vmem:[#allocation2 + $0x50] sm:$0x2] %v3353
    %v3355 = vld [vmem:[#allocation2 + $0x58] sm:$0x2]
    %v3356 = vsel %vm449, %v3334, %v3355
    %3357 = vst [vmem:[#allocation2 + $0x58] sm:$0x2] %v3356
    %v3358 = vld [vmem:[#allocation2 + $0x60] sm:$0x2]
    %v3359 = vsel %vm449, %v3335, %v3358
    %3360 = vst [vmem:[#allocation2 + $0x60] sm:$0x2] %v3359
    %v3361 = vld [vmem:[#allocation2 + $0x68] sm:$0x2]
    %v3362 = vsel %vm468, %v3329, %v3361
    %3363 = vst [vmem:[#allocation2 + $0x68] sm:$0x2] %v3362
    %v3364 = vld [vmem:[%s2942] sm:$0x7f]
    %v3366 = vcombine.high %v3364, %v3364
    %v3368 = vunpack.c.l.s4 1966171168
    %v3369 = vunpack.c.0.s8 %v3368
    %v3370 = vlaneseq
    %v3371 = vshrl.u32 %v3370, 7
    %v3372 = vsub.s32 %v3369, %v3371
    %v3373 = vrot.slane %v3364, %v3372
    %v3375 = vunpack.c.l.s4 1966171168
    %v3376 = vunpack.c.0.s8 %v3375
    %v3377 = vlaneseq
    %v3378 = vshrl.u32 %v3377, 7
    %v3379 = vsub.s32 %v3376, %v3378
    %v3380 = vrot.slane %v3366, %v3379
    %v3381 = vcombine.low %v3373, %v3373
    %v3382 = vcombine.low %v3380, %v3380
    %v3384 = vunpack.c.l.s4 1966171168
    %v3385 = vunpack.c.0.s8 %v3384
    %v3386 = vlaneseq
    %v3387 = vshrl.u32 %v3386, 7
    %v3388 = vsub.s32 %v3385, %v3387
    %v3389 = vrot.slane %v3381, %v3388
    %v3391 = vunpack.c.l.s4 1966171168
    %v3392 = vunpack.c.0.s8 %v3391
    %v3393 = vlaneseq
    %v3394 = vshrl.u32 %v3393, 7
    %v3395 = vsub.s32 %v3392, %v3394
    %v3396 = vrot.slane %v3382, %v3395
    %v3398 = vunpack.c.l.s4 1966171168
    %v3399 = vunpack.c.0.s8 %v3398
    %v3400 = vlaneseq
    %v3401 = vshrl.u32 %v3400, 7
    %v3402 = vsub.s32 %v3399, %v3401
    %v3403 = vrot.slane %v3373, %v3402
    %v3405 = vunpack.c.l.s4 1966171168
    %v3406 = vunpack.c.0.s8 %v3405
    %v3407 = vlaneseq
    %v3408 = vshrl.u32 %v3407, 7
    %v3409 = vsub.s32 %v3406, %v3408
    %v3410 = vrot.slane %v3380, %v3409
    %v3411 = vcombine.high %v3389, %v3389
    %v3412 = vcombine.high %v3396, %v3396
    %v3413 = vcombine.high %v3403, %v3403
    %3414 = vrot.lane.b32.xlu0 %v3389, 124
    %v3415 = vpop.permute.xlu0 %3414
    %3416 = vrot.lane.b32.xlu0 %v3403, 124
    %v3417 = vpop.permute.xlu0 %3416
    %3418 = vrot.lane.b32.xlu0 %v3411, 124
    %v3419 = vpop.permute.xlu0 %3418
    %3420 = vrot.lane.b32.xlu0 %v3413, 124
    %v3421 = vpop.permute.xlu0 %3420
    %3422 = vrot.lane.b32.xlu0 %v3396, 124
    %v3423 = vpop.permute.xlu0 %3422
    %3424 = vrot.lane.b32.xlu0 %v3410, 124
    %v3425 = vpop.permute.xlu0 %3424
    %3426 = vrot.lane.b32.xlu0 %v3412, 124
    %v3427 = vpop.permute.xlu0 %3426
    %v3428 = vsel %vm536, %v3415, %v3417
    %v3429 = vsel %vm536, %v3417, %v3419
    %v3430 = vsel %vm536, %v3419, %v3421
    %v3431 = vsel %vm536, %v3421, %v3423
    %v3432 = vsel %vm536, %v3423, %v3425
    %v3433 = vsel %vm536, %v3425, %v3427
    %v3441 = vld [vmem:[#allocation2 + $0x38] sm:$0x4]
    %v3442 = vsel %vm552, %v3428, %v3441
    %3443 = vst [vmem:[#allocation2 + $0x38] sm:$0x4] %v3442
    %v3444 = vld [vmem:[#allocation2 + $0x40] sm:$0x4]
    %v3445 = vsel %vm552, %v3429, %v3444
    %3446 = vst [vmem:[#allocation2 + $0x40] sm:$0x4] %v3445
    %v3447 = vld [vmem:[#allocation2 + $0x48] sm:$0x4]
    %v3448 = vsel %vm552, %v3430, %v3447
    %3449 = vst [vmem:[#allocation2 + $0x48] sm:$0x4] %v3448
    %v3450 = vld [vmem:[#allocation2 + $0x50] sm:$0x4]
    %v3451 = vsel %vm552, %v3431, %v3450
    %3452 = vst [vmem:[#allocation2 + $0x50] sm:$0x4] %v3451
    %v3453 = vld [vmem:[#allocation2 + $0x58] sm:$0x4]
    %v3454 = vsel %vm552, %v3432, %v3453
    %3455 = vst [vmem:[#allocation2 + $0x58] sm:$0x4] %v3454
    %v3456 = vld [vmem:[#allocation2 + $0x60] sm:$0x4]
    %v3457 = vsel %vm552, %v3433, %v3456
    %3458 = vst [vmem:[#allocation2 + $0x60] sm:$0x4] %v3457
    %v3459 = vld [vmem:[#allocation2 + $0x68] sm:$0x4]
    %v3460 = vsel %vm572, %v3427, %v3459
    %3461 = vst [vmem:[#allocation2 + $0x68] sm:$0x4] %v3460
    %v3462 = vld [vmem:[%s2942] sm:$0xff]
    %v3464 = vcombine.high %v3462, %v3462
    %v3466 = vunpack.c.l.s4 1966171168
    %v3467 = vunpack.c.0.s8 %v3466
    %v3468 = vlaneseq
    %v3469 = vshrl.u32 %v3468, 7
    %v3470 = vsub.s32 %v3467, %v3469
    %v3471 = vrot.slane %v3462, %v3470
    %v3473 = vunpack.c.l.s4 1966171168
    %v3474 = vunpack.c.0.s8 %v3473
    %v3475 = vlaneseq
    %v3476 = vshrl.u32 %v3475, 7
    %v3477 = vsub.s32 %v3474, %v3476
    %v3478 = vrot.slane %v3464, %v3477
    %v3479 = vcombine.high %v3471, %v3471
    %v3480 = vcombine.high %v3478, %v3478
    %v3482 = vunpack.c.l.s4 1966171168
    %v3483 = vunpack.c.0.s8 %v3482
    %v3484 = vlaneseq
    %v3485 = vshrl.u32 %v3484, 7
    %v3486 = vsub.s32 %v3483, %v3485
    %v3487 = vrot.slane %v3471, %v3486
    %v3489 = vunpack.c.l.s4 1966171168
    %v3490 = vunpack.c.0.s8 %v3489
    %v3491 = vlaneseq
    %v3492 = vshrl.u32 %v3491, 7
    %v3493 = vsub.s32 %v3490, %v3492
    %v3494 = vrot.slane %v3478, %v3493
    %v3496 = vunpack.c.l.s4 1966171168
    %v3497 = vunpack.c.0.s8 %v3496
    %v3498 = vlaneseq
    %v3499 = vshrl.u32 %v3498, 7
    %v3500 = vsub.s32 %v3497, %v3499
    %v3501 = vrot.slane %v3479, %v3500
    %v3503 = vunpack.c.l.s4 1966171168
    %v3504 = vunpack.c.0.s8 %v3503
    %v3505 = vlaneseq
    %v3506 = vshrl.u32 %v3505, 7
    %v3507 = vsub.s32 %v3504, %v3506
    %v3508 = vrot.slane %v3480, %v3507
    %v3509 = vcombine.high %v3487, %v3487
    %v3510 = vcombine.high %v3494, %v3494
    %v3511 = vcombine.high %v3501, %v3501
    %v3512 = vcombine.high %v3508, %v3508
    %v3514 = vshll.u32 %v3487, 16
    %v3516 = vrot.slane %v3514, 6
    %v3518 = vshll.u32 %v3501, 16
    %v3520 = vrot.slane %v3518, 6
    %v3522 = vshll.u32 %v3509, 16
    %v3524 = vrot.slane %v3522, 6
    %v3526 = vshll.u32 %v3511, 16
    %v3528 = vrot.slane %v3526, 6
    %v3530 = vshll.u32 %v3494, 16
    %v3532 = vrot.slane %v3530, 6
    %v3534 = vshll.u32 %v3508, 16
    %v3536 = vrot.slane %v3534, 6
    %v3538 = vshll.u32 %v3510, 16
    %v3540 = vrot.slane %v3538, 6
    %v3542 = vshll.u32 %v3512, 16
    %v3544 = vrot.slane %v3542, 6
    %3545 = vrot.lane.b32.xlu0 %v3516, 96
    %v3546 = vpop.permute.xlu0 %3545
    %3547 = vrot.lane.b32.xlu0 %v3520, 96
    %v3548 = vpop.permute.xlu0 %3547
    %3549 = vrot.lane.b32.xlu0 %v3524, 96
    %v3550 = vpop.permute.xlu0 %3549
    %3551 = vrot.lane.b32.xlu0 %v3528, 96
    %v3552 = vpop.permute.xlu0 %3551
    %3553 = vrot.lane.b32.xlu0 %v3532, 96
    %v3554 = vpop.permute.xlu0 %3553
    %3555 = vrot.lane.b32.xlu0 %v3536, 96
    %v3556 = vpop.permute.xlu0 %3555
    %3557 = vrot.lane.b32.xlu0 %v3540, 96
    %v3558 = vpop.permute.xlu0 %3557
    %3559 = vrot.lane.b32.xlu0 %v3544, 96
    %v3560 = vpop.permute.xlu0 %3559
    %v3561 = vsel %vm675, %v3546, %v3548
    %v3562 = vsel %vm675, %v3548, %v3550
    %v3563 = vsel %vm675, %v3550, %v3552
    %v3564 = vsel %vm675, %v3552, %v3554
    %v3565 = vsel %vm675, %v3554, %v3556
    %v3566 = vsel %vm675, %v3556, %v3558
    %v3567 = vsel %vm675, %v3558, %v3560
    %v3575 = vld [vmem:[#allocation2 + $0x38] sm:$0x4]
    %v3576 = vsel %vm691, %v3561, %v3575
    %3577 = vst [vmem:[#allocation2 + $0x38] sm:$0x4] %v3576
    %v3578 = vld [vmem:[#allocation2 + $0x40] sm:$0x4]
    %v3579 = vsel %vm691, %v3562, %v3578
    %3580 = vst [vmem:[#allocation2 + $0x40] sm:$0x4] %v3579
    %v3581 = vld [vmem:[#allocation2 + $0x48] sm:$0x4]
    %v3582 = vsel %vm691, %v3563, %v3581
    %3583 = vst [vmem:[#allocation2 + $0x48] sm:$0x4] %v3582
    %v3584 = vld [vmem:[#allocation2 + $0x50] sm:$0x4]
    %v3585 = vsel %vm691, %v3564, %v3584
    %3586 = vst [vmem:[#allocation2 + $0x50] sm:$0x4] %v3585
    %v3587 = vld [vmem:[#allocation2 + $0x58] sm:$0x4]
    %v3588 = vsel %vm691, %v3565, %v3587
    %3589 = vst [vmem:[#allocation2 + $0x58] sm:$0x4] %v3588
    %v3590 = vld [vmem:[#allocation2 + $0x60] sm:$0x4]
    %v3591 = vsel %vm691, %v3566, %v3590
    %3592 = vst [vmem:[#allocation2 + $0x60] sm:$0x4] %v3591
    %v3593 = vld [vmem:[#allocation2 + $0x68] sm:$0x4]
    %v3594 = vsel %vm710, %v3567, %v3593
    %3595 = vst [vmem:[#allocation2 + $0x68] sm:$0x4] %v3594
    %v3596 = vld [vmem:[%s2942] sm:$0xff]
    %v3598 = vcombine.low %v3596, %v3596
    %v3600 = vunpack.c.l.s4 1966171168
    %v3601 = vunpack.c.0.s8 %v3600
    %v3602 = vlaneseq
    %v3603 = vshrl.u32 %v3602, 7
    %v3604 = vsub.s32 %v3601, %v3603
    %v3605 = vrot.slane %v3598, %v3604
    %v3607 = vunpack.c.l.s4 1966171168
    %v3608 = vunpack.c.0.s8 %v3607
    %v3609 = vlaneseq
    %v3610 = vshrl.u32 %v3609, 7
    %v3611 = vsub.s32 %v3608, %v3610
    %v3612 = vrot.slane %v3596, %v3611
    %v3613 = vcombine.low %v3605, %v3605
    %v3614 = vcombine.low %v3612, %v3612
    %v3616 = vunpack.c.l.s4 1966171168
    %v3617 = vunpack.c.0.s8 %v3616
    %v3618 = vlaneseq
    %v3619 = vshrl.u32 %v3618, 7
    %v3620 = vsub.s32 %v3617, %v3619
    %v3621 = vrot.slane %v3613, %v3620
    %v3623 = vunpack.c.l.s4 1966171168
    %v3624 = vunpack.c.0.s8 %v3623
    %v3625 = vlaneseq
    %v3626 = vshrl.u32 %v3625, 7
    %v3627 = vsub.s32 %v3624, %v3626
    %v3628 = vrot.slane %v3614, %v3627
    %v3630 = vunpack.c.l.s4 1966171168
    %v3631 = vunpack.c.0.s8 %v3630
    %v3632 = vlaneseq
    %v3633 = vshrl.u32 %v3632, 7
    %v3634 = vsub.s32 %v3631, %v3633
    %v3635 = vrot.slane %v3605, %v3634
    %v3637 = vunpack.c.l.s4 1966171168
    %v3638 = vunpack.c.0.s8 %v3637
    %v3639 = vlaneseq
    %v3640 = vshrl.u32 %v3639, 7
    %v3641 = vsub.s32 %v3638, %v3640
    %v3642 = vrot.slane %v3612, %v3641
    %v3643 = vcombine.high %v3621, %v3621
    %v3644 = vcombine.high %v3628, %v3628
    %v3645 = vcombine.high %v3635, %v3635
    %v3646 = vcombine.high %v3642, %v3642
    %3647 = vrot.lane.b32.xlu0 %v3621, 95
    %v3648 = vpop.permute.xlu0 %3647
    %3649 = vrot.lane.b32.xlu0 %v3635, 95
    %v3650 = vpop.permute.xlu0 %3649
    %3651 = vrot.lane.b32.xlu0 %v3643, 95
    %v3652 = vpop.permute.xlu0 %3651
    %3653 = vrot.lane.b32.xlu0 %v3645, 95
    %v3654 = vpop.permute.xlu0 %3653
    %3655 = vrot.lane.b32.xlu0 %v3628, 95
    %v3656 = vpop.permute.xlu0 %3655
    %3657 = vrot.lane.b32.xlu0 %v3642, 95
    %v3658 = vpop.permute.xlu0 %3657
    %3659 = vrot.lane.b32.xlu0 %v3644, 95
    %v3660 = vpop.permute.xlu0 %3659
    %3661 = vrot.lane.b32.xlu0 %v3646, 95
    %v3662 = vpop.permute.xlu0 %3661
    %v3663 = vsel %vm781, %v3648, %v3650
    %v3664 = vsel %vm781, %v3650, %v3652
    %v3665 = vsel %vm781, %v3652, %v3654
    %v3666 = vsel %vm781, %v3654, %v3656
    %v3667 = vsel %vm781, %v3656, %v3658
    %v3668 = vsel %vm781, %v3658, %v3660
    %v3669 = vsel %vm781, %v3660, %v3662
    %v3677 = vld [vmem:[#allocation2 + $0x38] sm:$0x8]
    %v3678 = vsel %vm798, %v3663, %v3677
    %3679 = vst [vmem:[#allocation2 + $0x38] sm:$0x8] %v3678
    %v3680 = vld [vmem:[#allocation2 + $0x40] sm:$0x8]
    %v3681 = vsel %vm798, %v3664, %v3680
    %3682 = vst [vmem:[#allocation2 + $0x40] sm:$0x8] %v3681
    %v3683 = vld [vmem:[#allocation2 + $0x48] sm:$0x8]
    %v3684 = vsel %vm798, %v3665, %v3683
    %3685 = vst [vmem:[#allocation2 + $0x48] sm:$0x8] %v3684
    %v3686 = vld [vmem:[#allocation2 + $0x50] sm:$0x8]
    %v3687 = vsel %vm798, %v3666, %v3686
    %3688 = vst [vmem:[#allocation2 + $0x50] sm:$0x8] %v3687
    %v3689 = vld [vmem:[#allocation2 + $0x58] sm:$0x8]
    %v3690 = vsel %vm798, %v3667, %v3689
    %3691 = vst [vmem:[#allocation2 + $0x58] sm:$0x8] %v3690
    %v3692 = vld [vmem:[#allocation2 + $0x60] sm:$0x8]
    %v3693 = vsel %vm798, %v3668, %v3692
    %3694 = vst [vmem:[#allocation2 + $0x60] sm:$0x8] %v3693
    %v3695 = vld [vmem:[#allocation2 + $0x68] sm:$0x8]
    %v3696 = vsel %vm818, %v3669, %v3695
    %3697 = vst [vmem:[#allocation2 + $0x68] sm:$0x8] %v3696
    %v3698 = vld [vmem:[%s2942] sm:$0xff]
    %v3700 = vcombine.high %v3698, %v3698
    %v3702 = vunpack.c.l.s4 1966171168
    %v3703 = vunpack.c.0.s8 %v3702
    %v3704 = vlaneseq
    %v3705 = vshrl.u32 %v3704, 7
    %v3706 = vsub.s32 %v3703, %v3705
    %v3707 = vrot.slane %v3698, %v3706
    %v3709 = vunpack.c.l.s4 1966171168
    %v3710 = vunpack.c.0.s8 %v3709
    %v3711 = vlaneseq
    %v3712 = vshrl.u32 %v3711, 7
    %v3713 = vsub.s32 %v3710, %v3712
    %v3714 = vrot.slane %v3700, %v3713
    %v3715 = vcombine.high %v3707, %v3707
    %v3716 = vcombine.high %v3714, %v3714
    %v3718 = vunpack.c.l.s4 1966171168
    %v3719 = vunpack.c.0.s8 %v3718
    %v3720 = vlaneseq
    %v3721 = vshrl.u32 %v3720, 7
    %v3722 = vsub.s32 %v3719, %v3721
    %v3723 = vrot.slane %v3707, %v3722
    %v3725 = vunpack.c.l.s4 1966171168
    %v3726 = vunpack.c.0.s8 %v3725
    %v3727 = vlaneseq
    %v3728 = vshrl.u32 %v3727, 7
    %v3729 = vsub.s32 %v3726, %v3728
    %v3730 = vrot.slane %v3714, %v3729
    %v3732 = vunpack.c.l.s4 1966171168
    %v3733 = vunpack.c.0.s8 %v3732
    %v3734 = vlaneseq
    %v3735 = vshrl.u32 %v3734, 7
    %v3736 = vsub.s32 %v3733, %v3735
    %v3737 = vrot.slane %v3715, %v3736
    %v3739 = vunpack.c.l.s4 1966171168
    %v3740 = vunpack.c.0.s8 %v3739
    %v3741 = vlaneseq
    %v3742 = vshrl.u32 %v3741, 7
    %v3743 = vsub.s32 %v3740, %v3742
    %v3744 = vrot.slane %v3716, %v3743
    %v3745 = vcombine.high %v3723, %v3723
    %v3746 = vcombine.high %v3730, %v3730
    %v3747 = vcombine.high %v3737, %v3737
    %v3748 = vcombine.high %v3744, %v3744
    %v3750 = vshll.u32 %v3723, 16
    %v3752 = vrot.slane %v3750, 5
    %v3754 = vshll.u32 %v3737, 16
    %v3756 = vrot.slane %v3754, 5
    %v3758 = vshll.u32 %v3745, 16
    %v3760 = vrot.slane %v3758, 5
    %v3762 = vshll.u32 %v3747, 16
    %v3764 = vrot.slane %v3762, 5
    %v3766 = vshll.u32 %v3730, 16
    %v3768 = vrot.slane %v3766, 5
    %v3770 = vshll.u32 %v3744, 16
    %v3772 = vrot.slane %v3770, 5
    %v3774 = vshll.u32 %v3746, 16
    %v3776 = vrot.slane %v3774, 5
    %v3778 = vshll.u32 %v3748, 16
    %v3780 = vrot.slane %v3778, 5
    %3781 = vrot.lane.b32.xlu0 %v3752, 94
    %v3782 = vpop.permute.xlu0 %3781
    %3783 = vrot.lane.b32.xlu0 %v3756, 94
    %v3784 = vpop.permute.xlu0 %3783
    %3785 = vrot.lane.b32.xlu0 %v3760, 94
    %v3786 = vpop.permute.xlu0 %3785
    %3787 = vrot.lane.b32.xlu0 %v3764, 94
    %v3788 = vpop.permute.xlu0 %3787
    %3789 = vrot.lane.b32.xlu0 %v3768, 94
    %v3790 = vpop.permute.xlu0 %3789
    %3791 = vrot.lane.b32.xlu0 %v3772, 94
    %v3792 = vpop.permute.xlu0 %3791
    %3793 = vrot.lane.b32.xlu0 %v3776, 94
    %v3794 = vpop.permute.xlu0 %3793
    %3795 = vrot.lane.b32.xlu0 %v3780, 94
    %v3796 = vpop.permute.xlu0 %3795
    %v3797 = vsel %vm921, %v3782, %v3784
    %v3798 = vsel %vm921, %v3784, %v3786
    %v3799 = vsel %vm921, %v3786, %v3788
    %v3800 = vsel %vm921, %v3788, %v3790
    %v3801 = vsel %vm921, %v3790, %v3792
    %v3802 = vsel %vm921, %v3792, %v3794
    %v3803 = vsel %vm921, %v3794, %v3796
    %v3811 = vld [vmem:[#allocation2 + $0x38] sm:$0x8]
    %v3812 = vsel %vm937, %v3797, %v3811
    %3813 = vst [vmem:[#allocation2 + $0x38] sm:$0x8] %v3812
    %v3814 = vld [vmem:[#allocation2 + $0x40] sm:$0x8]
    %v3815 = vsel %vm937, %v3798, %v3814
    %3816 = vst [vmem:[#allocation2 + $0x40] sm:$0x8] %v3815
    %v3817 = vld [vmem:[#allocation2 + $0x48] sm:$0x8]
    %v3818 = vsel %vm937, %v3799, %v3817
    %3819 = vst [vmem:[#allocation2 + $0x48] sm:$0x8] %v3818
    %v3820 = vld [vmem:[#allocation2 + $0x50] sm:$0x8]
    %v3821 = vsel %vm937, %v3800, %v3820
    %3822 = vst [vmem:[#allocation2 + $0x50] sm:$0x8] %v3821
    %v3823 = vld [vmem:[#allocation2 + $0x58] sm:$0x8]
    %v3824 = vsel %vm937, %v3801, %v3823
    %3825 = vst [vmem:[#allocation2 + $0x58] sm:$0x8] %v3824
    %v3826 = vld [vmem:[#allocation2 + $0x60] sm:$0x8]
    %v3827 = vsel %vm937, %v3802, %v3826
    %3828 = vst [vmem:[#allocation2 + $0x60] sm:$0x8] %v3827
    %v3829 = vld [vmem:[#allocation2 + $0x68] sm:$0x8]
    %v3830 = vsel %vm956, %v3803, %v3829
    %3831 = vst [vmem:[#allocation2 + $0x68] sm:$0x8] %v3830
    %v3832 = vld [vmem:[%s2942] sm:$0xff]
    %v3834 = vcombine.high %v3832, %v3832
    %v3836 = vunpack.c.l.s4 1966171168
    %v3837 = vunpack.c.0.s8 %v3836
    %v3838 = vlaneseq
    %v3839 = vshrl.u32 %v3838, 7
    %v3840 = vsub.s32 %v3837, %v3839
    %v3841 = vrot.slane %v3832, %v3840
    %v3843 = vunpack.c.l.s4 1966171168
    %v3844 = vunpack.c.0.s8 %v3843
    %v3845 = vlaneseq
    %v3846 = vshrl.u32 %v3845, 7
    %v3847 = vsub.s32 %v3844, %v3846
    %v3848 = vrot.slane %v3834, %v3847
    %v3849 = vcombine.high %v3841, %v3841
    %v3850 = vcombine.high %v3848, %v3848
    %v3852 = vunpack.c.l.s4 1966171168
    %v3853 = vunpack.c.0.s8 %v3852
    %v3854 = vlaneseq
    %v3855 = vshrl.u32 %v3854, 7
    %v3856 = vsub.s32 %v3853, %v3855
    %v3857 = vrot.slane %v3841, %v3856
    %v3859 = vunpack.c.l.s4 1966171168
    %v3860 = vunpack.c.0.s8 %v3859
    %v3861 = vlaneseq
    %v3862 = vshrl.u32 %v3861, 7
    %v3863 = vsub.s32 %v3860, %v3862
    %v3864 = vrot.slane %v3848, %v3863
    %v3866 = vunpack.c.l.s4 1966171168
    %v3867 = vunpack.c.0.s8 %v3866
    %v3868 = vlaneseq
    %v3869 = vshrl.u32 %v3868, 7
    %v3870 = vsub.s32 %v3867, %v3869
    %v3871 = vrot.slane %v3849, %v3870
    %v3873 = vunpack.c.l.s4 1966171168
    %v3874 = vunpack.c.0.s8 %v3873
    %v3875 = vlaneseq
    %v3876 = vshrl.u32 %v3875, 7
    %v3877 = vsub.s32 %v3874, %v3876
    %v3878 = vrot.slane %v3850, %v3877
    %v3879 = vcombine.low %v3857, %v3857
    %v3880 = vcombine.low %v3864, %v3864
    %v3881 = vcombine.low %v3871, %v3871
    %v3882 = vcombine.low %v3878, %v3878
    %3883 = vrot.lane.b32.xlu0 %v3879, 93
    %v3884 = vpop.permute.xlu0 %3883
    %3885 = vrot.lane.b32.xlu0 %v3881, 93
    %v3886 = vpop.permute.xlu0 %3885
    %3887 = vrot.lane.b32.xlu0 %v3857, 93
    %v3888 = vpop.permute.xlu0 %3887
    %3889 = vrot.lane.b32.xlu0 %v3871, 93
    %v3890 = vpop.permute.xlu0 %3889
    %3891 = vrot.lane.b32.xlu0 %v3880, 93
    %v3892 = vpop.permute.xlu0 %3891
    %3893 = vrot.lane.b32.xlu0 %v3882, 93
    %v3894 = vpop.permute.xlu0 %3893
    %3895 = vrot.lane.b32.xlu0 %v3864, 93
    %v3896 = vpop.permute.xlu0 %3895
    %3897 = vrot.lane.b32.xlu0 %v3878, 93
    %v3898 = vpop.permute.xlu0 %3897
    %v3899 = vsel %vm1027, %v3884, %v3886
    %v3900 = vsel %vm1027, %v3886, %v3888
    %v3901 = vsel %vm1027, %v3888, %v3890
    %v3902 = vsel %vm1027, %v3890, %v3892
    %v3903 = vsel %vm1027, %v3892, %v3894
    %v3904 = vsel %vm1027, %v3894, %v3896
    %v3905 = vsel %vm1027, %v3896, %v3898
    %v3913 = vld [vmem:[#allocation2 + $0x38] sm:$0x10]
    %v3914 = vsel %vm1044, %v3899, %v3913
    %3915 = vst [vmem:[#allocation2 + $0x38] sm:$0x10] %v3914
    %v3916 = vld [vmem:[#allocation2 + $0x40] sm:$0x10]
    %v3917 = vsel %vm1044, %v3900, %v3916
    %3918 = vst [vmem:[#allocation2 + $0x40] sm:$0x10] %v3917
    %v3919 = vld [vmem:[#allocation2 + $0x48] sm:$0x10]
    %v3920 = vsel %vm1044, %v3901, %v3919
    %3921 = vst [vmem:[#allocation2 + $0x48] sm:$0x10] %v3920
    %v3922 = vld [vmem:[#allocation2 + $0x50] sm:$0x10]
    %v3923 = vsel %vm1044, %v3902, %v3922
    %3924 = vst [vmem:[#allocation2 + $0x50] sm:$0x10] %v3923
    %v3925 = vld [vmem:[#allocation2 + $0x58] sm:$0x10]
    %v3926 = vsel %vm1044, %v3903, %v3925
    %3927 = vst [vmem:[#allocation2 + $0x58] sm:$0x10] %v3926
    %v3928 = vld [vmem:[#allocation2 + $0x60] sm:$0x10]
    %v3929 = vsel %vm1044, %v3904, %v3928
    %3930 = vst [vmem:[#allocation2 + $0x60] sm:$0x10] %v3929
    %v3931 = vld [vmem:[#allocation2 + $0x68] sm:$0x10]
    %v3932 = vsel %vm1064, %v3905, %v3931
    %3933 = vst [vmem:[#allocation2 + $0x68] sm:$0x10] %v3932
    %v3934 = vld [vmem:[%s2942] sm:$0xff]
    %v3936 = vcombine.high %v3934, %v3934
    %v3938 = vunpack.c.l.s4 1966171168
    %v3939 = vunpack.c.0.s8 %v3938
    %v3940 = vlaneseq
    %v3941 = vshrl.u32 %v3940, 7
    %v3942 = vsub.s32 %v3939, %v3941
    %v3943 = vrot.slane %v3934, %v3942
    %v3945 = vunpack.c.l.s4 1966171168
    %v3946 = vunpack.c.0.s8 %v3945
    %v3947 = vlaneseq
    %v3948 = vshrl.u32 %v3947, 7
    %v3949 = vsub.s32 %v3946, %v3948
    %v3950 = vrot.slane %v3936, %v3949
    %v3951 = vcombine.high %v3943, %v3943
    %v3952 = vcombine.high %v3950, %v3950
    %v3954 = vunpack.c.l.s4 1966171168
    %v3955 = vunpack.c.0.s8 %v3954
    %v3956 = vlaneseq
    %v3957 = vshrl.u32 %v3956, 7
    %v3958 = vsub.s32 %v3955, %v3957
    %v3959 = vrot.slane %v3943, %v3958
    %v3961 = vunpack.c.l.s4 1966171168
    %v3962 = vunpack.c.0.s8 %v3961
    %v3963 = vlaneseq
    %v3964 = vshrl.u32 %v3963, 7
    %v3965 = vsub.s32 %v3962, %v3964
    %v3966 = vrot.slane %v3950, %v3965
    %v3968 = vunpack.c.l.s4 1966171168
    %v3969 = vunpack.c.0.s8 %v3968
    %v3970 = vlaneseq
    %v3971 = vshrl.u32 %v3970, 7
    %v3972 = vsub.s32 %v3969, %v3971
    %v3973 = vrot.slane %v3951, %v3972
    %v3975 = vunpack.c.l.s4 1966171168
    %v3976 = vunpack.c.0.s8 %v3975
    %v3977 = vlaneseq
    %v3978 = vshrl.u32 %v3977, 7
    %v3979 = vsub.s32 %v3976, %v3978
    %v3980 = vrot.slane %v3952, %v3979
    %v3981 = vcombine.high %v3959, %v3959
    %v3982 = vcombine.high %v3966, %v3966
    %v3983 = vcombine.high %v3973, %v3973
    %v3984 = vcombine.high %v3980, %v3980
    %v3986 = vshll.u32 %v3959, 16
    %v3988 = vrot.slane %v3986, 4
    %v3990 = vshll.u32 %v3973, 16
    %v3992 = vrot.slane %v3990, 4
    %v3994 = vshll.u32 %v3981, 16
    %v3996 = vrot.slane %v3994, 4
    %v3998 = vshll.u32 %v3983, 16
    %v4000 = vrot.slane %v3998, 4
    %v4002 = vshll.u32 %v3966, 16
    %v4004 = vrot.slane %v4002, 4
    %v4006 = vshll.u32 %v3980, 16
    %v4008 = vrot.slane %v4006, 4
    %v4010 = vshll.u32 %v3982, 16
    %v4012 = vrot.slane %v4010, 4
    %v4014 = vshll.u32 %v3984, 16
    %v4016 = vrot.slane %v4014, 4
    %4017 = vrot.lane.b32.xlu0 %v3988, 92
    %v4018 = vpop.permute.xlu0 %4017
    %4019 = vrot.lane.b32.xlu0 %v3992, 92
    %v4020 = vpop.permute.xlu0 %4019
    %4021 = vrot.lane.b32.xlu0 %v3996, 92
    %v4022 = vpop.permute.xlu0 %4021
    %4023 = vrot.lane.b32.xlu0 %v4000, 92
    %v4024 = vpop.permute.xlu0 %4023
    %4025 = vrot.lane.b32.xlu0 %v4004, 92
    %v4026 = vpop.permute.xlu0 %4025
    %4027 = vrot.lane.b32.xlu0 %v4008, 92
    %v4028 = vpop.permute.xlu0 %4027
    %4029 = vrot.lane.b32.xlu0 %v4012, 92
    %v4030 = vpop.permute.xlu0 %4029
    %4031 = vrot.lane.b32.xlu0 %v4016, 92
    %v4032 = vpop.permute.xlu0 %4031
    %v4033 = vsel %vm1167, %v4018, %v4020
    %v4034 = vsel %vm1167, %v4020, %v4022
    %v4035 = vsel %vm1167, %v4022, %v4024
    %v4036 = vsel %vm1167, %v4024, %v4026
    %v4037 = vsel %vm1167, %v4026, %v4028
    %v4038 = vsel %vm1167, %v4028, %v4030
    %v4039 = vsel %vm1167, %v4030, %v4032
    %v4047 = vld [vmem:[#allocation2 + $0x38] sm:$0x10]
    %v4048 = vsel %vm1183, %v4033, %v4047
    %4049 = vst [vmem:[#allocation2 + $0x38] sm:$0x10] %v4048
    %v4050 = vld [vmem:[#allocation2 + $0x40] sm:$0x10]
    %v4051 = vsel %vm1183, %v4034, %v4050
    %4052 = vst [vmem:[#allocation2 + $0x40] sm:$0x10] %v4051
    %v4053 = vld [vmem:[#allocation2 + $0x48] sm:$0x10]
    %v4054 = vsel %vm1183, %v4035, %v4053
    %4055 = vst [vmem:[#allocation2 + $0x48] sm:$0x10] %v4054
    %v4056 = vld [vmem:[#allocation2 + $0x50] sm:$0x10]
    %v4057 = vsel %vm1183, %v4036, %v4056
    %4058 = vst [vmem:[#allocation2 + $0x50] sm:$0x10] %v4057
    %v4059 = vld [vmem:[#allocation2 + $0x58] sm:$0x10]
    %v4060 = vsel %vm1183, %v4037, %v4059
    %4061 = vst [vmem:[#allocation2 + $0x58] sm:$0x10] %v4060
    %v4062 = vld [vmem:[#allocation2 + $0x60] sm:$0x10]
    %v4063 = vsel %vm1183, %v4038, %v4062
    %4064 = vst [vmem:[#allocation2 + $0x60] sm:$0x10] %v4063
    %v4065 = vld [vmem:[#allocation2 + $0x68] sm:$0x10]
    %v4066 = vsel %vm1202, %v4039, %v4065
    %4067 = vst [vmem:[#allocation2 + $0x68] sm:$0x10] %v4066
    %v4068 = vld [vmem:[%s2942] sm:$0xff]
    %v4070 = vcombine.low %v4068, %v4068
    %v4072 = vunpack.c.l.s4 1966171168
    %v4073 = vunpack.c.0.s8 %v4072
    %v4074 = vlaneseq
    %v4075 = vshrl.u32 %v4074, 7
    %v4076 = vsub.s32 %v4073, %v4075
    %v4077 = vrot.slane %v4070, %v4076
    %v4079 = vunpack.c.l.s4 1966171168
    %v4080 = vunpack.c.0.s8 %v4079
    %v4081 = vlaneseq
    %v4082 = vshrl.u32 %v4081, 7
    %v4083 = vsub.s32 %v4080, %v4082
    %v4084 = vrot.slane %v4068, %v4083
    %v4085 = vcombine.high %v4077, %v4077
    %v4086 = vcombine.high %v4084, %v4084
    %v4088 = vunpack.c.l.s4 1966171168
    %v4089 = vunpack.c.0.s8 %v4088
    %v4090 = vlaneseq
    %v4091 = vshrl.u32 %v4090, 7
    %v4092 = vsub.s32 %v4089, %v4091
    %v4093 = vrot.slane %v4077, %v4092
    %v4095 = vunpack.c.l.s4 1966171168
    %v4096 = vunpack.c.0.s8 %v4095
    %v4097 = vlaneseq
    %v4098 = vshrl.u32 %v4097, 7
    %v4099 = vsub.s32 %v4096, %v4098
    %v4100 = vrot.slane %v4084, %v4099
    %v4102 = vunpack.c.l.s4 1966171168
    %v4103 = vunpack.c.0.s8 %v4102
    %v4104 = vlaneseq
    %v4105 = vshrl.u32 %v4104, 7
    %v4106 = vsub.s32 %v4103, %v4105
    %v4107 = vrot.slane %v4085, %v4106
    %v4109 = vunpack.c.l.s4 1966171168
    %v4110 = vunpack.c.0.s8 %v4109
    %v4111 = vlaneseq
    %v4112 = vshrl.u32 %v4111, 7
    %v4113 = vsub.s32 %v4110, %v4112
    %v4114 = vrot.slane %v4086, %v4113
    %v4115 = vcombine.low %v4093, %v4093
    %v4116 = vcombine.low %v4100, %v4100
    %v4117 = vcombine.low %v4107, %v4107
    %v4118 = vcombine.low %v4114, %v4114
    %4119 = vrot.lane.b32.xlu0 %v4115, 64
    %v4120 = vpop.permute.xlu0 %4119
    %4121 = vrot.lane.b32.xlu0 %v4117, 64
    %v4122 = vpop.permute.xlu0 %4121
    %4123 = vrot.lane.b32.xlu0 %v4093, 64
    %v4124 = vpop.permute.xlu0 %4123
    %4125 = vrot.lane.b32.xlu0 %v4107, 64
    %v4126 = vpop.permute.xlu0 %4125
    %4127 = vrot.lane.b32.xlu0 %v4116, 64
    %v4128 = vpop.permute.xlu0 %4127
    %4129 = vrot.lane.b32.xlu0 %v4118, 64
    %v4130 = vpop.permute.xlu0 %4129
    %4131 = vrot.lane.b32.xlu0 %v4100, 64
    %v4132 = vpop.permute.xlu0 %4131
    %4133 = vrot.lane.b32.xlu0 %v4114, 64
    %v4134 = vpop.permute.xlu0 %4133
    %v4135 = vsel %vm1273, %v4120, %v4122
    %v4136 = vsel %vm1273, %v4122, %v4124
    %v4137 = vsel %vm1273, %v4124, %v4126
    %v4138 = vsel %vm1273, %v4126, %v4128
    %v4139 = vsel %vm1273, %v4128, %v4130
    %v4140 = vsel %vm1273, %v4130, %v4132
    %v4141 = vsel %vm1273, %v4132, %v4134
    %v4149 = vld [vmem:[#allocation2 + $0x38] sm:$0x20]
    %v4150 = vsel %vm1290, %v4135, %v4149
    %4151 = vst [vmem:[#allocation2 + $0x38] sm:$0x20] %v4150
    %v4152 = vld [vmem:[#allocation2 + $0x40] sm:$0x20]
    %v4153 = vsel %vm1290, %v4136, %v4152
    %4154 = vst [vmem:[#allocation2 + $0x40] sm:$0x20] %v4153
    %v4155 = vld [vmem:[#allocation2 + $0x48] sm:$0x20]
    %v4156 = vsel %vm1290, %v4137, %v4155
    %4157 = vst [vmem:[#allocation2 + $0x48] sm:$0x20] %v4156
    %v4158 = vld [vmem:[#allocation2 + $0x50] sm:$0x20]
    %v4159 = vsel %vm1290, %v4138, %v4158
    %4160 = vst [vmem:[#allocation2 + $0x50] sm:$0x20] %v4159
    %v4161 = vld [vmem:[#allocation2 + $0x58] sm:$0x20]
    %v4162 = vsel %vm1290, %v4139, %v4161
    %4163 = vst [vmem:[#allocation2 + $0x58] sm:$0x20] %v4162
    %v4164 = vld [vmem:[#allocation2 + $0x60] sm:$0x20]
    %v4165 = vsel %vm1290, %v4140, %v4164
    %4166 = vst [vmem:[#allocation2 + $0x60] sm:$0x20] %v4165
    %v4167 = vld [vmem:[#allocation2 + $0x68] sm:$0x20]
    %v4168 = vsel %vm1310, %v4141, %v4167
    %4169 = vst [vmem:[#allocation2 + $0x68] sm:$0x20] %v4168
    %v4170 = vld [vmem:[%s2942] sm:$0xff]
    %v4172 = vcombine.high %v4170, %v4170
    %v4174 = vunpack.c.l.s4 1966171168
    %v4175 = vunpack.c.0.s8 %v4174
    %v4176 = vlaneseq
    %v4177 = vshrl.u32 %v4176, 7
    %v4178 = vsub.s32 %v4175, %v4177
    %v4179 = vrot.slane %v4170, %v4178
    %v4181 = vunpack.c.l.s4 1966171168
    %v4182 = vunpack.c.0.s8 %v4181
    %v4183 = vlaneseq
    %v4184 = vshrl.u32 %v4183, 7
    %v4185 = vsub.s32 %v4182, %v4184
    %v4186 = vrot.slane %v4172, %v4185
    %v4187 = vcombine.high %v4179, %v4179
    %v4188 = vcombine.high %v4186, %v4186
    %v4190 = vunpack.c.l.s4 1966171168
    %v4191 = vunpack.c.0.s8 %v4190
    %v4192 = vlaneseq
    %v4193 = vshrl.u32 %v4192, 7
    %v4194 = vsub.s32 %v4191, %v4193
    %v4195 = vrot.slane %v4179, %v4194
    %v4197 = vunpack.c.l.s4 1966171168
    %v4198 = vunpack.c.0.s8 %v4197
    %v4199 = vlaneseq
    %v4200 = vshrl.u32 %v4199, 7
    %v4201 = vsub.s32 %v4198, %v4200
    %v4202 = vrot.slane %v4186, %v4201
    %v4204 = vunpack.c.l.s4 1966171168
    %v4205 = vunpack.c.0.s8 %v4204
    %v4206 = vlaneseq
    %v4207 = vshrl.u32 %v4206, 7
    %v4208 = vsub.s32 %v4205, %v4207
    %v4209 = vrot.slane %v4187, %v4208
    %v4211 = vunpack.c.l.s4 1966171168
    %v4212 = vunpack.c.0.s8 %v4211
    %v4213 = vlaneseq
    %v4214 = vshrl.u32 %v4213, 7
    %v4215 = vsub.s32 %v4212, %v4214
    %v4216 = vrot.slane %v4188, %v4215
    %v4217 = vcombine.high %v4195, %v4195
    %v4218 = vcombine.high %v4202, %v4202
    %v4219 = vcombine.high %v4209, %v4209
    %v4220 = vcombine.high %v4216, %v4216
    %v4222 = vshll.u32 %v4195, 16
    %v4224 = vrot.slane %v4222, 3
    %v4226 = vshll.u32 %v4209, 16
    %v4228 = vrot.slane %v4226, 3
    %v4230 = vshll.u32 %v4217, 16
    %v4232 = vrot.slane %v4230, 3
    %v4234 = vshll.u32 %v4219, 16
    %v4236 = vrot.slane %v4234, 3
    %v4238 = vshll.u32 %v4202, 16
    %v4240 = vrot.slane %v4238, 3
    %v4242 = vshll.u32 %v4216, 16
    %v4244 = vrot.slane %v4242, 3
    %v4246 = vshll.u32 %v4218, 16
    %v4248 = vrot.slane %v4246, 3
    %v4250 = vshll.u32 %v4220, 16
    %v4252 = vrot.slane %v4250, 3
    %4253 = vrot.lane.b32.xlu0 %v4224, 63
    %v4254 = vpop.permute.xlu0 %4253
    %4255 = vrot.lane.b32.xlu0 %v4228, 63
    %v4256 = vpop.permute.xlu0 %4255
    %4257 = vrot.lane.b32.xlu0 %v4232, 63
    %v4258 = vpop.permute.xlu0 %4257
    %4259 = vrot.lane.b32.xlu0 %v4236, 63
    %v4260 = vpop.permute.xlu0 %4259
    %4261 = vrot.lane.b32.xlu0 %v4240, 63
    %v4262 = vpop.permute.xlu0 %4261
    %4263 = vrot.lane.b32.xlu0 %v4244, 63
    %v4264 = vpop.permute.xlu0 %4263
    %4265 = vrot.lane.b32.xlu0 %v4248, 63
    %v4266 = vpop.permute.xlu0 %4265
    %4267 = vrot.lane.b32.xlu0 %v4252, 63
    %v4268 = vpop.permute.xlu0 %4267
    %v4269 = vsel %vm1413, %v4254, %v4256
    %v4270 = vsel %vm1413, %v4256, %v4258
    %v4271 = vsel %vm1413, %v4258, %v4260
    %v4272 = vsel %vm1413, %v4260, %v4262
    %v4273 = vsel %vm1413, %v4262, %v4264
    %v4274 = vsel %vm1413, %v4264, %v4266
    %v4275 = vsel %vm1413, %v4266, %v4268
    %v4283 = vld [vmem:[#allocation2 + $0x38] sm:$0x20]
    %v4284 = vsel %vm1429, %v4269, %v4283
    %4285 = vst [vmem:[#allocation2 + $0x38] sm:$0x20] %v4284
    %v4286 = vld [vmem:[#allocation2 + $0x40] sm:$0x20]
    %v4287 = vsel %vm1429, %v4270, %v4286
    %4288 = vst [vmem:[#allocation2 + $0x40] sm:$0x20] %v4287
    %v4289 = vld [vmem:[#allocation2 + $0x48] sm:$0x20]
    %v4290 = vsel %vm1429, %v4271, %v4289
    %4291 = vst [vmem:[#allocation2 + $0x48] sm:$0x20] %v4290
    %v4292 = vld [vmem:[#allocation2 + $0x50] sm:$0x20]
    %v4293 = vsel %vm1429, %v4272, %v4292
    %4294 = vst [vmem:[#allocation2 + $0x50] sm:$0x20] %v4293
    %v4295 = vld [vmem:[#allocation2 + $0x58] sm:$0x20]
    %v4296 = vsel %vm1429, %v4273, %v4295
    %4297 = vst [vmem:[#allocation2 + $0x58] sm:$0x20] %v4296
    %v4298 = vld [vmem:[#allocation2 + $0x60] sm:$0x20]
    %v4299 = vsel %vm1429, %v4274, %v4298
    %4300 = vst [vmem:[#allocation2 + $0x60] sm:$0x20] %v4299
    %v4301 = vld [vmem:[#allocation2 + $0x68] sm:$0x20]
    %v4302 = vsel %vm1448, %v4275, %v4301
    %4303 = vst [vmem:[#allocation2 + $0x68] sm:$0x20] %v4302
    %v4304 = vld [vmem:[%s2942] sm:$0xff]
    %v4306 = vcombine.high %v4304, %v4304
    %v4308 = vunpack.c.l.s4 1966171168
    %v4309 = vunpack.c.0.s8 %v4308
    %v4310 = vlaneseq
    %v4311 = vshrl.u32 %v4310, 7
    %v4312 = vsub.s32 %v4309, %v4311
    %v4313 = vrot.slane %v4304, %v4312
    %v4315 = vunpack.c.l.s4 1966171168
    %v4316 = vunpack.c.0.s8 %v4315
    %v4317 = vlaneseq
    %v4318 = vshrl.u32 %v4317, 7
    %v4319 = vsub.s32 %v4316, %v4318
    %v4320 = vrot.slane %v4306, %v4319
    %v4321 = vcombine.low %v4313, %v4313
    %v4322 = vcombine.low %v4320, %v4320
    %v4324 = vunpack.c.l.s4 1966171168
    %v4325 = vunpack.c.0.s8 %v4324
    %v4326 = vlaneseq
    %v4327 = vshrl.u32 %v4326, 7
    %v4328 = vsub.s32 %v4325, %v4327
    %v4329 = vrot.slane %v4321, %v4328
    %v4331 = vunpack.c.l.s4 1966171168
    %v4332 = vunpack.c.0.s8 %v4331
    %v4333 = vlaneseq
    %v4334 = vshrl.u32 %v4333, 7
    %v4335 = vsub.s32 %v4332, %v4334
    %v4336 = vrot.slane %v4322, %v4335
    %v4338 = vunpack.c.l.s4 1966171168
    %v4339 = vunpack.c.0.s8 %v4338
    %v4340 = vlaneseq
    %v4341 = vshrl.u32 %v4340, 7
    %v4342 = vsub.s32 %v4339, %v4341
    %v4343 = vrot.slane %v4313, %v4342
    %v4345 = vunpack.c.l.s4 1966171168
    %v4346 = vunpack.c.0.s8 %v4345
    %v4347 = vlaneseq
    %v4348 = vshrl.u32 %v4347, 7
    %v4349 = vsub.s32 %v4346, %v4348
    %v4350 = vrot.slane %v4320, %v4349
    %v4351 = vcombine.low %v4329, %v4329
    %v4352 = vcombine.low %v4336, %v4336
    %v4353 = vcombine.low %v4343, %v4343
    %v4354 = vcombine.low %v4350, %v4350
    %4355 = vrot.lane.b32.xlu0 %v4351, 62
    %v4356 = vpop.permute.xlu0 %4355
    %4357 = vrot.lane.b32.xlu0 %v4353, 62
    %v4358 = vpop.permute.xlu0 %4357
    %4359 = vrot.lane.b32.xlu0 %v4329, 62
    %v4360 = vpop.permute.xlu0 %4359
    %4361 = vrot.lane.b32.xlu0 %v4343, 62
    %v4362 = vpop.permute.xlu0 %4361
    %4363 = vrot.lane.b32.xlu0 %v4352, 62
    %v4364 = vpop.permute.xlu0 %4363
    %4365 = vrot.lane.b32.xlu0 %v4354, 62
    %v4366 = vpop.permute.xlu0 %4365
    %4367 = vrot.lane.b32.xlu0 %v4336, 62
    %v4368 = vpop.permute.xlu0 %4367
    %4369 = vrot.lane.b32.xlu0 %v4350, 62
    %v4370 = vpop.permute.xlu0 %4369
    %v4371 = vsel %vm1519, %v4356, %v4358
    %v4372 = vsel %vm1519, %v4358, %v4360
    %v4373 = vsel %vm1519, %v4360, %v4362
    %v4374 = vsel %vm1519, %v4362, %v4364
    %v4375 = vsel %vm1519, %v4364, %v4366
    %v4376 = vsel %vm1519, %v4366, %v4368
    %v4377 = vsel %vm1519, %v4368, %v4370
    %v4385 = vld [vmem:[#allocation2 + $0x38] sm:$0x40]
    %v4386 = vsel %vm1536, %v4371, %v4385
    %4387 = vst [vmem:[#allocation2 + $0x38] sm:$0x40] %v4386
    %v4388 = vld [vmem:[#allocation2 + $0x40] sm:$0x40]
    %v4389 = vsel %vm1536, %v4372, %v4388
    %4390 = vst [vmem:[#allocation2 + $0x40] sm:$0x40] %v4389
    %v4391 = vld [vmem:[#allocation2 + $0x48] sm:$0x40]
    %v4392 = vsel %vm1536, %v4373, %v4391
    %4393 = vst [vmem:[#allocation2 + $0x48] sm:$0x40] %v4392
    %v4394 = vld [vmem:[#allocation2 + $0x50] sm:$0x40]
    %v4395 = vsel %vm1536, %v4374, %v4394
    %4396 = vst [vmem:[#allocation2 + $0x50] sm:$0x40] %v4395
    %v4397 = vld [vmem:[#allocation2 + $0x58] sm:$0x40]
    %v4398 = vsel %vm1536, %v4375, %v4397
    %4399 = vst [vmem:[#allocation2 + $0x58] sm:$0x40] %v4398
    %v4400 = vld [vmem:[#allocation2 + $0x60] sm:$0x40]
    %v4401 = vsel %vm1536, %v4376, %v4400
    %4402 = vst [vmem:[#allocation2 + $0x60] sm:$0x40] %v4401
    %v4403 = vld [vmem:[#allocation2 + $0x68] sm:$0x40]
    %v4404 = vsel %vm1556, %v4377, %v4403
    %4405 = vst [vmem:[#allocation2 + $0x68] sm:$0x40] %v4404
    %v4406 = vld [vmem:[%s2942] sm:$0xff]
    %v4408 = vcombine.high %v4406, %v4406
    %v4410 = vunpack.c.l.s4 1966171168
    %v4411 = vunpack.c.0.s8 %v4410
    %v4412 = vlaneseq
    %v4413 = vshrl.u32 %v4412, 7
    %v4414 = vsub.s32 %v4411, %v4413
    %v4415 = vrot.slane %v4406, %v4414
    %v4417 = vunpack.c.l.s4 1966171168
    %v4418 = vunpack.c.0.s8 %v4417
    %v4419 = vlaneseq
    %v4420 = vshrl.u32 %v4419, 7
    %v4421 = vsub.s32 %v4418, %v4420
    %v4422 = vrot.slane %v4408, %v4421
    %v4423 = vcombine.high %v4415, %v4415
    %v4424 = vcombine.high %v4422, %v4422
    %v4426 = vunpack.c.l.s4 1966171168
    %v4427 = vunpack.c.0.s8 %v4426
    %v4428 = vlaneseq
    %v4429 = vshrl.u32 %v4428, 7
    %v4430 = vsub.s32 %v4427, %v4429
    %v4431 = vrot.slane %v4415, %v4430
    %v4433 = vunpack.c.l.s4 1966171168
    %v4434 = vunpack.c.0.s8 %v4433
    %v4435 = vlaneseq
    %v4436 = vshrl.u32 %v4435, 7
    %v4437 = vsub.s32 %v4434, %v4436
    %v4438 = vrot.slane %v4422, %v4437
    %v4440 = vunpack.c.l.s4 1966171168
    %v4441 = vunpack.c.0.s8 %v4440
    %v4442 = vlaneseq
    %v4443 = vshrl.u32 %v4442, 7
    %v4444 = vsub.s32 %v4441, %v4443
    %v4445 = vrot.slane %v4423, %v4444
    %v4447 = vunpack.c.l.s4 1966171168
    %v4448 = vunpack.c.0.s8 %v4447
    %v4449 = vlaneseq
    %v4450 = vshrl.u32 %v4449, 7
    %v4451 = vsub.s32 %v4448, %v4450
    %v4452 = vrot.slane %v4424, %v4451
    %v4453 = vcombine.high %v4431, %v4431
    %v4454 = vcombine.high %v4438, %v4438
    %v4455 = vcombine.high %v4445, %v4445
    %v4456 = vcombine.high %v4452, %v4452
    %v4458 = vshll.u32 %v4431, 16
    %v4460 = vrot.slane %v4458, 2
    %v4462 = vshll.u32 %v4445, 16
    %v4464 = vrot.slane %v4462, 2
    %v4466 = vshll.u32 %v4453, 16
    %v4468 = vrot.slane %v4466, 2
    %v4470 = vshll.u32 %v4455, 16
    %v4472 = vrot.slane %v4470, 2
    %v4474 = vshll.u32 %v4438, 16
    %v4476 = vrot.slane %v4474, 2
    %v4478 = vshll.u32 %v4452, 16
    %v4480 = vrot.slane %v4478, 2
    %v4482 = vshll.u32 %v4454, 16
    %v4484 = vrot.slane %v4482, 2
    %v4486 = vshll.u32 %v4456, 16
    %v4488 = vrot.slane %v4486, 2
    %4489 = vrot.lane.b32.xlu0 %v4460, 61
    %v4490 = vpop.permute.xlu0 %4489
    %4491 = vrot.lane.b32.xlu0 %v4464, 61
    %v4492 = vpop.permute.xlu0 %4491
    %4493 = vrot.lane.b32.xlu0 %v4468, 61
    %v4494 = vpop.permute.xlu0 %4493
    %4495 = vrot.lane.b32.xlu0 %v4472, 61
    %v4496 = vpop.permute.xlu0 %4495
    %4497 = vrot.lane.b32.xlu0 %v4476, 61
    %v4498 = vpop.permute.xlu0 %4497
    %4499 = vrot.lane.b32.xlu0 %v4480, 61
    %v4500 = vpop.permute.xlu0 %4499
    %4501 = vrot.lane.b32.xlu0 %v4484, 61
    %v4502 = vpop.permute.xlu0 %4501
    %4503 = vrot.lane.b32.xlu0 %v4488, 61
    %v4504 = vpop.permute.xlu0 %4503
    %v4505 = vsel %vm1659, %v4490, %v4492
    %v4506 = vsel %vm1659, %v4492, %v4494
    %v4507 = vsel %vm1659, %v4494, %v4496
    %v4508 = vsel %vm1659, %v4496, %v4498
    %v4509 = vsel %vm1659, %v4498, %v4500
    %v4510 = vsel %vm1659, %v4500, %v4502
    %v4511 = vsel %vm1659, %v4502, %v4504
    %v4519 = vld [vmem:[#allocation2 + $0x38] sm:$0x40]
    %v4520 = vsel %vm1675, %v4505, %v4519
    %4521 = vst [vmem:[#allocation2 + $0x38] sm:$0x40] %v4520
    %v4522 = vld [vmem:[#allocation2 + $0x40] sm:$0x40]
    %v4523 = vsel %vm1675, %v4506, %v4522
    %4524 = vst [vmem:[#allocation2 + $0x40] sm:$0x40] %v4523
    %v4525 = vld [vmem:[#allocation2 + $0x48] sm:$0x40]
    %v4526 = vsel %vm1675, %v4507, %v4525
    %4527 = vst [vmem:[#allocation2 + $0x48] sm:$0x40] %v4526
    %v4528 = vld [vmem:[#allocation2 + $0x50] sm:$0x40]
    %v4529 = vsel %vm1675, %v4508, %v4528
    %4530 = vst [vmem:[#allocation2 + $0x50] sm:$0x40] %v4529
    %v4531 = vld [vmem:[#allocation2 + $0x58] sm:$0x40]
    %v4532 = vsel %vm1675, %v4509, %v4531
    %4533 = vst [vmem:[#allocation2 + $0x58] sm:$0x40] %v4532
    %v4534 = vld [vmem:[#allocation2 + $0x60] sm:$0x40]
    %v4535 = vsel %vm1675, %v4510, %v4534
    %4536 = vst [vmem:[#allocation2 + $0x60] sm:$0x40] %v4535
    %v4537 = vld [vmem:[#allocation2 + $0x68] sm:$0x40]
    %v4538 = vsel %vm1694, %v4511, %v4537
    %4539 = vst [vmem:[#allocation2 + $0x68] sm:$0x40] %v4538
    %v4540 = vld [vmem:[%s2942] sm:$0xff]
    %v4542 = vcombine.low %v4540, %v4540
    %v4544 = vunpack.c.l.s4 1966171168
    %v4545 = vunpack.c.0.s8 %v4544
    %v4546 = vlaneseq
    %v4547 = vshrl.u32 %v4546, 7
    %v4548 = vsub.s32 %v4545, %v4547
    %v4549 = vrot.slane %v4542, %v4548
    %v4551 = vunpack.c.l.s4 1966171168
    %v4552 = vunpack.c.0.s8 %v4551
    %v4553 = vlaneseq
    %v4554 = vshrl.u32 %v4553, 7
    %v4555 = vsub.s32 %v4552, %v4554
    %v4556 = vrot.slane %v4540, %v4555
    %v4557 = vcombine.low %v4549, %v4549
    %v4558 = vcombine.low %v4556, %v4556
    %v4560 = vunpack.c.l.s4 1966171168
    %v4561 = vunpack.c.0.s8 %v4560
    %v4562 = vlaneseq
    %v4563 = vshrl.u32 %v4562, 7
    %v4564 = vsub.s32 %v4561, %v4563
    %v4565 = vrot.slane %v4557, %v4564
    %v4567 = vunpack.c.l.s4 1966171168
    %v4568 = vunpack.c.0.s8 %v4567
    %v4569 = vlaneseq
    %v4570 = vshrl.u32 %v4569, 7
    %v4571 = vsub.s32 %v4568, %v4570
    %v4572 = vrot.slane %v4558, %v4571
    %v4574 = vunpack.c.l.s4 1966171168
    %v4575 = vunpack.c.0.s8 %v4574
    %v4576 = vlaneseq
    %v4577 = vshrl.u32 %v4576, 7
    %v4578 = vsub.s32 %v4575, %v4577
    %v4579 = vrot.slane %v4549, %v4578
    %v4581 = vunpack.c.l.s4 1966171168
    %v4582 = vunpack.c.0.s8 %v4581
    %v4583 = vlaneseq
    %v4584 = vshrl.u32 %v4583, 7
    %v4585 = vsub.s32 %v4582, %v4584
    %v4586 = vrot.slane %v4556, %v4585
    %v4587 = vcombine.low %v4565, %v4565
    %v4588 = vcombine.low %v4572, %v4572
    %v4589 = vcombine.low %v4579, %v4579
    %v4590 = vcombine.low %v4586, %v4586
    %4591 = vrot.lane.b32.xlu0 %v4587, 60
    %v4592 = vpop.permute.xlu0 %4591
    %4593 = vrot.lane.b32.xlu0 %v4589, 60
    %v4594 = vpop.permute.xlu0 %4593
    %4595 = vrot.lane.b32.xlu0 %v4565, 60
    %v4596 = vpop.permute.xlu0 %4595
    %4597 = vrot.lane.b32.xlu0 %v4579, 60
    %v4598 = vpop.permute.xlu0 %4597
    %4599 = vrot.lane.b32.xlu0 %v4588, 60
    %v4600 = vpop.permute.xlu0 %4599
    %4601 = vrot.lane.b32.xlu0 %v4590, 60
    %v4602 = vpop.permute.xlu0 %4601
    %4603 = vrot.lane.b32.xlu0 %v4572, 60
    %v4604 = vpop.permute.xlu0 %4603
    %4605 = vrot.lane.b32.xlu0 %v4586, 60
    %v4606 = vpop.permute.xlu0 %4605
    %v4607 = vsel %vm1765, %v4592, %v4594
    %v4608 = vsel %vm1765, %v4594, %v4596
    %v4609 = vsel %vm1765, %v4596, %v4598
    %v4610 = vsel %vm1765, %v4598, %v4600
    %v4611 = vsel %vm1765, %v4600, %v4602
    %v4612 = vsel %vm1765, %v4602, %v4604
    %v4613 = vsel %vm1765, %v4604, %v4606
    %v4621 = vld [vmem:[#allocation2 + $0x38] sm:$0x80]
    %v4622 = vsel %vm1782, %v4607, %v4621
    %4623 = vst [vmem:[#allocation2 + $0x38] sm:$0x80] %v4622
    %v4624 = vld [vmem:[#allocation2 + $0x40] sm:$0x80]
    %v4625 = vsel %vm1782, %v4608, %v4624
    %4626 = vst [vmem:[#allocation2 + $0x40] sm:$0x80] %v4625
    %v4627 = vld [vmem:[#allocation2 + $0x48] sm:$0x80]
    %v4628 = vsel %vm1782, %v4609, %v4627
    %4629 = vst [vmem:[#allocation2 + $0x48] sm:$0x80] %v4628
    %v4630 = vld [vmem:[#allocation2 + $0x50] sm:$0x80]
    %v4631 = vsel %vm1782, %v4610, %v4630
    %4632 = vst [vmem:[#allocation2 + $0x50] sm:$0x80] %v4631
    %v4633 = vld [vmem:[#allocation2 + $0x58] sm:$0x80]
    %v4634 = vsel %vm1782, %v4611, %v4633
    %4635 = vst [vmem:[#allocation2 + $0x58] sm:$0x80] %v4634
    %v4636 = vld [vmem:[#allocation2 + $0x60] sm:$0x80]
    %v4637 = vsel %vm1782, %v4612, %v4636
    %4638 = vst [vmem:[#allocation2 + $0x60] sm:$0x80] %v4637
    %v4639 = vld [vmem:[#allocation2 + $0x68] sm:$0x80]
    %v4640 = vsel %vm1802, %v4613, %v4639
    %4641 = vst [vmem:[#allocation2 + $0x68] sm:$0x80] %v4640
    %v4642 = vld [vmem:[%s2942] sm:$0xff]
    %v4644 = vcombine.high %v4642, %v4642
    %v4646 = vunpack.c.l.s4 1966171168
    %v4647 = vunpack.c.0.s8 %v4646
    %v4648 = vlaneseq
    %v4649 = vshrl.u32 %v4648, 7
    %v4650 = vsub.s32 %v4647, %v4649
    %v4651 = vrot.slane %v4642, %v4650
    %v4653 = vunpack.c.l.s4 1966171168
    %v4654 = vunpack.c.0.s8 %v4653
    %v4655 = vlaneseq
    %v4656 = vshrl.u32 %v4655, 7
    %v4657 = vsub.s32 %v4654, %v4656
    %v4658 = vrot.slane %v4644, %v4657
    %v4659 = vcombine.high %v4651, %v4651
    %v4660 = vcombine.high %v4658, %v4658
    %v4662 = vunpack.c.l.s4 1966171168
    %v4663 = vunpack.c.0.s8 %v4662
    %v4664 = vlaneseq
    %v4665 = vshrl.u32 %v4664, 7
    %v4666 = vsub.s32 %v4663, %v4665
    %v4667 = vrot.slane %v4651, %v4666
    %v4669 = vunpack.c.l.s4 1966171168
    %v4670 = vunpack.c.0.s8 %v4669
    %v4671 = vlaneseq
    %v4672 = vshrl.u32 %v4671, 7
    %v4673 = vsub.s32 %v4670, %v4672
    %v4674 = vrot.slane %v4658, %v4673
    %v4676 = vunpack.c.l.s4 1966171168
    %v4677 = vunpack.c.0.s8 %v4676
    %v4678 = vlaneseq
    %v4679 = vshrl.u32 %v4678, 7
    %v4680 = vsub.s32 %v4677, %v4679
    %v4681 = vrot.slane %v4659, %v4680
    %v4683 = vunpack.c.l.s4 1966171168
    %v4684 = vunpack.c.0.s8 %v4683
    %v4685 = vlaneseq
    %v4686 = vshrl.u32 %v4685, 7
    %v4687 = vsub.s32 %v4684, %v4686
    %v4688 = vrot.slane %v4660, %v4687
    %v4689 = vcombine.high %v4667, %v4667
    %v4690 = vcombine.high %v4674, %v4674
    %v4691 = vcombine.high %v4681, %v4681
    %v4692 = vcombine.high %v4688, %v4688
    %v4694 = vshll.u32 %v4667, 16
    %v4696 = vrot.slane %v4694, 1
    %v4698 = vshll.u32 %v4681, 16
    %v4700 = vrot.slane %v4698, 1
    %v4702 = vshll.u32 %v4689, 16
    %v4704 = vrot.slane %v4702, 1
    %v4706 = vshll.u32 %v4691, 16
    %v4708 = vrot.slane %v4706, 1
    %v4710 = vshll.u32 %v4674, 16
    %v4712 = vrot.slane %v4710, 1
    %v4714 = vshll.u32 %v4688, 16
    %v4716 = vrot.slane %v4714, 1
    %v4718 = vshll.u32 %v4690, 16
    %v4720 = vrot.slane %v4718, 1
    %v4722 = vshll.u32 %v4692, 16
    %v4724 = vrot.slane %v4722, 1
    %4725 = vrot.lane.b32.xlu0 %v4696, 32
    %v4726 = vpop.permute.xlu0 %4725
    %4727 = vrot.lane.b32.xlu0 %v4700, 32
    %v4728 = vpop.permute.xlu0 %4727
    %4729 = vrot.lane.b32.xlu0 %v4704, 32
    %v4730 = vpop.permute.xlu0 %4729
    %4731 = vrot.lane.b32.xlu0 %v4708, 32
    %v4732 = vpop.permute.xlu0 %4731
    %4733 = vrot.lane.b32.xlu0 %v4712, 32
    %v4734 = vpop.permute.xlu0 %4733
    %4735 = vrot.lane.b32.xlu0 %v4716, 32
    %v4736 = vpop.permute.xlu0 %4735
    %4737 = vrot.lane.b32.xlu0 %v4720, 32
    %v4738 = vpop.permute.xlu0 %4737
    %4739 = vrot.lane.b32.xlu0 %v4724, 32
    %v4740 = vpop.permute.xlu0 %4739
    %v4741 = vsel %vm1905, %v4726, %v4728
    %v4742 = vsel %vm1905, %v4728, %v4730
    %v4743 = vsel %vm1905, %v4730, %v4732
    %v4744 = vsel %vm1905, %v4732, %v4734
    %v4745 = vsel %vm1905, %v4734, %v4736
    %v4746 = vsel %vm1905, %v4736, %v4738
    %v4747 = vsel %vm1905, %v4738, %v4740
    %v4755 = vld [vmem:[#allocation2 + $0x38] sm:$0x80]
    %v4756 = vsel %vm1921, %v4741, %v4755
    %4757 = vst [vmem:[#allocation2 + $0x38] sm:$0x80] %v4756
    %v4758 = vld [vmem:[#allocation2 + $0x40] sm:$0x80]
    %v4759 = vsel %vm1921, %v4742, %v4758
    %4760 = vst [vmem:[#allocation2 + $0x40] sm:$0x80] %v4759
    %v4761 = vld [vmem:[#allocation2 + $0x48] sm:$0x80]
    %v4762 = vsel %vm1921, %v4743, %v4761
    %4763 = vst [vmem:[#allocation2 + $0x48] sm:$0x80] %v4762
    %v4764 = vld [vmem:[#allocation2 + $0x50] sm:$0x80]
    %v4765 = vsel %vm1921, %v4744, %v4764
    %4766 = vst [vmem:[#allocation2 + $0x50] sm:$0x80] %v4765
    %v4767 = vld [vmem:[#allocation2 + $0x58] sm:$0x80]
    %v4768 = vsel %vm1921, %v4745, %v4767
    %4769 = vst [vmem:[#allocation2 + $0x58] sm:$0x80] %v4768
    %v4770 = vld [vmem:[#allocation2 + $0x60] sm:$0x80]
    %v4771 = vsel %vm1921, %v4746, %v4770
    %4772 = vst [vmem:[#allocation2 + $0x60] sm:$0x80] %v4771
    %v4773 = vld [vmem:[#allocation2 + $0x68] sm:$0x80]
    %v4774 = vsel %vm1940, %v4747, %v4773
    %4775 = vst [vmem:[#allocation2 + $0x68] sm:$0x80] %v4774
    %v4776 = vld [vmem:[%s2942] sm:$0xff]
    %v4778 = vcombine.high %v4776, %v4776
    %v4780 = vunpack.c.l.s4 1966171168
    %v4781 = vunpack.c.0.s8 %v4780
    %v4782 = vlaneseq
    %v4783 = vshrl.u32 %v4782, 7
    %v4784 = vsub.s32 %v4781, %v4783
    %v4785 = vrot.slane %v4776, %v4784
    %v4787 = vunpack.c.l.s4 1966171168
    %v4788 = vunpack.c.0.s8 %v4787
    %v4789 = vlaneseq
    %v4790 = vshrl.u32 %v4789, 7
    %v4791 = vsub.s32 %v4788, %v4790
    %v4792 = vrot.slane %v4778, %v4791
    %v4793 = vcombine.high %v4785, %v4785
    %v4794 = vcombine.high %v4792, %v4792
    %v4796 = vunpack.c.l.s4 1966171168
    %v4797 = vunpack.c.0.s8 %v4796
    %v4798 = vlaneseq
    %v4799 = vshrl.u32 %v4798, 7
    %v4800 = vsub.s32 %v4797, %v4799
    %v4801 = vrot.slane %v4785, %v4800
    %v4803 = vunpack.c.l.s4 1966171168
    %v4804 = vunpack.c.0.s8 %v4803
    %v4805 = vlaneseq
    %v4806 = vshrl.u32 %v4805, 7
    %v4807 = vsub.s32 %v4804, %v4806
    %v4808 = vrot.slane %v4792, %v4807
    %v4810 = vunpack.c.l.s4 1966171168
    %v4811 = vunpack.c.0.s8 %v4810
    %v4812 = vlaneseq
    %v4813 = vshrl.u32 %v4812, 7
    %v4814 = vsub.s32 %v4811, %v4813
    %v4815 = vrot.slane %v4793, %v4814
    %v4817 = vunpack.c.l.s4 1966171168
    %v4818 = vunpack.c.0.s8 %v4817
    %v4819 = vlaneseq
    %v4820 = vshrl.u32 %v4819, 7
    %v4821 = vsub.s32 %v4818, %v4820
    %v4822 = vrot.slane %v4794, %v4821
    %v4823 = vcombine.high %v4801, %v4801
    %v4824 = vcombine.high %v4808, %v4808
    %v4825 = vcombine.high %v4815, %v4815
    %v4826 = vcombine.high %v4822, %v4822
    %4827 = vrot.lane.b32.xlu0 %v4801, 31
    %v4828 = vpop.permute.xlu0 %4827
    %4829 = vrot.lane.b32.xlu0 %v4815, 31
    %v4830 = vpop.permute.xlu0 %4829
    %4831 = vrot.lane.b32.xlu0 %v4823, 31
    %v4832 = vpop.permute.xlu0 %4831
    %4833 = vrot.lane.b32.xlu0 %v4825, 31
    %v4834 = vpop.permute.xlu0 %4833
    %4835 = vrot.lane.b32.xlu0 %v4808, 31
    %v4836 = vpop.permute.xlu0 %4835
    %4837 = vrot.lane.b32.xlu0 %v4822, 31
    %v4838 = vpop.permute.xlu0 %4837
    %4839 = vrot.lane.b32.xlu0 %v4824, 31
    %v4840 = vpop.permute.xlu0 %4839
    %4841 = vrot.lane.b32.xlu0 %v4826, 31
    %v4842 = vpop.permute.xlu0 %4841
    %v4843 = vsel %vm2011, %v4828, %v4830
    %v4844 = vsel %vm2011, %v4830, %v4832
    %v4845 = vsel %vm2011, %v4832, %v4834
    %v4846 = vsel %vm2011, %v4834, %v4836
    %v4847 = vsel %vm2011, %v4836, %v4838
    %v4848 = vsel %vm2011, %v4838, %v4840
    %v4849 = vsel %vm2011, %v4840, %v4842
    %v4857 = vld [vmem:[#allocation2 + $0xa8] sm:$0x1]
    %v4858 = vsel %vm91, %v4843, %v4857
    %4859 = vst [vmem:[#allocation2 + $0xa8] sm:$0x1] %v4858
    %v4860 = vld [vmem:[#allocation2 + $0xb0] sm:$0x1]
    %v4861 = vsel %vm91, %v4844, %v4860
    %4862 = vst [vmem:[#allocation2 + $0xb0] sm:$0x1] %v4861
    %v4863 = vld [vmem:[#allocation2 + $0xb8] sm:$0x1]
    %v4864 = vsel %vm91, %v4845, %v4863
    %4865 = vst [vmem:[#allocation2 + $0xb8] sm:$0x1] %v4864
    %v4866 = vld [vmem:[#allocation2 + $0xc0] sm:$0x1]
    %v4867 = vsel %vm91, %v4846, %v4866
    %4868 = vst [vmem:[#allocation2 + $0xc0] sm:$0x1] %v4867
    %v4869 = vld [vmem:[#allocation2 + $0xc8] sm:$0x1]
    %v4870 = vsel %vm91, %v4847, %v4869
    %4871 = vst [vmem:[#allocation2 + $0xc8] sm:$0x1] %v4870
    %v4872 = vld [vmem:[#allocation2 + $0xd0] sm:$0x1]
    %v4873 = vsel %vm91, %v4848, %v4872
    %4874 = vst [vmem:[#allocation2 + $0xd0] sm:$0x1] %v4873
    %v4875 = vld [vmem:[#allocation2 + $0xd8] sm:$0x1]
    %v4876 = vsel %vm111, %v4849, %v4875
    %4877 = vst [vmem:[#allocation2 + $0xd8] sm:$0x1] %v4876
    %v4878 = vld [vmem:[%s2942] sm:$0xff]
    %v4880 = vcombine.high %v4878, %v4878
    %v4882 = vunpack.c.l.s4 1966171168
    %v4883 = vunpack.c.0.s8 %v4882
    %v4884 = vlaneseq
    %v4885 = vshrl.u32 %v4884, 7
    %v4886 = vsub.s32 %v4883, %v4885
    %v4887 = vrot.slane %v4878, %v4886
    %v4889 = vunpack.c.l.s4 1966171168
    %v4890 = vunpack.c.0.s8 %v4889
    %v4891 = vlaneseq
    %v4892 = vshrl.u32 %v4891, 7
    %v4893 = vsub.s32 %v4890, %v4892
    %v4894 = vrot.slane %v4880, %v4893
    %v4895 = vcombine.high %v4887, %v4887
    %v4896 = vcombine.high %v4894, %v4894
    %v4898 = vunpack.c.l.s4 1966171168
    %v4899 = vunpack.c.0.s8 %v4898
    %v4900 = vlaneseq
    %v4901 = vshrl.u32 %v4900, 7
    %v4902 = vsub.s32 %v4899, %v4901
    %v4903 = vrot.slane %v4887, %v4902
    %v4905 = vunpack.c.l.s4 1966171168
    %v4906 = vunpack.c.0.s8 %v4905
    %v4907 = vlaneseq
    %v4908 = vshrl.u32 %v4907, 7
    %v4909 = vsub.s32 %v4906, %v4908
    %v4910 = vrot.slane %v4894, %v4909
    %v4912 = vunpack.c.l.s4 1966171168
    %v4913 = vunpack.c.0.s8 %v4912
    %v4914 = vlaneseq
    %v4915 = vshrl.u32 %v4914, 7
    %v4916 = vsub.s32 %v4913, %v4915
    %v4917 = vrot.slane %v4895, %v4916
    %v4919 = vunpack.c.l.s4 1966171168
    %v4920 = vunpack.c.0.s8 %v4919
    %v4921 = vlaneseq
    %v4922 = vshrl.u32 %v4921, 7
    %v4923 = vsub.s32 %v4920, %v4922
    %v4924 = vrot.slane %v4896, %v4923
    %v4925 = vcombine.high %v4903, %v4903
    %v4926 = vcombine.high %v4910, %v4910
    %v4927 = vcombine.high %v4917, %v4917
    %v4928 = vcombine.high %v4924, %v4924
    %v4930 = vshll.u32 %v4903, 16
    %v4933 = vshll.u32 %v4917, 16
    %v4936 = vshll.u32 %v4925, 16
    %v4939 = vshll.u32 %v4927, 16
    %v4942 = vshll.u32 %v4910, 16
    %v4945 = vshll.u32 %v4924, 16
    %v4948 = vshll.u32 %v4926, 16
    %v4951 = vshll.u32 %v4928, 16
    %4953 = vrot.lane.b32.xlu0 %v4930, 30
    %v4954 = vpop.permute.xlu0 %4953
    %4955 = vrot.lane.b32.xlu0 %v4933, 30
    %v4956 = vpop.permute.xlu0 %4955
    %4957 = vrot.lane.b32.xlu0 %v4936, 30
    %v4958 = vpop.permute.xlu0 %4957
    %4959 = vrot.lane.b32.xlu0 %v4939, 30
    %v4960 = vpop.permute.xlu0 %4959
    %4961 = vrot.lane.b32.xlu0 %v4942, 30
    %v4962 = vpop.permute.xlu0 %4961
    %4963 = vrot.lane.b32.xlu0 %v4945, 30
    %v4964 = vpop.permute.xlu0 %4963
    %4965 = vrot.lane.b32.xlu0 %v4948, 30
    %v4966 = vpop.permute.xlu0 %4965
    %4967 = vrot.lane.b32.xlu0 %v4951, 30
    %v4968 = vpop.permute.xlu0 %4967
    %v4969 = vsel %vm2138, %v4954, %v4956
    %v4970 = vsel %vm2138, %v4956, %v4958
    %v4971 = vsel %vm2138, %v4958, %v4960
    %v4972 = vsel %vm2138, %v4960, %v4962
    %v4973 = vsel %vm2138, %v4962, %v4964
    %v4974 = vsel %vm2138, %v4964, %v4966
    %v4975 = vsel %vm2138, %v4966, %v4968
    %v4983 = vld [vmem:[#allocation2 + $0xa8] sm:$0x1]
    %v4984 = vsel %vm215, %v4969, %v4983
    %4985 = vst [vmem:[#allocation2 + $0xa8] sm:$0x1] %v4984
    %v4986 = vld [vmem:[#allocation2 + $0xb0] sm:$0x1]
    %v4987 = vsel %vm215, %v4970, %v4986
    %4988 = vst [vmem:[#allocation2 + $0xb0] sm:$0x1] %v4987
    %v4989 = vld [vmem:[#allocation2 + $0xb8] sm:$0x1]
    %v4990 = vsel %vm215, %v4971, %v4989
    %4991 = vst [vmem:[#allocation2 + $0xb8] sm:$0x1] %v4990
    %v4992 = vld [vmem:[#allocation2 + $0xc0] sm:$0x1]
    %v4993 = vsel %vm215, %v4972, %v4992
    %4994 = vst [vmem:[#allocation2 + $0xc0] sm:$0x1] %v4993
    %v4995 = vld [vmem:[#allocation2 + $0xc8] sm:$0x1]
    %v4996 = vsel %vm215, %v4973, %v4995
    %4997 = vst [vmem:[#allocation2 + $0xc8] sm:$0x1] %v4996
    %v4998 = vld [vmem:[#allocation2 + $0xd0] sm:$0x1]
    %v4999 = vsel %vm215, %v4974, %v4998
    %5000 = vst [vmem:[#allocation2 + $0xd0] sm:$0x1] %v4999
    %v5001 = vld [vmem:[#allocation2 + $0xd8] sm:$0x1]
    %v5002 = vsel %vm234, %v4975, %v5001
    %5003 = vst [vmem:[#allocation2 + $0xd8] sm:$0x1] %v5002
    %v5004 = vld [vmem:[%s2942] sm:$0xff]
    %v5006 = vcombine.low %v5004, %v5004
    %v5008 = vunpack.c.l.s4 1966171168
    %v5009 = vunpack.c.0.s8 %v5008
    %v5010 = vlaneseq
    %v5011 = vshrl.u32 %v5010, 7
    %v5012 = vsub.s32 %v5009, %v5011
    %v5013 = vrot.slane %v5006, %v5012
    %v5015 = vunpack.c.l.s4 1966171168
    %v5016 = vunpack.c.0.s8 %v5015
    %v5017 = vlaneseq
    %v5018 = vshrl.u32 %v5017, 7
    %v5019 = vsub.s32 %v5016, %v5018
    %v5020 = vrot.slane %v5004, %v5019
    %v5021 = vcombine.high %v5013, %v5013
    %v5022 = vcombine.high %v5020, %v5020
    %v5024 = vunpack.c.l.s4 1966171168
    %v5025 = vunpack.c.0.s8 %v5024
    %v5026 = vlaneseq
    %v5027 = vshrl.u32 %v5026, 7
    %v5028 = vsub.s32 %v5025, %v5027
    %v5029 = vrot.slane %v5013, %v5028
    %v5031 = vunpack.c.l.s4 1966171168
    %v5032 = vunpack.c.0.s8 %v5031
    %v5033 = vlaneseq
    %v5034 = vshrl.u32 %v5033, 7
    %v5035 = vsub.s32 %v5032, %v5034
    %v5036 = vrot.slane %v5020, %v5035
    %v5038 = vunpack.c.l.s4 1966171168
    %v5039 = vunpack.c.0.s8 %v5038
    %v5040 = vlaneseq
    %v5041 = vshrl.u32 %v5040, 7
    %v5042 = vsub.s32 %v5039, %v5041
    %v5043 = vrot.slane %v5021, %v5042
    %v5045 = vunpack.c.l.s4 1966171168
    %v5046 = vunpack.c.0.s8 %v5045
    %v5047 = vlaneseq
    %v5048 = vshrl.u32 %v5047, 7
    %v5049 = vsub.s32 %v5046, %v5048
    %v5050 = vrot.slane %v5022, %v5049
    %v5051 = vcombine.high %v5029, %v5029
    %v5052 = vcombine.high %v5036, %v5036
    %v5053 = vcombine.high %v5043, %v5043
    %v5054 = vcombine.high %v5050, %v5050
    %5055 = vrot.lane.b32.xlu0 %v5029, 29
    %v5056 = vpop.permute.xlu0 %5055
    %5057 = vrot.lane.b32.xlu0 %v5043, 29
    %v5058 = vpop.permute.xlu0 %5057
    %5059 = vrot.lane.b32.xlu0 %v5051, 29
    %v5060 = vpop.permute.xlu0 %5059
    %5061 = vrot.lane.b32.xlu0 %v5053, 29
    %v5062 = vpop.permute.xlu0 %5061
    %5063 = vrot.lane.b32.xlu0 %v5036, 29
    %v5064 = vpop.permute.xlu0 %5063
    %5065 = vrot.lane.b32.xlu0 %v5050, 29
    %v5066 = vpop.permute.xlu0 %5065
    %5067 = vrot.lane.b32.xlu0 %v5052, 29
    %v5068 = vpop.permute.xlu0 %5067
    %5069 = vrot.lane.b32.xlu0 %v5054, 29
    %v5070 = vpop.permute.xlu0 %5069
    %v5071 = vsel %vm2241, %v5056, %v5058
    %v5072 = vsel %vm2241, %v5058, %v5060
    %v5073 = vsel %vm2241, %v5060, %v5062
    %v5074 = vsel %vm2241, %v5062, %v5064
    %v5075 = vsel %vm2241, %v5064, %v5066
    %v5076 = vsel %vm2241, %v5066, %v5068
    %v5077 = vsel %vm2241, %v5068, %v5070
    %v5085 = vld [vmem:[#allocation2 + $0xa8] sm:$0x2]
    %v5086 = vsel %vm318, %v5071, %v5085
    %5087 = vst [vmem:[#allocation2 + $0xa8] sm:$0x2] %v5086
    %v5088 = vld [vmem:[#allocation2 + $0xb0] sm:$0x2]
    %v5089 = vsel %vm318, %v5072, %v5088
    %5090 = vst [vmem:[#allocation2 + $0xb0] sm:$0x2] %v5089
    %v5091 = vld [vmem:[#allocation2 + $0xb8] sm:$0x2]
    %v5092 = vsel %vm318, %v5073, %v5091
    %5093 = vst [vmem:[#allocation2 + $0xb8] sm:$0x2] %v5092
    %v5094 = vld [vmem:[#allocation2 + $0xc0] sm:$0x2]
    %v5095 = vsel %vm318, %v5074, %v5094
    %5096 = vst [vmem:[#allocation2 + $0xc0] sm:$0x2] %v5095
    %v5097 = vld [vmem:[#allocation2 + $0xc8] sm:$0x2]
    %v5098 = vsel %vm318, %v5075, %v5097
    %5099 = vst [vmem:[#allocation2 + $0xc8] sm:$0x2] %v5098
    %v5100 = vld [vmem:[#allocation2 + $0xd0] sm:$0x2]
    %v5101 = vsel %vm318, %v5076, %v5100
    %5102 = vst [vmem:[#allocation2 + $0xd0] sm:$0x2] %v5101
    %v5103 = vld [vmem:[#allocation2 + $0xd8] sm:$0x2]
    %v5104 = vsel %vm338, %v5077, %v5103
    %5105 = vst [vmem:[#allocation2 + $0xd8] sm:$0x2] %v5104
    %v5106 = vld [vmem:[%s2942] sm:$0xff]
    %v5108 = vcombine.high %v5106, %v5106
    %v5110 = vunpack.c.l.s4 1966171168
    %v5111 = vunpack.c.0.s8 %v5110
    %v5112 = vlaneseq
    %v5113 = vshrl.u32 %v5112, 7
    %v5114 = vsub.s32 %v5111, %v5113
    %v5115 = vrot.slane %v5106, %v5114
    %v5117 = vunpack.c.l.s4 1966171168
    %v5118 = vunpack.c.0.s8 %v5117
    %v5119 = vlaneseq
    %v5120 = vshrl.u32 %v5119, 7
    %v5121 = vsub.s32 %v5118, %v5120
    %v5122 = vrot.slane %v5108, %v5121
    %v5123 = vcombine.high %v5115, %v5115
    %v5124 = vcombine.high %v5122, %v5122
    %v5126 = vunpack.c.l.s4 1966171168
    %v5127 = vunpack.c.0.s8 %v5126
    %v5128 = vlaneseq
    %v5129 = vshrl.u32 %v5128, 7
    %v5130 = vsub.s32 %v5127, %v5129
    %v5131 = vrot.slane %v5115, %v5130
    %v5133 = vunpack.c.l.s4 1966171168
    %v5134 = vunpack.c.0.s8 %v5133
    %v5135 = vlaneseq
    %v5136 = vshrl.u32 %v5135, 7
    %v5137 = vsub.s32 %v5134, %v5136
    %v5138 = vrot.slane %v5122, %v5137
    %v5140 = vunpack.c.l.s4 1966171168
    %v5141 = vunpack.c.0.s8 %v5140
    %v5142 = vlaneseq
    %v5143 = vshrl.u32 %v5142, 7
    %v5144 = vsub.s32 %v5141, %v5143
    %v5145 = vrot.slane %v5123, %v5144
    %v5147 = vunpack.c.l.s4 1966171168
    %v5148 = vunpack.c.0.s8 %v5147
    %v5149 = vlaneseq
    %v5150 = vshrl.u32 %v5149, 7
    %v5151 = vsub.s32 %v5148, %v5150
    %v5152 = vrot.slane %v5124, %v5151
    %v5153 = vcombine.high %v5131, %v5131
    %v5154 = vcombine.high %v5138, %v5138
    %v5155 = vcombine.high %v5145, %v5145
    %v5156 = vcombine.high %v5152, %v5152
    %v5158 = vshll.u32 %v5131, 16
    %v5160 = vrot.slane %v5158, 7
    %v5162 = vshll.u32 %v5145, 16
    %v5164 = vrot.slane %v5162, 7
    %v5166 = vshll.u32 %v5153, 16
    %v5168 = vrot.slane %v5166, 7
    %v5170 = vshll.u32 %v5155, 16
    %v5172 = vrot.slane %v5170, 7
    %v5174 = vshll.u32 %v5138, 16
    %v5176 = vrot.slane %v5174, 7
    %v5178 = vshll.u32 %v5152, 16
    %v5180 = vrot.slane %v5178, 7
    %v5182 = vshll.u32 %v5154, 16
    %v5184 = vrot.slane %v5182, 7
    %v5186 = vshll.u32 %v5156, 16
    %v5188 = vrot.slane %v5186, 7
    %5189 = vrot.lane.b32.xlu0 %v5160, 28
    %v5190 = vpop.permute.xlu0 %5189
    %5191 = vrot.lane.b32.xlu0 %v5164, 28
    %v5192 = vpop.permute.xlu0 %5191
    %5193 = vrot.lane.b32.xlu0 %v5168, 28
    %v5194 = vpop.permute.xlu0 %5193
    %5195 = vrot.lane.b32.xlu0 %v5172, 28
    %v5196 = vpop.permute.xlu0 %5195
    %5197 = vrot.lane.b32.xlu0 %v5176, 28
    %v5198 = vpop.permute.xlu0 %5197
    %5199 = vrot.lane.b32.xlu0 %v5180, 28
    %v5200 = vpop.permute.xlu0 %5199
    %5201 = vrot.lane.b32.xlu0 %v5184, 28
    %v5202 = vpop.permute.xlu0 %5201
    %5203 = vrot.lane.b32.xlu0 %v5188, 28
    %v5204 = vpop.permute.xlu0 %5203
    %v5205 = vsel %vm2376, %v5190, %v5192
    %v5206 = vsel %vm2376, %v5192, %v5194
    %v5207 = vsel %vm2376, %v5194, %v5196
    %v5208 = vsel %vm2376, %v5196, %v5198
    %v5209 = vsel %vm2376, %v5198, %v5200
    %v5210 = vsel %vm2376, %v5200, %v5202
    %v5211 = vsel %vm2376, %v5202, %v5204
    %v5219 = vld [vmem:[#allocation2 + $0xa8] sm:$0x2]
    %v5220 = vsel %vm449, %v5205, %v5219
    %5221 = vst [vmem:[#allocation2 + $0xa8] sm:$0x2] %v5220
    %v5222 = vld [vmem:[#allocation2 + $0xb0] sm:$0x2]
    %v5223 = vsel %vm449, %v5206, %v5222
    %5224 = vst [vmem:[#allocation2 + $0xb0] sm:$0x2] %v5223
    %v5225 = vld [vmem:[#allocation2 + $0xb8] sm:$0x2]
    %v5226 = vsel %vm449, %v5207, %v5225
    %5227 = vst [vmem:[#allocation2 + $0xb8] sm:$0x2] %v5226
    %v5228 = vld [vmem:[#allocation2 + $0xc0] sm:$0x2]
    %v5229 = vsel %vm449, %v5208, %v5228
    %5230 = vst [vmem:[#allocation2 + $0xc0] sm:$0x2] %v5229
    %v5231 = vld [vmem:[#allocation2 + $0xc8] sm:$0x2]
    %v5232 = vsel %vm449, %v5209, %v5231
    %5233 = vst [vmem:[#allocation2 + $0xc8] sm:$0x2] %v5232
    %v5234 = vld [vmem:[#allocation2 + $0xd0] sm:$0x2]
    %v5235 = vsel %vm449, %v5210, %v5234
    %5236 = vst [vmem:[#allocation2 + $0xd0] sm:$0x2] %v5235
    %v5237 = vld [vmem:[#allocation2 + $0xd8] sm:$0x2]
    %v5238 = vsel %vm468, %v5211, %v5237
    %5239 = vst [vmem:[#allocation2 + $0xd8] sm:$0x2] %v5238
    %v5240 = vld [vmem:[%s2942 + $0x1] sm:$0x7f]
    %v5242 = vcombine.high %v5240, %v5240
    %v5244 = vunpack.c.l.s4 1966171168
    %v5245 = vunpack.c.0.s8 %v5244
    %v5246 = vlaneseq
    %v5247 = vshrl.u32 %v5246, 7
    %v5248 = vsub.s32 %v5245, %v5247
    %v5249 = vrot.slane %v5240, %v5248
    %v5251 = vunpack.c.l.s4 1966171168
    %v5252 = vunpack.c.0.s8 %v5251
    %v5253 = vlaneseq
    %v5254 = vshrl.u32 %v5253, 7
    %v5255 = vsub.s32 %v5252, %v5254
    %v5256 = vrot.slane %v5242, %v5255
    %v5257 = vcombine.low %v5249, %v5249
    %v5258 = vcombine.low %v5256, %v5256
    %v5260 = vunpack.c.l.s4 1966171168
    %v5261 = vunpack.c.0.s8 %v5260
    %v5262 = vlaneseq
    %v5263 = vshrl.u32 %v5262, 7
    %v5264 = vsub.s32 %v5261, %v5263
    %v5265 = vrot.slane %v5257, %v5264
    %v5267 = vunpack.c.l.s4 1966171168
    %v5268 = vunpack.c.0.s8 %v5267
    %v5269 = vlaneseq
    %v5270 = vshrl.u32 %v5269, 7
    %v5271 = vsub.s32 %v5268, %v5270
    %v5272 = vrot.slane %v5258, %v5271
    %v5274 = vunpack.c.l.s4 1966171168
    %v5275 = vunpack.c.0.s8 %v5274
    %v5276 = vlaneseq
    %v5277 = vshrl.u32 %v5276, 7
    %v5278 = vsub.s32 %v5275, %v5277
    %v5279 = vrot.slane %v5249, %v5278
    %v5281 = vunpack.c.l.s4 1966171168
    %v5282 = vunpack.c.0.s8 %v5281
    %v5283 = vlaneseq
    %v5284 = vshrl.u32 %v5283, 7
    %v5285 = vsub.s32 %v5282, %v5284
    %v5286 = vrot.slane %v5256, %v5285
    %v5287 = vcombine.high %v5265, %v5265
    %v5288 = vcombine.high %v5272, %v5272
    %v5289 = vcombine.high %v5279, %v5279
    %v5297 = vld [vmem:[#allocation2 + $0xa8] sm:$0x4]
    %v5298 = vsel %vm552, %v5265, %v5297
    %5299 = vst [vmem:[#allocation2 + $0xa8] sm:$0x4] %v5298
    %v5300 = vld [vmem:[#allocation2 + $0xb0] sm:$0x4]
    %v5301 = vsel %vm552, %v5279, %v5300
    %5302 = vst [vmem:[#allocation2 + $0xb0] sm:$0x4] %v5301
    %v5303 = vld [vmem:[#allocation2 + $0xb8] sm:$0x4]
    %v5304 = vsel %vm552, %v5287, %v5303
    %5305 = vst [vmem:[#allocation2 + $0xb8] sm:$0x4] %v5304
    %v5306 = vld [vmem:[#allocation2 + $0xc0] sm:$0x4]
    %v5307 = vsel %vm552, %v5289, %v5306
    %5308 = vst [vmem:[#allocation2 + $0xc0] sm:$0x4] %v5307
    %v5309 = vld [vmem:[#allocation2 + $0xc8] sm:$0x4]
    %v5310 = vsel %vm552, %v5272, %v5309
    %5311 = vst [vmem:[#allocation2 + $0xc8] sm:$0x4] %v5310
    %v5312 = vld [vmem:[#allocation2 + $0xd0] sm:$0x4]
    %v5313 = vsel %vm552, %v5286, %v5312
    %5314 = vst [vmem:[#allocation2 + $0xd0] sm:$0x4] %v5313
    %v5315 = vld [vmem:[#allocation2 + $0xd8] sm:$0x4]
    %v5316 = vsel %vm572, %v5288, %v5315
    %5317 = vst [vmem:[#allocation2 + $0xd8] sm:$0x4] %v5316
    %v5318 = vld [vmem:[%s2942 + $0x1] sm:$0x7f]
    %v5320 = vcombine.high %v5318, %v5318
    %v5322 = vunpack.c.l.s4 1966171168
    %v5323 = vunpack.c.0.s8 %v5322
    %v5324 = vlaneseq
    %v5325 = vshrl.u32 %v5324, 7
    %v5326 = vsub.s32 %v5323, %v5325
    %v5327 = vrot.slane %v5318, %v5326
    %v5329 = vunpack.c.l.s4 1966171168
    %v5330 = vunpack.c.0.s8 %v5329
    %v5331 = vlaneseq
    %v5332 = vshrl.u32 %v5331, 7
    %v5333 = vsub.s32 %v5330, %v5332
    %v5334 = vrot.slane %v5320, %v5333
    %v5335 = vcombine.high %v5327, %v5327
    %v5336 = vcombine.high %v5334, %v5334
    %v5338 = vunpack.c.l.s4 1966171168
    %v5339 = vunpack.c.0.s8 %v5338
    %v5340 = vlaneseq
    %v5341 = vshrl.u32 %v5340, 7
    %v5342 = vsub.s32 %v5339, %v5341
    %v5343 = vrot.slane %v5327, %v5342
    %v5345 = vunpack.c.l.s4 1966171168
    %v5346 = vunpack.c.0.s8 %v5345
    %v5347 = vlaneseq
    %v5348 = vshrl.u32 %v5347, 7
    %v5349 = vsub.s32 %v5346, %v5348
    %v5350 = vrot.slane %v5334, %v5349
    %v5352 = vunpack.c.l.s4 1966171168
    %v5353 = vunpack.c.0.s8 %v5352
    %v5354 = vlaneseq
    %v5355 = vshrl.u32 %v5354, 7
    %v5356 = vsub.s32 %v5353, %v5355
    %v5357 = vrot.slane %v5335, %v5356
    %v5359 = vunpack.c.l.s4 1966171168
    %v5360 = vunpack.c.0.s8 %v5359
    %v5361 = vlaneseq
    %v5362 = vshrl.u32 %v5361, 7
    %v5363 = vsub.s32 %v5360, %v5362
    %v5364 = vrot.slane %v5336, %v5363
    %v5365 = vcombine.high %v5343, %v5343
    %v5366 = vcombine.high %v5350, %v5350
    %v5367 = vcombine.high %v5357, %v5357
    %v5369 = vshll.u32 %v5343, 16
    %v5371 = vrot.slane %v5369, 6
    %v5373 = vshll.u32 %v5357, 16
    %v5375 = vrot.slane %v5373, 6
    %v5377 = vshll.u32 %v5365, 16
    %v5379 = vrot.slane %v5377, 6
    %v5381 = vshll.u32 %v5367, 16
    %v5383 = vrot.slane %v5381, 6
    %v5385 = vshll.u32 %v5350, 16
    %v5387 = vrot.slane %v5385, 6
    %v5389 = vshll.u32 %v5364, 16
    %v5391 = vrot.slane %v5389, 6
    %v5393 = vshll.u32 %v5366, 16
    %v5395 = vrot.slane %v5393, 6
    %5396 = vrot.lane.b32.xlu0 %v5371, 127
    %v5397 = vpop.permute.xlu0 %5396
    %5398 = vrot.lane.b32.xlu0 %v5375, 127
    %v5399 = vpop.permute.xlu0 %5398
    %5400 = vrot.lane.b32.xlu0 %v5379, 127
    %v5401 = vpop.permute.xlu0 %5400
    %5402 = vrot.lane.b32.xlu0 %v5383, 127
    %v5403 = vpop.permute.xlu0 %5402
    %5404 = vrot.lane.b32.xlu0 %v5387, 127
    %v5405 = vpop.permute.xlu0 %5404
    %5406 = vrot.lane.b32.xlu0 %v5391, 127
    %v5407 = vpop.permute.xlu0 %5406
    %5408 = vrot.lane.b32.xlu0 %v5395, 127
    %v5409 = vpop.permute.xlu0 %5408
    %v5410 = vsel %vm200, %v5397, %v5399
    %v5411 = vsel %vm200, %v5399, %v5401
    %v5412 = vsel %vm200, %v5401, %v5403
    %v5413 = vsel %vm200, %v5403, %v5405
    %v5414 = vsel %vm200, %v5405, %v5407
    %v5415 = vsel %vm200, %v5407, %v5409
    %v5423 = vld [vmem:[#allocation2 + $0xa8] sm:$0x4]
    %v5424 = vsel %vm691, %v5410, %v5423
    %5425 = vst [vmem:[#allocation2 + $0xa8] sm:$0x4] %v5424
    %v5426 = vld [vmem:[#allocation2 + $0xb0] sm:$0x4]
    %v5427 = vsel %vm691, %v5411, %v5426
    %5428 = vst [vmem:[#allocation2 + $0xb0] sm:$0x4] %v5427
    %v5429 = vld [vmem:[#allocation2 + $0xb8] sm:$0x4]
    %v5430 = vsel %vm691, %v5412, %v5429
    %5431 = vst [vmem:[#allocation2 + $0xb8] sm:$0x4] %v5430
    %v5432 = vld [vmem:[#allocation2 + $0xc0] sm:$0x4]
    %v5433 = vsel %vm691, %v5413, %v5432
    %5434 = vst [vmem:[#allocation2 + $0xc0] sm:$0x4] %v5433
    %v5435 = vld [vmem:[#allocation2 + $0xc8] sm:$0x4]
    %v5436 = vsel %vm691, %v5414, %v5435
    %5437 = vst [vmem:[#allocation2 + $0xc8] sm:$0x4] %v5436
    %v5438 = vld [vmem:[#allocation2 + $0xd0] sm:$0x4]
    %v5439 = vsel %vm691, %v5415, %v5438
    %5440 = vst [vmem:[#allocation2 + $0xd0] sm:$0x4] %v5439
    %v5441 = vld [vmem:[#allocation2 + $0xd8] sm:$0x4]
    %v5442 = vsel %vm710, %v5409, %v5441
    %5443 = vst [vmem:[#allocation2 + $0xd8] sm:$0x4] %v5442
    %v5444 = vld [vmem:[%s2942 + $0x1] sm:$0x7f]
    %v5446 = vcombine.low %v5444, %v5444
    %v5448 = vunpack.c.l.s4 1966171168
    %v5449 = vunpack.c.0.s8 %v5448
    %v5450 = vlaneseq
    %v5451 = vshrl.u32 %v5450, 7
    %v5452 = vsub.s32 %v5449, %v5451
    %v5453 = vrot.slane %v5446, %v5452
    %v5455 = vunpack.c.l.s4 1966171168
    %v5456 = vunpack.c.0.s8 %v5455
    %v5457 = vlaneseq
    %v5458 = vshrl.u32 %v5457, 7
    %v5459 = vsub.s32 %v5456, %v5458
    %v5460 = vrot.slane %v5444, %v5459
    %v5461 = vcombine.low %v5453, %v5453
    %v5462 = vcombine.low %v5460, %v5460
    %v5464 = vunpack.c.l.s4 1966171168
    %v5465 = vunpack.c.0.s8 %v5464
    %v5466 = vlaneseq
    %v5467 = vshrl.u32 %v5466, 7
    %v5468 = vsub.s32 %v5465, %v5467
    %v5469 = vrot.slane %v5461, %v5468
    %v5471 = vunpack.c.l.s4 1966171168
    %v5472 = vunpack.c.0.s8 %v5471
    %v5473 = vlaneseq
    %v5474 = vshrl.u32 %v5473, 7
    %v5475 = vsub.s32 %v5472, %v5474
    %v5476 = vrot.slane %v5462, %v5475
    %v5478 = vunpack.c.l.s4 1966171168
    %v5479 = vunpack.c.0.s8 %v5478
    %v5480 = vlaneseq
    %v5481 = vshrl.u32 %v5480, 7
    %v5482 = vsub.s32 %v5479, %v5481
    %v5483 = vrot.slane %v5453, %v5482
    %v5485 = vunpack.c.l.s4 1966171168
    %v5486 = vunpack.c.0.s8 %v5485
    %v5487 = vlaneseq
    %v5488 = vshrl.u32 %v5487, 7
    %v5489 = vsub.s32 %v5486, %v5488
    %v5490 = vrot.slane %v5460, %v5489
    %v5491 = vcombine.high %v5469, %v5469
    %v5492 = vcombine.high %v5476, %v5476
    %v5493 = vcombine.high %v5483, %v5483
    %5494 = vrot.lane.b32.xlu0 %v5469, 126
    %v5495 = vpop.permute.xlu0 %5494
    %5496 = vrot.lane.b32.xlu0 %v5483, 126
    %v5497 = vpop.permute.xlu0 %5496
    %5498 = vrot.lane.b32.xlu0 %v5491, 126
    %v5499 = vpop.permute.xlu0 %5498
    %5500 = vrot.lane.b32.xlu0 %v5493, 126
    %v5501 = vpop.permute.xlu0 %5500
    %5502 = vrot.lane.b32.xlu0 %v5476, 126
    %v5503 = vpop.permute.xlu0 %5502
    %5504 = vrot.lane.b32.xlu0 %v5490, 126
    %v5505 = vpop.permute.xlu0 %5504
    %5506 = vrot.lane.b32.xlu0 %v5492, 126
    %v5507 = vpop.permute.xlu0 %5506
    %v5508 = vsel %vm302, %v5495, %v5497
    %v5509 = vsel %vm302, %v5497, %v5499
    %v5510 = vsel %vm302, %v5499, %v5501
    %v5511 = vsel %vm302, %v5501, %v5503
    %v5512 = vsel %vm302, %v5503, %v5505
    %v5513 = vsel %vm302, %v5505, %v5507
    %v5521 = vld [vmem:[#allocation2 + $0xa8] sm:$0x8]
    %v5522 = vsel %vm798, %v5508, %v5521
    %5523 = vst [vmem:[#allocation2 + $0xa8] sm:$0x8] %v5522
    %v5524 = vld [vmem:[#allocation2 + $0xb0] sm:$0x8]
    %v5525 = vsel %vm798, %v5509, %v5524
    %5526 = vst [vmem:[#allocation2 + $0xb0] sm:$0x8] %v5525
    %v5527 = vld [vmem:[#allocation2 + $0xb8] sm:$0x8]
    %v5528 = vsel %vm798, %v5510, %v5527
    %5529 = vst [vmem:[#allocation2 + $0xb8] sm:$0x8] %v5528
    %v5530 = vld [vmem:[#allocation2 + $0xc0] sm:$0x8]
    %v5531 = vsel %vm798, %v5511, %v5530
    %5532 = vst [vmem:[#allocation2 + $0xc0] sm:$0x8] %v5531
    %v5533 = vld [vmem:[#allocation2 + $0xc8] sm:$0x8]
    %v5534 = vsel %vm798, %v5512, %v5533
    %5535 = vst [vmem:[#allocation2 + $0xc8] sm:$0x8] %v5534
    %v5536 = vld [vmem:[#allocation2 + $0xd0] sm:$0x8]
    %v5537 = vsel %vm798, %v5513, %v5536
    %5538 = vst [vmem:[#allocation2 + $0xd0] sm:$0x8] %v5537
    %v5539 = vld [vmem:[#allocation2 + $0xd8] sm:$0x8]
    %v5540 = vsel %vm818, %v5507, %v5539
    %5541 = vst [vmem:[#allocation2 + $0xd8] sm:$0x8] %v5540
    %v5542 = vld [vmem:[%s2942 + $0x1] sm:$0x7f]
    %v5544 = vcombine.high %v5542, %v5542
    %v5546 = vunpack.c.l.s4 1966171168
    %v5547 = vunpack.c.0.s8 %v5546
    %v5548 = vlaneseq
    %v5549 = vshrl.u32 %v5548, 7
    %v5550 = vsub.s32 %v5547, %v5549
    %v5551 = vrot.slane %v5542, %v5550
    %v5553 = vunpack.c.l.s4 1966171168
    %v5554 = vunpack.c.0.s8 %v5553
    %v5555 = vlaneseq
    %v5556 = vshrl.u32 %v5555, 7
    %v5557 = vsub.s32 %v5554, %v5556
    %v5558 = vrot.slane %v5544, %v5557
    %v5559 = vcombine.high %v5551, %v5551
    %v5560 = vcombine.high %v5558, %v5558
    %v5562 = vunpack.c.l.s4 1966171168
    %v5563 = vunpack.c.0.s8 %v5562
    %v5564 = vlaneseq
    %v5565 = vshrl.u32 %v5564, 7
    %v5566 = vsub.s32 %v5563, %v5565
    %v5567 = vrot.slane %v5551, %v5566
    %v5569 = vunpack.c.l.s4 1966171168
    %v5570 = vunpack.c.0.s8 %v5569
    %v5571 = vlaneseq
    %v5572 = vshrl.u32 %v5571, 7
    %v5573 = vsub.s32 %v5570, %v5572
    %v5574 = vrot.slane %v5558, %v5573
    %v5576 = vunpack.c.l.s4 1966171168
    %v5577 = vunpack.c.0.s8 %v5576
    %v5578 = vlaneseq
    %v5579 = vshrl.u32 %v5578, 7
    %v5580 = vsub.s32 %v5577, %v5579
    %v5581 = vrot.slane %v5559, %v5580
    %v5583 = vunpack.c.l.s4 1966171168
    %v5584 = vunpack.c.0.s8 %v5583
    %v5585 = vlaneseq
    %v5586 = vshrl.u32 %v5585, 7
    %v5587 = vsub.s32 %v5584, %v5586
    %v5588 = vrot.slane %v5560, %v5587
    %v5589 = vcombine.high %v5567, %v5567
    %v5590 = vcombine.high %v5574, %v5574
    %v5591 = vcombine.high %v5581, %v5581
    %v5593 = vshll.u32 %v5567, 16
    %v5595 = vrot.slane %v5593, 5
    %v5597 = vshll.u32 %v5581, 16
    %v5599 = vrot.slane %v5597, 5
    %v5601 = vshll.u32 %v5589, 16
    %v5603 = vrot.slane %v5601, 5
    %v5605 = vshll.u32 %v5591, 16
    %v5607 = vrot.slane %v5605, 5
    %v5609 = vshll.u32 %v5574, 16
    %v5611 = vrot.slane %v5609, 5
    %v5613 = vshll.u32 %v5588, 16
    %v5615 = vrot.slane %v5613, 5
    %v5617 = vshll.u32 %v5590, 16
    %v5619 = vrot.slane %v5617, 5
    %5620 = vrot.lane.b32.xlu0 %v5595, 125
    %v5621 = vpop.permute.xlu0 %5620
    %5622 = vrot.lane.b32.xlu0 %v5599, 125
    %v5623 = vpop.permute.xlu0 %5622
    %5624 = vrot.lane.b32.xlu0 %v5603, 125
    %v5625 = vpop.permute.xlu0 %5624
    %5626 = vrot.lane.b32.xlu0 %v5607, 125
    %v5627 = vpop.permute.xlu0 %5626
    %5628 = vrot.lane.b32.xlu0 %v5611, 125
    %v5629 = vpop.permute.xlu0 %5628
    %5630 = vrot.lane.b32.xlu0 %v5615, 125
    %v5631 = vpop.permute.xlu0 %5630
    %5632 = vrot.lane.b32.xlu0 %v5619, 125
    %v5633 = vpop.permute.xlu0 %5632
    %v5634 = vsel %vm434, %v5621, %v5623
    %v5635 = vsel %vm434, %v5623, %v5625
    %v5636 = vsel %vm434, %v5625, %v5627
    %v5637 = vsel %vm434, %v5627, %v5629
    %v5638 = vsel %vm434, %v5629, %v5631
    %v5639 = vsel %vm434, %v5631, %v5633
    %v5647 = vld [vmem:[#allocation2 + $0xa8] sm:$0x8]
    %v5648 = vsel %vm937, %v5634, %v5647
    %5649 = vst [vmem:[#allocation2 + $0xa8] sm:$0x8] %v5648
    %v5650 = vld [vmem:[#allocation2 + $0xb0] sm:$0x8]
    %v5651 = vsel %vm937, %v5635, %v5650
    %5652 = vst [vmem:[#allocation2 + $0xb0] sm:$0x8] %v5651
    %v5653 = vld [vmem:[#allocation2 + $0xb8] sm:$0x8]
    %v5654 = vsel %vm937, %v5636, %v5653
    %5655 = vst [vmem:[#allocation2 + $0xb8] sm:$0x8] %v5654
    %v5656 = vld [vmem:[#allocation2 + $0xc0] sm:$0x8]
    %v5657 = vsel %vm937, %v5637, %v5656
    %5658 = vst [vmem:[#allocation2 + $0xc0] sm:$0x8] %v5657
    %v5659 = vld [vmem:[#allocation2 + $0xc8] sm:$0x8]
    %v5660 = vsel %vm937, %v5638, %v5659
    %5661 = vst [vmem:[#allocation2 + $0xc8] sm:$0x8] %v5660
    %v5662 = vld [vmem:[#allocation2 + $0xd0] sm:$0x8]
    %v5663 = vsel %vm937, %v5639, %v5662
    %5664 = vst [vmem:[#allocation2 + $0xd0] sm:$0x8] %v5663
    %v5665 = vld [vmem:[#allocation2 + $0xd8] sm:$0x8]
    %v5666 = vsel %vm956, %v5633, %v5665
    %5667 = vst [vmem:[#allocation2 + $0xd8] sm:$0x8] %v5666
    %v5668 = vld [vmem:[%s2942 + $0x1] sm:$0x7f]
    %v5670 = vcombine.high %v5668, %v5668
    %v5672 = vunpack.c.l.s4 1966171168
    %v5673 = vunpack.c.0.s8 %v5672
    %v5674 = vlaneseq
    %v5675 = vshrl.u32 %v5674, 7
    %v5676 = vsub.s32 %v5673, %v5675
    %v5677 = vrot.slane %v5668, %v5676
    %v5679 = vunpack.c.l.s4 1966171168
    %v5680 = vunpack.c.0.s8 %v5679
    %v5681 = vlaneseq
    %v5682 = vshrl.u32 %v5681, 7
    %v5683 = vsub.s32 %v5680, %v5682
    %v5684 = vrot.slane %v5670, %v5683
    %v5685 = vcombine.high %v5677, %v5677
    %v5686 = vcombine.high %v5684, %v5684
    %v5688 = vunpack.c.l.s4 1966171168
    %v5689 = vunpack.c.0.s8 %v5688
    %v5690 = vlaneseq
    %v5691 = vshrl.u32 %v5690, 7
    %v5692 = vsub.s32 %v5689, %v5691
    %v5693 = vrot.slane %v5677, %v5692
    %v5695 = vunpack.c.l.s4 1966171168
    %v5696 = vunpack.c.0.s8 %v5695
    %v5697 = vlaneseq
    %v5698 = vshrl.u32 %v5697, 7
    %v5699 = vsub.s32 %v5696, %v5698
    %v5700 = vrot.slane %v5684, %v5699
    %v5702 = vunpack.c.l.s4 1966171168
    %v5703 = vunpack.c.0.s8 %v5702
    %v5704 = vlaneseq
    %v5705 = vshrl.u32 %v5704, 7
    %v5706 = vsub.s32 %v5703, %v5705
    %v5707 = vrot.slane %v5685, %v5706
    %v5709 = vunpack.c.l.s4 1966171168
    %v5710 = vunpack.c.0.s8 %v5709
    %v5711 = vlaneseq
    %v5712 = vshrl.u32 %v5711, 7
    %v5713 = vsub.s32 %v5710, %v5712
    %v5714 = vrot.slane %v5686, %v5713
    %v5715 = vcombine.low %v5693, %v5693
    %v5716 = vcombine.low %v5700, %v5700
    %v5717 = vcombine.low %v5707, %v5707
    %v5718 = vcombine.low %v5714, %v5714
    %5719 = vrot.lane.b32.xlu0 %v5715, 124
    %v5720 = vpop.permute.xlu0 %5719
    %5721 = vrot.lane.b32.xlu0 %v5717, 124
    %v5722 = vpop.permute.xlu0 %5721
    %5723 = vrot.lane.b32.xlu0 %v5693, 124
    %v5724 = vpop.permute.xlu0 %5723
    %5725 = vrot.lane.b32.xlu0 %v5707, 124
    %v5726 = vpop.permute.xlu0 %5725
    %5727 = vrot.lane.b32.xlu0 %v5716, 124
    %v5728 = vpop.permute.xlu0 %5727
    %5729 = vrot.lane.b32.xlu0 %v5718, 124
    %v5730 = vpop.permute.xlu0 %5729
    %5731 = vrot.lane.b32.xlu0 %v5700, 124
    %v5732 = vpop.permute.xlu0 %5731
    %v5733 = vsel %vm536, %v5720, %v5722
    %v5734 = vsel %vm536, %v5722, %v5724
    %v5735 = vsel %vm536, %v5724, %v5726
    %v5736 = vsel %vm536, %v5726, %v5728
    %v5737 = vsel %vm536, %v5728, %v5730
    %v5738 = vsel %vm536, %v5730, %v5732
    %v5746 = vld [vmem:[#allocation2 + $0xa8] sm:$0x10]
    %v5747 = vsel %vm1044, %v5733, %v5746
    %5748 = vst [vmem:[#allocation2 + $0xa8] sm:$0x10] %v5747
    %v5749 = vld [vmem:[#allocation2 + $0xb0] sm:$0x10]
    %v5750 = vsel %vm1044, %v5734, %v5749
    %5751 = vst [vmem:[#allocation2 + $0xb0] sm:$0x10] %v5750
    %v5752 = vld [vmem:[#allocation2 + $0xb8] sm:$0x10]
    %v5753 = vsel %vm1044, %v5735, %v5752
    %5754 = vst [vmem:[#allocation2 + $0xb8] sm:$0x10] %v5753
    %v5755 = vld [vmem:[#allocation2 + $0xc0] sm:$0x10]
    %v5756 = vsel %vm1044, %v5736, %v5755
    %5757 = vst [vmem:[#allocation2 + $0xc0] sm:$0x10] %v5756
    %v5758 = vld [vmem:[#allocation2 + $0xc8] sm:$0x10]
    %v5759 = vsel %vm1044, %v5737, %v5758
    %5760 = vst [vmem:[#allocation2 + $0xc8] sm:$0x10] %v5759
    %v5761 = vld [vmem:[#allocation2 + $0xd0] sm:$0x10]
    %v5762 = vsel %vm1044, %v5738, %v5761
    %5763 = vst [vmem:[#allocation2 + $0xd0] sm:$0x10] %v5762
    %v5764 = vld [vmem:[#allocation2 + $0xd8] sm:$0x10]
    %v5765 = vsel %vm1064, %v5732, %v5764
    %5766 = vst [vmem:[#allocation2 + $0xd8] sm:$0x10] %v5765
    %5767 = vst.msk [vmem:[#allocation2 + $0x68] sm:$0xff] %vm2939, 0
    %5768 = vst.msk [vmem:[#allocation2 + $0xd8] sm:$0xff] %vm2939, 0
    %vm5769 = vcmask 1047556
    %vm5770 = vmand %vm5769, %vm1182
    %v5771 = vld [vmem:[#allocation2 + $0x70] sm:$0xf0]
    %v5772 = vsel %vm5770, 0, %v5771
    %5773 = vst [vmem:[#allocation2 + $0x70] sm:$0xf0] %v5772
    %v5774 = vld [vmem:[#allocation2 + $0x78] sm:$0xf0]
    %v5775 = vsel %vm5770, 0, %v5774
    %5776 = vst [vmem:[#allocation2 + $0x78] sm:$0xf0] %v5775
    %v5777 = vld [vmem:[#allocation2 + $0x80] sm:$0xf0]
    %v5778 = vsel %vm5770, 0, %v5777
    %5779 = vst [vmem:[#allocation2 + $0x80] sm:$0xf0] %v5778
    %v5780 = vld [vmem:[#allocation2 + $0x88] sm:$0xf0]
    %v5781 = vsel %vm5770, 0, %v5780
    %5782 = vst [vmem:[#allocation2 + $0x88] sm:$0xf0] %v5781
    %v5783 = vld [vmem:[#allocation2 + $0x90] sm:$0xf0]
    %v5784 = vsel %vm5770, 0, %v5783
    %5785 = vst [vmem:[#allocation2 + $0x90] sm:$0xf0] %v5784
    %v5786 = vld [vmem:[#allocation2 + $0x98] sm:$0xf0]
    %v5787 = vsel %vm5770, 0, %v5786
    %5788 = vst [vmem:[#allocation2 + $0x98] sm:$0xf0] %v5787
    %v5789 = vld [vmem:[#allocation2 + $0xa0] sm:$0xf0]
    %v5790 = vsel %vm5770, 0, %v5789
    %5791 = vst [vmem:[#allocation2 + $0xa0] sm:$0xf0] %v5790
    %v5792 = vld [vmem:[#allocation2 + $0xa8] sm:$0xf0]
    %v5793 = vsel %vm5770, 0, %v5792
    %5794 = vst [vmem:[#allocation2 + $0xa8] sm:$0xf0] %v5793
    %v5795 = vld [vmem:[#allocation2 + $0xb0] sm:$0xf0]
    %v5796 = vsel %vm5770, 0, %v5795
    %5797 = vst [vmem:[#allocation2 + $0xb0] sm:$0xf0] %v5796
    %v5798 = vld [vmem:[#allocation2 + $0xb8] sm:$0xf0]
    %v5799 = vsel %vm5770, 0, %v5798
    %5800 = vst [vmem:[#allocation2 + $0xb8] sm:$0xf0] %v5799
    %v5801 = vld [vmem:[#allocation2 + $0xc0] sm:$0xf0]
    %v5802 = vsel %vm5770, 0, %v5801
    %5803 = vst [vmem:[#allocation2 + $0xc0] sm:$0xf0] %v5802
    %v5804 = vld [vmem:[#allocation2 + $0xc8] sm:$0xf0]
    %v5805 = vsel %vm5770, 0, %v5804
    %5806 = vst [vmem:[#allocation2 + $0xc8] sm:$0xf0] %v5805
    %v5807 = vld [vmem:[#allocation2 + $0xd0] sm:$0xf0]
    %v5808 = vsel %vm5770, 0, %v5807
    %5809 = vst [vmem:[#allocation2 + $0xd0] sm:$0xf0] %v5808
    %v5810 = vld [vmem:[#allocation2 + $0xd8] sm:$0xf0]
    %v5811 = vsel %vm5770, 0, %v5810
    %5812 = vst [vmem:[#allocation2 + $0xd8] sm:$0xf0] %v5811
    %v5813 = vld [vmem:[%s1] sm:$0xf]
    %v5814 = vld [vmem:[%s1 + $0x4] sm:$0xf]
    %v5815 = vld [vmem:[#allocation2] sm:$0xff]
    %v5816 = vld [vmem:[#allocation2 + $0x8] sm:$0xff]
    %v5817 = vld [vmem:[#allocation2 + $0x10] sm:$0xff]
    %v5818 = vld [vmem:[#allocation2 + $0x18] sm:$0xff]
    %v5819 = vld [vmem:[#allocation2 + $0x20] sm:$0xff]
    %v5820 = vld [vmem:[#allocation2 + $0x28] sm:$0xff]
    %v5821 = vld [vmem:[#allocation2 + $0x30] sm:$0xff]
    %v5822 = vld [vmem:[#allocation2 + $0x38] sm:$0xff]
    %v5823 = vld [vmem:[#allocation2 + $0x40] sm:$0xff]
    %v5824 = vld [vmem:[#allocation2 + $0x48] sm:$0xff]
    %v5825 = vld [vmem:[#allocation2 + $0x50] sm:$0xff]
    %v5826 = vld [vmem:[#allocation2 + $0x58] sm:$0xff]
    %v5827 = vld [vmem:[#allocation2 + $0x60] sm:$0xff]
    %v5828 = vld [vmem:[#allocation2 + $0x68] sm:$0xff]
    %v5829 = vld [vmem:[#allocation2 + $0x70] sm:$0xff]
    %v5830 = vld [vmem:[#allocation2 + $0x78] sm:$0xff]
    %v5831 = vld [vmem:[#allocation2 + $0x80] sm:$0xff]
    %v5832 = vld [vmem:[#allocation2 + $0x88] sm:$0xff]
    %v5833 = vld [vmem:[#allocation2 + $0x90] sm:$0xff]
    %v5834 = vld [vmem:[#allocation2 + $0x98] sm:$0xff]
    %v5835 = vld [vmem:[#allocation2 + $0xa0] sm:$0xff]
    %v5836 = vld [vmem:[#allocation2 + $0xa8] sm:$0xff]
    %v5837 = vld [vmem:[#allocation2 + $0xb0] sm:$0xff]
    %v5838 = vld [vmem:[#allocation2 + $0xb8] sm:$0xff]
    %v5839 = vld [vmem:[#allocation2 + $0xc0] sm:$0xff]
    %v5840 = vld [vmem:[#allocation2 + $0xc8] sm:$0xff]
    %v5841 = vld [vmem:[#allocation2 + $0xd0] sm:$0xff]
    %v5842 = vld [vmem:[#allocation2 + $0xd8] sm:$0xff]
    %v5843 = vld [vmem:[%s2] sm:$0xff]
    %v5844 = vld [vmem:[%s2 + $0x8] sm:$0xff]
    %5846 = vset.pattern.permute.xlu0 0
    %5847 = vperm.xlu0 %5846, %v5843
    %v5848 = vpop.permute.xlu0 %5847
    %5851 = vset.pattern.permute.xlu0 0
    %5852 = vperm.xlu0 %5851, %v5844
    %v5853 = vpop.permute.xlu0 %5852
    %v5857 = vunpack.c.l.b16 %v5813
    %v5858 = vunpack.c.l.b16 %v5814
    %v5859 = vpack.c.b16 %v5858, %v5857
    %vm5860 = vcmask 261120
    %v5862 = vsel %vm5860, %v5859, 0
    %5864 = vmatprep.subr.bf16.mxu0 %v5816
    %5865 = vmatpush1.bf16.msra.mxu0 %v5815
    %5866 = vmatprep.subr.bf16.mxu0 %v5830
    %5867 = vmatpush1.bf16.msra.mxu0 %v5829
    %5868 = vmatprep.subr.bf16.mxu0 0
    %5869 = vmatpush1.bf16.msra.mxu0 0
    %5870 = vmatprep.subr.bf16.mxu0 0
    %5871 = vmatpush1.bf16.msra.mxu0 0
    %5872 = vmatprep.subr.bf16.mxu0 0
    %5873 = vmatpush1.bf16.msra.mxu0 0
    %5874 = vmatprep.subr.bf16.mxu0 0
    %5875 = vmatpush1.bf16.msra.mxu0 0
    %5876 = vmatprep.subr.bf16.mxu0 0
    %5877 = vmatpush1.bf16.msra.mxu0 0
    %5878 = vmatprep.subr.bf16.mxu0 0
    %5879 = vmatpush1.bf16.msra.mxu0 0
    %5880 = vmatprep.subr.bf16.mxu0 0
    %5881 = vmatpush1.bf16.msra.mxu0 0
    %5882 = vmatprep.subr.bf16.mxu0 0
    %5883 = vmatpush1.bf16.msra.mxu0 0
    %5884 = vmatprep.subr.bf16.mxu0 0
    %5885 = vmatpush1.bf16.msra.mxu0 0
    %5886 = vmatprep.subr.bf16.mxu0 0
    %5887 = vmatpush1.bf16.msra.mxu0 0
    %5888 = vmatprep.subr.bf16.mxu0 0
    %5889 = vmatpush1.bf16.msra.mxu0 0
    %5890 = vmatprep.subr.bf16.mxu0 0
    %5891 = vmatpush1.bf16.msra.mxu0 0
    %5892 = vmatprep.subr.bf16.mxu0 0
    %5893 = vmatpush1.bf16.msra.mxu0 0
    %5894 = vmatprep.subr.bf16.mxu0 0
    %5895 = vmatpush1.bf16.msra.mxu0 0
    %5896 = vmatprep.mubr.bf16.mxu0 0
    %5897 = vmatmul.mubr.bf16.gmra.mrb[0].mxu0 %v5862
    %v5898 = vpop.f32.mrb[0].mxu0
    %v5899 = vadd.f32 %v5848, %v5898
    %v5900 = vpop.f32.mrb[0].mxu0
    %v5901 = vadd.f32 %v5848, %v5900
    %v5902 = vpop.f32.mrb[0].mxu0
    %v5903 = vadd.f32 %v5853, %v5902
    %v5904 = vpop.f32.mrb[0].mxu0
    %v5905 = vadd.f32 %v5853, %v5904
    %5906 = vdwg.mxu0
    %5907 = vmatprep.subr.bf16.mxu0 %v5818
    %5908 = vmatpush1.bf16.msra.mxu0 %v5817
    %5909 = vmatprep.subr.bf16.mxu0 %v5832
    %5910 = vmatpush1.bf16.msra.mxu0 %v5831
    %5911 = vmatprep.subr.bf16.mxu0 0
    %5912 = vmatpush1.bf16.msra.mxu0 0
    %5913 = vmatprep.subr.bf16.mxu0 0
    %5914 = vmatpush1.bf16.msra.mxu0 0
    %5915 = vmatprep.subr.bf16.mxu0 0
    %5916 = vmatpush1.bf16.msra.mxu0 0
    %5917 = vmatprep.subr.bf16.mxu0 0
    %5918 = vmatpush1.bf16.msra.mxu0 0
    %5919 = vmatprep.subr.bf16.mxu0 0
    %5920 = vmatpush1.bf16.msra.mxu0 0
    %5921 = vmatprep.subr.bf16.mxu0 0
    %5922 = vmatpush1.bf16.msra.mxu0 0
    %5923 = vmatprep.subr.bf16.mxu0 0
    %5924 = vmatpush1.bf16.msra.mxu0 0
    %5925 = vmatprep.subr.bf16.mxu0 0
    %5926 = vmatpush1.bf16.msra.mxu0 0
    %5927 = vmatprep.subr.bf16.mxu0 0
    %5928 = vmatpush1.bf16.msra.mxu0 0
    %5929 = vmatprep.subr.bf16.mxu0 0
    %5930 = vmatpush1.bf16.msra.mxu0 0
    %5931 = vmatprep.subr.bf16.mxu0 0
    %5932 = vmatpush1.bf16.msra.mxu0 0
    %5933 = vmatprep.subr.bf16.mxu0 0
    %5934 = vmatpush1.bf16.msra.mxu0 0
    %5935 = vmatprep.subr.bf16.mxu0 0
    %5936 = vmatpush1.bf16.msra.mxu0 0
    %5937 = vmatprep.subr.bf16.mxu0 0
    %5938 = vmatpush1.bf16.msra.mxu0 0
    %5939 = vmatprep.mubr.bf16.mxu0 0
    %5940 = vmatmul.mubr.bf16.gmra.mrb[0].mxu0 %v5862
    %v5941 = vpop.f32.mrb[0].mxu0
    %v5942 = vadd.f32 %v5848, %v5941
    %v5943 = vpop.f32.mrb[0].mxu0
    %v5944 = vadd.f32 %v5848, %v5943
    %v5945 = vpop.f32.mrb[0].mxu0
    %v5946 = vadd.f32 %v5853, %v5945
    %v5947 = vpop.f32.mrb[0].mxu0
    %v5948 = vadd.f32 %v5853, %v5947
    %5949 = vdwg.mxu0
    %5950 = vmatprep.subr.bf16.mxu0 %v5820
    %5951 = vmatpush1.bf16.msra.mxu0 %v5819
    %5952 = vmatprep.subr.bf16.mxu0 %v5834
    %5953 = vmatpush1.bf16.msra.mxu0 %v5833
    %5954 = vmatprep.subr.bf16.mxu0 0
    %5955 = vmatpush1.bf16.msra.mxu0 0
    %5956 = vmatprep.subr.bf16.mxu0 0
    %5957 = vmatpush1.bf16.msra.mxu0 0
    %5958 = vmatprep.subr.bf16.mxu0 0
    %5959 = vmatpush1.bf16.msra.mxu0 0
    %5960 = vmatprep.subr.bf16.mxu0 0
    %5961 = vmatpush1.bf16.msra.mxu0 0
    %5962 = vmatprep.subr.bf16.mxu0 0
    %5963 = vmatpush1.bf16.msra.mxu0 0
    %5964 = vmatprep.subr.bf16.mxu0 0
    %5965 = vmatpush1.bf16.msra.mxu0 0
    %5966 = vmatprep.subr.bf16.mxu0 0
    %5967 = vmatpush1.bf16.msra.mxu0 0
    %5968 = vmatprep.subr.bf16.mxu0 0
    %5969 = vmatpush1.bf16.msra.mxu0 0
    %5970 = vmatprep.subr.bf16.mxu0 0
    %5971 = vmatpush1.bf16.msra.mxu0 0
    %5972 = vmatprep.subr.bf16.mxu0 0
    %5973 = vmatpush1.bf16.msra.mxu0 0
    %5974 = vmatprep.subr.bf16.mxu0 0
    %5975 = vmatpush1.bf16.msra.mxu0 0
    %5976 = vmatprep.subr.bf16.mxu0 0
    %5977 = vmatpush1.bf16.msra.mxu0 0
    %5978 = vmatprep.subr.bf16.mxu0 0
    %5979 = vmatpush1.bf16.msra.mxu0 0
    %5980 = vmatprep.subr.bf16.mxu0 0
    %5981 = vmatpush1.bf16.msra.mxu0 0
    %5982 = vmatprep.mubr.bf16.mxu0 0
    %5983 = vmatmul.mubr.bf16.gmra.mrb[0].mxu0 %v5862
    %v5984 = vpop.f32.mrb[0].mxu0
    %v5985 = vadd.f32 %v5848, %v5984
    %v5986 = vpop.f32.mrb[0].mxu0
    %v5987 = vadd.f32 %v5848, %v5986
    %v5988 = vpop.f32.mrb[0].mxu0
    %v5989 = vadd.f32 %v5853, %v5988
    %v5990 = vpop.f32.mrb[0].mxu0
    %v5991 = vadd.f32 %v5853, %v5990
    %5992 = vdwg.mxu0
    %5993 = vmatprep.subr.bf16.mxu0 %v5822
    %5994 = vmatpush1.bf16.msra.mxu0 %v5821
    %5995 = vmatprep.subr.bf16.mxu0 %v5836
    %5996 = vmatpush1.bf16.msra.mxu0 %v5835
    %5997 = vmatprep.subr.bf16.mxu0 0
    %5998 = vmatpush1.bf16.msra.mxu0 0
    %5999 = vmatprep.subr.bf16.mxu0 0
    %6000 = vmatpush1.bf16.msra.mxu0 0
    %6001 = vmatprep.subr.bf16.mxu0 0
    %6002 = vmatpush1.bf16.msra.mxu0 0
    %6003 = vmatprep.subr.bf16.mxu0 0
    %6004 = vmatpush1.bf16.msra.mxu0 0
    %6005 = vmatprep.subr.bf16.mxu0 0
    %6006 = vmatpush1.bf16.msra.mxu0 0
    %6007 = vmatprep.subr.bf16.mxu0 0
    %6008 = vmatpush1.bf16.msra.mxu0 0
    %6009 = vmatprep.subr.bf16.mxu0 0
    %6010 = vmatpush1.bf16.msra.mxu0 0
    %6011 = vmatprep.subr.bf16.mxu0 0
    %6012 = vmatpush1.bf16.msra.mxu0 0
    %6013 = vmatprep.subr.bf16.mxu0 0
    %6014 = vmatpush1.bf16.msra.mxu0 0
    %6015 = vmatprep.subr.bf16.mxu0 0
    %6016 = vmatpush1.bf16.msra.mxu0 0
    %6017 = vmatprep.subr.bf16.mxu0 0
    %6018 = vmatpush1.bf16.msra.mxu0 0
    %6019 = vmatprep.subr.bf16.mxu0 0
    %6020 = vmatpush1.bf16.msra.mxu0 0
    %6021 = vmatprep.subr.bf16.mxu0 0
    %6022 = vmatpush1.bf16.msra.mxu0 0
    %6023 = vmatprep.subr.bf16.mxu0 0
    %6024 = vmatpush1.bf16.msra.mxu0 0
    %6025 = vmatprep.mubr.bf16.mxu0 0
    %6026 = vmatmul.mubr.bf16.gmra.mrb[0].mxu0 %v5862
    %v6027 = vpop.f32.mrb[0].mxu0
    %v6028 = vadd.f32 %v5848, %v6027
    %v6029 = vpop.f32.mrb[0].mxu0
    %v6030 = vadd.f32 %v5848, %v6029
    %v6031 = vpop.f32.mrb[0].mxu0
    %v6032 = vadd.f32 %v5853, %v6031
    %v6033 = vpop.f32.mrb[0].mxu0
    %v6034 = vadd.f32 %v5853, %v6033
    %6035 = vdwg.mxu0
    %6036 = vmatprep.subr.bf16.mxu0 %v5824
    %6037 = vmatpush1.bf16.msra.mxu0 %v5823
    %6038 = vmatprep.subr.bf16.mxu0 %v5838
    %6039 = vmatpush1.bf16.msra.mxu0 %v5837
    %6040 = vmatprep.subr.bf16.mxu0 0
    %6041 = vmatpush1.bf16.msra.mxu0 0
    %6042 = vmatprep.subr.bf16.mxu0 0
    %6043 = vmatpush1.bf16.msra.mxu0 0
    %6044 = vmatprep.subr.bf16.mxu0 0
    %6045 = vmatpush1.bf16.msra.mxu0 0
    %6046 = vmatprep.subr.bf16.mxu0 0
    %6047 = vmatpush1.bf16.msra.mxu0 0
    %6048 = vmatprep.subr.bf16.mxu0 0
    %6049 = vmatpush1.bf16.msra.mxu0 0
    %6050 = vmatprep.subr.bf16.mxu0 0
    %6051 = vmatpush1.bf16.msra.mxu0 0
    %6052 = vmatprep.subr.bf16.mxu0 0
    %6053 = vmatpush1.bf16.msra.mxu0 0
    %6054 = vmatprep.subr.bf16.mxu0 0
    %6055 = vmatpush1.bf16.msra.mxu0 0
    %6056 = vmatprep.subr.bf16.mxu0 0
    %6057 = vmatpush1.bf16.msra.mxu0 0
    %6058 = vmatprep.subr.bf16.mxu0 0
    %6059 = vmatpush1.bf16.msra.mxu0 0
    %6060 = vmatprep.subr.bf16.mxu0 0
    %6061 = vmatpush1.bf16.msra.mxu0 0
    %6062 = vmatprep.subr.bf16.mxu0 0
    %6063 = vmatpush1.bf16.msra.mxu0 0
    %6064 = vmatprep.subr.bf16.mxu0 0
    %6065 = vmatpush1.bf16.msra.mxu0 0
    %6066 = vmatprep.subr.bf16.mxu0 0
    %6067 = vmatpush1.bf16.msra.mxu0 0
    %6068 = vmatprep.mubr.bf16.mxu0 0
    %6069 = vmatmul.mubr.bf16.gmra.mrb[0].mxu0 %v5862
    %v6070 = vpop.f32.mrb[0].mxu0
    %v6071 = vadd.f32 %v5848, %v6070
    %v6072 = vpop.f32.mrb[0].mxu0
    %v6073 = vadd.f32 %v5848, %v6072
    %v6074 = vpop.f32.mrb[0].mxu0
    %v6075 = vadd.f32 %v5853, %v6074
    %v6076 = vpop.f32.mrb[0].mxu0
    %v6077 = vadd.f32 %v5853, %v6076
    %6078 = vdwg.mxu0
    %6079 = vmatprep.subr.bf16.mxu0 %v5826
    %6080 = vmatpush1.bf16.msra.mxu0 %v5825
    %6081 = vmatprep.subr.bf16.mxu0 %v5840
    %6082 = vmatpush1.bf16.msra.mxu0 %v5839
    %6083 = vmatprep.subr.bf16.mxu0 0
    %6084 = vmatpush1.bf16.msra.mxu0 0
    %6085 = vmatprep.subr.bf16.mxu0 0
    %6086 = vmatpush1.bf16.msra.mxu0 0
    %6087 = vmatprep.subr.bf16.mxu0 0
    %6088 = vmatpush1.bf16.msra.mxu0 0
    %6089 = vmatprep.subr.bf16.mxu0 0
    %6090 = vmatpush1.bf16.msra.mxu0 0
    %6091 = vmatprep.subr.bf16.mxu0 0
    %6092 = vmatpush1.bf16.msra.mxu0 0
    %6093 = vmatprep.subr.bf16.mxu0 0
    %6094 = vmatpush1.bf16.msra.mxu0 0
    %6095 = vmatprep.subr.bf16.mxu0 0
    %6096 = vmatpush1.bf16.msra.mxu0 0
    %6097 = vmatprep.subr.bf16.mxu0 0
    %6098 = vmatpush1.bf16.msra.mxu0 0
    %6099 = vmatprep.subr.bf16.mxu0 0
    %6100 = vmatpush1.bf16.msra.mxu0 0
    %6101 = vmatprep.subr.bf16.mxu0 0
    %6102 = vmatpush1.bf16.msra.mxu0 0
    %6103 = vmatprep.subr.bf16.mxu0 0
    %6104 = vmatpush1.bf16.msra.mxu0 0
    %6105 = vmatprep.subr.bf16.mxu0 0
    %6106 = vmatpush1.bf16.msra.mxu0 0
    %6107 = vmatprep.subr.bf16.mxu0 0
    %6108 = vmatpush1.bf16.msra.mxu0 0
    %6109 = vmatprep.subr.bf16.mxu0 0
    %6110 = vmatpush1.bf16.msra.mxu0 0
    %6111 = vmatprep.mubr.bf16.mxu0 0
    %6112 = vmatmul.mubr.bf16.gmra.mrb[0].mxu0 %v5862
    %v6113 = vpop.f32.mrb[0].mxu0
    %v6114 = vadd.f32 %v5848, %v6113
    %v6115 = vpop.f32.mrb[0].mxu0
    %v6116 = vadd.f32 %v5848, %v6115
    %v6117 = vpop.f32.mrb[0].mxu0
    %v6118 = vadd.f32 %v5853, %v6117
    %v6119 = vpop.f32.mrb[0].mxu0
    %v6120 = vadd.f32 %v5853, %v6119
    %6121 = vdwg.mxu0
    %6122 = vmatprep.subr.bf16.mxu0 %v5828
    %6123 = vmatpush1.bf16.msra.mxu0 %v5827
    %6124 = vmatprep.subr.bf16.mxu0 %v5842
    %6125 = vmatpush1.bf16.msra.mxu0 %v5841
    %6126 = vmatprep.subr.bf16.mxu0 0
    %6127 = vmatpush1.bf16.msra.mxu0 0
    %6128 = vmatprep.subr.bf16.mxu0 0
    %6129 = vmatpush1.bf16.msra.mxu0 0
    %6130 = vmatprep.subr.bf16.mxu0 0
    %6131 = vmatpush1.bf16.msra.mxu0 0
    %6132 = vmatprep.subr.bf16.mxu0 0
    %6133 = vmatpush1.bf16.msra.mxu0 0
    %6134 = vmatprep.subr.bf16.mxu0 0
    %6135 = vmatpush1.bf16.msra.mxu0 0
    %6136 = vmatprep.subr.bf16.mxu0 0
    %6137 = vmatpush1.bf16.msra.mxu0 0
    %6138 = vmatprep.subr.bf16.mxu0 0
    %6139 = vmatpush1.bf16.msra.mxu0 0
    %6140 = vmatprep.subr.bf16.mxu0 0
    %6141 = vmatpush1.bf16.msra.mxu0 0
    %6142 = vmatprep.subr.bf16.mxu0 0
    %6143 = vmatpush1.bf16.msra.mxu0 0
    %6144 = vmatprep.subr.bf16.mxu0 0
    %6145 = vmatpush1.bf16.msra.mxu0 0
    %6146 = vmatprep.subr.bf16.mxu0 0
    %6147 = vmatpush1.bf16.msra.mxu0 0
    %6148 = vmatprep.subr.bf16.mxu0 0
    %6149 = vmatpush1.bf16.msra.mxu0 0
    %6150 = vmatprep.subr.bf16.mxu0 0
    %6151 = vmatpush1.bf16.msra.mxu0 0
    %6152 = vmatprep.subr.bf16.mxu0 0
    %6153 = vmatpush1.bf16.msra.mxu0 0
    %6154 = vmatprep.mubr.bf16.mxu0 0
    %6155 = vmatmul.mubr.bf16.gmra.mrb[0].mxu0 %v5862
    %v6156 = vpop.f32.mrb[0].mxu0
    %v6157 = vadd.f32 %v5848, %v6156
    %v6158 = vpop.f32.mrb[0].mxu0
    %v6159 = vadd.f32 %v5848, %v6158
    %v6160 = vpop.f32.mrb[0].mxu0
    %v6161 = vadd.f32 %v5853, %v6160
    %v6162 = vpop.f32.mrb[0].mxu0
    %v6163 = vadd.f32 %v5853, %v6162
    %6164 = vdwg.mxu0
    %v6165 = vmax.f32 %v5899, 0.0
    %v6166 = vmax.f32 %v5901, 0.0
    %v6167 = vmax.f32 %v5942, 0.0
    %v6168 = vmax.f32 %v5944, 0.0
    %v6169 = vmax.f32 %v5985, 0.0
    %v6170 = vmax.f32 %v5987, 0.0
    %v6171 = vmax.f32 %v6028, 0.0
    %v6172 = vmax.f32 %v6030, 0.0
    %v6173 = vmax.f32 %v6071, 0.0
    %v6174 = vmax.f32 %v6073, 0.0
    %v6175 = vmax.f32 %v6114, 0.0
    %v6176 = vmax.f32 %v6116, 0.0
    %v6177 = vmax.f32 %v6157, 0.0
    %v6178 = vmax.f32 %v6159, 0.0
    %v6179 = vmax.f32 %v5903, 0.0
    %v6180 = vmax.f32 %v5905, 0.0
    %v6181 = vmax.f32 %v5946, 0.0
    %v6182 = vmax.f32 %v5948, 0.0
    %v6183 = vmax.f32 %v5989, 0.0
    %v6184 = vmax.f32 %v5991, 0.0
    %v6185 = vmax.f32 %v6032, 0.0
    %v6186 = vmax.f32 %v6034, 0.0
    %v6187 = vmax.f32 %v6075, 0.0
    %v6188 = vmax.f32 %v6077, 0.0
    %v6189 = vmax.f32 %v6118, 0.0
    %v6190 = vmax.f32 %v6120, 0.0
    %v6191 = vmax.f32 %v6161, 0.0
    %v6192 = vmax.f32 %v6163, 0.0
    %v6193 = vpack.c.bf16 %v6179, %v6165
    %v6194 = vpack.c.bf16 %v6180, %v6166
    %v6195 = vpack.c.bf16 %v6181, %v6167
    %v6196 = vpack.c.bf16 %v6182, %v6168
    %v6197 = vpack.c.bf16 %v6183, %v6169
    %v6198 = vpack.c.bf16 %v6184, %v6170
    %v6199 = vpack.c.bf16 %v6185, %v6171
    %v6200 = vpack.c.bf16 %v6186, %v6172
    %v6201 = vpack.c.bf16 %v6187, %v6173
    %v6202 = vpack.c.bf16 %v6188, %v6174
    %v6203 = vpack.c.bf16 %v6189, %v6175
    %v6204 = vpack.c.bf16 %v6190, %v6176
    %v6205 = vpack.c.bf16 %v6191, %v6177
    %v6206 = vpack.c.bf16 %v6192, %v6178
    %6207 = vst [vmem:[#allocation3] sm:$0xff] %v6193
    %6208 = vst [vmem:[#allocation3 + $0x8] sm:$0xff] %v6194
    %6209 = vst [vmem:[#allocation3 + $0x10] sm:$0xff] %v6195
    %6210 = vst [vmem:[#allocation3 + $0x18] sm:$0xff] %v6196
    %6211 = vst [vmem:[#allocation3 + $0x20] sm:$0xff] %v6197
    %6212 = vst [vmem:[#allocation3 + $0x28] sm:$0xff] %v6198
    %6213 = vst [vmem:[#allocation3 + $0x30] sm:$0xff] %v6199
    %6214 = vst [vmem:[#allocation3 + $0x38] sm:$0xff] %v6200
    %6215 = vst [vmem:[#allocation3 + $0x40] sm:$0xff] %v6201
    %6216 = vst [vmem:[#allocation3 + $0x48] sm:$0xff] %v6202
    %6217 = vst [vmem:[#allocation3 + $0x50] sm:$0xff] %v6203
    %6218 = vst [vmem:[#allocation3 + $0x58] sm:$0xff] %v6204
    %6219 = vst [vmem:[#allocation3 + $0x60] sm:$0xff] %v6205
    %6220 = vst [vmem:[#allocation3 + $0x68] sm:$0xff] %v6206
    %v6221 = vld [vmem:[#allocation4] sm:$0xff]
    %v6222 = vld [vmem:[#allocation4 + $0x8] sm:$0xff]
    %v6223 = vld [vmem:[#allocation4 + $0x10] sm:$0xff]
    %v6224 = vld [vmem:[#allocation4 + $0x18] sm:$0xff]
    %v6225 = vld [vmem:[#allocation4 + $0x20] sm:$0xff]
    %v6226 = vld [vmem:[#allocation4 + $0x28] sm:$0xff]
    %v6227 = vld [vmem:[#allocation4 + $0x30] sm:$0xff]
    %v6228 = vld [vmem:[#allocation4 + $0x38] sm:$0xff]
    %v6229 = vld [vmem:[#allocation4 + $0x40] sm:$0xff]
    %v6230 = vld [vmem:[#allocation4 + $0x48] sm:$0xff]
    %v6231 = vld [vmem:[#allocation4 + $0x50] sm:$0xff]
    %v6232 = vld [vmem:[#allocation4 + $0x58] sm:$0xff]
    %v6233 = vld [vmem:[#allocation4 + $0x60] sm:$0xff]
    %v6234 = vld [vmem:[#allocation4 + $0x68] sm:$0xff]
    %v6235 = vld [vmem:[#allocation4 + $0x70] sm:$0xff]
    %v6236 = vld [vmem:[#allocation4 + $0x78] sm:$0xff]
    %v6237 = vld [vmem:[#allocation4 + $0x80] sm:$0xff]
    %v6238 = vld [vmem:[#allocation4 + $0x88] sm:$0xff]
    %v6239 = vld [vmem:[#allocation4 + $0x90] sm:$0xff]
    %v6240 = vld [vmem:[#allocation4 + $0x98] sm:$0xff]
    %v6241 = vld [vmem:[#allocation4 + $0xa0] sm:$0xff]
    %v6242 = vld [vmem:[#allocation4 + $0xa8] sm:$0xff]
    %v6243 = vld [vmem:[#allocation4 + $0xb0] sm:$0xff]
    %v6244 = vld [vmem:[#allocation4 + $0xb8] sm:$0xff]
    %v6245 = vld [vmem:[#allocation4 + $0xc0] sm:$0xff]
    %v6246 = vld [vmem:[#allocation4 + $0xc8] sm:$0xff]
    %v6247 = vld [vmem:[#allocation4 + $0xd0] sm:$0xff]
    %v6248 = vld [vmem:[#allocation4 + $0xd8] sm:$0xff]
    %v6249 = vld [vmem:[#allocation4 + $0xe0] sm:$0xff]
    %v6250 = vld [vmem:[#allocation4 + $0xe8] sm:$0xff]
    %v6251 = vld [vmem:[#allocation4 + $0xf0] sm:$0xff]
    %v6252 = vld [vmem:[#allocation4 + $0xf8] sm:$0xff]
    %v6253 = vld [vmem:[#allocation4 + $0x100] sm:$0xff]
    %v6254 = vld [vmem:[#allocation4 + $0x108] sm:$0xff]
    %v6255 = vld [vmem:[#allocation4 + $0x110] sm:$0xff]
    %v6256 = vld [vmem:[#allocation4 + $0x118] sm:$0xff]
    %v6257 = vld [vmem:[#allocation4 + $0x120] sm:$0xff]
    %v6258 = vld [vmem:[#allocation4 + $0x128] sm:$0xff]
    %v6259 = vld [vmem:[#allocation4 + $0x130] sm:$0xff]
    %v6260 = vld [vmem:[#allocation4 + $0x138] sm:$0xff]
    %v6261 = vld [vmem:[#allocation4 + $0x140] sm:$0xff]
    %v6262 = vld [vmem:[#allocation4 + $0x148] sm:$0xff]
    %v6263 = vld [vmem:[#allocation4 + $0x150] sm:$0xff]
    %v6264 = vld [vmem:[#allocation4 + $0x158] sm:$0xff]
    %v6265 = vld [vmem:[#allocation4 + $0x160] sm:$0xff]
    %v6266 = vld [vmem:[#allocation4 + $0x168] sm:$0xff]
    %v6267 = vld [vmem:[#allocation4 + $0x170] sm:$0xff]
    %v6268 = vld [vmem:[#allocation4 + $0x178] sm:$0xff]
    %v6269 = vld [vmem:[#allocation4 + $0x180] sm:$0xff]
    %v6270 = vld [vmem:[#allocation4 + $0x188] sm:$0xff]
    %v6271 = vld [vmem:[#allocation4 + $0x190] sm:$0xff]
    %v6272 = vld [vmem:[#allocation4 + $0x198] sm:$0xff]
    %v6273 = vld [vmem:[#allocation4 + $0x1a0] sm:$0xff]
    %v6274 = vld [vmem:[#allocation4 + $0x1a8] sm:$0xff]
    %v6275 = vld [vmem:[#allocation4 + $0x1b0] sm:$0xff]
    %v6276 = vld [vmem:[#allocation4 + $0x1b8] sm:$0xff]
    %v6277 = vld [vmem:[#allocation4 + $0x1c0] sm:$0xff]
    %v6278 = vld [vmem:[#allocation4 + $0x1c8] sm:$0xff]
    %v6279 = vld [vmem:[#allocation4 + $0x1d0] sm:$0xff]
    %v6280 = vld [vmem:[#allocation4 + $0x1d8] sm:$0xff]
    %v6281 = vld [vmem:[#allocation4 + $0x1e0] sm:$0xff]
    %v6282 = vld [vmem:[#allocation4 + $0x1e8] sm:$0xff]
    %v6283 = vld [vmem:[#allocation4 + $0x1f0] sm:$0xff]
    %v6284 = vld [vmem:[#allocation4 + $0x1f8] sm:$0xff]
    %v6285 = vld [vmem:[#allocation4 + $0x200] sm:$0xff]
    %v6286 = vld [vmem:[#allocation4 + $0x208] sm:$0xff]
    %v6287 = vld [vmem:[#allocation4 + $0x210] sm:$0xff]
    %v6288 = vld [vmem:[#allocation4 + $0x218] sm:$0xff]
    %v6289 = vld [vmem:[#allocation4 + $0x220] sm:$0xff]
    %v6290 = vld [vmem:[#allocation4 + $0x228] sm:$0xff]
    %v6291 = vld [vmem:[#allocation4 + $0x230] sm:$0xff]
    %v6292 = vld [vmem:[#allocation4 + $0x238] sm:$0xff]
    %v6293 = vld [vmem:[#allocation4 + $0x240] sm:$0xff]
    %v6294 = vld [vmem:[#allocation4 + $0x248] sm:$0xff]
    %v6295 = vld [vmem:[#allocation4 + $0x250] sm:$0xff]
    %v6296 = vld [vmem:[#allocation4 + $0x258] sm:$0xff]
    %v6297 = vld [vmem:[#allocation4 + $0x260] sm:$0xff]
    %v6298 = vld [vmem:[#allocation4 + $0x268] sm:$0xff]
    %v6299 = vld [vmem:[#allocation4 + $0x270] sm:$0xff]
    %v6300 = vld [vmem:[#allocation4 + $0x278] sm:$0xff]
    %v6301 = vld [vmem:[#allocation4 + $0x280] sm:$0xff]
    %v6302 = vld [vmem:[#allocation4 + $0x288] sm:$0xff]
    %v6303 = vld [vmem:[#allocation4 + $0x290] sm:$0xff]
    %v6304 = vld [vmem:[#allocation4 + $0x298] sm:$0xff]
    %v6305 = vld [vmem:[#allocation4 + $0x2a0] sm:$0xff]
    %v6306 = vld [vmem:[#allocation4 + $0x2a8] sm:$0xff]
    %v6307 = vld [vmem:[#allocation4 + $0x2b0] sm:$0xff]
    %v6308 = vld [vmem:[#allocation4 + $0x2b8] sm:$0xff]
    %v6309 = vld [vmem:[#allocation4 + $0x2c0] sm:$0xff]
    %v6310 = vld [vmem:[#allocation4 + $0x2c8] sm:$0xff]
    %v6311 = vld [vmem:[#allocation4 + $0x2d0] sm:$0xff]
    %v6312 = vld [vmem:[#allocation4 + $0x2d8] sm:$0xff]
    %v6313 = vld [vmem:[#allocation4 + $0x2e0] sm:$0xff]
    %v6314 = vld [vmem:[#allocation4 + $0x2e8] sm:$0xff]
    %v6315 = vld [vmem:[#allocation4 + $0x2f0] sm:$0xff]
    %v6316 = vld [vmem:[#allocation4 + $0x2f8] sm:$0xff]
    %v6317 = vld [vmem:[#allocation4 + $0x300] sm:$0xff]
    %v6318 = vld [vmem:[#allocation4 + $0x308] sm:$0xff]
    %v6319 = vld [vmem:[#allocation4 + $0x310] sm:$0xff]
    %v6320 = vld [vmem:[#allocation4 + $0x318] sm:$0xff]
    %v6321 = vld [vmem:[#allocation4 + $0x320] sm:$0xff]
    %v6322 = vld [vmem:[#allocation4 + $0x328] sm:$0xff]
    %v6323 = vld [vmem:[#allocation4 + $0x330] sm:$0xff]
    %v6324 = vld [vmem:[#allocation4 + $0x338] sm:$0xff]
    %v6325 = vld [vmem:[#allocation4 + $0x340] sm:$0xff]
    %v6326 = vld [vmem:[#allocation4 + $0x348] sm:$0xff]
    %v6327 = vld [vmem:[#allocation4 + $0x350] sm:$0xff]
    %v6328 = vld [vmem:[#allocation4 + $0x358] sm:$0x33]
    %v6329 = vld [vmem:[#allocation3] sm:$0xff]
    %v6330 = vld [vmem:[#allocation3 + $0x8] sm:$0xff]
    %v6331 = vld [vmem:[#allocation3 + $0x10] sm:$0xff]
    %v6332 = vld [vmem:[#allocation3 + $0x18] sm:$0xff]
    %v6333 = vld [vmem:[#allocation3 + $0x20] sm:$0xff]
    %v6334 = vld [vmem:[#allocation3 + $0x28] sm:$0xff]
    %v6335 = vld [vmem:[#allocation3 + $0x30] sm:$0xff]
    %6343 = vrot.lane.b32.xlu0 %v6329, 127
    %v6344 = vpop.permute.xlu0 %6343
    %6345 = vrot.lane.b32.xlu0 %v6330, 127
    %v6346 = vpop.permute.xlu0 %6345
    %6347 = vrot.lane.b32.xlu0 %v6331, 127
    %v6348 = vpop.permute.xlu0 %6347
    %6349 = vrot.lane.b32.xlu0 %v6332, 127
    %v6350 = vpop.permute.xlu0 %6349
    %6351 = vrot.lane.b32.xlu0 %v6333, 127
    %v6352 = vpop.permute.xlu0 %6351
    %6353 = vrot.lane.b32.xlu0 %v6334, 127
    %v6354 = vpop.permute.xlu0 %6353
    %6355 = vrot.lane.b32.xlu0 %v6335, 127
    %v6356 = vpop.permute.xlu0 %6355
    %v6357 = vsel %vm200, %v6344, %v6346
    %v6358 = vsel %vm200, %v6346, %v6348
    %v6359 = vsel %vm200, %v6348, %v6350
    %v6360 = vsel %vm200, %v6350, %v6352
    %v6361 = vsel %vm200, %v6352, %v6354
    %v6362 = vsel %vm200, %v6354, %v6356
    %v6370 = vmax.bf16 %v6329, %v6357
    %v6371 = vmax.bf16 %v6330, %v6358
    %v6372 = vmax.bf16 %v6331, %v6359
    %v6373 = vmax.bf16 %v6332, %v6360
    %v6374 = vmax.bf16 %v6333, %v6361
    %v6375 = vmax.bf16 %v6334, %v6362
    %v6376 = vmax.bf16 %v6335, %v6356
    %6384 = vrot.lane.b32.xlu0 %v6370, 96
    %v6385 = vpop.permute.xlu0 %6384
    %6386 = vrot.lane.b32.xlu0 %v6371, 96
    %v6387 = vpop.permute.xlu0 %6386
    %6388 = vrot.lane.b32.xlu0 %v6372, 96
    %v6389 = vpop.permute.xlu0 %6388
    %6390 = vrot.lane.b32.xlu0 %v6373, 96
    %v6391 = vpop.permute.xlu0 %6390
    %6392 = vrot.lane.b32.xlu0 %v6374, 96
    %v6393 = vpop.permute.xlu0 %6392
    %6394 = vrot.lane.b32.xlu0 %v6375, 96
    %v6395 = vpop.permute.xlu0 %6394
    %6396 = vrot.lane.b32.xlu0 %v6376, 96
    %v6397 = vpop.permute.xlu0 %6396
    %v6398 = vsel %vm675, %v6385, %v6387
    %v6399 = vsel %vm675, %v6387, %v6389
    %v6400 = vsel %vm675, %v6389, %v6391
    %v6401 = vsel %vm675, %v6391, %v6393
    %v6402 = vsel %vm675, %v6393, %v6395
    %v6403 = vsel %vm675, %v6395, %v6397
    %v6411 = vmax.bf16 %v6370, %v6398
    %v6412 = vmax.bf16 %v6371, %v6399
    %v6413 = vmax.bf16 %v6372, %v6400
    %v6414 = vmax.bf16 %v6373, %v6401
    %v6415 = vmax.bf16 %v6374, %v6402
    %v6416 = vmax.bf16 %v6375, %v6403
    %v6417 = vmax.bf16 %v6376, %v6397
    %v6526 = vunpack.c.l.b16 %v6221
    %v6527 = vunpack.c.h.b16 %v6221
    %v6528 = vunpack.c.l.b16 %v6222
    %v6529 = vunpack.c.h.b16 %v6222
    %v6530 = vunpack.c.l.b16 %v6223
    %v6531 = vunpack.c.h.b16 %v6223
    %v6532 = vunpack.c.l.b16 %v6224
    %v6533 = vunpack.c.h.b16 %v6224
    %v6534 = vunpack.c.l.b16 %v6225
    %v6535 = vunpack.c.h.b16 %v6225
    %v6536 = vunpack.c.l.b16 %v6226
    %v6537 = vunpack.c.h.b16 %v6226
    %v6538 = vunpack.c.l.b16 %v6227
    %v6539 = vunpack.c.h.b16 %v6227
    %v6540 = vunpack.c.l.b16 %v6228
    %v6541 = vunpack.c.h.b16 %v6228
    %v6542 = vunpack.c.l.b16 %v6229
    %v6543 = vunpack.c.h.b16 %v6229
    %v6544 = vunpack.c.l.b16 %v6230
    %v6545 = vunpack.c.h.b16 %v6230
    %v6546 = vunpack.c.l.b16 %v6231
    %v6547 = vunpack.c.h.b16 %v6231
    %v6548 = vunpack.c.l.b16 %v6232
    %v6549 = vunpack.c.h.b16 %v6232
    %v6550 = vunpack.c.l.b16 %v6233
    %v6551 = vunpack.c.h.b16 %v6233
    %v6552 = vunpack.c.l.b16 %v6234
    %v6553 = vunpack.c.h.b16 %v6234
    %v6554 = vunpack.c.l.b16 %v6235
    %v6555 = vunpack.c.h.b16 %v6235
    %v6556 = vunpack.c.l.b16 %v6236
    %v6557 = vunpack.c.h.b16 %v6236
    %v6558 = vunpack.c.l.b16 %v6237
    %v6559 = vunpack.c.h.b16 %v6237
    %v6560 = vunpack.c.l.b16 %v6238
    %v6561 = vunpack.c.h.b16 %v6238
    %v6562 = vunpack.c.l.b16 %v6239
    %v6563 = vunpack.c.h.b16 %v6239
    %v6564 = vunpack.c.l.b16 %v6240
    %v6565 = vunpack.c.h.b16 %v6240
    %v6566 = vunpack.c.l.b16 %v6241
    %v6567 = vunpack.c.h.b16 %v6241
    %v6568 = vunpack.c.l.b16 %v6242
    %v6569 = vunpack.c.h.b16 %v6242
    %v6570 = vunpack.c.l.b16 %v6243
    %v6571 = vunpack.c.h.b16 %v6243
    %v6572 = vunpack.c.l.b16 %v6244
    %v6573 = vunpack.c.h.b16 %v6244
    %v6574 = vunpack.c.l.b16 %v6245
    %v6575 = vunpack.c.h.b16 %v6245
    %v6576 = vunpack.c.l.b16 %v6246
    %v6577 = vunpack.c.h.b16 %v6246
    %v6578 = vunpack.c.l.b16 %v6247
    %v6579 = vunpack.c.h.b16 %v6247
    %v6580 = vunpack.c.l.b16 %v6248
    %v6581 = vunpack.c.h.b16 %v6248
    %v6582 = vunpack.c.l.b16 %v6249
    %v6583 = vunpack.c.h.b16 %v6249
    %v6584 = vunpack.c.l.b16 %v6250
    %v6585 = vunpack.c.h.b16 %v6250
    %v6586 = vunpack.c.l.b16 %v6251
    %v6587 = vunpack.c.h.b16 %v6251
    %v6588 = vunpack.c.l.b16 %v6252
    %v6589 = vunpack.c.h.b16 %v6252
    %v6590 = vunpack.c.l.b16 %v6253
    %v6591 = vunpack.c.h.b16 %v6253
    %v6592 = vunpack.c.l.b16 %v6254
    %v6593 = vunpack.c.h.b16 %v6254
    %v6594 = vunpack.c.l.b16 %v6255
    %v6595 = vunpack.c.h.b16 %v6255
    %v6596 = vunpack.c.l.b16 %v6256
    %v6597 = vunpack.c.h.b16 %v6256
    %v6598 = vunpack.c.l.b16 %v6257
    %v6599 = vunpack.c.h.b16 %v6257
    %v6600 = vunpack.c.l.b16 %v6258
    %v6601 = vunpack.c.h.b16 %v6258
    %v6602 = vunpack.c.l.b16 %v6259
    %v6603 = vunpack.c.h.b16 %v6259
    %v6604 = vunpack.c.l.b16 %v6260
    %v6605 = vunpack.c.h.b16 %v6260
    %v6606 = vunpack.c.l.b16 %v6261
    %v6607 = vunpack.c.h.b16 %v6261
    %v6608 = vunpack.c.l.b16 %v6262
    %v6609 = vunpack.c.h.b16 %v6262
    %v6610 = vunpack.c.l.b16 %v6263
    %v6611 = vunpack.c.h.b16 %v6263
    %v6612 = vunpack.c.l.b16 %v6264
    %v6613 = vunpack.c.h.b16 %v6264
    %v6614 = vunpack.c.l.b16 %v6265
    %v6615 = vunpack.c.h.b16 %v6265
    %v6616 = vunpack.c.l.b16 %v6266
    %v6617 = vunpack.c.h.b16 %v6266
    %v6618 = vunpack.c.l.b16 %v6267
    %v6619 = vunpack.c.h.b16 %v6267
    %v6620 = vunpack.c.l.b16 %v6268
    %v6621 = vunpack.c.h.b16 %v6268
    %v6622 = vunpack.c.l.b16 %v6269
    %v6623 = vunpack.c.h.b16 %v6269
    %v6624 = vunpack.c.l.b16 %v6270
    %v6625 = vunpack.c.h.b16 %v6270
    %v6626 = vunpack.c.l.b16 %v6271
    %v6627 = vunpack.c.h.b16 %v6271
    %v6628 = vunpack.c.l.b16 %v6272
    %v6629 = vunpack.c.h.b16 %v6272
    %v6630 = vunpack.c.l.b16 %v6273
    %v6631 = vunpack.c.h.b16 %v6273
    %v6632 = vunpack.c.l.b16 %v6274
    %v6633 = vunpack.c.h.b16 %v6274
    %v6634 = vunpack.c.l.b16 %v6275
    %v6635 = vunpack.c.h.b16 %v6275
    %v6636 = vunpack.c.l.b16 %v6276
    %v6637 = vunpack.c.h.b16 %v6276
    %v6638 = vunpack.c.l.b16 %v6277
    %v6639 = vunpack.c.h.b16 %v6277
    %v6640 = vunpack.c.l.b16 %v6278
    %v6641 = vunpack.c.h.b16 %v6278
    %v6642 = vunpack.c.l.b16 %v6279
    %v6643 = vunpack.c.h.b16 %v6279
    %v6644 = vunpack.c.l.b16 %v6280
    %v6645 = vunpack.c.h.b16 %v6280
    %v6646 = vunpack.c.l.b16 %v6281
    %v6647 = vunpack.c.h.b16 %v6281
    %v6648 = vunpack.c.l.b16 %v6282
    %v6649 = vunpack.c.h.b16 %v6282
    %v6650 = vunpack.c.l.b16 %v6283
    %v6651 = vunpack.c.h.b16 %v6283
    %v6652 = vunpack.c.l.b16 %v6284
    %v6653 = vunpack.c.h.b16 %v6284
    %v6654 = vunpack.c.l.b16 %v6285
    %v6655 = vunpack.c.h.b16 %v6285
    %v6656 = vunpack.c.l.b16 %v6286
    %v6657 = vunpack.c.h.b16 %v6286
    %v6658 = vunpack.c.l.b16 %v6287
    %v6659 = vunpack.c.h.b16 %v6287
    %v6660 = vunpack.c.l.b16 %v6288
    %v6661 = vunpack.c.h.b16 %v6288
    %v6662 = vunpack.c.l.b16 %v6289
    %v6663 = vunpack.c.h.b16 %v6289
    %v6664 = vunpack.c.l.b16 %v6290
    %v6665 = vunpack.c.h.b16 %v6290
    %v6666 = vunpack.c.l.b16 %v6291
    %v6667 = vunpack.c.h.b16 %v6291
    %v6668 = vunpack.c.l.b16 %v6292
    %v6669 = vunpack.c.h.b16 %v6292
    %v6670 = vunpack.c.l.b16 %v6293
    %v6671 = vunpack.c.h.b16 %v6293
    %v6672 = vunpack.c.l.b16 %v6294
    %v6673 = vunpack.c.h.b16 %v6294
    %v6674 = vunpack.c.l.b16 %v6295
    %v6675 = vunpack.c.h.b16 %v6295
    %v6676 = vunpack.c.l.b16 %v6296
    %v6677 = vunpack.c.h.b16 %v6296
    %v6678 = vunpack.c.l.b16 %v6297
    %v6679 = vunpack.c.h.b16 %v6297
    %v6680 = vunpack.c.l.b16 %v6298
    %v6681 = vunpack.c.h.b16 %v6298
    %v6682 = vunpack.c.l.b16 %v6299
    %v6683 = vunpack.c.h.b16 %v6299
    %v6684 = vunpack.c.l.b16 %v6300
    %v6685 = vunpack.c.h.b16 %v6300
    %v6686 = vunpack.c.l.b16 %v6301
    %v6687 = vunpack.c.h.b16 %v6301
    %v6688 = vunpack.c.l.b16 %v6302
    %v6689 = vunpack.c.h.b16 %v6302
    %v6690 = vunpack.c.l.b16 %v6303
    %v6691 = vunpack.c.h.b16 %v6303
    %v6692 = vunpack.c.l.b16 %v6304
    %v6693 = vunpack.c.h.b16 %v6304
    %v6694 = vunpack.c.l.b16 %v6305
    %v6695 = vunpack.c.h.b16 %v6305
    %v6696 = vunpack.c.l.b16 %v6306
    %v6697 = vunpack.c.h.b16 %v6306
    %v6698 = vunpack.c.l.b16 %v6307
    %v6699 = vunpack.c.h.b16 %v6307
    %v6700 = vunpack.c.l.b16 %v6308
    %v6701 = vunpack.c.h.b16 %v6308
    %v6702 = vunpack.c.l.b16 %v6309
    %v6703 = vunpack.c.h.b16 %v6309
    %v6704 = vunpack.c.l.b16 %v6310
    %v6705 = vunpack.c.h.b16 %v6310
    %v6706 = vunpack.c.l.b16 %v6311
    %v6707 = vunpack.c.h.b16 %v6311
    %v6708 = vunpack.c.l.b16 %v6312
    %v6709 = vunpack.c.h.b16 %v6312
    %v6710 = vunpack.c.l.b16 %v6313
    %v6711 = vunpack.c.h.b16 %v6313
    %v6712 = vunpack.c.l.b16 %v6314
    %v6713 = vunpack.c.h.b16 %v6314
    %v6714 = vunpack.c.l.b16 %v6315
    %v6715 = vunpack.c.h.b16 %v6315
    %v6716 = vunpack.c.l.b16 %v6316
    %v6717 = vunpack.c.h.b16 %v6316
    %v6718 = vunpack.c.l.b16 %v6317
    %v6719 = vunpack.c.h.b16 %v6317
    %v6720 = vunpack.c.l.b16 %v6318
    %v6721 = vunpack.c.h.b16 %v6318
    %v6722 = vunpack.c.l.b16 %v6319
    %v6723 = vunpack.c.h.b16 %v6319
    %v6724 = vunpack.c.l.b16 %v6320
    %v6725 = vunpack.c.h.b16 %v6320
    %v6726 = vunpack.c.l.b16 %v6321
    %v6727 = vunpack.c.h.b16 %v6321
    %v6728 = vunpack.c.l.b16 %v6322
    %v6729 = vunpack.c.h.b16 %v6322
    %v6730 = vunpack.c.l.b16 %v6323
    %v6731 = vunpack.c.h.b16 %v6323
    %v6732 = vunpack.c.l.b16 %v6324
    %v6733 = vunpack.c.h.b16 %v6324
    %v6734 = vunpack.c.l.b16 %v6325
    %v6735 = vunpack.c.h.b16 %v6325
    %v6736 = vunpack.c.l.b16 %v6326
    %v6737 = vunpack.c.h.b16 %v6326
    %v6738 = vunpack.c.l.b16 %v6327
    %v6739 = vunpack.c.h.b16 %v6327
    %v6740 = vunpack.c.l.b16 %v6328
    %v6741 = vunpack.c.h.b16 %v6328
    %v6742 = vpack.c.b16 %v6528, %v6526
    %v6743 = vpack.c.b16 %v6529, %v6527
    %v6744 = vpack.c.b16 %v6532, %v6530
    %v6745 = vpack.c.b16 %v6533, %v6531
    %v6746 = vpack.c.b16 %v6536, %v6534
    %v6747 = vpack.c.b16 %v6537, %v6535
    %v6748 = vpack.c.b16 %v6540, %v6538
    %v6749 = vpack.c.b16 %v6541, %v6539
    %v6750 = vpack.c.b16 %v6544, %v6542
    %v6751 = vpack.c.b16 %v6545, %v6543
    %v6752 = vpack.c.b16 %v6548, %v6546
    %v6753 = vpack.c.b16 %v6549, %v6547
    %v6754 = vpack.c.b16 %v6552, %v6550
    %v6755 = vpack.c.b16 %v6553, %v6551
    %v6756 = vpack.c.b16 %v6556, %v6554
    %v6757 = vpack.c.b16 %v6557, %v6555
    %v6758 = vpack.c.b16 %v6560, %v6558
    %v6759 = vpack.c.b16 %v6561, %v6559
    %v6760 = vpack.c.b16 %v6564, %v6562
    %v6761 = vpack.c.b16 %v6565, %v6563
    %v6762 = vpack.c.b16 %v6568, %v6566
    %v6763 = vpack.c.b16 %v6569, %v6567
    %v6764 = vpack.c.b16 %v6572, %v6570
    %v6765 = vpack.c.b16 %v6573, %v6571
    %v6766 = vpack.c.b16 %v6576, %v6574
    %v6767 = vpack.c.b16 %v6577, %v6575
    %v6768 = vpack.c.b16 %v6580, %v6578
    %v6769 = vpack.c.b16 %v6581, %v6579
    %v6770 = vpack.c.b16 %v6584, %v6582
    %v6771 = vpack.c.b16 %v6585, %v6583
    %v6772 = vpack.c.b16 %v6588, %v6586
    %v6773 = vpack.c.b16 %v6589, %v6587
    %v6774 = vpack.c.b16 %v6592, %v6590
    %v6775 = vpack.c.b16 %v6593, %v6591
    %v6776 = vpack.c.b16 %v6596, %v6594
    %v6777 = vpack.c.b16 %v6597, %v6595
    %v6778 = vpack.c.b16 %v6600, %v6598
    %v6779 = vpack.c.b16 %v6601, %v6599
    %v6780 = vpack.c.b16 %v6604, %v6602
    %v6781 = vpack.c.b16 %v6605, %v6603
    %v6782 = vpack.c.b16 %v6608, %v6606
    %v6783 = vpack.c.b16 %v6609, %v6607
    %v6784 = vpack.c.b16 %v6612, %v6610
    %v6785 = vpack.c.b16 %v6613, %v6611
    %v6786 = vpack.c.b16 %v6616, %v6614
    %v6787 = vpack.c.b16 %v6617, %v6615
    %v6788 = vpack.c.b16 %v6620, %v6618
    %v6789 = vpack.c.b16 %v6621, %v6619
    %v6790 = vpack.c.b16 %v6624, %v6622
    %v6791 = vpack.c.b16 %v6625, %v6623
    %v6792 = vpack.c.b16 %v6628, %v6626
    %v6793 = vpack.c.b16 %v6629, %v6627
    %v6794 = vpack.c.b16 %v6632, %v6630
    %v6795 = vpack.c.b16 %v6633, %v6631
    %v6796 = vpack.c.b16 %v6636, %v6634
    %v6797 = vpack.c.b16 %v6637, %v6635
    %v6798 = vpack.c.b16 %v6640, %v6638
    %v6799 = vpack.c.b16 %v6641, %v6639
    %v6800 = vpack.c.b16 %v6644, %v6642
    %v6801 = vpack.c.b16 %v6645, %v6643
    %v6802 = vpack.c.b16 %v6648, %v6646
    %v6803 = vpack.c.b16 %v6649, %v6647
    %v6804 = vpack.c.b16 %v6652, %v6650
    %v6805 = vpack.c.b16 %v6653, %v6651
    %v6806 = vpack.c.b16 %v6656, %v6654
    %v6807 = vpack.c.b16 %v6657, %v6655
    %v6808 = vpack.c.b16 %v6660, %v6658
    %v6809 = vpack.c.b16 %v6661, %v6659
    %v6810 = vpack.c.b16 %v6664, %v6662
    %v6811 = vpack.c.b16 %v6665, %v6663
    %v6812 = vpack.c.b16 %v6668, %v6666
    %v6813 = vpack.c.b16 %v6669, %v6667
    %v6814 = vpack.c.b16 %v6672, %v6670
    %v6815 = vpack.c.b16 %v6673, %v6671
    %v6816 = vpack.c.b16 %v6676, %v6674
    %v6817 = vpack.c.b16 %v6677, %v6675
    %v6818 = vpack.c.b16 %v6680, %v6678
    %v6819 = vpack.c.b16 %v6681, %v6679
    %v6820 = vpack.c.b16 %v6684, %v6682
    %v6821 = vpack.c.b16 %v6685, %v6683
    %v6822 = vpack.c.b16 %v6688, %v6686
    %v6823 = vpack.c.b16 %v6689, %v6687
    %v6824 = vpack.c.b16 %v6692, %v6690
    %v6825 = vpack.c.b16 %v6693, %v6691
    %v6826 = vpack.c.b16 %v6696, %v6694
    %v6827 = vpack.c.b16 %v6697, %v6695
    %v6828 = vpack.c.b16 %v6700, %v6698
    %v6829 = vpack.c.b16 %v6701, %v6699
    %v6830 = vpack.c.b16 %v6704, %v6702
    %v6831 = vpack.c.b16 %v6705, %v6703
    %v6832 = vpack.c.b16 %v6708, %v6706
    %v6833 = vpack.c.b16 %v6709, %v6707
    %v6834 = vpack.c.b16 %v6712, %v6710
    %v6835 = vpack.c.b16 %v6713, %v6711
    %v6836 = vpack.c.b16 %v6716, %v6714
    %v6837 = vpack.c.b16 %v6717, %v6715
    %v6838 = vpack.c.b16 %v6720, %v6718
    %v6839 = vpack.c.b16 %v6721, %v6719
    %v6840 = vpack.c.b16 %v6724, %v6722
    %v6841 = vpack.c.b16 %v6725, %v6723
    %v6842 = vpack.c.b16 %v6728, %v6726
    %v6843 = vpack.c.b16 %v6729, %v6727
    %v6844 = vpack.c.b16 %v6732, %v6730
    %v6845 = vpack.c.b16 %v6733, %v6731
    %v6846 = vpack.c.b16 %v6736, %v6734
    %v6847 = vpack.c.b16 %v6737, %v6735
    %v6848 = vpack.c.b16 %v6740, %v6738
    %v6849 = vpack.c.b16 %v6741, %v6739
    %vm6956 = vcmask 744448
    %v6958 = vsel %vm6956, %v6417, 0
    %vm6960 = vcmask 1044480
    %vm6961 = vcmask 1045504
    %v6962 = vsel %vm6960, 4294967295, 65535
    %v6963 = vsel %vm6961, %v6962, 0
    %v6965 = vand.u32 %v6848, %v6963
    %v6968 = vand.u32 %v6849, %v6963
    %6970 = vmatprep.subr.bf16.mxu0 %v6743
    %6971 = vmatpush1.bf16.msra.mxu0 %v6742
    %6972 = vmatprep.subr.bf16.mxu0 %v6745
    %6973 = vmatpush1.bf16.msra.mxu0 %v6744
    %6974 = vmatprep.subr.bf16.mxu0 %v6747
    %6975 = vmatpush1.bf16.msra.mxu0 %v6746
    %6976 = vmatprep.subr.bf16.mxu0 %v6749
    %6977 = vmatpush1.bf16.msra.mxu0 %v6748
    %6978 = vmatprep.subr.bf16.mxu0 %v6751
    %6979 = vmatpush1.bf16.msra.mxu0 %v6750
    %6980 = vmatprep.subr.bf16.mxu0 %v6753
    %6981 = vmatpush1.bf16.msra.mxu0 %v6752
    %6982 = vmatprep.subr.bf16.mxu0 %v6755
    %6983 = vmatpush1.bf16.msra.mxu0 %v6754
    %6984 = vmatprep.subr.bf16.mxu0 %v6757
    %6985 = vmatpush1.bf16.msra.mxu0 %v6756
    %6986 = vmatprep.subr.bf16.mxu0 %v6759
    %6987 = vmatpush1.bf16.msra.mxu0 %v6758
    %6988 = vmatprep.subr.bf16.mxu0 %v6761
    %6989 = vmatpush1.bf16.msra.mxu0 %v6760
    %6990 = vmatprep.subr.bf16.mxu0 %v6763
    %6991 = vmatpush1.bf16.msra.mxu0 %v6762
    %6992 = vmatprep.subr.bf16.mxu0 %v6765
    %6993 = vmatpush1.bf16.msra.mxu0 %v6764
    %6994 = vmatprep.subr.bf16.mxu0 %v6767
    %6995 = vmatpush1.bf16.msra.mxu0 %v6766
    %6996 = vmatprep.subr.bf16.mxu0 %v6769
    %6997 = vmatpush1.bf16.msra.mxu0 %v6768
    %6998 = vmatprep.subr.bf16.mxu0 %v6771
    %6999 = vmatpush1.bf16.msra.mxu0 %v6770
    %7000 = vmatprep.subr.bf16.mxu0 %v6773
    %7001 = vmatpush1.bf16.msra.mxu0 %v6772
    %7002 = vmatprep.mubr.bf16.mxu0 %v6412
    %7003 = vmatmul.mubr.bf16.gmra.mrb[0].mxu0 %v6411
    %v7004 = vpop.f32.mrb[0].mxu0
    %v7005 = vadd.f32 0.0, %v7004
    %v7006 = vpop.f32.mrb[0].mxu0
    %v7007 = vadd.f32 0.0, %v7006
    %v7008 = vpop.f32.mrb[0].mxu0
    %v7009 = vadd.f32 0.0, %v7008
    %v7010 = vpop.f32.mrb[0].mxu0
    %v7011 = vadd.f32 0.0, %v7010
    %7012 = vdwg.mxu0
    %7013 = vmatprep.subr.bf16.mxu0 %v6775
    %7014 = vmatpush1.bf16.msra.mxu0 %v6774
    %7015 = vmatprep.subr.bf16.mxu0 %v6777
    %7016 = vmatpush1.bf16.msra.mxu0 %v6776
    %7017 = vmatprep.subr.bf16.mxu0 %v6779
    %7018 = vmatpush1.bf16.msra.mxu0 %v6778
    %7019 = vmatprep.subr.bf16.mxu0 %v6781
    %7020 = vmatpush1.bf16.msra.mxu0 %v6780
    %7021 = vmatprep.subr.bf16.mxu0 %v6783
    %7022 = vmatpush1.bf16.msra.mxu0 %v6782
    %7023 = vmatprep.subr.bf16.mxu0 %v6785
    %7024 = vmatpush1.bf16.msra.mxu0 %v6784
    %7025 = vmatprep.subr.bf16.mxu0 %v6787
    %7026 = vmatpush1.bf16.msra.mxu0 %v6786
    %7027 = vmatprep.subr.bf16.mxu0 %v6789
    %7028 = vmatpush1.bf16.msra.mxu0 %v6788
    %7029 = vmatprep.subr.bf16.mxu0 %v6791
    %7030 = vmatpush1.bf16.msra.mxu0 %v6790
    %7031 = vmatprep.subr.bf16.mxu0 %v6793
    %7032 = vmatpush1.bf16.msra.mxu0 %v6792
    %7033 = vmatprep.subr.bf16.mxu0 %v6795
    %7034 = vmatpush1.bf16.msra.mxu0 %v6794
    %7035 = vmatprep.subr.bf16.mxu0 %v6797
    %7036 = vmatpush1.bf16.msra.mxu0 %v6796
    %7037 = vmatprep.subr.bf16.mxu0 %v6799
    %7038 = vmatpush1.bf16.msra.mxu0 %v6798
    %7039 = vmatprep.subr.bf16.mxu0 %v6801
    %7040 = vmatpush1.bf16.msra.mxu0 %v6800
    %7041 = vmatprep.subr.bf16.mxu0 %v6803
    %7042 = vmatpush1.bf16.msra.mxu0 %v6802
    %7043 = vmatprep.subr.bf16.mxu0 %v6805
    %7044 = vmatpush1.bf16.msra.mxu0 %v6804
    %7045 = vmatprep.mubr.bf16.mxu0 %v6414
    %7046 = vmatmul.mubr.bf16.gmra.mrb[0].mxu0 %v6413
    %v7047 = vpop.f32.mrb[0].mxu0
    %v7048 = vadd.f32 %v7005, %v7047
    %v7049 = vpop.f32.mrb[0].mxu0
    %v7050 = vadd.f32 %v7007, %v7049
    %v7051 = vpop.f32.mrb[0].mxu0
    %v7052 = vadd.f32 %v7009, %v7051
    %v7053 = vpop.f32.mrb[0].mxu0
    %v7054 = vadd.f32 %v7011, %v7053
    %7055 = vdwg.mxu0
    %7056 = vmatprep.subr.bf16.mxu0 %v6807
    %7057 = vmatpush1.bf16.msra.mxu0 %v6806
    %7058 = vmatprep.subr.bf16.mxu0 %v6809
    %7059 = vmatpush1.bf16.msra.mxu0 %v6808
    %7060 = vmatprep.subr.bf16.mxu0 %v6811
    %7061 = vmatpush1.bf16.msra.mxu0 %v6810
    %7062 = vmatprep.subr.bf16.mxu0 %v6813
    %7063 = vmatpush1.bf16.msra.mxu0 %v6812
    %7064 = vmatprep.subr.bf16.mxu0 %v6815
    %7065 = vmatpush1.bf16.msra.mxu0 %v6814
    %7066 = vmatprep.subr.bf16.mxu0 %v6817
    %7067 = vmatpush1.bf16.msra.mxu0 %v6816
    %7068 = vmatprep.subr.bf16.mxu0 %v6819
    %7069 = vmatpush1.bf16.msra.mxu0 %v6818
    %7070 = vmatprep.subr.bf16.mxu0 %v6821
    %7071 = vmatpush1.bf16.msra.mxu0 %v6820
    %7072 = vmatprep.subr.bf16.mxu0 %v6823
    %7073 = vmatpush1.bf16.msra.mxu0 %v6822
    %7074 = vmatprep.subr.bf16.mxu0 %v6825
    %7075 = vmatpush1.bf16.msra.mxu0 %v6824
    %7076 = vmatprep.subr.bf16.mxu0 %v6827
    %7077 = vmatpush1.bf16.msra.mxu0 %v6826
    %7078 = vmatprep.subr.bf16.mxu0 %v6829
    %7079 = vmatpush1.bf16.msra.mxu0 %v6828
    %7080 = vmatprep.subr.bf16.mxu0 %v6831
    %7081 = vmatpush1.bf16.msra.mxu0 %v6830
    %7082 = vmatprep.subr.bf16.mxu0 %v6833
    %7083 = vmatpush1.bf16.msra.mxu0 %v6832
    %7084 = vmatprep.subr.bf16.mxu0 %v6835
    %7085 = vmatpush1.bf16.msra.mxu0 %v6834
    %7086 = vmatprep.subr.bf16.mxu0 %v6837
    %7087 = vmatpush1.bf16.msra.mxu0 %v6836
    %7088 = vmatprep.mubr.bf16.mxu0 %v6416
    %7089 = vmatmul.mubr.bf16.gmra.mrb[0].mxu0 %v6415
    %v7090 = vpop.f32.mrb[0].mxu0
    %v7091 = vadd.f32 %v7048, %v7090
    %v7092 = vpop.f32.mrb[0].mxu0
    %v7093 = vadd.f32 %v7050, %v7092
    %v7094 = vpop.f32.mrb[0].mxu0
    %v7095 = vadd.f32 %v7052, %v7094
    %v7096 = vpop.f32.mrb[0].mxu0
    %v7097 = vadd.f32 %v7054, %v7096
    %7098 = vdwg.mxu0
    %7099 = vmatprep.subr.bf16.mxu0 %v6839
    %7100 = vmatpush1.bf16.msra.mxu0 %v6838
    %7101 = vmatprep.subr.bf16.mxu0 %v6841
    %7102 = vmatpush1.bf16.msra.mxu0 %v6840
    %7103 = vmatprep.subr.bf16.mxu0 %v6843
    %7104 = vmatpush1.bf16.msra.mxu0 %v6842
    %7105 = vmatprep.subr.bf16.mxu0 %v6845
    %7106 = vmatpush1.bf16.msra.mxu0 %v6844
    %7107 = vmatprep.subr.bf16.mxu0 %v6847
    %7108 = vmatpush1.bf16.msra.mxu0 %v6846
    %7109 = vmatprep.subr.bf16.mxu0 %v6968
    %7110 = vmatpush1.bf16.msra.mxu0 %v6965
    %7111 = vmatprep.subr.bf16.mxu0 0
    %7112 = vmatpush1.bf16.msra.mxu0 0
    %7113 = vmatprep.subr.bf16.mxu0 0
    %7114 = vmatpush1.bf16.msra.mxu0 0
    %7115 = vmatprep.subr.bf16.mxu0 0
    %7116 = vmatpush1.bf16.msra.mxu0 0
    %7117 = vmatprep.subr.bf16.mxu0 0
    %7118 = vmatpush1.bf16.msra.mxu0 0
    %7119 = vmatprep.subr.bf16.mxu0 0
    %7120 = vmatpush1.bf16.msra.mxu0 0
    %7121 = vmatprep.subr.bf16.mxu0 0
    %7122 = vmatpush1.bf16.msra.mxu0 0
    %7123 = vmatprep.subr.bf16.mxu0 0
    %7124 = vmatpush1.bf16.msra.mxu0 0
    %7125 = vmatprep.subr.bf16.mxu0 0
    %7126 = vmatpush1.bf16.msra.mxu0 0
    %7127 = vmatprep.subr.bf16.mxu0 0
    %7128 = vmatpush1.bf16.msra.mxu0 0
    %7129 = vmatprep.subr.bf16.mxu0 0
    %7130 = vmatpush1.bf16.msra.mxu0 0
    %7131 = vmatprep.mubr.bf16.mxu0 0
    %7132 = vmatmul.mubr.bf16.gmra.mrb[0].mxu0 %v6958
    %v7133 = vpop.f32.mrb[0].mxu0
    %v7134 = vadd.f32 %v7091, %v7133
    %v7135 = vpop.f32.mrb[0].mxu0
    %v7136 = vadd.f32 %v7093, %v7135
    %v7137 = vpop.f32.mrb[0].mxu0
    %v7138 = vadd.f32 %v7095, %v7137
    %v7139 = vpop.f32.mrb[0].mxu0
    %v7140 = vadd.f32 %v7097, %v7139
    %7141 = vdwg.mxu0
    %v7142 = vpack.c.bf16 %v7138, %v7134
    %v7143 = vpack.c.bf16 %v7140, %v7136
    %v7146 = vunpack.c.l.b16 %v7142
    %v7147 = vunpack.c.l.b16 %v7143
    %v7148 = vunpack.c.h.b16 %v7142
    %v7149 = vunpack.c.h.b16 %v7143
    %v7150 = vpack.c.b16 %v7147, %v7146
    %v7151 = vpack.c.b16 %v7149, %v7148
    %vm7154 = vcmask 1043456
    %vm7155 = vcmask 556036
    %vm7156 = vmor %vm7155, %vm7154
    %7157 = vst.msk [vmem:[%s4] sm:$0xff] %vm7156, %v7150
    %7158 = vst.msk [vmem:[%s4 + $0x8] sm:$0xff] %vm7156, %v7151
    %v7159 = vld [vmem:[#allocation3 + $0x38] sm:$0xff]
    %v7160 = vld [vmem:[#allocation3 + $0x40] sm:$0xff]
    %v7161 = vld [vmem:[#allocation3 + $0x48] sm:$0xff]
    %v7162 = vld [vmem:[#allocation3 + $0x50] sm:$0xff]
    %v7163 = vld [vmem:[#allocation3 + $0x58] sm:$0xff]
    %v7164 = vld [vmem:[#allocation3 + $0x60] sm:$0xff]
    %v7165 = vld [vmem:[#allocation3 + $0x68] sm:$0xff]
    %7173 = vrot.lane.b32.xlu0 %v7159, 127
    %v7174 = vpop.permute.xlu0 %7173
    %7175 = vrot.lane.b32.xlu0 %v7160, 127
    %v7176 = vpop.permute.xlu0 %7175
    %7177 = vrot.lane.b32.xlu0 %v7161, 127
    %v7178 = vpop.permute.xlu0 %7177
    %7179 = vrot.lane.b32.xlu0 %v7162, 127
    %v7180 = vpop.permute.xlu0 %7179
    %7181 = vrot.lane.b32.xlu0 %v7163, 127
    %v7182 = vpop.permute.xlu0 %7181
    %7183 = vrot.lane.b32.xlu0 %v7164, 127
    %v7184 = vpop.permute.xlu0 %7183
    %7185 = vrot.lane.b32.xlu0 %v7165, 127
    %v7186 = vpop.permute.xlu0 %7185
    %v7187 = vsel %vm200, %v7174, %v7176
    %v7188 = vsel %vm200, %v7176, %v7178
    %v7189 = vsel %vm200, %v7178, %v7180
    %v7190 = vsel %vm200, %v7180, %v7182
    %v7191 = vsel %vm200, %v7182, %v7184
    %v7192 = vsel %vm200, %v7184, %v7186
    %v7200 = vmax.bf16 %v7159, %v7187
    %v7201 = vmax.bf16 %v7160, %v7188
    %v7202 = vmax.bf16 %v7161, %v7189
    %v7203 = vmax.bf16 %v7162, %v7190
    %v7204 = vmax.bf16 %v7163, %v7191
    %v7205 = vmax.bf16 %v7164, %v7192
    %v7206 = vmax.bf16 %v7165, %v7186
    %7214 = vrot.lane.b32.xlu0 %v7200, 96
    %v7215 = vpop.permute.xlu0 %7214
    %7216 = vrot.lane.b32.xlu0 %v7201, 96
    %v7217 = vpop.permute.xlu0 %7216
    %7218 = vrot.lane.b32.xlu0 %v7202, 96
    %v7219 = vpop.permute.xlu0 %7218
    %7220 = vrot.lane.b32.xlu0 %v7203, 96
    %v7221 = vpop.permute.xlu0 %7220
    %7222 = vrot.lane.b32.xlu0 %v7204, 96
    %v7223 = vpop.permute.xlu0 %7222
    %7224 = vrot.lane.b32.xlu0 %v7205, 96
    %v7225 = vpop.permute.xlu0 %7224
    %7226 = vrot.lane.b32.xlu0 %v7206, 96
    %v7227 = vpop.permute.xlu0 %7226
    %v7228 = vsel %vm675, %v7215, %v7217
    %v7229 = vsel %vm675, %v7217, %v7219
    %v7230 = vsel %vm675, %v7219, %v7221
    %v7231 = vsel %vm675, %v7221, %v7223
    %v7232 = vsel %vm675, %v7223, %v7225
    %v7233 = vsel %vm675, %v7225, %v7227
    %v7241 = vmax.bf16 %v7200, %v7228
    %v7242 = vmax.bf16 %v7201, %v7229
    %v7243 = vmax.bf16 %v7202, %v7230
    %v7244 = vmax.bf16 %v7203, %v7231
    %v7245 = vmax.bf16 %v7204, %v7232
    %v7246 = vmax.bf16 %v7205, %v7233
    %v7247 = vmax.bf16 %v7206, %v7227
    %v7249 = vsel %vm6956, %v7247, 0
    %7251 = vmatprep.subr.bf16.mxu0 %v6743
    %7252 = vmatpush1.bf16.msra.mxu0 %v6742
    %7253 = vmatprep.subr.bf16.mxu0 %v6745
    %7254 = vmatpush1.bf16.msra.mxu0 %v6744
    %7255 = vmatprep.subr.bf16.mxu0 %v6747
    %7256 = vmatpush1.bf16.msra.mxu0 %v6746
    %7257 = vmatprep.subr.bf16.mxu0 %v6749
    %7258 = vmatpush1.bf16.msra.mxu0 %v6748
    %7259 = vmatprep.subr.bf16.mxu0 %v6751
    %7260 = vmatpush1.bf16.msra.mxu0 %v6750
    %7261 = vmatprep.subr.bf16.mxu0 %v6753
    %7262 = vmatpush1.bf16.msra.mxu0 %v6752
    %7263 = vmatprep.subr.bf16.mxu0 %v6755
    %7264 = vmatpush1.bf16.msra.mxu0 %v6754
    %7265 = vmatprep.subr.bf16.mxu0 %v6757
    %7266 = vmatpush1.bf16.msra.mxu0 %v6756
    %7267 = vmatprep.subr.bf16.mxu0 %v6759
    %7268 = vmatpush1.bf16.msra.mxu0 %v6758
    %7269 = vmatprep.subr.bf16.mxu0 %v6761
    %7270 = vmatpush1.bf16.msra.mxu0 %v6760
    %7271 = vmatprep.subr.bf16.mxu0 %v6763
    %7272 = vmatpush1.bf16.msra.mxu0 %v6762
    %7273 = vmatprep.subr.bf16.mxu0 %v6765
    %7274 = vmatpush1.bf16.msra.mxu0 %v6764
    %7275 = vmatprep.subr.bf16.mxu0 %v6767
    %7276 = vmatpush1.bf16.msra.mxu0 %v6766
    %7277 = vmatprep.subr.bf16.mxu0 %v6769
    %7278 = vmatpush1.bf16.msra.mxu0 %v6768
    %7279 = vmatprep.subr.bf16.mxu0 %v6771
    %7280 = vmatpush1.bf16.msra.mxu0 %v6770
    %7281 = vmatprep.subr.bf16.mxu0 %v6773
    %7282 = vmatpush1.bf16.msra.mxu0 %v6772
    %7283 = vmatprep.mubr.bf16.mxu0 %v7242
    %7284 = vmatmul.mubr.bf16.gmra.mrb[0].mxu0 %v7241
    %v7285 = vpop.f32.mrb[0].mxu0
    %v7286 = vadd.f32 0.0, %v7285
    %v7287 = vpop.f32.mrb[0].mxu0
    %v7288 = vadd.f32 0.0, %v7287
    %v7289 = vpop.f32.mrb[0].mxu0
    %v7290 = vadd.f32 0.0, %v7289
    %v7291 = vpop.f32.mrb[0].mxu0
    %v7292 = vadd.f32 0.0, %v7291
    %7293 = vdwg.mxu0
    %7294 = vmatprep.subr.bf16.mxu0 %v6775
    %7295 = vmatpush1.bf16.msra.mxu0 %v6774
    %7296 = vmatprep.subr.bf16.mxu0 %v6777
    %7297 = vmatpush1.bf16.msra.mxu0 %v6776
    %7298 = vmatprep.subr.bf16.mxu0 %v6779
    %7299 = vmatpush1.bf16.msra.mxu0 %v6778
    %7300 = vmatprep.subr.bf16.mxu0 %v6781
    %7301 = vmatpush1.bf16.msra.mxu0 %v6780
    %7302 = vmatprep.subr.bf16.mxu0 %v6783
    %7303 = vmatpush1.bf16.msra.mxu0 %v6782
    %7304 = vmatprep.subr.bf16.mxu0 %v6785
    %7305 = vmatpush1.bf16.msra.mxu0 %v6784
    %7306 = vmatprep.subr.bf16.mxu0 %v6787
    %7307 = vmatpush1.bf16.msra.mxu0 %v6786
    %7308 = vmatprep.subr.bf16.mxu0 %v6789
    %7309 = vmatpush1.bf16.msra.mxu0 %v6788
    %7310 = vmatprep.subr.bf16.mxu0 %v6791
    %7311 = vmatpush1.bf16.msra.mxu0 %v6790
    %7312 = vmatprep.subr.bf16.mxu0 %v6793
    %7313 = vmatpush1.bf16.msra.mxu0 %v6792
    %7314 = vmatprep.subr.bf16.mxu0 %v6795
    %7315 = vmatpush1.bf16.msra.mxu0 %v6794
    %7316 = vmatprep.subr.bf16.mxu0 %v6797
    %7317 = vmatpush1.bf16.msra.mxu0 %v6796
    %7318 = vmatprep.subr.bf16.mxu0 %v6799
    %7319 = vmatpush1.bf16.msra.mxu0 %v6798
    %7320 = vmatprep.subr.bf16.mxu0 %v6801
    %7321 = vmatpush1.bf16.msra.mxu0 %v6800
    %7322 = vmatprep.subr.bf16.mxu0 %v6803
    %7323 = vmatpush1.bf16.msra.mxu0 %v6802
    %7324 = vmatprep.subr.bf16.mxu0 %v6805
    %7325 = vmatpush1.bf16.msra.mxu0 %v6804
    %7326 = vmatprep.mubr.bf16.mxu0 %v7244
    %7327 = vmatmul.mubr.bf16.gmra.mrb[0].mxu0 %v7243
    %v7328 = vpop.f32.mrb[0].mxu0
    %v7329 = vadd.f32 %v7286, %v7328
    %v7330 = vpop.f32.mrb[0].mxu0
    %v7331 = vadd.f32 %v7288, %v7330
    %v7332 = vpop.f32.mrb[0].mxu0
    %v7333 = vadd.f32 %v7290, %v7332
    %v7334 = vpop.f32.mrb[0].mxu0
    %v7335 = vadd.f32 %v7292, %v7334
    %7336 = vdwg.mxu0
    %7337 = vmatprep.subr.bf16.mxu0 %v6807
    %7338 = vmatpush1.bf16.msra.mxu0 %v6806
    %7339 = vmatprep.subr.bf16.mxu0 %v6809
    %7340 = vmatpush1.bf16.msra.mxu0 %v6808
    %7341 = vmatprep.subr.bf16.mxu0 %v6811
    %7342 = vmatpush1.bf16.msra.mxu0 %v6810
    %7343 = vmatprep.subr.bf16.mxu0 %v6813
    %7344 = vmatpush1.bf16.msra.mxu0 %v6812
    %7345 = vmatprep.subr.bf16.mxu0 %v6815
    %7346 = vmatpush1.bf16.msra.mxu0 %v6814
    %7347 = vmatprep.subr.bf16.mxu0 %v6817
    %7348 = vmatpush1.bf16.msra.mxu0 %v6816
    %7349 = vmatprep.subr.bf16.mxu0 %v6819
    %7350 = vmatpush1.bf16.msra.mxu0 %v6818
    %7351 = vmatprep.subr.bf16.mxu0 %v6821
    %7352 = vmatpush1.bf16.msra.mxu0 %v6820
    %7353 = vmatprep.subr.bf16.mxu0 %v6823
    %7354 = vmatpush1.bf16.msra.mxu0 %v6822
    %7355 = vmatprep.subr.bf16.mxu0 %v6825
    %7356 = vmatpush1.bf16.msra.mxu0 %v6824
    %7357 = vmatprep.subr.bf16.mxu0 %v6827
    %7358 = vmatpush1.bf16.msra.mxu0 %v6826
    %7359 = vmatprep.subr.bf16.mxu0 %v6829
    %7360 = vmatpush1.bf16.msra.mxu0 %v6828
    %7361 = vmatprep.subr.bf16.mxu0 %v6831
    %7362 = vmatpush1.bf16.msra.mxu0 %v6830
    %7363 = vmatprep.subr.bf16.mxu0 %v6833
    %7364 = vmatpush1.bf16.msra.mxu0 %v6832
    %7365 = vmatprep.subr.bf16.mxu0 %v6835
    %7366 = vmatpush1.bf16.msra.mxu0 %v6834
    %7367 = vmatprep.subr.bf16.mxu0 %v6837
    %7368 = vmatpush1.bf16.msra.mxu0 %v6836
    %7369 = vmatprep.mubr.bf16.mxu0 %v7246
    %7370 = vmatmul.mubr.bf16.gmra.mrb[0].mxu0 %v7245
    %v7371 = vpop.f32.mrb[0].mxu0
    %v7372 = vadd.f32 %v7329, %v7371
    %v7373 = vpop.f32.mrb[0].mxu0
    %v7374 = vadd.f32 %v7331, %v7373
    %v7375 = vpop.f32.mrb[0].mxu0
    %v7376 = vadd.f32 %v7333, %v7375
    %v7377 = vpop.f32.mrb[0].mxu0
    %v7378 = vadd.f32 %v7335, %v7377
    %7379 = vdwg.mxu0
    %7380 = vmatprep.subr.bf16.mxu0 %v6839
    %7381 = vmatpush1.bf16.msra.mxu0 %v6838
    %7382 = vmatprep.subr.bf16.mxu0 %v6841
    %7383 = vmatpush1.bf16.msra.mxu0 %v6840
    %7384 = vmatprep.subr.bf16.mxu0 %v6843
    %7385 = vmatpush1.bf16.msra.mxu0 %v6842
    %7386 = vmatprep.subr.bf16.mxu0 %v6845
    %7387 = vmatpush1.bf16.msra.mxu0 %v6844
    %7388 = vmatprep.subr.bf16.mxu0 %v6847
    %7389 = vmatpush1.bf16.msra.mxu0 %v6846
    %7390 = vmatprep.subr.bf16.mxu0 %v6968
    %7391 = vmatpush1.bf16.msra.mxu0 %v6965
    %7392 = vmatprep.subr.bf16.mxu0 0
    %7393 = vmatpush1.bf16.msra.mxu0 0
    %7394 = vmatprep.subr.bf16.mxu0 0
    %7395 = vmatpush1.bf16.msra.mxu0 0
    %7396 = vmatprep.subr.bf16.mxu0 0
    %7397 = vmatpush1.bf16.msra.mxu0 0
    %7398 = vmatprep.subr.bf16.mxu0 0
    %7399 = vmatpush1.bf16.msra.mxu0 0
    %7400 = vmatprep.subr.bf16.mxu0 0
    %7401 = vmatpush1.bf16.msra.mxu0 0
    %7402 = vmatprep.subr.bf16.mxu0 0
    %7403 = vmatpush1.bf16.msra.mxu0 0
    %7404 = vmatprep.subr.bf16.mxu0 0
    %7405 = vmatpush1.bf16.msra.mxu0 0
    %7406 = vmatprep.subr.bf16.mxu0 0
    %7407 = vmatpush1.bf16.msra.mxu0 0
    %7408 = vmatprep.subr.bf16.mxu0 0
    %7409 = vmatpush1.bf16.msra.mxu0 0
    %7410 = vmatprep.subr.bf16.mxu0 0
    %7411 = vmatpush1.bf16.msra.mxu0 0
    %7412 = vmatprep.mubr.bf16.mxu0 0
    %7413 = vmatmul.mubr.bf16.gmra.mrb[0].mxu0 %v7249
    %v7414 = vpop.f32.mrb[0].mxu0
    %v7415 = vadd.f32 %v7372, %v7414
    %v7416 = vpop.f32.mrb[0].mxu0
    %v7417 = vadd.f32 %v7374, %v7416
    %v7418 = vpop.f32.mrb[0].mxu0
    %v7419 = vadd.f32 %v7376, %v7418
    %v7420 = vpop.f32.mrb[0].mxu0
    %v7421 = vadd.f32 %v7378, %v7420
    %7422 = vdwg.mxu0
    %v7423 = vpack.c.bf16 %v7419, %v7415
    %v7424 = vpack.c.bf16 %v7421, %v7417
    %v7427 = vunpack.c.l.b16 %v7423
    %v7428 = vunpack.c.l.b16 %v7424
    %v7429 = vunpack.c.h.b16 %v7423
    %v7430 = vunpack.c.h.b16 %v7424
    %v7431 = vpack.c.b16 %v7428, %v7427
    %v7432 = vpack.c.b16 %v7430, %v7429
    %s7435 = scalar_lea.vmem %s4, 16
    %7436 = vst.msk [vmem:[%s7435] sm:$0xff] %vm7156, %v7431
    %7437 = vst.msk [vmem:[%s7435 + $0x8] sm:$0xff] %vm7156, %v7432
    // Predicated region
    $region22: #{cnn_forward.3} parent=1 // pred_check
      _
    $region23: #{cnn_forward.3} parent=1 // pred_check_branch
      %7439 = sbr.rel (0) target = $region25
    $region24: #{cnn_forward.3} parent=1 // pred_region
      _
    $region25: #{cnn_forward.3} parent=1 // pred_fallthru
      _
    // Predicated region
    $region26: #{cnn_forward.3} parent=1 // pred_check
      _
    $region27: #{cnn_forward.3} parent=1 // pred_check_branch
      %7441 = sbr.rel (0) target = $region29
    $region28: #{cnn_forward.3} parent=1 // pred_region
      _
    $region29: #{cnn_forward.3} parent=1 // pred_fallthru
      _
    %7442 = vsyncpa [#allocation5], 1

</llo_original>
